<compile_context>
chip_gen: v7x
topology: tpu7x:2x2x1
jax: 0.10.0
libtpu: 0.0.40
codegen_flags: <defaults>
</compile_context>

<pallas_src>
import jax
import jax.numpy as jnp
from jax.experimental import pallas as pl
from jax.experimental.pallas import tpu as pltpu

IN_FEATURES = 196608
OUT_FEATURES = 10

CHUNK = 1024          # one f32 vreg = (8, 128) elements
TK_CHUNKS = 48        # K tile = 48 * 1024 = 49152 features -> 4 K-tiles total


def _core_split() -> int:
    """2 on chips whose Pallas device has two TensorCores, else 1."""
    try:
        kind = jax.devices()[0].device_kind.lower()
    except Exception:
        return 1
    return 2 if any(t in kind for t in ("v4", "v5p", "v7", "7x")) else 1


def _make_kernel(B, N, steps, multi):
    def kernel(x_ref, w_ref, bias_ref, o_ref, acc_ref):
        # grid = (CORE_SPLIT, steps) if multi else (steps,); K axis is last.
        k = pl.program_id(1) if multi else pl.program_id(0)

        @pl.when(k == 0)
        def _init():
            acc_ref[...] = jnp.zeros_like(acc_ref)

        # VPU accumulate: for each (b, n) pair, fold this step's TK_CHUNKS
        # vreg-chunks of x[b] * w[n] into one (8, 128) f32 accumulator.
        # No MXU, no XLU, no per-step cross-lane work, no relayouts.
        for b in range(B):
            x_b = x_ref[b]                               # (TK_CHUNKS, 8, 128)
            for n in range(N):
                acc_ref[b, n] += jnp.sum(x_b * w_ref[n], axis=0)

        @pl.when(k == steps - 1)
        def _finalize():
            # Single cross-lane/sublane reduction, once per kernel.
            res = acc_ref[...].sum(axis=-1).sum(axis=-1)   # (B, N) f32
            if multi:
                # Only core 0 adds the bias; the wrapper sums per-core partials.
                bias = jnp.where(pl.program_id(0) == 0,
                                 bias_ref[...], jnp.zeros_like(bias_ref[...]))
                o_ref[...] = (res + bias).astype(o_ref.dtype)[None]
            else:
                o_ref[...] = (res + bias_ref[...]).astype(o_ref.dtype)

    return kernel


def tudui_forward(x, weight, bias):
    """x: [B, 196608] f32, weight: [10, 196608] (native torch layout), bias: [10]."""
    B, K = x.shape
    N = weight.shape[0]
    assert K % CHUNK == 0, "feature dim must be a multiple of 1024"
    n_chunks = K // CHUNK

    core_split = _core_split()
    assert n_chunks % (TK_CHUNKS * core_split) == 0, "K must tile evenly"
    steps = n_chunks // TK_CHUNKS // core_split
    multi = core_split > 1

    # Free (bitcast) reshapes of the contiguous HBM arrays into vreg-shaped
    # (..., chunks, 8, 128) form: no sublane padding in VMEM, and the kernel
    # can accumulate on the VPU with zero per-step layout changes.
    x4 = x.reshape(B, n_chunks, 8, 128)
    w4 = weight.reshape(N, n_chunks, 8, 128)
    b2 = bias.reshape(1, N).astype(jnp.float32)

    cost = pl.CostEstimate(
        flops=2 * B * K * N,
        transcendentals=0,
        bytes_accessed=4 * (B * K + N * K + B * N + N),
    )

    kernel = _make_kernel(B, N, steps, multi)

    if multi:
        grid = (core_split, steps)
        x_spec = pl.BlockSpec((B, TK_CHUNKS, 8, 128),
                              lambda c, k: (0, c * steps + k, 0, 0))
        w_spec = pl.BlockSpec((N, TK_CHUNKS, 8, 128),
                              lambda c, k: (0, c * steps + k, 0, 0))
        bias_spec = pl.BlockSpec((1, N), lambda c, k: (0, 0))
        out_specs = pl.BlockSpec((1, B, N), lambda c, k: (c, 0, 0))
        out_shape = jax.ShapeDtypeStruct((core_split, B, N), jnp.float32)
        dims = ("parallel", "arbitrary")
    else:
        grid = (steps,)
        x_spec = pl.BlockSpec((B, TK_CHUNKS, 8, 128), lambda k: (0, k, 0, 0))
        w_spec = pl.BlockSpec((N, TK_CHUNKS, 8, 128), lambda k: (0, k, 0, 0))
        bias_spec = pl.BlockSpec((1, N), lambda k: (0, 0))
        out_specs = pl.BlockSpec((B, N), lambda k: (0, 0))
        out_shape = jax.ShapeDtypeStruct((B, N), jnp.float32)
        dims = ("arbitrary",)

    out = pl.pallas_call(
        kernel,
        out_shape=out_shape,
        grid_spec=pltpu.PrefetchScalarGridSpec(
            num_scalar_prefetch=0,
            grid=grid,
            in_specs=[x_spec, w_spec, bias_spec],
            out_specs=out_specs,
            scratch_shapes=[pltpu.VMEM((B, N, 8, 128), jnp.float32)],
        ),
        compiler_params=pltpu.CompilerParams(dimension_semantics=dims),
        cost_estimate=cost,
    )(x4, w4, b2)

    if multi:
        out = out.sum(axis=0)   # combine the two per-core partials (tiny)
    return out.astype(x.dtype)


def init_params(key):
    """Deterministic init matching torch.nn.Linear shapes:
    weight [10, 196608], bias [10], uniform(-1/sqrt(fan_in), 1/sqrt(fan_in))."""
    kw, kb = jax.random.split(key)
    bound = 1.0 / jnp.sqrt(jnp.float32(IN_FEATURES))
    weight = jax.random.uniform(
        kw, (OUT_FEATURES, IN_FEATURES), jnp.float32, -bound, bound
    )
    bias = jax.random.uniform(kb, (OUT_FEATURES,), jnp.float32, -bound, bound)
    return weight, bias


if __name__ == "__main__":
    key = jax.random.PRNGKey(0)
    k_x, k_p = jax.random.split(key)

    B = 2
    x = jax.random.normal(k_x, (B, IN_FEATURES), jnp.float32)
    weight, bias = init_params(k_p)

    fwd = jax.jit(tudui_forward)
    out = jax.block_until_ready(fwd(x, weight, bias))

    # Reference check against plain JAX (same math as torch Linear, f32).
    ref = jnp.dot(x, weight.T, precision=jax.lax.Precision.HIGHEST) + bias
    assert out.shape == (B, OUT_FEATURES)
    assert jnp.allclose(out, ref, atol=1e-3, rtol=1e-3)

    print("KERNEL_OK")
</pallas_src>

<mosaic_0001>
module attributes {stable_mosaic.version = 11 : i64} {
  func.func @kernel(%arg0: i32, %arg1: memref<2x48x8x128xf32, #tpu.memory_space<vmem>>, %arg2: memref<10x48x8x128xf32, #tpu.memory_space<vmem>>, %arg3: memref<1x10xf32, #tpu.memory_space<vmem>>, %arg4: memref<2x10xf32, #tpu.memory_space<vmem>>, %arg5: memref<2x10x8x128xf32, #tpu.memory_space<vmem>>) attributes {dimension_semantics = [#tpu.dimension_semantics<arbitrary>], iteration_bounds = array<i64: 4>, scalar_prefetch = 0 : i64, scratch_operands = 1 : i64, tpu.core_type = #tpu.core_type<tc>, window_params = [{transform_indices = @transform_0, window_bounds = array<i64: 2, 48, 8, 128>}, {transform_indices = @transform_1, window_bounds = array<i64: 10, 48, 8, 128>}, {pipeline_mode = #tpu.pipeline_mode<synchronous>, transform_indices = @transform_2, window_bounds = array<i64: 1, 10>}, {pipeline_mode = #tpu.pipeline_mode<synchronous>, transform_indices = @transform_3, window_bounds = array<i64: 2, 10>}]} {
    %c0_i32 = arith.constant 0 : i32
    %0 = arith.cmpi eq, %arg0, %c0_i32 : i32
    %1 = arith.extui %0 : i1 to i32
    %c0_i32_0 = arith.constant 0 : i32
    %2 = arith.cmpi ne, %1, %c0_i32_0 : i32
    scf.if %2 {
      %cst_259 = arith.constant 0.000000e+00 : f32
      %210 = vector.broadcast %cst_259 : f32 to vector<2x10x8x128xf32>
      %c0_260 = arith.constant 0 : index
      %c0_261 = arith.constant 0 : index
      %c0_262 = arith.constant 0 : index
      %c0_263 = arith.constant 0 : index
      %211 = vector.load %arg5[%c0_260, %c0_261, %c0_262, %c0_263] : memref<2x10x8x128xf32, #tpu.memory_space<vmem>>, vector<2x10x8x128xf32>
      tpu.vector_store %arg5[%c0_260, %c0_261, %c0_262, %c0_263], %210 {strides = array<i32>} : memref<2x10x8x128xf32, #tpu.memory_space<vmem>>, vector<2x10x8x128xf32>,
    } else {
    }
    %c0 = arith.constant 0 : index
    %c0_1 = arith.constant 0 : index
    %c0_2 = arith.constant 0 : index
    %c0_3 = arith.constant 0 : index
    %3 = vector.load %arg1[%c0, %c0_1, %c0_2, %c0_3] : memref<2x48x8x128xf32, #tpu.memory_space<vmem>>, vector<1x48x8x128xf32>
    %4 = vector.shape_cast %3 : vector<1x48x8x128xf32> to vector<48x8x128xf32>
    %c0_4 = arith.constant 0 : index
    %c0_5 = arith.constant 0 : index
    %c0_6 = arith.constant 0 : index
    %c0_7 = arith.constant 0 : index
    %5 = vector.load %arg5[%c0_4, %c0_5, %c0_6, %c0_7] : memref<2x10x8x128xf32, #tpu.memory_space<vmem>>, vector<1x1x8x128xf32>
    %6 = vector.shape_cast %5 : vector<1x1x8x128xf32> to vector<8x128xf32>
    %c0_8 = arith.constant 0 : index
    %c0_9 = arith.constant 0 : index
    %c0_10 = arith.constant 0 : index
    %c0_11 = arith.constant 0 : index
    %7 = vector.load %arg2[%c0_8, %c0_9, %c0_10, %c0_11] : memref<10x48x8x128xf32, #tpu.memory_space<vmem>>, vector<1x48x8x128xf32>
    %8 = vector.shape_cast %7 : vector<1x48x8x128xf32> to vector<48x8x128xf32>
    %9 = arith.mulf %4, %8 : vector<48x8x128xf32>
    %cst = arith.constant dense<0.000000e+00> : vector<8x128xf32>
    %10 = vector.multi_reduction <add>, %9, %cst [0] : vector<48x8x128xf32> to vector<8x128xf32>
    %11 = arith.addf %6, %10 : vector<8x128xf32>
    %c0_12 = arith.constant 0 : index
    %c0_13 = arith.constant 0 : index
    %c0_14 = arith.constant 0 : index
    %c0_15 = arith.constant 0 : index
    %12 = vector.load %arg5[%c0_12, %c0_13, %c0_14, %c0_15] : memref<2x10x8x128xf32, #tpu.memory_space<vmem>>, vector<1x1x8x128xf32>
    %13 = vector.shape_cast %12 : vector<1x1x8x128xf32> to vector<8x128xf32>
    %14 = vector.shape_cast %11 : vector<8x128xf32> to vector<1x1x8x128xf32>
    tpu.vector_store %arg5[%c0_12, %c0_13, %c0_14, %c0_15], %14 {strides = array<i32>} : memref<2x10x8x128xf32, #tpu.memory_space<vmem>>, vector<1x1x8x128xf32>,
    %c0_16 = arith.constant 0 : index
    %c1 = arith.constant 1 : index
    %c0_17 = arith.constant 0 : index
    %c0_18 = arith.constant 0 : index
    %15 = vector.load %arg5[%c0_16, %c1, %c0_17, %c0_18] : memref<2x10x8x128xf32, #tpu.memory_space<vmem>>, vector<1x1x8x128xf32>
    %16 = vector.shape_cast %15 : vector<1x1x8x128xf32> to vector<8x128xf32>
    %c1_19 = arith.constant 1 : index
    %c0_20 = arith.constant 0 : index
    %c0_21 = arith.constant 0 : index
    %c0_22 = arith.constant 0 : index
    %17 = vector.load %arg2[%c1_19, %c0_20, %c0_21, %c0_22] : memref<10x48x8x128xf32, #tpu.memory_space<vmem>>, vector<1x48x8x128xf32>
    %18 = vector.shape_cast %17 : vector<1x48x8x128xf32> to vector<48x8x128xf32>
    %19 = arith.mulf %4, %18 : vector<48x8x128xf32>
    %cst_23 = arith.constant dense<0.000000e+00> : vector<8x128xf32>
    %20 = vector.multi_reduction <add>, %19, %cst_23 [0] : vector<48x8x128xf32> to vector<8x128xf32>
    %21 = arith.addf %16, %20 : vector<8x128xf32>
    %c0_24 = arith.constant 0 : index
    %c1_25 = arith.constant 1 : index
    %c0_26 = arith.constant 0 : index
    %c0_27 = arith.constant 0 : index
    %22 = vector.load %arg5[%c0_24, %c1_25, %c0_26, %c0_27] : memref<2x10x8x128xf32, #tpu.memory_space<vmem>>, vector<1x1x8x128xf32>
    %23 = vector.shape_cast %22 : vector<1x1x8x128xf32> to vector<8x128xf32>
    %24 = vector.shape_cast %21 : vector<8x128xf32> to vector<1x1x8x128xf32>
    tpu.vector_store %arg5[%c0_24, %c1_25, %c0_26, %c0_27], %24 {strides = array<i32>} : memref<2x10x8x128xf32, #tpu.memory_space<vmem>>, vector<1x1x8x128xf32>,
    %c0_28 = arith.constant 0 : index
    %c2 = arith.constant 2 : index
    %c0_29 = arith.constant 0 : index
    %c0_30 = arith.constant 0 : index
    %25 = vector.load %arg5[%c0_28, %c2, %c0_29, %c0_30] : memref<2x10x8x128xf32, #tpu.memory_space<vmem>>, vector<1x1x8x128xf32>
    %26 = vector.shape_cast %25 : vector<1x1x8x128xf32> to vector<8x128xf32>
    %c2_31 = arith.constant 2 : index
    %c0_32 = arith.constant 0 : index
    %c0_33 = arith.constant 0 : index
    %c0_34 = arith.constant 0 : index
    %27 = vector.load %arg2[%c2_31, %c0_32, %c0_33, %c0_34] : memref<10x48x8x128xf32, #tpu.memory_space<vmem>>, vector<1x48x8x128xf32>
    %28 = vector.shape_cast %27 : vector<1x48x8x128xf32> to vector<48x8x128xf32>
    %29 = arith.mulf %4, %28 : vector<48x8x128xf32>
    %cst_35 = arith.constant dense<0.000000e+00> : vector<8x128xf32>
    %30 = vector.multi_reduction <add>, %29, %cst_35 [0] : vector<48x8x128xf32> to vector<8x128xf32>
    %31 = arith.addf %26, %30 : vector<8x128xf32>
    %c0_36 = arith.constant 0 : index
    %c2_37 = arith.constant 2 : index
    %c0_38 = arith.constant 0 : index
    %c0_39 = arith.constant 0 : index
    %32 = vector.load %arg5[%c0_36, %c2_37, %c0_38, %c0_39] : memref<2x10x8x128xf32, #tpu.memory_space<vmem>>, vector<1x1x8x128xf32>
    %33 = vector.shape_cast %32 : vector<1x1x8x128xf32> to vector<8x128xf32>
    %34 = vector.shape_cast %31 : vector<8x128xf32> to vector<1x1x8x128xf32>
    tpu.vector_store %arg5[%c0_36, %c2_37, %c0_38, %c0_39], %34 {strides = array<i32>} : memref<2x10x8x128xf32, #tpu.memory_space<vmem>>, vector<1x1x8x128xf32>,
    %c0_40 = arith.constant 0 : index
    %c3 = arith.constant 3 : index
    %c0_41 = arith.constant 0 : index
    %c0_42 = arith.constant 0 : index
    %35 = vector.load %arg5[%c0_40, %c3, %c0_41, %c0_42] : memref<2x10x8x128xf32, #tpu.memory_space<vmem>>, vector<1x1x8x128xf32>
    %36 = vector.shape_cast %35 : vector<1x1x8x128xf32> to vector<8x128xf32>
    %c3_43 = arith.constant 3 : index
    %c0_44 = arith.constant 0 : index
    %c0_45 = arith.constant 0 : index
    %c0_46 = arith.constant 0 : index
    %37 = vector.load %arg2[%c3_43, %c0_44, %c0_45, %c0_46] : memref<10x48x8x128xf32, #tpu.memory_space<vmem>>, vector<1x48x8x128xf32>
    %38 = vector.shape_cast %37 : vector<1x48x8x128xf32> to vector<48x8x128xf32>
    %39 = arith.mulf %4, %38 : vector<48x8x128xf32>
    %cst_47 = arith.constant dense<0.000000e+00> : vector<8x128xf32>
    %40 = vector.multi_reduction <add>, %39, %cst_47 [0] : vector<48x8x128xf32> to vector<8x128xf32>
    %41 = arith.addf %36, %40 : vector<8x128xf32>
    %c0_48 = arith.constant 0 : index
    %c3_49 = arith.constant 3 : index
    %c0_50 = arith.constant 0 : index
    %c0_51 = arith.constant 0 : index
    %42 = vector.load %arg5[%c0_48, %c3_49, %c0_50, %c0_51] : memref<2x10x8x128xf32, #tpu.memory_space<vmem>>, vector<1x1x8x128xf32>
    %43 = vector.shape_cast %42 : vector<1x1x8x128xf32> to vector<8x128xf32>
    %44 = vector.shape_cast %41 : vector<8x128xf32> to vector<1x1x8x128xf32>
    tpu.vector_store %arg5[%c0_48, %c3_49, %c0_50, %c0_51], %44 {strides = array<i32>} : memref<2x10x8x128xf32, #tpu.memory_space<vmem>>, vector<1x1x8x128xf32>,
    %c0_52 = arith.constant 0 : index
    %c4 = arith.constant 4 : index
    %c0_53 = arith.constant 0 : index
    %c0_54 = arith.constant 0 : index
    %45 = vector.load %arg5[%c0_52, %c4, %c0_53, %c0_54] : memref<2x10x8x128xf32, #tpu.memory_space<vmem>>, vector<1x1x8x128xf32>
    %46 = vector.shape_cast %45 : vector<1x1x8x128xf32> to vector<8x128xf32>
    %c4_55 = arith.constant 4 : index
    %c0_56 = arith.constant 0 : index
    %c0_57 = arith.constant 0 : index
    %c0_58 = arith.constant 0 : index
    %47 = vector.load %arg2[%c4_55, %c0_56, %c0_57, %c0_58] : memref<10x48x8x128xf32, #tpu.memory_space<vmem>>, vector<1x48x8x128xf32>
    %48 = vector.shape_cast %47 : vector<1x48x8x128xf32> to vector<48x8x128xf32>
    %49 = arith.mulf %4, %48 : vector<48x8x128xf32>
    %cst_59 = arith.constant dense<0.000000e+00> : vector<8x128xf32>
    %50 = vector.multi_reduction <add>, %49, %cst_59 [0] : vector<48x8x128xf32> to vector<8x128xf32>
    %51 = arith.addf %46, %50 : vector<8x128xf32>
    %c0_60 = arith.constant 0 : index
    %c4_61 = arith.constant 4 : index
    %c0_62 = arith.constant 0 : index
    %c0_63 = arith.constant 0 : index
    %52 = vector.load %arg5[%c0_60, %c4_61, %c0_62, %c0_63] : memref<2x10x8x128xf32, #tpu.memory_space<vmem>>, vector<1x1x8x128xf32>
    %53 = vector.shape_cast %52 : vector<1x1x8x128xf32> to vector<8x128xf32>
    %54 = vector.shape_cast %51 : vector<8x128xf32> to vector<1x1x8x128xf32>
    tpu.vector_store %arg5[%c0_60, %c4_61, %c0_62, %c0_63], %54 {strides = array<i32>} : memref<2x10x8x128xf32, #tpu.memory_space<vmem>>, vector<1x1x8x128xf32>,
    %c0_64 = arith.constant 0 : index
    %c5 = arith.constant 5 : index
    %c0_65 = arith.constant 0 : index
    %c0_66 = arith.constant 0 : index
    %55 = vector.load %arg5[%c0_64, %c5, %c0_65, %c0_66] : memref<2x10x8x128xf32, #tpu.memory_space<vmem>>, vector<1x1x8x128xf32>
    %56 = vector.shape_cast %55 : vector<1x1x8x128xf32> to vector<8x128xf32>
    %c5_67 = arith.constant 5 : index
    %c0_68 = arith.constant 0 : index
    %c0_69 = arith.constant 0 : index
    %c0_70 = arith.constant 0 : index
    %57 = vector.load %arg2[%c5_67, %c0_68, %c0_69, %c0_70] : memref<10x48x8x128xf32, #tpu.memory_space<vmem>>, vector<1x48x8x128xf32>
    %58 = vector.shape_cast %57 : vector<1x48x8x128xf32> to vector<48x8x128xf32>
    %59 = arith.mulf %4, %58 : vector<48x8x128xf32>
    %cst_71 = arith.constant dense<0.000000e+00> : vector<8x128xf32>
    %60 = vector.multi_reduction <add>, %59, %cst_71 [0] : vector<48x8x128xf32> to vector<8x128xf32>
    %61 = arith.addf %56, %60 : vector<8x128xf32>
    %c0_72 = arith.constant 0 : index
    %c5_73 = arith.constant 5 : index
    %c0_74 = arith.constant 0 : index
    %c0_75 = arith.constant 0 : index
    %62 = vector.load %arg5[%c0_72, %c5_73, %c0_74, %c0_75] : memref<2x10x8x128xf32, #tpu.memory_space<vmem>>, vector<1x1x8x128xf32>
    %63 = vector.shape_cast %62 : vector<1x1x8x128xf32> to vector<8x128xf32>
    %64 = vector.shape_cast %61 : vector<8x128xf32> to vector<1x1x8x128xf32>
    tpu.vector_store %arg5[%c0_72, %c5_73, %c0_74, %c0_75], %64 {strides = array<i32>} : memref<2x10x8x128xf32, #tpu.memory_space<vmem>>, vector<1x1x8x128xf32>,
    %c0_76 = arith.constant 0 : index
    %c6 = arith.constant 6 : index
    %c0_77 = arith.constant 0 : index
    %c0_78 = arith.constant 0 : index
    %65 = vector.load %arg5[%c0_76, %c6, %c0_77, %c0_78] : memref<2x10x8x128xf32, #tpu.memory_space<vmem>>, vector<1x1x8x128xf32>
    %66 = vector.shape_cast %65 : vector<1x1x8x128xf32> to vector<8x128xf32>
    %c6_79 = arith.constant 6 : index
    %c0_80 = arith.constant 0 : index
    %c0_81 = arith.constant 0 : index
    %c0_82 = arith.constant 0 : index
    %67 = vector.load %arg2[%c6_79, %c0_80, %c0_81, %c0_82] : memref<10x48x8x128xf32, #tpu.memory_space<vmem>>, vector<1x48x8x128xf32>
    %68 = vector.shape_cast %67 : vector<1x48x8x128xf32> to vector<48x8x128xf32>
    %69 = arith.mulf %4, %68 : vector<48x8x128xf32>
    %cst_83 = arith.constant dense<0.000000e+00> : vector<8x128xf32>
    %70 = vector.multi_reduction <add>, %69, %cst_83 [0] : vector<48x8x128xf32> to vector<8x128xf32>
    %71 = arith.addf %66, %70 : vector<8x128xf32>
    %c0_84 = arith.constant 0 : index
    %c6_85 = arith.constant 6 : index
    %c0_86 = arith.constant 0 : index
    %c0_87 = arith.constant 0 : index
    %72 = vector.load %arg5[%c0_84, %c6_85, %c0_86, %c0_87] : memref<2x10x8x128xf32, #tpu.memory_space<vmem>>, vector<1x1x8x128xf32>
    %73 = vector.shape_cast %72 : vector<1x1x8x128xf32> to vector<8x128xf32>
    %74 = vector.shape_cast %71 : vector<8x128xf32> to vector<1x1x8x128xf32>
    tpu.vector_store %arg5[%c0_84, %c6_85, %c0_86, %c0_87], %74 {strides = array<i32>} : memref<2x10x8x128xf32, #tpu.memory_space<vmem>>, vector<1x1x8x128xf32>,
    %c0_88 = arith.constant 0 : index
    %c7 = arith.constant 7 : index
    %c0_89 = arith.constant 0 : index
    %c0_90 = arith.constant 0 : index
    %75 = vector.load %arg5[%c0_88, %c7, %c0_89, %c0_90] : memref<2x10x8x128xf32, #tpu.memory_space<vmem>>, vector<1x1x8x128xf32>
    %76 = vector.shape_cast %75 : vector<1x1x8x128xf32> to vector<8x128xf32>
    %c7_91 = arith.constant 7 : index
    %c0_92 = arith.constant 0 : index
    %c0_93 = arith.constant 0 : index
    %c0_94 = arith.constant 0 : index
    %77 = vector.load %arg2[%c7_91, %c0_92, %c0_93, %c0_94] : memref<10x48x8x128xf32, #tpu.memory_space<vmem>>, vector<1x48x8x128xf32>
    %78 = vector.shape_cast %77 : vector<1x48x8x128xf32> to vector<48x8x128xf32>
    %79 = arith.mulf %4, %78 : vector<48x8x128xf32>
    %cst_95 = arith.constant dense<0.000000e+00> : vector<8x128xf32>
    %80 = vector.multi_reduction <add>, %79, %cst_95 [0] : vector<48x8x128xf32> to vector<8x128xf32>
    %81 = arith.addf %76, %80 : vector<8x128xf32>
    %c0_96 = arith.constant 0 : index
    %c7_97 = arith.constant 7 : index
    %c0_98 = arith.constant 0 : index
    %c0_99 = arith.constant 0 : index
    %82 = vector.load %arg5[%c0_96, %c7_97, %c0_98, %c0_99] : memref<2x10x8x128xf32, #tpu.memory_space<vmem>>, vector<1x1x8x128xf32>
    %83 = vector.shape_cast %82 : vector<1x1x8x128xf32> to vector<8x128xf32>
    %84 = vector.shape_cast %81 : vector<8x128xf32> to vector<1x1x8x128xf32>
    tpu.vector_store %arg5[%c0_96, %c7_97, %c0_98, %c0_99], %84 {strides = array<i32>} : memref<2x10x8x128xf32, #tpu.memory_space<vmem>>, vector<1x1x8x128xf32>,
    %c0_100 = arith.constant 0 : index
    %c8 = arith.constant 8 : index
    %c0_101 = arith.constant 0 : index
    %c0_102 = arith.constant 0 : index
    %85 = vector.load %arg5[%c0_100, %c8, %c0_101, %c0_102] : memref<2x10x8x128xf32, #tpu.memory_space<vmem>>, vector<1x1x8x128xf32>
    %86 = vector.shape_cast %85 : vector<1x1x8x128xf32> to vector<8x128xf32>
    %c8_103 = arith.constant 8 : index
    %c0_104 = arith.constant 0 : index
    %c0_105 = arith.constant 0 : index
    %c0_106 = arith.constant 0 : index
    %87 = vector.load %arg2[%c8_103, %c0_104, %c0_105, %c0_106] : memref<10x48x8x128xf32, #tpu.memory_space<vmem>>, vector<1x48x8x128xf32>
    %88 = vector.shape_cast %87 : vector<1x48x8x128xf32> to vector<48x8x128xf32>
    %89 = arith.mulf %4, %88 : vector<48x8x128xf32>
    %cst_107 = arith.constant dense<0.000000e+00> : vector<8x128xf32>
    %90 = vector.multi_reduction <add>, %89, %cst_107 [0] : vector<48x8x128xf32> to vector<8x128xf32>
    %91 = arith.addf %86, %90 : vector<8x128xf32>
    %c0_108 = arith.constant 0 : index
    %c8_109 = arith.constant 8 : index
    %c0_110 = arith.constant 0 : index
    %c0_111 = arith.constant 0 : index
    %92 = vector.load %arg5[%c0_108, %c8_109, %c0_110, %c0_111] : memref<2x10x8x128xf32, #tpu.memory_space<vmem>>, vector<1x1x8x128xf32>
    %93 = vector.shape_cast %92 : vector<1x1x8x128xf32> to vector<8x128xf32>
    %94 = vector.shape_cast %91 : vector<8x128xf32> to vector<1x1x8x128xf32>
    tpu.vector_store %arg5[%c0_108, %c8_109, %c0_110, %c0_111], %94 {strides = array<i32>} : memref<2x10x8x128xf32, #tpu.memory_space<vmem>>, vector<1x1x8x128xf32>,
    %c0_112 = arith.constant 0 : index
    %c9 = arith.constant 9 : index
    %c0_113 = arith.constant 0 : index
    %c0_114 = arith.constant 0 : index
    %95 = vector.load %arg5[%c0_112, %c9, %c0_113, %c0_114] : memref<2x10x8x128xf32, #tpu.memory_space<vmem>>, vector<1x1x8x128xf32>
    %96 = vector.shape_cast %95 : vector<1x1x8x128xf32> to vector<8x128xf32>
    %c9_115 = arith.constant 9 : index
    %c0_116 = arith.constant 0 : index
    %c0_117 = arith.constant 0 : index
    %c0_118 = arith.constant 0 : index
    %97 = vector.load %arg2[%c9_115, %c0_116, %c0_117, %c0_118] : memref<10x48x8x128xf32, #tpu.memory_space<vmem>>, vector<1x48x8x128xf32>
    %98 = vector.shape_cast %97 : vector<1x48x8x128xf32> to vector<48x8x128xf32>
    %99 = arith.mulf %4, %98 : vector<48x8x128xf32>
    %cst_119 = arith.constant dense<0.000000e+00> : vector<8x128xf32>
    %100 = vector.multi_reduction <add>, %99, %cst_119 [0] : vector<48x8x128xf32> to vector<8x128xf32>
    %101 = arith.addf %96, %100 : vector<8x128xf32>
    %c0_120 = arith.constant 0 : index
    %c9_121 = arith.constant 9 : index
    %c0_122 = arith.constant 0 : index
    %c0_123 = arith.constant 0 : index
    %102 = vector.load %arg5[%c0_120, %c9_121, %c0_122, %c0_123] : memref<2x10x8x128xf32, #tpu.memory_space<vmem>>, vector<1x1x8x128xf32>
    %103 = vector.shape_cast %102 : vector<1x1x8x128xf32> to vector<8x128xf32>
    %104 = vector.shape_cast %101 : vector<8x128xf32> to vector<1x1x8x128xf32>
    tpu.vector_store %arg5[%c0_120, %c9_121, %c0_122, %c0_123], %104 {strides = array<i32>} : memref<2x10x8x128xf32, #tpu.memory_space<vmem>>, vector<1x1x8x128xf32>,
    %c1_124 = arith.constant 1 : index
    %c0_125 = arith.constant 0 : index
    %c0_126 = arith.constant 0 : index
    %c0_127 = arith.constant 0 : index
    %105 = vector.load %arg1[%c1_124, %c0_125, %c0_126, %c0_127] : memref<2x48x8x128xf32, #tpu.memory_space<vmem>>, vector<1x48x8x128xf32>
    %106 = vector.shape_cast %105 : vector<1x48x8x128xf32> to vector<48x8x128xf32>
    %c1_128 = arith.constant 1 : index
    %c0_129 = arith.constant 0 : index
    %c0_130 = arith.constant 0 : index
    %c0_131 = arith.constant 0 : index
    %107 = vector.load %arg5[%c1_128, %c0_129, %c0_130, %c0_131] : memref<2x10x8x128xf32, #tpu.memory_space<vmem>>, vector<1x1x8x128xf32>
    %108 = vector.shape_cast %107 : vector<1x1x8x128xf32> to vector<8x128xf32>
    %c0_132 = arith.constant 0 : index
    %c0_133 = arith.constant 0 : index
    %c0_134 = arith.constant 0 : index
    %c0_135 = arith.constant 0 : index
    %109 = vector.load %arg2[%c0_132, %c0_133, %c0_134, %c0_135] : memref<10x48x8x128xf32, #tpu.memory_space<vmem>>, vector<1x48x8x128xf32>
    %110 = vector.shape_cast %109 : vector<1x48x8x128xf32> to vector<48x8x128xf32>
    %111 = arith.mulf %106, %110 : vector<48x8x128xf32>
    %cst_136 = arith.constant dense<0.000000e+00> : vector<8x128xf32>
    %112 = vector.multi_reduction <add>, %111, %cst_136 [0] : vector<48x8x128xf32> to vector<8x128xf32>
    %113 = arith.addf %108, %112 : vector<8x128xf32>
    %c1_137 = arith.constant 1 : index
    %c0_138 = arith.constant 0 : index
    %c0_139 = arith.constant 0 : index
    %c0_140 = arith.constant 0 : index
    %114 = vector.load %arg5[%c1_137, %c0_138, %c0_139, %c0_140] : memref<2x10x8x128xf32, #tpu.memory_space<vmem>>, vector<1x1x8x128xf32>
    %115 = vector.shape_cast %114 : vector<1x1x8x128xf32> to vector<8x128xf32>
    %116 = vector.shape_cast %113 : vector<8x128xf32> to vector<1x1x8x128xf32>
    tpu.vector_store %arg5[%c1_137, %c0_138, %c0_139, %c0_140], %116 {strides = array<i32>} : memref<2x10x8x128xf32, #tpu.memory_space<vmem>>, vector<1x1x8x128xf32>,
    %c1_141 = arith.constant 1 : index
    %c1_142 = arith.constant 1 : index
    %c0_143 = arith.constant 0 : index
    %c0_144 = arith.constant 0 : index
    %117 = vector.load %arg5[%c1_141, %c1_142, %c0_143, %c0_144] : memref<2x10x8x128xf32, #tpu.memory_space<vmem>>, vector<1x1x8x128xf32>
    %118 = vector.shape_cast %117 : vector<1x1x8x128xf32> to vector<8x128xf32>
    %c1_145 = arith.constant 1 : index
    %c0_146 = arith.constant 0 : index
    %c0_147 = arith.constant 0 : index
    %c0_148 = arith.constant 0 : index
    %119 = vector.load %arg2[%c1_145, %c0_146, %c0_147, %c0_148] : memref<10x48x8x128xf32, #tpu.memory_space<vmem>>, vector<1x48x8x128xf32>
    %120 = vector.shape_cast %119 : vector<1x48x8x128xf32> to vector<48x8x128xf32>
    %121 = arith.mulf %106, %120 : vector<48x8x128xf32>
    %cst_149 = arith.constant dense<0.000000e+00> : vector<8x128xf32>
    %122 = vector.multi_reduction <add>, %121, %cst_149 [0] : vector<48x8x128xf32> to vector<8x128xf32>
    %123 = arith.addf %118, %122 : vector<8x128xf32>
    %c1_150 = arith.constant 1 : index
    %c1_151 = arith.constant 1 : index
    %c0_152 = arith.constant 0 : index
    %c0_153 = arith.constant 0 : index
    %124 = vector.load %arg5[%c1_150, %c1_151, %c0_152, %c0_153] : memref<2x10x8x128xf32, #tpu.memory_space<vmem>>, vector<1x1x8x128xf32>
    %125 = vector.shape_cast %124 : vector<1x1x8x128xf32> to vector<8x128xf32>
    %126 = vector.shape_cast %123 : vector<8x128xf32> to vector<1x1x8x128xf32>
    tpu.vector_store %arg5[%c1_150, %c1_151, %c0_152, %c0_153], %126 {strides = array<i32>} : memref<2x10x8x128xf32, #tpu.memory_space<vmem>>, vector<1x1x8x128xf32>,
    %c1_154 = arith.constant 1 : index
    %c2_155 = arith.constant 2 : index
    %c0_156 = arith.constant 0 : index
    %c0_157 = arith.constant 0 : index
    %127 = vector.load %arg5[%c1_154, %c2_155, %c0_156, %c0_157] : memref<2x10x8x128xf32, #tpu.memory_space<vmem>>, vector<1x1x8x128xf32>
    %128 = vector.shape_cast %127 : vector<1x1x8x128xf32> to vector<8x128xf32>
    %c2_158 = arith.constant 2 : index
    %c0_159 = arith.constant 0 : index
    %c0_160 = arith.constant 0 : index
    %c0_161 = arith.constant 0 : index
    %129 = vector.load %arg2[%c2_158, %c0_159, %c0_160, %c0_161] : memref<10x48x8x128xf32, #tpu.memory_space<vmem>>, vector<1x48x8x128xf32>
    %130 = vector.shape_cast %129 : vector<1x48x8x128xf32> to vector<48x8x128xf32>
    %131 = arith.mulf %106, %130 : vector<48x8x128xf32>
    %cst_162 = arith.constant dense<0.000000e+00> : vector<8x128xf32>
    %132 = vector.multi_reduction <add>, %131, %cst_162 [0] : vector<48x8x128xf32> to vector<8x128xf32>
    %133 = arith.addf %128, %132 : vector<8x128xf32>
    %c1_163 = arith.constant 1 : index
    %c2_164 = arith.constant 2 : index
    %c0_165 = arith.constant 0 : index
    %c0_166 = arith.constant 0 : index
    %134 = vector.load %arg5[%c1_163, %c2_164, %c0_165, %c0_166] : memref<2x10x8x128xf32, #tpu.memory_space<vmem>>, vector<1x1x8x128xf32>
    %135 = vector.shape_cast %134 : vector<1x1x8x128xf32> to vector<8x128xf32>
    %136 = vector.shape_cast %133 : vector<8x128xf32> to vector<1x1x8x128xf32>
    tpu.vector_store %arg5[%c1_163, %c2_164, %c0_165, %c0_166], %136 {strides = array<i32>} : memref<2x10x8x128xf32, #tpu.memory_space<vmem>>, vector<1x1x8x128xf32>,
    %c1_167 = arith.constant 1 : index
    %c3_168 = arith.constant 3 : index
    %c0_169 = arith.constant 0 : index
    %c0_170 = arith.constant 0 : index
    %137 = vector.load %arg5[%c1_167, %c3_168, %c0_169, %c0_170] : memref<2x10x8x128xf32, #tpu.memory_space<vmem>>, vector<1x1x8x128xf32>
    %138 = vector.shape_cast %137 : vector<1x1x8x128xf32> to vector<8x128xf32>
    %c3_171 = arith.constant 3 : index
    %c0_172 = arith.constant 0 : index
    %c0_173 = arith.constant 0 : index
    %c0_174 = arith.constant 0 : index
    %139 = vector.load %arg2[%c3_171, %c0_172, %c0_173, %c0_174] : memref<10x48x8x128xf32, #tpu.memory_space<vmem>>, vector<1x48x8x128xf32>
    %140 = vector.shape_cast %139 : vector<1x48x8x128xf32> to vector<48x8x128xf32>
    %141 = arith.mulf %106, %140 : vector<48x8x128xf32>
    %cst_175 = arith.constant dense<0.000000e+00> : vector<8x128xf32>
    %142 = vector.multi_reduction <add>, %141, %cst_175 [0] : vector<48x8x128xf32> to vector<8x128xf32>
    %143 = arith.addf %138, %142 : vector<8x128xf32>
    %c1_176 = arith.constant 1 : index
    %c3_177 = arith.constant 3 : index
    %c0_178 = arith.constant 0 : index
    %c0_179 = arith.constant 0 : index
    %144 = vector.load %arg5[%c1_176, %c3_177, %c0_178, %c0_179] : memref<2x10x8x128xf32, #tpu.memory_space<vmem>>, vector<1x1x8x128xf32>
    %145 = vector.shape_cast %144 : vector<1x1x8x128xf32> to vector<8x128xf32>
    %146 = vector.shape_cast %143 : vector<8x128xf32> to vector<1x1x8x128xf32>
    tpu.vector_store %arg5[%c1_176, %c3_177, %c0_178, %c0_179], %146 {strides = array<i32>} : memref<2x10x8x128xf32, #tpu.memory_space<vmem>>, vector<1x1x8x128xf32>,
    %c1_180 = arith.constant 1 : index
    %c4_181 = arith.constant 4 : index
    %c0_182 = arith.constant 0 : index
    %c0_183 = arith.constant 0 : index
    %147 = vector.load %arg5[%c1_180, %c4_181, %c0_182, %c0_183] : memref<2x10x8x128xf32, #tpu.memory_space<vmem>>, vector<1x1x8x128xf32>
    %148 = vector.shape_cast %147 : vector<1x1x8x128xf32> to vector<8x128xf32>
    %c4_184 = arith.constant 4 : index
    %c0_185 = arith.constant 0 : index
    %c0_186 = arith.constant 0 : index
    %c0_187 = arith.constant 0 : index
    %149 = vector.load %arg2[%c4_184, %c0_185, %c0_186, %c0_187] : memref<10x48x8x128xf32, #tpu.memory_space<vmem>>, vector<1x48x8x128xf32>
    %150 = vector.shape_cast %149 : vector<1x48x8x128xf32> to vector<48x8x128xf32>
    %151 = arith.mulf %106, %150 : vector<48x8x128xf32>
    %cst_188 = arith.constant dense<0.000000e+00> : vector<8x128xf32>
    %152 = vector.multi_reduction <add>, %151, %cst_188 [0] : vector<48x8x128xf32> to vector<8x128xf32>
    %153 = arith.addf %148, %152 : vector<8x128xf32>
    %c1_189 = arith.constant 1 : index
    %c4_190 = arith.constant 4 : index
    %c0_191 = arith.constant 0 : index
    %c0_192 = arith.constant 0 : index
    %154 = vector.load %arg5[%c1_189, %c4_190, %c0_191, %c0_192] : memref<2x10x8x128xf32, #tpu.memory_space<vmem>>, vector<1x1x8x128xf32>
    %155 = vector.shape_cast %154 : vector<1x1x8x128xf32> to vector<8x128xf32>
    %156 = vector.shape_cast %153 : vector<8x128xf32> to vector<1x1x8x128xf32>
    tpu.vector_store %arg5[%c1_189, %c4_190, %c0_191, %c0_192], %156 {strides = array<i32>} : memref<2x10x8x128xf32, #tpu.memory_space<vmem>>, vector<1x1x8x128xf32>,
    %c1_193 = arith.constant 1 : index
    %c5_194 = arith.constant 5 : index
    %c0_195 = arith.constant 0 : index
    %c0_196 = arith.constant 0 : index
    %157 = vector.load %arg5[%c1_193, %c5_194, %c0_195, %c0_196] : memref<2x10x8x128xf32, #tpu.memory_space<vmem>>, vector<1x1x8x128xf32>
    %158 = vector.shape_cast %157 : vector<1x1x8x128xf32> to vector<8x128xf32>
    %c5_197 = arith.constant 5 : index
    %c0_198 = arith.constant 0 : index
    %c0_199 = arith.constant 0 : index
    %c0_200 = arith.constant 0 : index
    %159 = vector.load %arg2[%c5_197, %c0_198, %c0_199, %c0_200] : memref<10x48x8x128xf32, #tpu.memory_space<vmem>>, vector<1x48x8x128xf32>
    %160 = vector.shape_cast %159 : vector<1x48x8x128xf32> to vector<48x8x128xf32>
    %161 = arith.mulf %106, %160 : vector<48x8x128xf32>
    %cst_201 = arith.constant dense<0.000000e+00> : vector<8x128xf32>
    %162 = vector.multi_reduction <add>, %161, %cst_201 [0] : vector<48x8x128xf32> to vector<8x128xf32>
    %163 = arith.addf %158, %162 : vector<8x128xf32>
    %c1_202 = arith.constant 1 : index
    %c5_203 = arith.constant 5 : index
    %c0_204 = arith.constant 0 : index
    %c0_205 = arith.constant 0 : index
    %164 = vector.load %arg5[%c1_202, %c5_203, %c0_204, %c0_205] : memref<2x10x8x128xf32, #tpu.memory_space<vmem>>, vector<1x1x8x128xf32>
    %165 = vector.shape_cast %164 : vector<1x1x8x128xf32> to vector<8x128xf32>
    %166 = vector.shape_cast %163 : vector<8x128xf32> to vector<1x1x8x128xf32>
    tpu.vector_store %arg5[%c1_202, %c5_203, %c0_204, %c0_205], %166 {strides = array<i32>} : memref<2x10x8x128xf32, #tpu.memory_space<vmem>>, vector<1x1x8x128xf32>,
    %c1_206 = arith.constant 1 : index
    %c6_207 = arith.constant 6 : index
    %c0_208 = arith.constant 0 : index
    %c0_209 = arith.constant 0 : index
    %167 = vector.load %arg5[%c1_206, %c6_207, %c0_208, %c0_209] : memref<2x10x8x128xf32, #tpu.memory_space<vmem>>, vector<1x1x8x128xf32>
    %168 = vector.shape_cast %167 : vector<1x1x8x128xf32> to vector<8x128xf32>
    %c6_210 = arith.constant 6 : index
    %c0_211 = arith.constant 0 : index
    %c0_212 = arith.constant 0 : index
    %c0_213 = arith.constant 0 : index
    %169 = vector.load %arg2[%c6_210, %c0_211, %c0_212, %c0_213] : memref<10x48x8x128xf32, #tpu.memory_space<vmem>>, vector<1x48x8x128xf32>
    %170 = vector.shape_cast %169 : vector<1x48x8x128xf32> to vector<48x8x128xf32>
    %171 = arith.mulf %106, %170 : vector<48x8x128xf32>
    %cst_214 = arith.constant dense<0.000000e+00> : vector<8x128xf32>
    %172 = vector.multi_reduction <add>, %171, %cst_214 [0] : vector<48x8x128xf32> to vector<8x128xf32>
    %173 = arith.addf %168, %172 : vector<8x128xf32>
    %c1_215 = arith.constant 1 : index
    %c6_216 = arith.constant 6 : index
    %c0_217 = arith.constant 0 : index
    %c0_218 = arith.constant 0 : index
    %174 = vector.load %arg5[%c1_215, %c6_216, %c0_217, %c0_218] : memref<2x10x8x128xf32, #tpu.memory_space<vmem>>, vector<1x1x8x128xf32>
    %175 = vector.shape_cast %174 : vector<1x1x8x128xf32> to vector<8x128xf32>
    %176 = vector.shape_cast %173 : vector<8x128xf32> to vector<1x1x8x128xf32>
    tpu.vector_store %arg5[%c1_215, %c6_216, %c0_217, %c0_218], %176 {strides = array<i32>} : memref<2x10x8x128xf32, #tpu.memory_space<vmem>>, vector<1x1x8x128xf32>,
    %c1_219 = arith.constant 1 : index
    %c7_220 = arith.constant 7 : index
    %c0_221 = arith.constant 0 : index
    %c0_222 = arith.constant 0 : index
    %177 = vector.load %arg5[%c1_219, %c7_220, %c0_221, %c0_222] : memref<2x10x8x128xf32, #tpu.memory_space<vmem>>, vector<1x1x8x128xf32>
    %178 = vector.shape_cast %177 : vector<1x1x8x128xf32> to vector<8x128xf32>
    %c7_223 = arith.constant 7 : index
    %c0_224 = arith.constant 0 : index
    %c0_225 = arith.constant 0 : index
    %c0_226 = arith.constant 0 : index
    %179 = vector.load %arg2[%c7_223, %c0_224, %c0_225, %c0_226] : memref<10x48x8x128xf32, #tpu.memory_space<vmem>>, vector<1x48x8x128xf32>
    %180 = vector.shape_cast %179 : vector<1x48x8x128xf32> to vector<48x8x128xf32>
    %181 = arith.mulf %106, %180 : vector<48x8x128xf32>
    %cst_227 = arith.constant dense<0.000000e+00> : vector<8x128xf32>
    %182 = vector.multi_reduction <add>, %181, %cst_227 [0] : vector<48x8x128xf32> to vector<8x128xf32>
    %183 = arith.addf %178, %182 : vector<8x128xf32>
    %c1_228 = arith.constant 1 : index
    %c7_229 = arith.constant 7 : index
    %c0_230 = arith.constant 0 : index
    %c0_231 = arith.constant 0 : index
    %184 = vector.load %arg5[%c1_228, %c7_229, %c0_230, %c0_231] : memref<2x10x8x128xf32, #tpu.memory_space<vmem>>, vector<1x1x8x128xf32>
    %185 = vector.shape_cast %184 : vector<1x1x8x128xf32> to vector<8x128xf32>
    %186 = vector.shape_cast %183 : vector<8x128xf32> to vector<1x1x8x128xf32>
    tpu.vector_store %arg5[%c1_228, %c7_229, %c0_230, %c0_231], %186 {strides = array<i32>} : memref<2x10x8x128xf32, #tpu.memory_space<vmem>>, vector<1x1x8x128xf32>,
    %c1_232 = arith.constant 1 : index
    %c8_233 = arith.constant 8 : index
    %c0_234 = arith.constant 0 : index
    %c0_235 = arith.constant 0 : index
    %187 = vector.load %arg5[%c1_232, %c8_233, %c0_234, %c0_235] : memref<2x10x8x128xf32, #tpu.memory_space<vmem>>, vector<1x1x8x128xf32>
    %188 = vector.shape_cast %187 : vector<1x1x8x128xf32> to vector<8x128xf32>
    %c8_236 = arith.constant 8 : index
    %c0_237 = arith.constant 0 : index
    %c0_238 = arith.constant 0 : index
    %c0_239 = arith.constant 0 : index
    %189 = vector.load %arg2[%c8_236, %c0_237, %c0_238, %c0_239] : memref<10x48x8x128xf32, #tpu.memory_space<vmem>>, vector<1x48x8x128xf32>
    %190 = vector.shape_cast %189 : vector<1x48x8x128xf32> to vector<48x8x128xf32>
    %191 = arith.mulf %106, %190 : vector<48x8x128xf32>
    %cst_240 = arith.constant dense<0.000000e+00> : vector<8x128xf32>
    %192 = vector.multi_reduction <add>, %191, %cst_240 [0] : vector<48x8x128xf32> to vector<8x128xf32>
    %193 = arith.addf %188, %192 : vector<8x128xf32>
    %c1_241 = arith.constant 1 : index
    %c8_242 = arith.constant 8 : index
    %c0_243 = arith.constant 0 : index
    %c0_244 = arith.constant 0 : index
    %194 = vector.load %arg5[%c1_241, %c8_242, %c0_243, %c0_244] : memref<2x10x8x128xf32, #tpu.memory_space<vmem>>, vector<1x1x8x128xf32>
    %195 = vector.shape_cast %194 : vector<1x1x8x128xf32> to vector<8x128xf32>
    %196 = vector.shape_cast %193 : vector<8x128xf32> to vector<1x1x8x128xf32>
    tpu.vector_store %arg5[%c1_241, %c8_242, %c0_243, %c0_244], %196 {strides = array<i32>} : memref<2x10x8x128xf32, #tpu.memory_space<vmem>>, vector<1x1x8x128xf32>,
    %c1_245 = arith.constant 1 : index
    %c9_246 = arith.constant 9 : index
    %c0_247 = arith.constant 0 : index
    %c0_248 = arith.constant 0 : index
    %197 = vector.load %arg5[%c1_245, %c9_246, %c0_247, %c0_248] : memref<2x10x8x128xf32, #tpu.memory_space<vmem>>, vector<1x1x8x128xf32>
    %198 = vector.shape_cast %197 : vector<1x1x8x128xf32> to vector<8x128xf32>
    %c9_249 = arith.constant 9 : index
    %c0_250 = arith.constant 0 : index
    %c0_251 = arith.constant 0 : index
    %c0_252 = arith.constant 0 : index
    %199 = vector.load %arg2[%c9_249, %c0_250, %c0_251, %c0_252] : memref<10x48x8x128xf32, #tpu.memory_space<vmem>>, vector<1x48x8x128xf32>
    %200 = vector.shape_cast %199 : vector<1x48x8x128xf32> to vector<48x8x128xf32>
    %201 = arith.mulf %106, %200 : vector<48x8x128xf32>
    %cst_253 = arith.constant dense<0.000000e+00> : vector<8x128xf32>
    %202 = vector.multi_reduction <add>, %201, %cst_253 [0] : vector<48x8x128xf32> to vector<8x128xf32>
    %203 = arith.addf %198, %202 : vector<8x128xf32>
    %c1_254 = arith.constant 1 : index
    %c9_255 = arith.constant 9 : index
    %c0_256 = arith.constant 0 : index
    %c0_257 = arith.constant 0 : index
    %204 = vector.load %arg5[%c1_254, %c9_255, %c0_256, %c0_257] : memref<2x10x8x128xf32, #tpu.memory_space<vmem>>, vector<1x1x8x128xf32>
    %205 = vector.shape_cast %204 : vector<1x1x8x128xf32> to vector<8x128xf32>
    %206 = vector.shape_cast %203 : vector<8x128xf32> to vector<1x1x8x128xf32>
    tpu.vector_store %arg5[%c1_254, %c9_255, %c0_256, %c0_257], %206 {strides = array<i32>} : memref<2x10x8x128xf32, #tpu.memory_space<vmem>>, vector<1x1x8x128xf32>,
    %c3_i32 = arith.constant 3 : i32
    %207 = arith.cmpi eq, %arg0, %c3_i32 : i32
    %208 = arith.extui %207 : i1 to i32
    %c0_i32_258 = arith.constant 0 : i32
    %209 = arith.cmpi ne, %208, %c0_i32_258 : i32
    scf.if %209 {
      %c0_259 = arith.constant 0 : index
      %c0_260 = arith.constant 0 : index
      %c0_261 = arith.constant 0 : index
      %c0_262 = arith.constant 0 : index
      %210 = vector.load %arg5[%c0_259, %c0_260, %c0_261, %c0_262] : memref<2x10x8x128xf32, #tpu.memory_space<vmem>>, vector<2x10x8x128xf32>
      %cst_263 = arith.constant dense<0.000000e+00> : vector<2x10x8xf32>
      %211 = vector.multi_reduction <add>, %210, %cst_263 [3] : vector<2x10x8x128xf32> to vector<2x10x8xf32>
      %cst_264 = arith.constant dense<0.000000e+00> : vector<2x10xf32>
      %212 = vector.multi_reduction <add>, %211, %cst_264 [2] : vector<2x10x8xf32> to vector<2x10xf32>
      %c0_265 = arith.constant 0 : index
      %c0_266 = arith.constant 0 : index
      %213 = vector.load %arg3[%c0_265, %c0_266] : memref<1x10xf32, #tpu.memory_space<vmem>>, vector<1x10xf32>
      %214 = vector.broadcast %213 : vector<1x10xf32> to vector<2x10xf32>
      %215 = arith.addf %212, %214 : vector<2x10xf32>
      %c0_267 = arith.constant 0 : index
      %c0_268 = arith.constant 0 : index
      %216 = vector.load %arg4[%c0_267, %c0_268] : memref<2x10xf32, #tpu.memory_space<vmem>>, vector<2x10xf32>
      tpu.vector_store %arg4[%c0_267, %c0_268], %215 {strides = array<i32>} : memref<2x10xf32, #tpu.memory_space<vmem>>, vector<2x10xf32>,
    } else {
    }
    return
  }
  func.func @transform_0(%arg0: i32) -> (i32, i32, i32, i32) {
    %c0_i32 = arith.constant 0 : i32
    %c0_i32_0 = arith.constant 0 : i32
    %c0_i32_1 = arith.constant 0 : i32
    %c0_i32_2 = arith.constant 0 : i32
    return %c0_i32, %arg0, %c0_i32_0, %c0_i32_1 : i32, i32, i32, i32
  }
  func.func @transform_1(%arg0: i32) -> (i32, i32, i32, i32) {
    %c0_i32 = arith.constant 0 : i32
    %c0_i32_0 = arith.constant 0 : i32
    %c0_i32_1 = arith.constant 0 : i32
    %c0_i32_2 = arith.constant 0 : i32
    return %c0_i32, %arg0, %c0_i32_0, %c0_i32_1 : i32, i32, i32, i32
  }
  func.func @transform_2(%arg0: i32) -> (i32, i32) {
    %c0_i32 = arith.constant 0 : i32
    %c0_i32_0 = arith.constant 0 : i32
    %c0_i32_1 = arith.constant 0 : i32
    return %c0_i32, %c0_i32_0 : i32, i32
  }
  func.func @transform_3(%arg0: i32) -> (i32, i32) {
    %c0_i32 = arith.constant 0 : i32
    %c0_i32_0 = arith.constant 0 : i32
    %c0_i32_1 = arith.constant 0 : i32
    return %c0_i32, %c0_i32_0 : i32, i32
  }
}

</mosaic_0001>

<llo_original>
// kernel: tudui_forward.1
$region0: #{tudui_forward.1}
  #allocation0 [shape = 'u32[]', space=smem, size = 0x4, offset = 0x4, fixed_abs, tag = 'smem constant byte address 0x4 - core index']
  #allocation1 [shape = 'u32[144,128]{1,0:T(1,128)}', space=vmem, size = 0x12000, scoped, tag = 'internal scratch']
  #allocation2 [shape = 'f32[2,10,8,128]{3,2,1,0:T(8,128)}', space=vmem, size = 0x14000, scoped, tag = 'scratch operand']
  %s0 = inlined_call_operand.vmem [shape: f32[2,192,8,128], index: 0, kind: input, shape index: {}]
  %s1 = inlined_call_operand.vmem [shape: f32[10,192,8,128], index: 1, kind: input, shape index: {}]
  %s2 = inlined_call_operand.vmem [shape: f32[1,10], index: 2, kind: input, shape index: {}]
  %s3 = inlined_call_operand.hbm [shape: f32[2,10], index: 3, kind: output, shape index: {}]
  %s4 = sld [smem:[#allocation0]]
  $region129: #{tudui_forward.1} parent=0
    _
  %s6 = ssub.s32 1, %s4
  %s7 = scalar_select 0, %s6, %s4
  $region1: #{tudui_forward.1} parent=0
    #allocation3 [shape = 'u8[786432]{0}', space=vmem, size = 0xc0000, scoped, tag = 'input window, operand 0']
    #allocation4 [shape = 'u8[3932160]{0}', space=vmem, size = 0x3c0000, scoped, tag = 'input window, operand 1']
    #allocation5 [shape = 'u8[1024]{0}', space=vmem, size = 0x400, scoped, tag = 'output window, operand 0, single buffered']
    #allocation6 [shape = 's32[2]{0}', space=sflag, size = 0x8, scoped, tag = 'scoped memory for tudui_forward.1']
    %8 = vsyncpa [#allocation6], 0
    loop: start=0, step=1, limit=6
    $region2: #{tudui_forward.1} parent=1 // loop_pre_header
      _
    $region3: #{tudui_forward.1} parent=1 // loop_header
      %s10 = sphi 0, %s14
      %p11 = scmp.ge.s32.totalorder %s10, 6
      %s20 = sphi 0, %s22
      %s23 = sphi 0, %s20
      %s24 = sphi 0, %s23
      %s40 = sphi 0, %s24
      %s46 = sphi 0, %s48
      %s49 = sphi 0, %s46
      %s50 = sphi 0, %s49
      %s66 = sphi 0, %s50
      %s70 = sphi 0, %s70
      %s72 = sphi 0, %s70
      %s73 = sphi 0, %s72
      %s87 = sphi 0, %s73
      %s91 = sphi 0, %s91
      %s93 = sphi 0, %s91
      %s94 = sphi 0, %s93
      %s108 = sphi 0, %s94
    $region4: #{tudui_forward.1} parent=1 // loop_header_branch
      %13 = sbr.rel (%p11) target = $region8
    $region5: #{tudui_forward.1} parent=1 // loop_body
      %s15 = ssub.s32 %s10, 1
      %s16 = ssub.s32 %s10, 2
      %s17 = sadd.s32 %s10, 1
      %s18 = ssub.s32 %s10, %s17
      %p19 = scmp.eq.s32.totalorder %s18, 0
      %s21 = sadd.s32 %s20, 1
      %s22 = scalar_select %p19, %s20, %s21
      %p25 = pneg %p19
      %p26 = scmp.eq.s32.totalorder %s10, 3
      %p27 = por %p25, %p26
      %p28 = scmp.ne.s32.totalorder %s20, %s23
      %p29 = scmp.eq.s32.totalorder %s10, 0
      %p30 = por %p28, %p29
      %p31 = scmp.ne.s32.totalorder %s20, %s23
      %p32 = scmp.eq.s32.totalorder %s15, 3
      %p33 = por %p31, %p32
      %p34 = scmp.ne.s32.totalorder %s23, %s24
      %p35 = scmp.eq.s32.totalorder %s15, 0
      %p36 = por %p34, %p35
      %p37 = scmp.ne.s32.totalorder %s23, %s24
      %p38 = scmp.eq.s32.totalorder %s16, 3
      %p39 = por %p37, %p38
      %p41 = scmp.ne.s32.totalorder %s24, %s40
      %p42 = scmp.eq.s32.totalorder %s16, 0
      %p43 = por %p41, %p42
      %s44 = ssub.s32 %s10, %s17
      %p45 = scmp.eq.s32.totalorder %s44, 0
      %s47 = sadd.s32 %s46, 1
      %s48 = scalar_select %p45, %s46, %s47
      %p51 = pneg %p45
      %p52 = scmp.eq.s32.totalorder %s10, 3
      %p53 = por %p51, %p52
      %p54 = scmp.ne.s32.totalorder %s46, %s49
      %p55 = scmp.eq.s32.totalorder %s10, 0
      %p56 = por %p54, %p55
      %p57 = scmp.ne.s32.totalorder %s46, %s49
      %p58 = scmp.eq.s32.totalorder %s15, 3
      %p59 = por %p57, %p58
      %p60 = scmp.ne.s32.totalorder %s49, %s50
      %p61 = scmp.eq.s32.totalorder %s15, 0
      %p62 = por %p60, %p61
      %p63 = scmp.ne.s32.totalorder %s49, %s50
      %p64 = scmp.eq.s32.totalorder %s16, 3
      %p65 = por %p63, %p64
      %p67 = scmp.ne.s32.totalorder %s50, %s66
      %p68 = scmp.eq.s32.totalorder %s16, 0
      %p69 = por %p67, %p68
      %s71 = sadd.s32 %s70, 1
      %p74 = scmp.eq.s32.totalorder %s10, 3
      %p75 = scmp.ne.s32.totalorder %s70, %s72
      %p76 = scmp.eq.s32.totalorder %s10, 0
      %p77 = por %p75, %p76
      %p78 = scmp.ne.s32.totalorder %s70, %s72
      %p79 = scmp.eq.s32.totalorder %s15, 3
      %p80 = por %p78, %p79
      %p81 = scmp.ne.s32.totalorder %s72, %s73
      %p82 = scmp.eq.s32.totalorder %s15, 0
      %p83 = por %p81, %p82
      %p84 = scmp.ne.s32.totalorder %s72, %s73
      %p85 = scmp.eq.s32.totalorder %s16, 3
      %p86 = por %p84, %p85
      %p88 = scmp.ne.s32.totalorder %s73, %s87
      %p89 = scmp.eq.s32.totalorder %s16, 0
      %p90 = por %p88, %p89
      %s92 = sadd.s32 %s91, 1
      %p95 = scmp.eq.s32.totalorder %s10, 3
      %p96 = scmp.ne.s32.totalorder %s91, %s93
      %p97 = scmp.eq.s32.totalorder %s10, 0
      %p98 = por %p96, %p97
      %p99 = scmp.ne.s32.totalorder %s91, %s93
      %p100 = scmp.eq.s32.totalorder %s15, 3
      %p101 = por %p99, %p100
      %p102 = scmp.ne.s32.totalorder %s93, %s94
      %p103 = scmp.eq.s32.totalorder %s15, 0
      %p104 = por %p102, %p103
      %p105 = scmp.ne.s32.totalorder %s93, %s94
      %p106 = scmp.eq.s32.totalorder %s16, 3
      %p107 = por %p105, %p106
      %p109 = scmp.ne.s32.totalorder %s94, %s108
      %p110 = scmp.eq.s32.totalorder %s16, 0
      %p111 = por %p109, %p110
      %p112 = scmp.le.s32.totalorder 1, %s10
      %p113 = scmp.lt.s32.totalorder %s10, 5
      %p114 = pnand %p112, %p113
      %p115 = pneg %p114
      // Predicated region
      $region9: #{tudui_forward.1} parent=5 // pred_check
        _
      $region10: #{tudui_forward.1} parent=5 // pred_check_branch
        %117 = sbr.rel (%p114) target = $region12
      $region11: #{tudui_forward.1} parent=5 // pred_region
        %s118 = ssub.s32 %s10, 1
        // Predicated region
        $region13: #{tudui_forward.1} parent=11 // pred_check
          %p119 = pneg %p83
        $region14: #{tudui_forward.1} parent=11 // pred_check_branch
          %121 = sbr.rel (%p119) target = $region16
        $region15: #{tudui_forward.1} parent=11 // pred_region
          _
        $region16: #{tudui_forward.1} parent=11 // pred_fallthru
          _
      $region12: #{tudui_forward.1} parent=5 // pred_fallthru
        _
      %p122 = scmp.lt.s32.totalorder %s10, 4
      // Predicated region
      $region17: #{tudui_forward.1} parent=5 // pred_check
        %p123 = pneg %p122
      $region18: #{tudui_forward.1} parent=5 // pred_check_branch
        %125 = sbr.rel (%p123) target = $region20
      $region19: #{tudui_forward.1} parent=5 // pred_region
        // Predicated region
        $region21: #{tudui_forward.1} parent=19 // pred_check
          %p126 = pneg %p30
        $region22: #{tudui_forward.1} parent=19 // pred_check_branch
          %128 = sbr.rel (%p126) target = $region24
        $region23: #{tudui_forward.1} parent=19 // pred_region
          %s129 = sand.u32 %s20, 1
          %s130 = sand.u32 %s20, 1
          %s131 = smul.addr %s130, 768
          %s132 = scalar_lea.vmem [#allocation3], %s131
          %s133 = smul.u32 48, %s10
          %s134 = smul.addr %s133, 8
          %s135 = scalar_lea.vmem %s0, %s134
          // Predicated region
          $region25: #{tudui_forward.1} parent=23 // pred_check
            _
          $region26: #{tudui_forward.1} parent=23 // pred_check_branch
            %137 = sbr.rel (0) target = $region28
          $region27: #{tudui_forward.1} parent=23 // pred_region
            // Predicated region
            $region29: #{tudui_forward.1} parent=27 // pred_check
              _
            $region30: #{tudui_forward.1} parent=27 // pred_check_branch
              %139 = sbr.rel (0) target = $region32
            $region31: #{tudui_forward.1} parent=27 // pred_region
              // Predicated region
              $region44: #{tudui_forward.1} parent=31 // pred_check
                _
              $region45: #{tudui_forward.1} parent=31 // pred_check_branch
                %344 = sbr.rel (0) target = $region47
              $region46: #{tudui_forward.1} parent=31 // pred_region
                loop: start=0, step=1, limit=1
                $region48: #{tudui_forward.1} parent=46 // loop_pre_header
                  _
                $region49: #{tudui_forward.1} parent=46 // loop_header
                  %s346 = sphi 0, %s350
                  %p347 = scmp.ge.s32.totalorder %s346, 1
                  %s351 = sphi %s135, %s135
                  %s352 = sphi %s132, %s132
                $region50: #{tudui_forward.1} parent=46 // loop_header_branch
                  %349 = sbr.rel (%p347) target = $region54
                $region51: #{tudui_forward.1} parent=46 // loop_body
                  %v353 = vld [vmem:[%s351] sm:$0xff]
                  %354 = vst [vmem:[%s352] sm:$0xff] %v353
                  %v355 = vld [vmem:[%s351 + $0x8] sm:$0xff]
                  %356 = vst [vmem:[%s352 + $0x8] sm:$0xff] %v355
                  %v357 = vld [vmem:[%s351 + $0x10] sm:$0xff]
                  %358 = vst [vmem:[%s352 + $0x10] sm:$0xff] %v357
                  %v359 = vld [vmem:[%s351 + $0x18] sm:$0xff]
                  %360 = vst [vmem:[%s352 + $0x18] sm:$0xff] %v359
                  %v361 = vld [vmem:[%s351 + $0x20] sm:$0xff]
                  %362 = vst [vmem:[%s352 + $0x20] sm:$0xff] %v361
                  %v363 = vld [vmem:[%s351 + $0x28] sm:$0xff]
                  %364 = vst [vmem:[%s352 + $0x28] sm:$0xff] %v363
                  %v365 = vld [vmem:[%s351 + $0x30] sm:$0xff]
                  %366 = vst [vmem:[%s352 + $0x30] sm:$0xff] %v365
                  %v367 = vld [vmem:[%s351 + $0x38] sm:$0xff]
                  %368 = vst [vmem:[%s352 + $0x38] sm:$0xff] %v367
                  %v369 = vld [vmem:[%s351 + $0x40] sm:$0xff]
                  %370 = vst [vmem:[%s352 + $0x40] sm:$0xff] %v369
                  %v371 = vld [vmem:[%s351 + $0x48] sm:$0xff]
                  %372 = vst [vmem:[%s352 + $0x48] sm:$0xff] %v371
                  %v373 = vld [vmem:[%s351 + $0x50] sm:$0xff]
                  %374 = vst [vmem:[%s352 + $0x50] sm:$0xff] %v373
                  %v375 = vld [vmem:[%s351 + $0x58] sm:$0xff]
                  %376 = vst [vmem:[%s352 + $0x58] sm:$0xff] %v375
                  %v377 = vld [vmem:[%s351 + $0x60] sm:$0xff]
                  %378 = vst [vmem:[%s352 + $0x60] sm:$0xff] %v377
                  %v379 = vld [vmem:[%s351 + $0x68] sm:$0xff]
                  %380 = vst [vmem:[%s352 + $0x68] sm:$0xff] %v379
                  %v381 = vld [vmem:[%s351 + $0x70] sm:$0xff]
                  %382 = vst [vmem:[%s352 + $0x70] sm:$0xff] %v381
                  %v383 = vld [vmem:[%s351 + $0x78] sm:$0xff]
                  %384 = vst [vmem:[%s352 + $0x78] sm:$0xff] %v383
                  %v385 = vld [vmem:[%s351 + $0x80] sm:$0xff]
                  %386 = vst [vmem:[%s352 + $0x80] sm:$0xff] %v385
                  %v387 = vld [vmem:[%s351 + $0x88] sm:$0xff]
                  %388 = vst [vmem:[%s352 + $0x88] sm:$0xff] %v387
                  %v389 = vld [vmem:[%s351 + $0x90] sm:$0xff]
                  %390 = vst [vmem:[%s352 + $0x90] sm:$0xff] %v389
                  %v391 = vld [vmem:[%s351 + $0x98] sm:$0xff]
                  %392 = vst [vmem:[%s352 + $0x98] sm:$0xff] %v391
                  %v393 = vld [vmem:[%s351 + $0xa0] sm:$0xff]
                  %394 = vst [vmem:[%s352 + $0xa0] sm:$0xff] %v393
                  %v395 = vld [vmem:[%s351 + $0xa8] sm:$0xff]
                  %396 = vst [vmem:[%s352 + $0xa8] sm:$0xff] %v395
                  %v397 = vld [vmem:[%s351 + $0xb0] sm:$0xff]
                  %398 = vst [vmem:[%s352 + $0xb0] sm:$0xff] %v397
                  %v399 = vld [vmem:[%s351 + $0xb8] sm:$0xff]
                  %400 = vst [vmem:[%s352 + $0xb8] sm:$0xff] %v399
                  %v401 = vld [vmem:[%s351 + $0xc0] sm:$0xff]
                  %402 = vst [vmem:[%s352 + $0xc0] sm:$0xff] %v401
                  %v403 = vld [vmem:[%s351 + $0xc8] sm:$0xff]
                  %404 = vst [vmem:[%s352 + $0xc8] sm:$0xff] %v403
                  %v405 = vld [vmem:[%s351 + $0xd0] sm:$0xff]
                  %406 = vst [vmem:[%s352 + $0xd0] sm:$0xff] %v405
                  %v407 = vld [vmem:[%s351 + $0xd8] sm:$0xff]
                  %408 = vst [vmem:[%s352 + $0xd8] sm:$0xff] %v407
                  %v409 = vld [vmem:[%s351 + $0xe0] sm:$0xff]
                  %410 = vst [vmem:[%s352 + $0xe0] sm:$0xff] %v409
                  %v411 = vld [vmem:[%s351 + $0xe8] sm:$0xff]
                  %412 = vst [vmem:[%s352 + $0xe8] sm:$0xff] %v411
                  %v413 = vld [vmem:[%s351 + $0xf0] sm:$0xff]
                  %414 = vst [vmem:[%s352 + $0xf0] sm:$0xff] %v413
                  %v415 = vld [vmem:[%s351 + $0xf8] sm:$0xff]
                  %416 = vst [vmem:[%s352 + $0xf8] sm:$0xff] %v415
                  %v417 = vld [vmem:[%s351 + $0x100] sm:$0xff]
                  %418 = vst [vmem:[%s352 + $0x100] sm:$0xff] %v417
                  %v419 = vld [vmem:[%s351 + $0x108] sm:$0xff]
                  %420 = vst [vmem:[%s352 + $0x108] sm:$0xff] %v419
                  %v421 = vld [vmem:[%s351 + $0x110] sm:$0xff]
                  %422 = vst [vmem:[%s352 + $0x110] sm:$0xff] %v421
                  %v423 = vld [vmem:[%s351 + $0x118] sm:$0xff]
                  %424 = vst [vmem:[%s352 + $0x118] sm:$0xff] %v423
                  %v425 = vld [vmem:[%s351 + $0x120] sm:$0xff]
                  %426 = vst [vmem:[%s352 + $0x120] sm:$0xff] %v425
                  %v427 = vld [vmem:[%s351 + $0x128] sm:$0xff]
                  %428 = vst [vmem:[%s352 + $0x128] sm:$0xff] %v427
                  %v429 = vld [vmem:[%s351 + $0x130] sm:$0xff]
                  %430 = vst [vmem:[%s352 + $0x130] sm:$0xff] %v429
                  %v431 = vld [vmem:[%s351 + $0x138] sm:$0xff]
                  %432 = vst [vmem:[%s352 + $0x138] sm:$0xff] %v431
                  %v433 = vld [vmem:[%s351 + $0x140] sm:$0xff]
                  %434 = vst [vmem:[%s352 + $0x140] sm:$0xff] %v433
                  %v435 = vld [vmem:[%s351 + $0x148] sm:$0xff]
                  %436 = vst [vmem:[%s352 + $0x148] sm:$0xff] %v435
                  %v437 = vld [vmem:[%s351 + $0x150] sm:$0xff]
                  %438 = vst [vmem:[%s352 + $0x150] sm:$0xff] %v437
                  %v439 = vld [vmem:[%s351 + $0x158] sm:$0xff]
                  %440 = vst [vmem:[%s352 + $0x158] sm:$0xff] %v439
                  %v441 = vld [vmem:[%s351 + $0x160] sm:$0xff]
                  %442 = vst [vmem:[%s352 + $0x160] sm:$0xff] %v441
                  %v443 = vld [vmem:[%s351 + $0x168] sm:$0xff]
                  %444 = vst [vmem:[%s352 + $0x168] sm:$0xff] %v443
                  %v445 = vld [vmem:[%s351 + $0x170] sm:$0xff]
                  %446 = vst [vmem:[%s352 + $0x170] sm:$0xff] %v445
                  %v447 = vld [vmem:[%s351 + $0x178] sm:$0xff]
                  %448 = vst [vmem:[%s352 + $0x178] sm:$0xff] %v447
                  %v449 = vld [vmem:[%s351 + $0x600] sm:$0xff]
                  %450 = vst [vmem:[%s352 + $0x180] sm:$0xff] %v449
                  %v451 = vld [vmem:[%s351 + $0x608] sm:$0xff]
                  %452 = vst [vmem:[%s352 + $0x188] sm:$0xff] %v451
                  %v453 = vld [vmem:[%s351 + $0x610] sm:$0xff]
                  %454 = vst [vmem:[%s352 + $0x190] sm:$0xff] %v453
                  %v455 = vld [vmem:[%s351 + $0x618] sm:$0xff]
                  %456 = vst [vmem:[%s352 + $0x198] sm:$0xff] %v455
                  %v457 = vld [vmem:[%s351 + $0x620] sm:$0xff]
                  %458 = vst [vmem:[%s352 + $0x1a0] sm:$0xff] %v457
                  %v459 = vld [vmem:[%s351 + $0x628] sm:$0xff]
                  %460 = vst [vmem:[%s352 + $0x1a8] sm:$0xff] %v459
                  %v461 = vld [vmem:[%s351 + $0x630] sm:$0xff]
                  %462 = vst [vmem:[%s352 + $0x1b0] sm:$0xff] %v461
                  %v463 = vld [vmem:[%s351 + $0x638] sm:$0xff]
                  %464 = vst [vmem:[%s352 + $0x1b8] sm:$0xff] %v463
                  %v465 = vld [vmem:[%s351 + $0x640] sm:$0xff]
                  %466 = vst [vmem:[%s352 + $0x1c0] sm:$0xff] %v465
                  %v467 = vld [vmem:[%s351 + $0x648] sm:$0xff]
                  %468 = vst [vmem:[%s352 + $0x1c8] sm:$0xff] %v467
                  %v469 = vld [vmem:[%s351 + $0x650] sm:$0xff]
                  %470 = vst [vmem:[%s352 + $0x1d0] sm:$0xff] %v469
                  %v471 = vld [vmem:[%s351 + $0x658] sm:$0xff]
                  %472 = vst [vmem:[%s352 + $0x1d8] sm:$0xff] %v471
                  %v473 = vld [vmem:[%s351 + $0x660] sm:$0xff]
                  %474 = vst [vmem:[%s352 + $0x1e0] sm:$0xff] %v473
                  %v475 = vld [vmem:[%s351 + $0x668] sm:$0xff]
                  %476 = vst [vmem:[%s352 + $0x1e8] sm:$0xff] %v475
                  %v477 = vld [vmem:[%s351 + $0x670] sm:$0xff]
                  %478 = vst [vmem:[%s352 + $0x1f0] sm:$0xff] %v477
                  %v479 = vld [vmem:[%s351 + $0x678] sm:$0xff]
                  %480 = vst [vmem:[%s352 + $0x1f8] sm:$0xff] %v479
                  %v481 = vld [vmem:[%s351 + $0x680] sm:$0xff]
                  %482 = vst [vmem:[%s352 + $0x200] sm:$0xff] %v481
                  %v483 = vld [vmem:[%s351 + $0x688] sm:$0xff]
                  %484 = vst [vmem:[%s352 + $0x208] sm:$0xff] %v483
                  %v485 = vld [vmem:[%s351 + $0x690] sm:$0xff]
                  %486 = vst [vmem:[%s352 + $0x210] sm:$0xff] %v485
                  %v487 = vld [vmem:[%s351 + $0x698] sm:$0xff]
                  %488 = vst [vmem:[%s352 + $0x218] sm:$0xff] %v487
                  %v489 = vld [vmem:[%s351 + $0x6a0] sm:$0xff]
                  %490 = vst [vmem:[%s352 + $0x220] sm:$0xff] %v489
                  %v491 = vld [vmem:[%s351 + $0x6a8] sm:$0xff]
                  %492 = vst [vmem:[%s352 + $0x228] sm:$0xff] %v491
                  %v493 = vld [vmem:[%s351 + $0x6b0] sm:$0xff]
                  %494 = vst [vmem:[%s352 + $0x230] sm:$0xff] %v493
                  %v495 = vld [vmem:[%s351 + $0x6b8] sm:$0xff]
                  %496 = vst [vmem:[%s352 + $0x238] sm:$0xff] %v495
                  %v497 = vld [vmem:[%s351 + $0x6c0] sm:$0xff]
                  %498 = vst [vmem:[%s352 + $0x240] sm:$0xff] %v497
                  %v499 = vld [vmem:[%s351 + $0x6c8] sm:$0xff]
                  %500 = vst [vmem:[%s352 + $0x248] sm:$0xff] %v499
                  %v501 = vld [vmem:[%s351 + $0x6d0] sm:$0xff]
                  %502 = vst [vmem:[%s352 + $0x250] sm:$0xff] %v501
                  %v503 = vld [vmem:[%s351 + $0x6d8] sm:$0xff]
                  %504 = vst [vmem:[%s352 + $0x258] sm:$0xff] %v503
                  %v505 = vld [vmem:[%s351 + $0x6e0] sm:$0xff]
                  %506 = vst [vmem:[%s352 + $0x260] sm:$0xff] %v505
                  %v507 = vld [vmem:[%s351 + $0x6e8] sm:$0xff]
                  %508 = vst [vmem:[%s352 + $0x268] sm:$0xff] %v507
                  %v509 = vld [vmem:[%s351 + $0x6f0] sm:$0xff]
                  %510 = vst [vmem:[%s352 + $0x270] sm:$0xff] %v509
                  %v511 = vld [vmem:[%s351 + $0x6f8] sm:$0xff]
                  %512 = vst [vmem:[%s352 + $0x278] sm:$0xff] %v511
                  %v513 = vld [vmem:[%s351 + $0x700] sm:$0xff]
                  %514 = vst [vmem:[%s352 + $0x280] sm:$0xff] %v513
                  %v515 = vld [vmem:[%s351 + $0x708] sm:$0xff]
                  %516 = vst [vmem:[%s352 + $0x288] sm:$0xff] %v515
                  %v517 = vld [vmem:[%s351 + $0x710] sm:$0xff]
                  %518 = vst [vmem:[%s352 + $0x290] sm:$0xff] %v517
                  %v519 = vld [vmem:[%s351 + $0x718] sm:$0xff]
                  %520 = vst [vmem:[%s352 + $0x298] sm:$0xff] %v519
                  %v521 = vld [vmem:[%s351 + $0x720] sm:$0xff]
                  %522 = vst [vmem:[%s352 + $0x2a0] sm:$0xff] %v521
                  %v523 = vld [vmem:[%s351 + $0x728] sm:$0xff]
                  %524 = vst [vmem:[%s352 + $0x2a8] sm:$0xff] %v523
                  %v525 = vld [vmem:[%s351 + $0x730] sm:$0xff]
                  %526 = vst [vmem:[%s352 + $0x2b0] sm:$0xff] %v525
                  %v527 = vld [vmem:[%s351 + $0x738] sm:$0xff]
                  %528 = vst [vmem:[%s352 + $0x2b8] sm:$0xff] %v527
                  %v529 = vld [vmem:[%s351 + $0x740] sm:$0xff]
                  %530 = vst [vmem:[%s352 + $0x2c0] sm:$0xff] %v529
                  %v531 = vld [vmem:[%s351 + $0x748] sm:$0xff]
                  %532 = vst [vmem:[%s352 + $0x2c8] sm:$0xff] %v531
                  %v533 = vld [vmem:[%s351 + $0x750] sm:$0xff]
                  %534 = vst [vmem:[%s352 + $0x2d0] sm:$0xff] %v533
                  %v535 = vld [vmem:[%s351 + $0x758] sm:$0xff]
                  %536 = vst [vmem:[%s352 + $0x2d8] sm:$0xff] %v535
                  %v537 = vld [vmem:[%s351 + $0x760] sm:$0xff]
                  %538 = vst [vmem:[%s352 + $0x2e0] sm:$0xff] %v537
                  %v539 = vld [vmem:[%s351 + $0x768] sm:$0xff]
                  %540 = vst [vmem:[%s352 + $0x2e8] sm:$0xff] %v539
                  %v541 = vld [vmem:[%s351 + $0x770] sm:$0xff]
                  %542 = vst [vmem:[%s352 + $0x2f0] sm:$0xff] %v541
                  %v543 = vld [vmem:[%s351 + $0x778] sm:$0xff]
                  %544 = vst [vmem:[%s352 + $0x2f8] sm:$0xff] %v543
                $region52: #{tudui_forward.1} parent=46 // loop_footer
                  %s350 = sadd.s32 1, %s346
                $region53: #{tudui_forward.1} parent=46 // loop_footer_branch
                  %345 = sbr.rel target = $region49
                $region54: #{tudui_forward.1} parent=46 // loop_exit
                  _
              $region47: #{tudui_forward.1} parent=31 // pred_fallthru
                _
              // Predicated region
              $region55: #{tudui_forward.1} parent=31 // pred_check
                _
              $region56: #{tudui_forward.1} parent=31 // pred_check_branch
                %546 = sbr.rel target = $region58
              $region57: #{tudui_forward.1} parent=31 // pred_region
                _
              $region58: #{tudui_forward.1} parent=31 // pred_fallthru
                _
            $region32: #{tudui_forward.1} parent=27 // pred_fallthru
              _
            // Predicated region
            $region33: #{tudui_forward.1} parent=27 // pred_check
              _
            $region34: #{tudui_forward.1} parent=27 // pred_check_branch
              %141 = sbr.rel target = $region36
            $region35: #{tudui_forward.1} parent=27 // pred_region
              loop: start=0, step=1, limit=1
              $region37: #{tudui_forward.1} parent=35 // loop_pre_header
                _
              $region38: #{tudui_forward.1} parent=35 // loop_header
                %s144 = sphi 0, %s148
                %p145 = scmp.ge.s32.totalorder %s144, 1
                %s149 = sphi %s135, %s135
                %s150 = sphi %s132, %s132
              $region39: #{tudui_forward.1} parent=35 // loop_header_branch
                %147 = sbr.rel (%p145) target = $region43
              $region40: #{tudui_forward.1} parent=35 // loop_body
                %v151 = vld [vmem:[%s149] sm:$0xff]
                %152 = vst [vmem:[%s150] sm:$0xff] %v151
                %v153 = vld [vmem:[%s149 + $0x8] sm:$0xff]
                %154 = vst [vmem:[%s150 + $0x8] sm:$0xff] %v153
                %v155 = vld [vmem:[%s149 + $0x10] sm:$0xff]
                %156 = vst [vmem:[%s150 + $0x10] sm:$0xff] %v155
                %v157 = vld [vmem:[%s149 + $0x18] sm:$0xff]
                %158 = vst [vmem:[%s150 + $0x18] sm:$0xff] %v157
                %v159 = vld [vmem:[%s149 + $0x20] sm:$0xff]
                %160 = vst [vmem:[%s150 + $0x20] sm:$0xff] %v159
                %v161 = vld [vmem:[%s149 + $0x28] sm:$0xff]
                %162 = vst [vmem:[%s150 + $0x28] sm:$0xff] %v161
                %v163 = vld [vmem:[%s149 + $0x30] sm:$0xff]
                %164 = vst [vmem:[%s150 + $0x30] sm:$0xff] %v163
                %v165 = vld [vmem:[%s149 + $0x38] sm:$0xff]
                %166 = vst [vmem:[%s150 + $0x38] sm:$0xff] %v165
                %v167 = vld [vmem:[%s149 + $0x40] sm:$0xff]
                %168 = vst [vmem:[%s150 + $0x40] sm:$0xff] %v167
                %v169 = vld [vmem:[%s149 + $0x48] sm:$0xff]
                %170 = vst [vmem:[%s150 + $0x48] sm:$0xff] %v169
                %v171 = vld [vmem:[%s149 + $0x50] sm:$0xff]
                %172 = vst [vmem:[%s150 + $0x50] sm:$0xff] %v171
                %v173 = vld [vmem:[%s149 + $0x58] sm:$0xff]
                %174 = vst [vmem:[%s150 + $0x58] sm:$0xff] %v173
                %v175 = vld [vmem:[%s149 + $0x60] sm:$0xff]
                %176 = vst [vmem:[%s150 + $0x60] sm:$0xff] %v175
                %v177 = vld [vmem:[%s149 + $0x68] sm:$0xff]
                %178 = vst [vmem:[%s150 + $0x68] sm:$0xff] %v177
                %v179 = vld [vmem:[%s149 + $0x70] sm:$0xff]
                %180 = vst [vmem:[%s150 + $0x70] sm:$0xff] %v179
                %v181 = vld [vmem:[%s149 + $0x78] sm:$0xff]
                %182 = vst [vmem:[%s150 + $0x78] sm:$0xff] %v181
                %v183 = vld [vmem:[%s149 + $0x80] sm:$0xff]
                %184 = vst [vmem:[%s150 + $0x80] sm:$0xff] %v183
                %v185 = vld [vmem:[%s149 + $0x88] sm:$0xff]
                %186 = vst [vmem:[%s150 + $0x88] sm:$0xff] %v185
                %v187 = vld [vmem:[%s149 + $0x90] sm:$0xff]
                %188 = vst [vmem:[%s150 + $0x90] sm:$0xff] %v187
                %v189 = vld [vmem:[%s149 + $0x98] sm:$0xff]
                %190 = vst [vmem:[%s150 + $0x98] sm:$0xff] %v189
                %v191 = vld [vmem:[%s149 + $0xa0] sm:$0xff]
                %192 = vst [vmem:[%s150 + $0xa0] sm:$0xff] %v191
                %v193 = vld [vmem:[%s149 + $0xa8] sm:$0xff]
                %194 = vst [vmem:[%s150 + $0xa8] sm:$0xff] %v193
                %v195 = vld [vmem:[%s149 + $0xb0] sm:$0xff]
                %196 = vst [vmem:[%s150 + $0xb0] sm:$0xff] %v195
                %v197 = vld [vmem:[%s149 + $0xb8] sm:$0xff]
                %198 = vst [vmem:[%s150 + $0xb8] sm:$0xff] %v197
                %v199 = vld [vmem:[%s149 + $0xc0] sm:$0xff]
                %200 = vst [vmem:[%s150 + $0xc0] sm:$0xff] %v199
                %v201 = vld [vmem:[%s149 + $0xc8] sm:$0xff]
                %202 = vst [vmem:[%s150 + $0xc8] sm:$0xff] %v201
                %v203 = vld [vmem:[%s149 + $0xd0] sm:$0xff]
                %204 = vst [vmem:[%s150 + $0xd0] sm:$0xff] %v203
                %v205 = vld [vmem:[%s149 + $0xd8] sm:$0xff]
                %206 = vst [vmem:[%s150 + $0xd8] sm:$0xff] %v205
                %v207 = vld [vmem:[%s149 + $0xe0] sm:$0xff]
                %208 = vst [vmem:[%s150 + $0xe0] sm:$0xff] %v207
                %v209 = vld [vmem:[%s149 + $0xe8] sm:$0xff]
                %210 = vst [vmem:[%s150 + $0xe8] sm:$0xff] %v209
                %v211 = vld [vmem:[%s149 + $0xf0] sm:$0xff]
                %212 = vst [vmem:[%s150 + $0xf0] sm:$0xff] %v211
                %v213 = vld [vmem:[%s149 + $0xf8] sm:$0xff]
                %214 = vst [vmem:[%s150 + $0xf8] sm:$0xff] %v213
                %v215 = vld [vmem:[%s149 + $0x100] sm:$0xff]
                %216 = vst [vmem:[%s150 + $0x100] sm:$0xff] %v215
                %v217 = vld [vmem:[%s149 + $0x108] sm:$0xff]
                %218 = vst [vmem:[%s150 + $0x108] sm:$0xff] %v217
                %v219 = vld [vmem:[%s149 + $0x110] sm:$0xff]
                %220 = vst [vmem:[%s150 + $0x110] sm:$0xff] %v219
                %v221 = vld [vmem:[%s149 + $0x118] sm:$0xff]
                %222 = vst [vmem:[%s150 + $0x118] sm:$0xff] %v221
                %v223 = vld [vmem:[%s149 + $0x120] sm:$0xff]
                %224 = vst [vmem:[%s150 + $0x120] sm:$0xff] %v223
                %v225 = vld [vmem:[%s149 + $0x128] sm:$0xff]
                %226 = vst [vmem:[%s150 + $0x128] sm:$0xff] %v225
                %v227 = vld [vmem:[%s149 + $0x130] sm:$0xff]
                %228 = vst [vmem:[%s150 + $0x130] sm:$0xff] %v227
                %v229 = vld [vmem:[%s149 + $0x138] sm:$0xff]
                %230 = vst [vmem:[%s150 + $0x138] sm:$0xff] %v229
                %v231 = vld [vmem:[%s149 + $0x140] sm:$0xff]
                %232 = vst [vmem:[%s150 + $0x140] sm:$0xff] %v231
                %v233 = vld [vmem:[%s149 + $0x148] sm:$0xff]
                %234 = vst [vmem:[%s150 + $0x148] sm:$0xff] %v233
                %v235 = vld [vmem:[%s149 + $0x150] sm:$0xff]
                %236 = vst [vmem:[%s150 + $0x150] sm:$0xff] %v235
                %v237 = vld [vmem:[%s149 + $0x158] sm:$0xff]
                %238 = vst [vmem:[%s150 + $0x158] sm:$0xff] %v237
                %v239 = vld [vmem:[%s149 + $0x160] sm:$0xff]
                %240 = vst [vmem:[%s150 + $0x160] sm:$0xff] %v239
                %v241 = vld [vmem:[%s149 + $0x168] sm:$0xff]
                %242 = vst [vmem:[%s150 + $0x168] sm:$0xff] %v241
                %v243 = vld [vmem:[%s149 + $0x170] sm:$0xff]
                %244 = vst [vmem:[%s150 + $0x170] sm:$0xff] %v243
                %v245 = vld [vmem:[%s149 + $0x178] sm:$0xff]
                %246 = vst [vmem:[%s150 + $0x178] sm:$0xff] %v245
                %v247 = vld [vmem:[%s149 + $0x600] sm:$0xff]
                %248 = vst [vmem:[%s150 + $0x180] sm:$0xff] %v247
                %v249 = vld [vmem:[%s149 + $0x608] sm:$0xff]
                %250 = vst [vmem:[%s150 + $0x188] sm:$0xff] %v249
                %v251 = vld [vmem:[%s149 + $0x610] sm:$0xff]
                %252 = vst [vmem:[%s150 + $0x190] sm:$0xff] %v251
                %v253 = vld [vmem:[%s149 + $0x618] sm:$0xff]
                %254 = vst [vmem:[%s150 + $0x198] sm:$0xff] %v253
                %v255 = vld [vmem:[%s149 + $0x620] sm:$0xff]
                %256 = vst [vmem:[%s150 + $0x1a0] sm:$0xff] %v255
                %v257 = vld [vmem:[%s149 + $0x628] sm:$0xff]
                %258 = vst [vmem:[%s150 + $0x1a8] sm:$0xff] %v257
                %v259 = vld [vmem:[%s149 + $0x630] sm:$0xff]
                %260 = vst [vmem:[%s150 + $0x1b0] sm:$0xff] %v259
                %v261 = vld [vmem:[%s149 + $0x638] sm:$0xff]
                %262 = vst [vmem:[%s150 + $0x1b8] sm:$0xff] %v261
                %v263 = vld [vmem:[%s149 + $0x640] sm:$0xff]
                %264 = vst [vmem:[%s150 + $0x1c0] sm:$0xff] %v263
                %v265 = vld [vmem:[%s149 + $0x648] sm:$0xff]
                %266 = vst [vmem:[%s150 + $0x1c8] sm:$0xff] %v265
                %v267 = vld [vmem:[%s149 + $0x650] sm:$0xff]
                %268 = vst [vmem:[%s150 + $0x1d0] sm:$0xff] %v267
                %v269 = vld [vmem:[%s149 + $0x658] sm:$0xff]
                %270 = vst [vmem:[%s150 + $0x1d8] sm:$0xff] %v269
                %v271 = vld [vmem:[%s149 + $0x660] sm:$0xff]
                %272 = vst [vmem:[%s150 + $0x1e0] sm:$0xff] %v271
                %v273 = vld [vmem:[%s149 + $0x668] sm:$0xff]
                %274 = vst [vmem:[%s150 + $0x1e8] sm:$0xff] %v273
                %v275 = vld [vmem:[%s149 + $0x670] sm:$0xff]
                %276 = vst [vmem:[%s150 + $0x1f0] sm:$0xff] %v275
                %v277 = vld [vmem:[%s149 + $0x678] sm:$0xff]
                %278 = vst [vmem:[%s150 + $0x1f8] sm:$0xff] %v277
                %v279 = vld [vmem:[%s149 + $0x680] sm:$0xff]
                %280 = vst [vmem:[%s150 + $0x200] sm:$0xff] %v279
                %v281 = vld [vmem:[%s149 + $0x688] sm:$0xff]
                %282 = vst [vmem:[%s150 + $0x208] sm:$0xff] %v281
                %v283 = vld [vmem:[%s149 + $0x690] sm:$0xff]
                %284 = vst [vmem:[%s150 + $0x210] sm:$0xff] %v283
                %v285 = vld [vmem:[%s149 + $0x698] sm:$0xff]
                %286 = vst [vmem:[%s150 + $0x218] sm:$0xff] %v285
                %v287 = vld [vmem:[%s149 + $0x6a0] sm:$0xff]
                %288 = vst [vmem:[%s150 + $0x220] sm:$0xff] %v287
                %v289 = vld [vmem:[%s149 + $0x6a8] sm:$0xff]
                %290 = vst [vmem:[%s150 + $0x228] sm:$0xff] %v289
                %v291 = vld [vmem:[%s149 + $0x6b0] sm:$0xff]
                %292 = vst [vmem:[%s150 + $0x230] sm:$0xff] %v291
                %v293 = vld [vmem:[%s149 + $0x6b8] sm:$0xff]
                %294 = vst [vmem:[%s150 + $0x238] sm:$0xff] %v293
                %v295 = vld [vmem:[%s149 + $0x6c0] sm:$0xff]
                %296 = vst [vmem:[%s150 + $0x240] sm:$0xff] %v295
                %v297 = vld [vmem:[%s149 + $0x6c8] sm:$0xff]
                %298 = vst [vmem:[%s150 + $0x248] sm:$0xff] %v297
                %v299 = vld [vmem:[%s149 + $0x6d0] sm:$0xff]
                %300 = vst [vmem:[%s150 + $0x250] sm:$0xff] %v299
                %v301 = vld [vmem:[%s149 + $0x6d8] sm:$0xff]
                %302 = vst [vmem:[%s150 + $0x258] sm:$0xff] %v301
                %v303 = vld [vmem:[%s149 + $0x6e0] sm:$0xff]
                %304 = vst [vmem:[%s150 + $0x260] sm:$0xff] %v303
                %v305 = vld [vmem:[%s149 + $0x6e8] sm:$0xff]
                %306 = vst [vmem:[%s150 + $0x268] sm:$0xff] %v305
                %v307 = vld [vmem:[%s149 + $0x6f0] sm:$0xff]
                %308 = vst [vmem:[%s150 + $0x270] sm:$0xff] %v307
                %v309 = vld [vmem:[%s149 + $0x6f8] sm:$0xff]
                %310 = vst [vmem:[%s150 + $0x278] sm:$0xff] %v309
                %v311 = vld [vmem:[%s149 + $0x700] sm:$0xff]
                %312 = vst [vmem:[%s150 + $0x280] sm:$0xff] %v311
                %v313 = vld [vmem:[%s149 + $0x708] sm:$0xff]
                %314 = vst [vmem:[%s150 + $0x288] sm:$0xff] %v313
                %v315 = vld [vmem:[%s149 + $0x710] sm:$0xff]
                %316 = vst [vmem:[%s150 + $0x290] sm:$0xff] %v315
                %v317 = vld [vmem:[%s149 + $0x718] sm:$0xff]
                %318 = vst [vmem:[%s150 + $0x298] sm:$0xff] %v317
                %v319 = vld [vmem:[%s149 + $0x720] sm:$0xff]
                %320 = vst [vmem:[%s150 + $0x2a0] sm:$0xff] %v319
                %v321 = vld [vmem:[%s149 + $0x728] sm:$0xff]
                %322 = vst [vmem:[%s150 + $0x2a8] sm:$0xff] %v321
                %v323 = vld [vmem:[%s149 + $0x730] sm:$0xff]
                %324 = vst [vmem:[%s150 + $0x2b0] sm:$0xff] %v323
                %v325 = vld [vmem:[%s149 + $0x738] sm:$0xff]
                %326 = vst [vmem:[%s150 + $0x2b8] sm:$0xff] %v325
                %v327 = vld [vmem:[%s149 + $0x740] sm:$0xff]
                %328 = vst [vmem:[%s150 + $0x2c0] sm:$0xff] %v327
                %v329 = vld [vmem:[%s149 + $0x748] sm:$0xff]
                %330 = vst [vmem:[%s150 + $0x2c8] sm:$0xff] %v329
                %v331 = vld [vmem:[%s149 + $0x750] sm:$0xff]
                %332 = vst [vmem:[%s150 + $0x2d0] sm:$0xff] %v331
                %v333 = vld [vmem:[%s149 + $0x758] sm:$0xff]
                %334 = vst [vmem:[%s150 + $0x2d8] sm:$0xff] %v333
                %v335 = vld [vmem:[%s149 + $0x760] sm:$0xff]
                %336 = vst [vmem:[%s150 + $0x2e0] sm:$0xff] %v335
                %v337 = vld [vmem:[%s149 + $0x768] sm:$0xff]
                %338 = vst [vmem:[%s150 + $0x2e8] sm:$0xff] %v337
                %v339 = vld [vmem:[%s149 + $0x770] sm:$0xff]
                %340 = vst [vmem:[%s150 + $0x2f0] sm:$0xff] %v339
                %v341 = vld [vmem:[%s149 + $0x778] sm:$0xff]
                %342 = vst [vmem:[%s150 + $0x2f8] sm:$0xff] %v341
              $region41: #{tudui_forward.1} parent=35 // loop_footer
                %s148 = sadd.s32 1, %s144
              $region42: #{tudui_forward.1} parent=35 // loop_footer_branch
                %143 = sbr.rel target = $region38
              $region43: #{tudui_forward.1} parent=35 // loop_exit
                _
            $region36: #{tudui_forward.1} parent=27 // pred_fallthru
              _
          $region28: #{tudui_forward.1} parent=23 // pred_fallthru
            _
          %547 = vnop
        $region24: #{tudui_forward.1} parent=19 // pred_fallthru
          _
        // Predicated region
        $region59: #{tudui_forward.1} parent=19 // pred_check
          %p548 = pneg %p56
        $region60: #{tudui_forward.1} parent=19 // pred_check_branch
          %550 = sbr.rel (%p548) target = $region62
        $region61: #{tudui_forward.1} parent=19 // pred_region
          %s551 = sand.u32 %s46, 1
          %s552 = sand.u32 %s46, 1
          %s553 = smul.addr %s552, 3840
          %s554 = scalar_lea.vmem [#allocation4], %s553
          %s555 = smul.u32 48, %s10
          %s556 = smul.addr %s555, 8
          %s557 = scalar_lea.vmem %s1, %s556
          // Predicated region
          $region63: #{tudui_forward.1} parent=61 // pred_check
            _
          $region64: #{tudui_forward.1} parent=61 // pred_check_branch
            %559 = sbr.rel (0) target = $region66
          $region65: #{tudui_forward.1} parent=61 // pred_region
            // Predicated region
            $region67: #{tudui_forward.1} parent=65 // pred_check
              _
            $region68: #{tudui_forward.1} parent=65 // pred_check_branch
              %561 = sbr.rel (0) target = $region70
            $region69: #{tudui_forward.1} parent=65 // pred_region
              // Predicated region
              $region82: #{tudui_forward.1} parent=69 // pred_check
                _
              $region83: #{tudui_forward.1} parent=69 // pred_check_branch
                %1534 = sbr.rel (0) target = $region85
              $region84: #{tudui_forward.1} parent=69 // pred_region
                loop: start=0, step=1, limit=1
                $region86: #{tudui_forward.1} parent=84 // loop_pre_header
                  _
                $region87: #{tudui_forward.1} parent=84 // loop_header
                  %s1536 = sphi 0, %s1540
                  %p1537 = scmp.ge.s32.totalorder %s1536, 1
                  %s1541 = sphi %s557, %s557
                  %s1542 = sphi %s554, %s554
                $region88: #{tudui_forward.1} parent=84 // loop_header_branch
                  %1539 = sbr.rel (%p1537) target = $region92
                $region89: #{tudui_forward.1} parent=84 // loop_body
                  %v1543 = vld [vmem:[%s1541] sm:$0xff]
                  %1544 = vst [vmem:[%s1542] sm:$0xff] %v1543
                  %v1545 = vld [vmem:[%s1541 + $0x8] sm:$0xff]
                  %1546 = vst [vmem:[%s1542 + $0x8] sm:$0xff] %v1545
                  %v1547 = vld [vmem:[%s1541 + $0x10] sm:$0xff]
                  %1548 = vst [vmem:[%s1542 + $0x10] sm:$0xff] %v1547
                  %v1549 = vld [vmem:[%s1541 + $0x18] sm:$0xff]
                  %1550 = vst [vmem:[%s1542 + $0x18] sm:$0xff] %v1549
                  %v1551 = vld [vmem:[%s1541 + $0x20] sm:$0xff]
                  %1552 = vst [vmem:[%s1542 + $0x20] sm:$0xff] %v1551
                  %v1553 = vld [vmem:[%s1541 + $0x28] sm:$0xff]
                  %1554 = vst [vmem:[%s1542 + $0x28] sm:$0xff] %v1553
                  %v1555 = vld [vmem:[%s1541 + $0x30] sm:$0xff]
                  %1556 = vst [vmem:[%s1542 + $0x30] sm:$0xff] %v1555
                  %v1557 = vld [vmem:[%s1541 + $0x38] sm:$0xff]
                  %1558 = vst [vmem:[%s1542 + $0x38] sm:$0xff] %v1557
                  %v1559 = vld [vmem:[%s1541 + $0x40] sm:$0xff]
                  %1560 = vst [vmem:[%s1542 + $0x40] sm:$0xff] %v1559
                  %v1561 = vld [vmem:[%s1541 + $0x48] sm:$0xff]
                  %1562 = vst [vmem:[%s1542 + $0x48] sm:$0xff] %v1561
                  %v1563 = vld [vmem:[%s1541 + $0x50] sm:$0xff]
                  %1564 = vst [vmem:[%s1542 + $0x50] sm:$0xff] %v1563
                  %v1565 = vld [vmem:[%s1541 + $0x58] sm:$0xff]
                  %1566 = vst [vmem:[%s1542 + $0x58] sm:$0xff] %v1565
                  %v1567 = vld [vmem:[%s1541 + $0x60] sm:$0xff]
                  %1568 = vst [vmem:[%s1542 + $0x60] sm:$0xff] %v1567
                  %v1569 = vld [vmem:[%s1541 + $0x68] sm:$0xff]
                  %1570 = vst [vmem:[%s1542 + $0x68] sm:$0xff] %v1569
                  %v1571 = vld [vmem:[%s1541 + $0x70] sm:$0xff]
                  %1572 = vst [vmem:[%s1542 + $0x70] sm:$0xff] %v1571
                  %v1573 = vld [vmem:[%s1541 + $0x78] sm:$0xff]
                  %1574 = vst [vmem:[%s1542 + $0x78] sm:$0xff] %v1573
                  %v1575 = vld [vmem:[%s1541 + $0x80] sm:$0xff]
                  %1576 = vst [vmem:[%s1542 + $0x80] sm:$0xff] %v1575
                  %v1577 = vld [vmem:[%s1541 + $0x88] sm:$0xff]
                  %1578 = vst [vmem:[%s1542 + $0x88] sm:$0xff] %v1577
                  %v1579 = vld [vmem:[%s1541 + $0x90] sm:$0xff]
                  %1580 = vst [vmem:[%s1542 + $0x90] sm:$0xff] %v1579
                  %v1581 = vld [vmem:[%s1541 + $0x98] sm:$0xff]
                  %1582 = vst [vmem:[%s1542 + $0x98] sm:$0xff] %v1581
                  %v1583 = vld [vmem:[%s1541 + $0xa0] sm:$0xff]
                  %1584 = vst [vmem:[%s1542 + $0xa0] sm:$0xff] %v1583
                  %v1585 = vld [vmem:[%s1541 + $0xa8] sm:$0xff]
                  %1586 = vst [vmem:[%s1542 + $0xa8] sm:$0xff] %v1585
                  %v1587 = vld [vmem:[%s1541 + $0xb0] sm:$0xff]
                  %1588 = vst [vmem:[%s1542 + $0xb0] sm:$0xff] %v1587
                  %v1589 = vld [vmem:[%s1541 + $0xb8] sm:$0xff]
                  %1590 = vst [vmem:[%s1542 + $0xb8] sm:$0xff] %v1589
                  %v1591 = vld [vmem:[%s1541 + $0xc0] sm:$0xff]
                  %1592 = vst [vmem:[%s1542 + $0xc0] sm:$0xff] %v1591
                  %v1593 = vld [vmem:[%s1541 + $0xc8] sm:$0xff]
                  %1594 = vst [vmem:[%s1542 + $0xc8] sm:$0xff] %v1593
                  %v1595 = vld [vmem:[%s1541 + $0xd0] sm:$0xff]
                  %1596 = vst [vmem:[%s1542 + $0xd0] sm:$0xff] %v1595
                  %v1597 = vld [vmem:[%s1541 + $0xd8] sm:$0xff]
                  %1598 = vst [vmem:[%s1542 + $0xd8] sm:$0xff] %v1597
                  %v1599 = vld [vmem:[%s1541 + $0xe0] sm:$0xff]
                  %1600 = vst [vmem:[%s1542 + $0xe0] sm:$0xff] %v1599
                  %v1601 = vld [vmem:[%s1541 + $0xe8] sm:$0xff]
                  %1602 = vst [vmem:[%s1542 + $0xe8] sm:$0xff] %v1601
                  %v1603 = vld [vmem:[%s1541 + $0xf0] sm:$0xff]
                  %1604 = vst [vmem:[%s1542 + $0xf0] sm:$0xff] %v1603
                  %v1605 = vld [vmem:[%s1541 + $0xf8] sm:$0xff]
                  %1606 = vst [vmem:[%s1542 + $0xf8] sm:$0xff] %v1605
                  %v1607 = vld [vmem:[%s1541 + $0x100] sm:$0xff]
                  %1608 = vst [vmem:[%s1542 + $0x100] sm:$0xff] %v1607
                  %v1609 = vld [vmem:[%s1541 + $0x108] sm:$0xff]
                  %1610 = vst [vmem:[%s1542 + $0x108] sm:$0xff] %v1609
                  %v1611 = vld [vmem:[%s1541 + $0x110] sm:$0xff]
                  %1612 = vst [vmem:[%s1542 + $0x110] sm:$0xff] %v1611
                  %v1613 = vld [vmem:[%s1541 + $0x118] sm:$0xff]
                  %1614 = vst [vmem:[%s1542 + $0x118] sm:$0xff] %v1613
                  %v1615 = vld [vmem:[%s1541 + $0x120] sm:$0xff]
                  %1616 = vst [vmem:[%s1542 + $0x120] sm:$0xff] %v1615
                  %v1617 = vld [vmem:[%s1541 + $0x128] sm:$0xff]
                  %1618 = vst [vmem:[%s1542 + $0x128] sm:$0xff] %v1617
                  %v1619 = vld [vmem:[%s1541 + $0x130] sm:$0xff]
                  %1620 = vst [vmem:[%s1542 + $0x130] sm:$0xff] %v1619
                  %v1621 = vld [vmem:[%s1541 + $0x138] sm:$0xff]
                  %1622 = vst [vmem:[%s1542 + $0x138] sm:$0xff] %v1621
                  %v1623 = vld [vmem:[%s1541 + $0x140] sm:$0xff]
                  %1624 = vst [vmem:[%s1542 + $0x140] sm:$0xff] %v1623
                  %v1625 = vld [vmem:[%s1541 + $0x148] sm:$0xff]
                  %1626 = vst [vmem:[%s1542 + $0x148] sm:$0xff] %v1625
                  %v1627 = vld [vmem:[%s1541 + $0x150] sm:$0xff]
                  %1628 = vst [vmem:[%s1542 + $0x150] sm:$0xff] %v1627
                  %v1629 = vld [vmem:[%s1541 + $0x158] sm:$0xff]
                  %1630 = vst [vmem:[%s1542 + $0x158] sm:$0xff] %v1629
                  %v1631 = vld [vmem:[%s1541 + $0x160] sm:$0xff]
                  %1632 = vst [vmem:[%s1542 + $0x160] sm:$0xff] %v1631
                  %v1633 = vld [vmem:[%s1541 + $0x168] sm:$0xff]
                  %1634 = vst [vmem:[%s1542 + $0x168] sm:$0xff] %v1633
                  %v1635 = vld [vmem:[%s1541 + $0x170] sm:$0xff]
                  %1636 = vst [vmem:[%s1542 + $0x170] sm:$0xff] %v1635
                  %v1637 = vld [vmem:[%s1541 + $0x178] sm:$0xff]
                  %1638 = vst [vmem:[%s1542 + $0x178] sm:$0xff] %v1637
                  %v1639 = vld [vmem:[%s1541 + $0x600] sm:$0xff]
                  %1640 = vst [vmem:[%s1542 + $0x180] sm:$0xff] %v1639
                  %v1641 = vld [vmem:[%s1541 + $0x608] sm:$0xff]
                  %1642 = vst [vmem:[%s1542 + $0x188] sm:$0xff] %v1641
                  %v1643 = vld [vmem:[%s1541 + $0x610] sm:$0xff]
                  %1644 = vst [vmem:[%s1542 + $0x190] sm:$0xff] %v1643
                  %v1645 = vld [vmem:[%s1541 + $0x618] sm:$0xff]
                  %1646 = vst [vmem:[%s1542 + $0x198] sm:$0xff] %v1645
                  %v1647 = vld [vmem:[%s1541 + $0x620] sm:$0xff]
                  %1648 = vst [vmem:[%s1542 + $0x1a0] sm:$0xff] %v1647
                  %v1649 = vld [vmem:[%s1541 + $0x628] sm:$0xff]
                  %1650 = vst [vmem:[%s1542 + $0x1a8] sm:$0xff] %v1649
                  %v1651 = vld [vmem:[%s1541 + $0x630] sm:$0xff]
                  %1652 = vst [vmem:[%s1542 + $0x1b0] sm:$0xff] %v1651
                  %v1653 = vld [vmem:[%s1541 + $0x638] sm:$0xff]
                  %1654 = vst [vmem:[%s1542 + $0x1b8] sm:$0xff] %v1653
                  %v1655 = vld [vmem:[%s1541 + $0x640] sm:$0xff]
                  %1656 = vst [vmem:[%s1542 + $0x1c0] sm:$0xff] %v1655
                  %v1657 = vld [vmem:[%s1541 + $0x648] sm:$0xff]
                  %1658 = vst [vmem:[%s1542 + $0x1c8] sm:$0xff] %v1657
                  %v1659 = vld [vmem:[%s1541 + $0x650] sm:$0xff]
                  %1660 = vst [vmem:[%s1542 + $0x1d0] sm:$0xff] %v1659
                  %v1661 = vld [vmem:[%s1541 + $0x658] sm:$0xff]
                  %1662 = vst [vmem:[%s1542 + $0x1d8] sm:$0xff] %v1661
                  %v1663 = vld [vmem:[%s1541 + $0x660] sm:$0xff]
                  %1664 = vst [vmem:[%s1542 + $0x1e0] sm:$0xff] %v1663
                  %v1665 = vld [vmem:[%s1541 + $0x668] sm:$0xff]
                  %1666 = vst [vmem:[%s1542 + $0x1e8] sm:$0xff] %v1665
                  %v1667 = vld [vmem:[%s1541 + $0x670] sm:$0xff]
                  %1668 = vst [vmem:[%s1542 + $0x1f0] sm:$0xff] %v1667
                  %v1669 = vld [vmem:[%s1541 + $0x678] sm:$0xff]
                  %1670 = vst [vmem:[%s1542 + $0x1f8] sm:$0xff] %v1669
                  %v1671 = vld [vmem:[%s1541 + $0x680] sm:$0xff]
                  %1672 = vst [vmem:[%s1542 + $0x200] sm:$0xff] %v1671
                  %v1673 = vld [vmem:[%s1541 + $0x688] sm:$0xff]
                  %1674 = vst [vmem:[%s1542 + $0x208] sm:$0xff] %v1673
                  %v1675 = vld [vmem:[%s1541 + $0x690] sm:$0xff]
                  %1676 = vst [vmem:[%s1542 + $0x210] sm:$0xff] %v1675
                  %v1677 = vld [vmem:[%s1541 + $0x698] sm:$0xff]
                  %1678 = vst [vmem:[%s1542 + $0x218] sm:$0xff] %v1677
                  %v1679 = vld [vmem:[%s1541 + $0x6a0] sm:$0xff]
                  %1680 = vst [vmem:[%s1542 + $0x220] sm:$0xff] %v1679
                  %v1681 = vld [vmem:[%s1541 + $0x6a8] sm:$0xff]
                  %1682 = vst [vmem:[%s1542 + $0x228] sm:$0xff] %v1681
                  %v1683 = vld [vmem:[%s1541 + $0x6b0] sm:$0xff]
                  %1684 = vst [vmem:[%s1542 + $0x230] sm:$0xff] %v1683
                  %v1685 = vld [vmem:[%s1541 + $0x6b8] sm:$0xff]
                  %1686 = vst [vmem:[%s1542 + $0x238] sm:$0xff] %v1685
                  %v1687 = vld [vmem:[%s1541 + $0x6c0] sm:$0xff]
                  %1688 = vst [vmem:[%s1542 + $0x240] sm:$0xff] %v1687
                  %v1689 = vld [vmem:[%s1541 + $0x6c8] sm:$0xff]
                  %1690 = vst [vmem:[%s1542 + $0x248] sm:$0xff] %v1689
                  %v1691 = vld [vmem:[%s1541 + $0x6d0] sm:$0xff]
                  %1692 = vst [vmem:[%s1542 + $0x250] sm:$0xff] %v1691
                  %v1693 = vld [vmem:[%s1541 + $0x6d8] sm:$0xff]
                  %1694 = vst [vmem:[%s1542 + $0x258] sm:$0xff] %v1693
                  %v1695 = vld [vmem:[%s1541 + $0x6e0] sm:$0xff]
                  %1696 = vst [vmem:[%s1542 + $0x260] sm:$0xff] %v1695
                  %v1697 = vld [vmem:[%s1541 + $0x6e8] sm:$0xff]
                  %1698 = vst [vmem:[%s1542 + $0x268] sm:$0xff] %v1697
                  %v1699 = vld [vmem:[%s1541 + $0x6f0] sm:$0xff]
                  %1700 = vst [vmem:[%s1542 + $0x270] sm:$0xff] %v1699
                  %v1701 = vld [vmem:[%s1541 + $0x6f8] sm:$0xff]
                  %1702 = vst [vmem:[%s1542 + $0x278] sm:$0xff] %v1701
                  %v1703 = vld [vmem:[%s1541 + $0x700] sm:$0xff]
                  %1704 = vst [vmem:[%s1542 + $0x280] sm:$0xff] %v1703
                  %v1705 = vld [vmem:[%s1541 + $0x708] sm:$0xff]
                  %1706 = vst [vmem:[%s1542 + $0x288] sm:$0xff] %v1705
                  %v1707 = vld [vmem:[%s1541 + $0x710] sm:$0xff]
                  %1708 = vst [vmem:[%s1542 + $0x290] sm:$0xff] %v1707
                  %v1709 = vld [vmem:[%s1541 + $0x718] sm:$0xff]
                  %1710 = vst [vmem:[%s1542 + $0x298] sm:$0xff] %v1709
                  %v1711 = vld [vmem:[%s1541 + $0x720] sm:$0xff]
                  %1712 = vst [vmem:[%s1542 + $0x2a0] sm:$0xff] %v1711
                  %v1713 = vld [vmem:[%s1541 + $0x728] sm:$0xff]
                  %1714 = vst [vmem:[%s1542 + $0x2a8] sm:$0xff] %v1713
                  %v1715 = vld [vmem:[%s1541 + $0x730] sm:$0xff]
                  %1716 = vst [vmem:[%s1542 + $0x2b0] sm:$0xff] %v1715
                  %v1717 = vld [vmem:[%s1541 + $0x738] sm:$0xff]
                  %1718 = vst [vmem:[%s1542 + $0x2b8] sm:$0xff] %v1717
                  %v1719 = vld [vmem:[%s1541 + $0x740] sm:$0xff]
                  %1720 = vst [vmem:[%s1542 + $0x2c0] sm:$0xff] %v1719
                  %v1721 = vld [vmem:[%s1541 + $0x748] sm:$0xff]
                  %1722 = vst [vmem:[%s1542 + $0x2c8] sm:$0xff] %v1721
                  %v1723 = vld [vmem:[%s1541 + $0x750] sm:$0xff]
                  %1724 = vst [vmem:[%s1542 + $0x2d0] sm:$0xff] %v1723
                  %v1725 = vld [vmem:[%s1541 + $0x758] sm:$0xff]
                  %1726 = vst [vmem:[%s1542 + $0x2d8] sm:$0xff] %v1725
                  %v1727 = vld [vmem:[%s1541 + $0x760] sm:$0xff]
                  %1728 = vst [vmem:[%s1542 + $0x2e0] sm:$0xff] %v1727
                  %v1729 = vld [vmem:[%s1541 + $0x768] sm:$0xff]
                  %1730 = vst [vmem:[%s1542 + $0x2e8] sm:$0xff] %v1729
                  %v1731 = vld [vmem:[%s1541 + $0x770] sm:$0xff]
                  %1732 = vst [vmem:[%s1542 + $0x2f0] sm:$0xff] %v1731
                  %v1733 = vld [vmem:[%s1541 + $0x778] sm:$0xff]
                  %1734 = vst [vmem:[%s1542 + $0x2f8] sm:$0xff] %v1733
                  %v1735 = vld [vmem:[%s1541 + $0xc00] sm:$0xff]
                  %1736 = vst [vmem:[%s1542 + $0x300] sm:$0xff] %v1735
                  %v1737 = vld [vmem:[%s1541 + $0xc08] sm:$0xff]
                  %1738 = vst [vmem:[%s1542 + $0x308] sm:$0xff] %v1737
                  %v1739 = vld [vmem:[%s1541 + $0xc10] sm:$0xff]
                  %1740 = vst [vmem:[%s1542 + $0x310] sm:$0xff] %v1739
                  %v1741 = vld [vmem:[%s1541 + $0xc18] sm:$0xff]
                  %1742 = vst [vmem:[%s1542 + $0x318] sm:$0xff] %v1741
                  %v1743 = vld [vmem:[%s1541 + $0xc20] sm:$0xff]
                  %1744 = vst [vmem:[%s1542 + $0x320] sm:$0xff] %v1743
                  %v1745 = vld [vmem:[%s1541 + $0xc28] sm:$0xff]
                  %1746 = vst [vmem:[%s1542 + $0x328] sm:$0xff] %v1745
                  %v1747 = vld [vmem:[%s1541 + $0xc30] sm:$0xff]
                  %1748 = vst [vmem:[%s1542 + $0x330] sm:$0xff] %v1747
                  %v1749 = vld [vmem:[%s1541 + $0xc38] sm:$0xff]
                  %1750 = vst [vmem:[%s1542 + $0x338] sm:$0xff] %v1749
                  %v1751 = vld [vmem:[%s1541 + $0xc40] sm:$0xff]
                  %1752 = vst [vmem:[%s1542 + $0x340] sm:$0xff] %v1751
                  %v1753 = vld [vmem:[%s1541 + $0xc48] sm:$0xff]
                  %1754 = vst [vmem:[%s1542 + $0x348] sm:$0xff] %v1753
                  %v1755 = vld [vmem:[%s1541 + $0xc50] sm:$0xff]
                  %1756 = vst [vmem:[%s1542 + $0x350] sm:$0xff] %v1755
                  %v1757 = vld [vmem:[%s1541 + $0xc58] sm:$0xff]
                  %1758 = vst [vmem:[%s1542 + $0x358] sm:$0xff] %v1757
                  %v1759 = vld [vmem:[%s1541 + $0xc60] sm:$0xff]
                  %1760 = vst [vmem:[%s1542 + $0x360] sm:$0xff] %v1759
                  %v1761 = vld [vmem:[%s1541 + $0xc68] sm:$0xff]
                  %1762 = vst [vmem:[%s1542 + $0x368] sm:$0xff] %v1761
                  %v1763 = vld [vmem:[%s1541 + $0xc70] sm:$0xff]
                  %1764 = vst [vmem:[%s1542 + $0x370] sm:$0xff] %v1763
                  %v1765 = vld [vmem:[%s1541 + $0xc78] sm:$0xff]
                  %1766 = vst [vmem:[%s1542 + $0x378] sm:$0xff] %v1765
                  %v1767 = vld [vmem:[%s1541 + $0xc80] sm:$0xff]
                  %1768 = vst [vmem:[%s1542 + $0x380] sm:$0xff] %v1767
                  %v1769 = vld [vmem:[%s1541 + $0xc88] sm:$0xff]
                  %1770 = vst [vmem:[%s1542 + $0x388] sm:$0xff] %v1769
                  %v1771 = vld [vmem:[%s1541 + $0xc90] sm:$0xff]
                  %1772 = vst [vmem:[%s1542 + $0x390] sm:$0xff] %v1771
                  %v1773 = vld [vmem:[%s1541 + $0xc98] sm:$0xff]
                  %1774 = vst [vmem:[%s1542 + $0x398] sm:$0xff] %v1773
                  %v1775 = vld [vmem:[%s1541 + $0xca0] sm:$0xff]
                  %1776 = vst [vmem:[%s1542 + $0x3a0] sm:$0xff] %v1775
                  %v1777 = vld [vmem:[%s1541 + $0xca8] sm:$0xff]
                  %1778 = vst [vmem:[%s1542 + $0x3a8] sm:$0xff] %v1777
                  %v1779 = vld [vmem:[%s1541 + $0xcb0] sm:$0xff]
                  %1780 = vst [vmem:[%s1542 + $0x3b0] sm:$0xff] %v1779
                  %v1781 = vld [vmem:[%s1541 + $0xcb8] sm:$0xff]
                  %1782 = vst [vmem:[%s1542 + $0x3b8] sm:$0xff] %v1781
                  %v1783 = vld [vmem:[%s1541 + $0xcc0] sm:$0xff]
                  %1784 = vst [vmem:[%s1542 + $0x3c0] sm:$0xff] %v1783
                  %v1785 = vld [vmem:[%s1541 + $0xcc8] sm:$0xff]
                  %1786 = vst [vmem:[%s1542 + $0x3c8] sm:$0xff] %v1785
                  %v1787 = vld [vmem:[%s1541 + $0xcd0] sm:$0xff]
                  %1788 = vst [vmem:[%s1542 + $0x3d0] sm:$0xff] %v1787
                  %v1789 = vld [vmem:[%s1541 + $0xcd8] sm:$0xff]
                  %1790 = vst [vmem:[%s1542 + $0x3d8] sm:$0xff] %v1789
                  %v1791 = vld [vmem:[%s1541 + $0xce0] sm:$0xff]
                  %1792 = vst [vmem:[%s1542 + $0x3e0] sm:$0xff] %v1791
                  %v1793 = vld [vmem:[%s1541 + $0xce8] sm:$0xff]
                  %1794 = vst [vmem:[%s1542 + $0x3e8] sm:$0xff] %v1793
                  %v1795 = vld [vmem:[%s1541 + $0xcf0] sm:$0xff]
                  %1796 = vst [vmem:[%s1542 + $0x3f0] sm:$0xff] %v1795
                  %v1797 = vld [vmem:[%s1541 + $0xcf8] sm:$0xff]
                  %1798 = vst [vmem:[%s1542 + $0x3f8] sm:$0xff] %v1797
                  %v1799 = vld [vmem:[%s1541 + $0xd00] sm:$0xff]
                  %1800 = vst [vmem:[%s1542 + $0x400] sm:$0xff] %v1799
                  %v1801 = vld [vmem:[%s1541 + $0xd08] sm:$0xff]
                  %1802 = vst [vmem:[%s1542 + $0x408] sm:$0xff] %v1801
                  %v1803 = vld [vmem:[%s1541 + $0xd10] sm:$0xff]
                  %1804 = vst [vmem:[%s1542 + $0x410] sm:$0xff] %v1803
                  %v1805 = vld [vmem:[%s1541 + $0xd18] sm:$0xff]
                  %1806 = vst [vmem:[%s1542 + $0x418] sm:$0xff] %v1805
                  %v1807 = vld [vmem:[%s1541 + $0xd20] sm:$0xff]
                  %1808 = vst [vmem:[%s1542 + $0x420] sm:$0xff] %v1807
                  %v1809 = vld [vmem:[%s1541 + $0xd28] sm:$0xff]
                  %1810 = vst [vmem:[%s1542 + $0x428] sm:$0xff] %v1809
                  %v1811 = vld [vmem:[%s1541 + $0xd30] sm:$0xff]
                  %1812 = vst [vmem:[%s1542 + $0x430] sm:$0xff] %v1811
                  %v1813 = vld [vmem:[%s1541 + $0xd38] sm:$0xff]
                  %1814 = vst [vmem:[%s1542 + $0x438] sm:$0xff] %v1813
                  %v1815 = vld [vmem:[%s1541 + $0xd40] sm:$0xff]
                  %1816 = vst [vmem:[%s1542 + $0x440] sm:$0xff] %v1815
                  %v1817 = vld [vmem:[%s1541 + $0xd48] sm:$0xff]
                  %1818 = vst [vmem:[%s1542 + $0x448] sm:$0xff] %v1817
                  %v1819 = vld [vmem:[%s1541 + $0xd50] sm:$0xff]
                  %1820 = vst [vmem:[%s1542 + $0x450] sm:$0xff] %v1819
                  %v1821 = vld [vmem:[%s1541 + $0xd58] sm:$0xff]
                  %1822 = vst [vmem:[%s1542 + $0x458] sm:$0xff] %v1821
                  %v1823 = vld [vmem:[%s1541 + $0xd60] sm:$0xff]
                  %1824 = vst [vmem:[%s1542 + $0x460] sm:$0xff] %v1823
                  %v1825 = vld [vmem:[%s1541 + $0xd68] sm:$0xff]
                  %1826 = vst [vmem:[%s1542 + $0x468] sm:$0xff] %v1825
                  %v1827 = vld [vmem:[%s1541 + $0xd70] sm:$0xff]
                  %1828 = vst [vmem:[%s1542 + $0x470] sm:$0xff] %v1827
                  %v1829 = vld [vmem:[%s1541 + $0xd78] sm:$0xff]
                  %1830 = vst [vmem:[%s1542 + $0x478] sm:$0xff] %v1829
                  %v1831 = vld [vmem:[%s1541 + $0x1200] sm:$0xff]
                  %1832 = vst [vmem:[%s1542 + $0x480] sm:$0xff] %v1831
                  %v1833 = vld [vmem:[%s1541 + $0x1208] sm:$0xff]
                  %1834 = vst [vmem:[%s1542 + $0x488] sm:$0xff] %v1833
                  %v1835 = vld [vmem:[%s1541 + $0x1210] sm:$0xff]
                  %1836 = vst [vmem:[%s1542 + $0x490] sm:$0xff] %v1835
                  %v1837 = vld [vmem:[%s1541 + $0x1218] sm:$0xff]
                  %1838 = vst [vmem:[%s1542 + $0x498] sm:$0xff] %v1837
                  %v1839 = vld [vmem:[%s1541 + $0x1220] sm:$0xff]
                  %1840 = vst [vmem:[%s1542 + $0x4a0] sm:$0xff] %v1839
                  %v1841 = vld [vmem:[%s1541 + $0x1228] sm:$0xff]
                  %1842 = vst [vmem:[%s1542 + $0x4a8] sm:$0xff] %v1841
                  %v1843 = vld [vmem:[%s1541 + $0x1230] sm:$0xff]
                  %1844 = vst [vmem:[%s1542 + $0x4b0] sm:$0xff] %v1843
                  %v1845 = vld [vmem:[%s1541 + $0x1238] sm:$0xff]
                  %1846 = vst [vmem:[%s1542 + $0x4b8] sm:$0xff] %v1845
                  %v1847 = vld [vmem:[%s1541 + $0x1240] sm:$0xff]
                  %1848 = vst [vmem:[%s1542 + $0x4c0] sm:$0xff] %v1847
                  %v1849 = vld [vmem:[%s1541 + $0x1248] sm:$0xff]
                  %1850 = vst [vmem:[%s1542 + $0x4c8] sm:$0xff] %v1849
                  %v1851 = vld [vmem:[%s1541 + $0x1250] sm:$0xff]
                  %1852 = vst [vmem:[%s1542 + $0x4d0] sm:$0xff] %v1851
                  %v1853 = vld [vmem:[%s1541 + $0x1258] sm:$0xff]
                  %1854 = vst [vmem:[%s1542 + $0x4d8] sm:$0xff] %v1853
                  %v1855 = vld [vmem:[%s1541 + $0x1260] sm:$0xff]
                  %1856 = vst [vmem:[%s1542 + $0x4e0] sm:$0xff] %v1855
                  %v1857 = vld [vmem:[%s1541 + $0x1268] sm:$0xff]
                  %1858 = vst [vmem:[%s1542 + $0x4e8] sm:$0xff] %v1857
                  %v1859 = vld [vmem:[%s1541 + $0x1270] sm:$0xff]
                  %1860 = vst [vmem:[%s1542 + $0x4f0] sm:$0xff] %v1859
                  %v1861 = vld [vmem:[%s1541 + $0x1278] sm:$0xff]
                  %1862 = vst [vmem:[%s1542 + $0x4f8] sm:$0xff] %v1861
                  %v1863 = vld [vmem:[%s1541 + $0x1280] sm:$0xff]
                  %1864 = vst [vmem:[%s1542 + $0x500] sm:$0xff] %v1863
                  %v1865 = vld [vmem:[%s1541 + $0x1288] sm:$0xff]
                  %1866 = vst [vmem:[%s1542 + $0x508] sm:$0xff] %v1865
                  %v1867 = vld [vmem:[%s1541 + $0x1290] sm:$0xff]
                  %1868 = vst [vmem:[%s1542 + $0x510] sm:$0xff] %v1867
                  %v1869 = vld [vmem:[%s1541 + $0x1298] sm:$0xff]
                  %1870 = vst [vmem:[%s1542 + $0x518] sm:$0xff] %v1869
                  %v1871 = vld [vmem:[%s1541 + $0x12a0] sm:$0xff]
                  %1872 = vst [vmem:[%s1542 + $0x520] sm:$0xff] %v1871
                  %v1873 = vld [vmem:[%s1541 + $0x12a8] sm:$0xff]
                  %1874 = vst [vmem:[%s1542 + $0x528] sm:$0xff] %v1873
                  %v1875 = vld [vmem:[%s1541 + $0x12b0] sm:$0xff]
                  %1876 = vst [vmem:[%s1542 + $0x530] sm:$0xff] %v1875
                  %v1877 = vld [vmem:[%s1541 + $0x12b8] sm:$0xff]
                  %1878 = vst [vmem:[%s1542 + $0x538] sm:$0xff] %v1877
                  %v1879 = vld [vmem:[%s1541 + $0x12c0] sm:$0xff]
                  %1880 = vst [vmem:[%s1542 + $0x540] sm:$0xff] %v1879
                  %v1881 = vld [vmem:[%s1541 + $0x12c8] sm:$0xff]
                  %1882 = vst [vmem:[%s1542 + $0x548] sm:$0xff] %v1881
                  %v1883 = vld [vmem:[%s1541 + $0x12d0] sm:$0xff]
                  %1884 = vst [vmem:[%s1542 + $0x550] sm:$0xff] %v1883
                  %v1885 = vld [vmem:[%s1541 + $0x12d8] sm:$0xff]
                  %1886 = vst [vmem:[%s1542 + $0x558] sm:$0xff] %v1885
                  %v1887 = vld [vmem:[%s1541 + $0x12e0] sm:$0xff]
                  %1888 = vst [vmem:[%s1542 + $0x560] sm:$0xff] %v1887
                  %v1889 = vld [vmem:[%s1541 + $0x12e8] sm:$0xff]
                  %1890 = vst [vmem:[%s1542 + $0x568] sm:$0xff] %v1889
                  %v1891 = vld [vmem:[%s1541 + $0x12f0] sm:$0xff]
                  %1892 = vst [vmem:[%s1542 + $0x570] sm:$0xff] %v1891
                  %v1893 = vld [vmem:[%s1541 + $0x12f8] sm:$0xff]
                  %1894 = vst [vmem:[%s1542 + $0x578] sm:$0xff] %v1893
                  %v1895 = vld [vmem:[%s1541 + $0x1300] sm:$0xff]
                  %1896 = vst [vmem:[%s1542 + $0x580] sm:$0xff] %v1895
                  %v1897 = vld [vmem:[%s1541 + $0x1308] sm:$0xff]
                  %1898 = vst [vmem:[%s1542 + $0x588] sm:$0xff] %v1897
                  %v1899 = vld [vmem:[%s1541 + $0x1310] sm:$0xff]
                  %1900 = vst [vmem:[%s1542 + $0x590] sm:$0xff] %v1899
                  %v1901 = vld [vmem:[%s1541 + $0x1318] sm:$0xff]
                  %1902 = vst [vmem:[%s1542 + $0x598] sm:$0xff] %v1901
                  %v1903 = vld [vmem:[%s1541 + $0x1320] sm:$0xff]
                  %1904 = vst [vmem:[%s1542 + $0x5a0] sm:$0xff] %v1903
                  %v1905 = vld [vmem:[%s1541 + $0x1328] sm:$0xff]
                  %1906 = vst [vmem:[%s1542 + $0x5a8] sm:$0xff] %v1905
                  %v1907 = vld [vmem:[%s1541 + $0x1330] sm:$0xff]
                  %1908 = vst [vmem:[%s1542 + $0x5b0] sm:$0xff] %v1907
                  %v1909 = vld [vmem:[%s1541 + $0x1338] sm:$0xff]
                  %1910 = vst [vmem:[%s1542 + $0x5b8] sm:$0xff] %v1909
                  %v1911 = vld [vmem:[%s1541 + $0x1340] sm:$0xff]
                  %1912 = vst [vmem:[%s1542 + $0x5c0] sm:$0xff] %v1911
                  %v1913 = vld [vmem:[%s1541 + $0x1348] sm:$0xff]
                  %1914 = vst [vmem:[%s1542 + $0x5c8] sm:$0xff] %v1913
                  %v1915 = vld [vmem:[%s1541 + $0x1350] sm:$0xff]
                  %1916 = vst [vmem:[%s1542 + $0x5d0] sm:$0xff] %v1915
                  %v1917 = vld [vmem:[%s1541 + $0x1358] sm:$0xff]
                  %1918 = vst [vmem:[%s1542 + $0x5d8] sm:$0xff] %v1917
                  %v1919 = vld [vmem:[%s1541 + $0x1360] sm:$0xff]
                  %1920 = vst [vmem:[%s1542 + $0x5e0] sm:$0xff] %v1919
                  %v1921 = vld [vmem:[%s1541 + $0x1368] sm:$0xff]
                  %1922 = vst [vmem:[%s1542 + $0x5e8] sm:$0xff] %v1921
                  %v1923 = vld [vmem:[%s1541 + $0x1370] sm:$0xff]
                  %1924 = vst [vmem:[%s1542 + $0x5f0] sm:$0xff] %v1923
                  %v1925 = vld [vmem:[%s1541 + $0x1378] sm:$0xff]
                  %1926 = vst [vmem:[%s1542 + $0x5f8] sm:$0xff] %v1925
                  %v1927 = vld [vmem:[%s1541 + $0x1800] sm:$0xff]
                  %1928 = vst [vmem:[%s1542 + $0x600] sm:$0xff] %v1927
                  %v1929 = vld [vmem:[%s1541 + $0x1808] sm:$0xff]
                  %1930 = vst [vmem:[%s1542 + $0x608] sm:$0xff] %v1929
                  %v1931 = vld [vmem:[%s1541 + $0x1810] sm:$0xff]
                  %1932 = vst [vmem:[%s1542 + $0x610] sm:$0xff] %v1931
                  %v1933 = vld [vmem:[%s1541 + $0x1818] sm:$0xff]
                  %1934 = vst [vmem:[%s1542 + $0x618] sm:$0xff] %v1933
                  %v1935 = vld [vmem:[%s1541 + $0x1820] sm:$0xff]
                  %1936 = vst [vmem:[%s1542 + $0x620] sm:$0xff] %v1935
                  %v1937 = vld [vmem:[%s1541 + $0x1828] sm:$0xff]
                  %1938 = vst [vmem:[%s1542 + $0x628] sm:$0xff] %v1937
                  %v1939 = vld [vmem:[%s1541 + $0x1830] sm:$0xff]
                  %1940 = vst [vmem:[%s1542 + $0x630] sm:$0xff] %v1939
                  %v1941 = vld [vmem:[%s1541 + $0x1838] sm:$0xff]
                  %1942 = vst [vmem:[%s1542 + $0x638] sm:$0xff] %v1941
                  %v1943 = vld [vmem:[%s1541 + $0x1840] sm:$0xff]
                  %1944 = vst [vmem:[%s1542 + $0x640] sm:$0xff] %v1943
                  %v1945 = vld [vmem:[%s1541 + $0x1848] sm:$0xff]
                  %1946 = vst [vmem:[%s1542 + $0x648] sm:$0xff] %v1945
                  %v1947 = vld [vmem:[%s1541 + $0x1850] sm:$0xff]
                  %1948 = vst [vmem:[%s1542 + $0x650] sm:$0xff] %v1947
                  %v1949 = vld [vmem:[%s1541 + $0x1858] sm:$0xff]
                  %1950 = vst [vmem:[%s1542 + $0x658] sm:$0xff] %v1949
                  %v1951 = vld [vmem:[%s1541 + $0x1860] sm:$0xff]
                  %1952 = vst [vmem:[%s1542 + $0x660] sm:$0xff] %v1951
                  %v1953 = vld [vmem:[%s1541 + $0x1868] sm:$0xff]
                  %1954 = vst [vmem:[%s1542 + $0x668] sm:$0xff] %v1953
                  %v1955 = vld [vmem:[%s1541 + $0x1870] sm:$0xff]
                  %1956 = vst [vmem:[%s1542 + $0x670] sm:$0xff] %v1955
                  %v1957 = vld [vmem:[%s1541 + $0x1878] sm:$0xff]
                  %1958 = vst [vmem:[%s1542 + $0x678] sm:$0xff] %v1957
                  %v1959 = vld [vmem:[%s1541 + $0x1880] sm:$0xff]
                  %1960 = vst [vmem:[%s1542 + $0x680] sm:$0xff] %v1959
                  %v1961 = vld [vmem:[%s1541 + $0x1888] sm:$0xff]
                  %1962 = vst [vmem:[%s1542 + $0x688] sm:$0xff] %v1961
                  %v1963 = vld [vmem:[%s1541 + $0x1890] sm:$0xff]
                  %1964 = vst [vmem:[%s1542 + $0x690] sm:$0xff] %v1963
                  %v1965 = vld [vmem:[%s1541 + $0x1898] sm:$0xff]
                  %1966 = vst [vmem:[%s1542 + $0x698] sm:$0xff] %v1965
                  %v1967 = vld [vmem:[%s1541 + $0x18a0] sm:$0xff]
                  %1968 = vst [vmem:[%s1542 + $0x6a0] sm:$0xff] %v1967
                  %v1969 = vld [vmem:[%s1541 + $0x18a8] sm:$0xff]
                  %1970 = vst [vmem:[%s1542 + $0x6a8] sm:$0xff] %v1969
                  %v1971 = vld [vmem:[%s1541 + $0x18b0] sm:$0xff]
                  %1972 = vst [vmem:[%s1542 + $0x6b0] sm:$0xff] %v1971
                  %v1973 = vld [vmem:[%s1541 + $0x18b8] sm:$0xff]
                  %1974 = vst [vmem:[%s1542 + $0x6b8] sm:$0xff] %v1973
                  %v1975 = vld [vmem:[%s1541 + $0x18c0] sm:$0xff]
                  %1976 = vst [vmem:[%s1542 + $0x6c0] sm:$0xff] %v1975
                  %v1977 = vld [vmem:[%s1541 + $0x18c8] sm:$0xff]
                  %1978 = vst [vmem:[%s1542 + $0x6c8] sm:$0xff] %v1977
                  %v1979 = vld [vmem:[%s1541 + $0x18d0] sm:$0xff]
                  %1980 = vst [vmem:[%s1542 + $0x6d0] sm:$0xff] %v1979
                  %v1981 = vld [vmem:[%s1541 + $0x18d8] sm:$0xff]
                  %1982 = vst [vmem:[%s1542 + $0x6d8] sm:$0xff] %v1981
                  %v1983 = vld [vmem:[%s1541 + $0x18e0] sm:$0xff]
                  %1984 = vst [vmem:[%s1542 + $0x6e0] sm:$0xff] %v1983
                  %v1985 = vld [vmem:[%s1541 + $0x18e8] sm:$0xff]
                  %1986 = vst [vmem:[%s1542 + $0x6e8] sm:$0xff] %v1985
                  %v1987 = vld [vmem:[%s1541 + $0x18f0] sm:$0xff]
                  %1988 = vst [vmem:[%s1542 + $0x6f0] sm:$0xff] %v1987
                  %v1989 = vld [vmem:[%s1541 + $0x18f8] sm:$0xff]
                  %1990 = vst [vmem:[%s1542 + $0x6f8] sm:$0xff] %v1989
                  %v1991 = vld [vmem:[%s1541 + $0x1900] sm:$0xff]
                  %1992 = vst [vmem:[%s1542 + $0x700] sm:$0xff] %v1991
                  %v1993 = vld [vmem:[%s1541 + $0x1908] sm:$0xff]
                  %1994 = vst [vmem:[%s1542 + $0x708] sm:$0xff] %v1993
                  %v1995 = vld [vmem:[%s1541 + $0x1910] sm:$0xff]
                  %1996 = vst [vmem:[%s1542 + $0x710] sm:$0xff] %v1995
                  %v1997 = vld [vmem:[%s1541 + $0x1918] sm:$0xff]
                  %1998 = vst [vmem:[%s1542 + $0x718] sm:$0xff] %v1997
                  %v1999 = vld [vmem:[%s1541 + $0x1920] sm:$0xff]
                  %2000 = vst [vmem:[%s1542 + $0x720] sm:$0xff] %v1999
                  %v2001 = vld [vmem:[%s1541 + $0x1928] sm:$0xff]
                  %2002 = vst [vmem:[%s1542 + $0x728] sm:$0xff] %v2001
                  %v2003 = vld [vmem:[%s1541 + $0x1930] sm:$0xff]
                  %2004 = vst [vmem:[%s1542 + $0x730] sm:$0xff] %v2003
                  %v2005 = vld [vmem:[%s1541 + $0x1938] sm:$0xff]
                  %2006 = vst [vmem:[%s1542 + $0x738] sm:$0xff] %v2005
                  %v2007 = vld [vmem:[%s1541 + $0x1940] sm:$0xff]
                  %2008 = vst [vmem:[%s1542 + $0x740] sm:$0xff] %v2007
                  %v2009 = vld [vmem:[%s1541 + $0x1948] sm:$0xff]
                  %2010 = vst [vmem:[%s1542 + $0x748] sm:$0xff] %v2009
                  %v2011 = vld [vmem:[%s1541 + $0x1950] sm:$0xff]
                  %2012 = vst [vmem:[%s1542 + $0x750] sm:$0xff] %v2011
                  %v2013 = vld [vmem:[%s1541 + $0x1958] sm:$0xff]
                  %2014 = vst [vmem:[%s1542 + $0x758] sm:$0xff] %v2013
                  %v2015 = vld [vmem:[%s1541 + $0x1960] sm:$0xff]
                  %2016 = vst [vmem:[%s1542 + $0x760] sm:$0xff] %v2015
                  %v2017 = vld [vmem:[%s1541 + $0x1968] sm:$0xff]
                  %2018 = vst [vmem:[%s1542 + $0x768] sm:$0xff] %v2017
                  %v2019 = vld [vmem:[%s1541 + $0x1970] sm:$0xff]
                  %2020 = vst [vmem:[%s1542 + $0x770] sm:$0xff] %v2019
                  %v2021 = vld [vmem:[%s1541 + $0x1978] sm:$0xff]
                  %2022 = vst [vmem:[%s1542 + $0x778] sm:$0xff] %v2021
                  %v2023 = vld [vmem:[%s1541 + $0x1e00] sm:$0xff]
                  %2024 = vst [vmem:[%s1542 + $0x780] sm:$0xff] %v2023
                  %v2025 = vld [vmem:[%s1541 + $0x1e08] sm:$0xff]
                  %2026 = vst [vmem:[%s1542 + $0x788] sm:$0xff] %v2025
                  %v2027 = vld [vmem:[%s1541 + $0x1e10] sm:$0xff]
                  %2028 = vst [vmem:[%s1542 + $0x790] sm:$0xff] %v2027
                  %v2029 = vld [vmem:[%s1541 + $0x1e18] sm:$0xff]
                  %2030 = vst [vmem:[%s1542 + $0x798] sm:$0xff] %v2029
                  %v2031 = vld [vmem:[%s1541 + $0x1e20] sm:$0xff]
                  %2032 = vst [vmem:[%s1542 + $0x7a0] sm:$0xff] %v2031
                  %v2033 = vld [vmem:[%s1541 + $0x1e28] sm:$0xff]
                  %2034 = vst [vmem:[%s1542 + $0x7a8] sm:$0xff] %v2033
                  %v2035 = vld [vmem:[%s1541 + $0x1e30] sm:$0xff]
                  %2036 = vst [vmem:[%s1542 + $0x7b0] sm:$0xff] %v2035
                  %v2037 = vld [vmem:[%s1541 + $0x1e38] sm:$0xff]
                  %2038 = vst [vmem:[%s1542 + $0x7b8] sm:$0xff] %v2037
                  %v2039 = vld [vmem:[%s1541 + $0x1e40] sm:$0xff]
                  %2040 = vst [vmem:[%s1542 + $0x7c0] sm:$0xff] %v2039
                  %v2041 = vld [vmem:[%s1541 + $0x1e48] sm:$0xff]
                  %2042 = vst [vmem:[%s1542 + $0x7c8] sm:$0xff] %v2041
                  %v2043 = vld [vmem:[%s1541 + $0x1e50] sm:$0xff]
                  %2044 = vst [vmem:[%s1542 + $0x7d0] sm:$0xff] %v2043
                  %v2045 = vld [vmem:[%s1541 + $0x1e58] sm:$0xff]
                  %2046 = vst [vmem:[%s1542 + $0x7d8] sm:$0xff] %v2045
                  %v2047 = vld [vmem:[%s1541 + $0x1e60] sm:$0xff]
                  %2048 = vst [vmem:[%s1542 + $0x7e0] sm:$0xff] %v2047
                  %v2049 = vld [vmem:[%s1541 + $0x1e68] sm:$0xff]
                  %2050 = vst [vmem:[%s1542 + $0x7e8] sm:$0xff] %v2049
                  %v2051 = vld [vmem:[%s1541 + $0x1e70] sm:$0xff]
                  %2052 = vst [vmem:[%s1542 + $0x7f0] sm:$0xff] %v2051
                  %v2053 = vld [vmem:[%s1541 + $0x1e78] sm:$0xff]
                  %2054 = vst [vmem:[%s1542 + $0x7f8] sm:$0xff] %v2053
                  %v2055 = vld [vmem:[%s1541 + $0x1e80] sm:$0xff]
                  %2056 = vst [vmem:[%s1542 + $0x800] sm:$0xff] %v2055
                  %v2057 = vld [vmem:[%s1541 + $0x1e88] sm:$0xff]
                  %2058 = vst [vmem:[%s1542 + $0x808] sm:$0xff] %v2057
                  %v2059 = vld [vmem:[%s1541 + $0x1e90] sm:$0xff]
                  %2060 = vst [vmem:[%s1542 + $0x810] sm:$0xff] %v2059
                  %v2061 = vld [vmem:[%s1541 + $0x1e98] sm:$0xff]
                  %2062 = vst [vmem:[%s1542 + $0x818] sm:$0xff] %v2061
                  %v2063 = vld [vmem:[%s1541 + $0x1ea0] sm:$0xff]
                  %2064 = vst [vmem:[%s1542 + $0x820] sm:$0xff] %v2063
                  %v2065 = vld [vmem:[%s1541 + $0x1ea8] sm:$0xff]
                  %2066 = vst [vmem:[%s1542 + $0x828] sm:$0xff] %v2065
                  %v2067 = vld [vmem:[%s1541 + $0x1eb0] sm:$0xff]
                  %2068 = vst [vmem:[%s1542 + $0x830] sm:$0xff] %v2067
                  %v2069 = vld [vmem:[%s1541 + $0x1eb8] sm:$0xff]
                  %2070 = vst [vmem:[%s1542 + $0x838] sm:$0xff] %v2069
                  %v2071 = vld [vmem:[%s1541 + $0x1ec0] sm:$0xff]
                  %2072 = vst [vmem:[%s1542 + $0x840] sm:$0xff] %v2071
                  %v2073 = vld [vmem:[%s1541 + $0x1ec8] sm:$0xff]
                  %2074 = vst [vmem:[%s1542 + $0x848] sm:$0xff] %v2073
                  %v2075 = vld [vmem:[%s1541 + $0x1ed0] sm:$0xff]
                  %2076 = vst [vmem:[%s1542 + $0x850] sm:$0xff] %v2075
                  %v2077 = vld [vmem:[%s1541 + $0x1ed8] sm:$0xff]
                  %2078 = vst [vmem:[%s1542 + $0x858] sm:$0xff] %v2077
                  %v2079 = vld [vmem:[%s1541 + $0x1ee0] sm:$0xff]
                  %2080 = vst [vmem:[%s1542 + $0x860] sm:$0xff] %v2079
                  %v2081 = vld [vmem:[%s1541 + $0x1ee8] sm:$0xff]
                  %2082 = vst [vmem:[%s1542 + $0x868] sm:$0xff] %v2081
                  %v2083 = vld [vmem:[%s1541 + $0x1ef0] sm:$0xff]
                  %2084 = vst [vmem:[%s1542 + $0x870] sm:$0xff] %v2083
                  %v2085 = vld [vmem:[%s1541 + $0x1ef8] sm:$0xff]
                  %2086 = vst [vmem:[%s1542 + $0x878] sm:$0xff] %v2085
                  %v2087 = vld [vmem:[%s1541 + $0x1f00] sm:$0xff]
                  %2088 = vst [vmem:[%s1542 + $0x880] sm:$0xff] %v2087
                  %v2089 = vld [vmem:[%s1541 + $0x1f08] sm:$0xff]
                  %2090 = vst [vmem:[%s1542 + $0x888] sm:$0xff] %v2089
                  %v2091 = vld [vmem:[%s1541 + $0x1f10] sm:$0xff]
                  %2092 = vst [vmem:[%s1542 + $0x890] sm:$0xff] %v2091
                  %v2093 = vld [vmem:[%s1541 + $0x1f18] sm:$0xff]
                  %2094 = vst [vmem:[%s1542 + $0x898] sm:$0xff] %v2093
                  %v2095 = vld [vmem:[%s1541 + $0x1f20] sm:$0xff]
                  %2096 = vst [vmem:[%s1542 + $0x8a0] sm:$0xff] %v2095
                  %v2097 = vld [vmem:[%s1541 + $0x1f28] sm:$0xff]
                  %2098 = vst [vmem:[%s1542 + $0x8a8] sm:$0xff] %v2097
                  %v2099 = vld [vmem:[%s1541 + $0x1f30] sm:$0xff]
                  %2100 = vst [vmem:[%s1542 + $0x8b0] sm:$0xff] %v2099
                  %v2101 = vld [vmem:[%s1541 + $0x1f38] sm:$0xff]
                  %2102 = vst [vmem:[%s1542 + $0x8b8] sm:$0xff] %v2101
                  %v2103 = vld [vmem:[%s1541 + $0x1f40] sm:$0xff]
                  %2104 = vst [vmem:[%s1542 + $0x8c0] sm:$0xff] %v2103
                  %v2105 = vld [vmem:[%s1541 + $0x1f48] sm:$0xff]
                  %2106 = vst [vmem:[%s1542 + $0x8c8] sm:$0xff] %v2105
                  %v2107 = vld [vmem:[%s1541 + $0x1f50] sm:$0xff]
                  %2108 = vst [vmem:[%s1542 + $0x8d0] sm:$0xff] %v2107
                  %v2109 = vld [vmem:[%s1541 + $0x1f58] sm:$0xff]
                  %2110 = vst [vmem:[%s1542 + $0x8d8] sm:$0xff] %v2109
                  %v2111 = vld [vmem:[%s1541 + $0x1f60] sm:$0xff]
                  %2112 = vst [vmem:[%s1542 + $0x8e0] sm:$0xff] %v2111
                  %v2113 = vld [vmem:[%s1541 + $0x1f68] sm:$0xff]
                  %2114 = vst [vmem:[%s1542 + $0x8e8] sm:$0xff] %v2113
                  %v2115 = vld [vmem:[%s1541 + $0x1f70] sm:$0xff]
                  %2116 = vst [vmem:[%s1542 + $0x8f0] sm:$0xff] %v2115
                  %v2117 = vld [vmem:[%s1541 + $0x1f78] sm:$0xff]
                  %2118 = vst [vmem:[%s1542 + $0x8f8] sm:$0xff] %v2117
                  %v2119 = vld [vmem:[%s1541 + $0x2400] sm:$0xff]
                  %2120 = vst [vmem:[%s1542 + $0x900] sm:$0xff] %v2119
                  %v2121 = vld [vmem:[%s1541 + $0x2408] sm:$0xff]
                  %2122 = vst [vmem:[%s1542 + $0x908] sm:$0xff] %v2121
                  %v2123 = vld [vmem:[%s1541 + $0x2410] sm:$0xff]
                  %2124 = vst [vmem:[%s1542 + $0x910] sm:$0xff] %v2123
                  %v2125 = vld [vmem:[%s1541 + $0x2418] sm:$0xff]
                  %2126 = vst [vmem:[%s1542 + $0x918] sm:$0xff] %v2125
                  %v2127 = vld [vmem:[%s1541 + $0x2420] sm:$0xff]
                  %2128 = vst [vmem:[%s1542 + $0x920] sm:$0xff] %v2127
                  %v2129 = vld [vmem:[%s1541 + $0x2428] sm:$0xff]
                  %2130 = vst [vmem:[%s1542 + $0x928] sm:$0xff] %v2129
                  %v2131 = vld [vmem:[%s1541 + $0x2430] sm:$0xff]
                  %2132 = vst [vmem:[%s1542 + $0x930] sm:$0xff] %v2131
                  %v2133 = vld [vmem:[%s1541 + $0x2438] sm:$0xff]
                  %2134 = vst [vmem:[%s1542 + $0x938] sm:$0xff] %v2133
                  %v2135 = vld [vmem:[%s1541 + $0x2440] sm:$0xff]
                  %2136 = vst [vmem:[%s1542 + $0x940] sm:$0xff] %v2135
                  %v2137 = vld [vmem:[%s1541 + $0x2448] sm:$0xff]
                  %2138 = vst [vmem:[%s1542 + $0x948] sm:$0xff] %v2137
                  %v2139 = vld [vmem:[%s1541 + $0x2450] sm:$0xff]
                  %2140 = vst [vmem:[%s1542 + $0x950] sm:$0xff] %v2139
                  %v2141 = vld [vmem:[%s1541 + $0x2458] sm:$0xff]
                  %2142 = vst [vmem:[%s1542 + $0x958] sm:$0xff] %v2141
                  %v2143 = vld [vmem:[%s1541 + $0x2460] sm:$0xff]
                  %2144 = vst [vmem:[%s1542 + $0x960] sm:$0xff] %v2143
                  %v2145 = vld [vmem:[%s1541 + $0x2468] sm:$0xff]
                  %2146 = vst [vmem:[%s1542 + $0x968] sm:$0xff] %v2145
                  %v2147 = vld [vmem:[%s1541 + $0x2470] sm:$0xff]
                  %2148 = vst [vmem:[%s1542 + $0x970] sm:$0xff] %v2147
                  %v2149 = vld [vmem:[%s1541 + $0x2478] sm:$0xff]
                  %2150 = vst [vmem:[%s1542 + $0x978] sm:$0xff] %v2149
                  %v2151 = vld [vmem:[%s1541 + $0x2480] sm:$0xff]
                  %2152 = vst [vmem:[%s1542 + $0x980] sm:$0xff] %v2151
                  %v2153 = vld [vmem:[%s1541 + $0x2488] sm:$0xff]
                  %2154 = vst [vmem:[%s1542 + $0x988] sm:$0xff] %v2153
                  %v2155 = vld [vmem:[%s1541 + $0x2490] sm:$0xff]
                  %2156 = vst [vmem:[%s1542 + $0x990] sm:$0xff] %v2155
                  %v2157 = vld [vmem:[%s1541 + $0x2498] sm:$0xff]
                  %2158 = vst [vmem:[%s1542 + $0x998] sm:$0xff] %v2157
                  %v2159 = vld [vmem:[%s1541 + $0x24a0] sm:$0xff]
                  %2160 = vst [vmem:[%s1542 + $0x9a0] sm:$0xff] %v2159
                  %v2161 = vld [vmem:[%s1541 + $0x24a8] sm:$0xff]
                  %2162 = vst [vmem:[%s1542 + $0x9a8] sm:$0xff] %v2161
                  %v2163 = vld [vmem:[%s1541 + $0x24b0] sm:$0xff]
                  %2164 = vst [vmem:[%s1542 + $0x9b0] sm:$0xff] %v2163
                  %v2165 = vld [vmem:[%s1541 + $0x24b8] sm:$0xff]
                  %2166 = vst [vmem:[%s1542 + $0x9b8] sm:$0xff] %v2165
                  %v2167 = vld [vmem:[%s1541 + $0x24c0] sm:$0xff]
                  %2168 = vst [vmem:[%s1542 + $0x9c0] sm:$0xff] %v2167
                  %v2169 = vld [vmem:[%s1541 + $0x24c8] sm:$0xff]
                  %2170 = vst [vmem:[%s1542 + $0x9c8] sm:$0xff] %v2169
                  %v2171 = vld [vmem:[%s1541 + $0x24d0] sm:$0xff]
                  %2172 = vst [vmem:[%s1542 + $0x9d0] sm:$0xff] %v2171
                  %v2173 = vld [vmem:[%s1541 + $0x24d8] sm:$0xff]
                  %2174 = vst [vmem:[%s1542 + $0x9d8] sm:$0xff] %v2173
                  %v2175 = vld [vmem:[%s1541 + $0x24e0] sm:$0xff]
                  %2176 = vst [vmem:[%s1542 + $0x9e0] sm:$0xff] %v2175
                  %v2177 = vld [vmem:[%s1541 + $0x24e8] sm:$0xff]
                  %2178 = vst [vmem:[%s1542 + $0x9e8] sm:$0xff] %v2177
                  %v2179 = vld [vmem:[%s1541 + $0x24f0] sm:$0xff]
                  %2180 = vst [vmem:[%s1542 + $0x9f0] sm:$0xff] %v2179
                  %v2181 = vld [vmem:[%s1541 + $0x24f8] sm:$0xff]
                  %2182 = vst [vmem:[%s1542 + $0x9f8] sm:$0xff] %v2181
                  %v2183 = vld [vmem:[%s1541 + $0x2500] sm:$0xff]
                  %2184 = vst [vmem:[%s1542 + $0xa00] sm:$0xff] %v2183
                  %v2185 = vld [vmem:[%s1541 + $0x2508] sm:$0xff]
                  %2186 = vst [vmem:[%s1542 + $0xa08] sm:$0xff] %v2185
                  %v2187 = vld [vmem:[%s1541 + $0x2510] sm:$0xff]
                  %2188 = vst [vmem:[%s1542 + $0xa10] sm:$0xff] %v2187
                  %v2189 = vld [vmem:[%s1541 + $0x2518] sm:$0xff]
                  %2190 = vst [vmem:[%s1542 + $0xa18] sm:$0xff] %v2189
                  %v2191 = vld [vmem:[%s1541 + $0x2520] sm:$0xff]
                  %2192 = vst [vmem:[%s1542 + $0xa20] sm:$0xff] %v2191
                  %v2193 = vld [vmem:[%s1541 + $0x2528] sm:$0xff]
                  %2194 = vst [vmem:[%s1542 + $0xa28] sm:$0xff] %v2193
                  %v2195 = vld [vmem:[%s1541 + $0x2530] sm:$0xff]
                  %2196 = vst [vmem:[%s1542 + $0xa30] sm:$0xff] %v2195
                  %v2197 = vld [vmem:[%s1541 + $0x2538] sm:$0xff]
                  %2198 = vst [vmem:[%s1542 + $0xa38] sm:$0xff] %v2197
                  %v2199 = vld [vmem:[%s1541 + $0x2540] sm:$0xff]
                  %2200 = vst [vmem:[%s1542 + $0xa40] sm:$0xff] %v2199
                  %v2201 = vld [vmem:[%s1541 + $0x2548] sm:$0xff]
                  %2202 = vst [vmem:[%s1542 + $0xa48] sm:$0xff] %v2201
                  %v2203 = vld [vmem:[%s1541 + $0x2550] sm:$0xff]
                  %2204 = vst [vmem:[%s1542 + $0xa50] sm:$0xff] %v2203
                  %v2205 = vld [vmem:[%s1541 + $0x2558] sm:$0xff]
                  %2206 = vst [vmem:[%s1542 + $0xa58] sm:$0xff] %v2205
                  %v2207 = vld [vmem:[%s1541 + $0x2560] sm:$0xff]
                  %2208 = vst [vmem:[%s1542 + $0xa60] sm:$0xff] %v2207
                  %v2209 = vld [vmem:[%s1541 + $0x2568] sm:$0xff]
                  %2210 = vst [vmem:[%s1542 + $0xa68] sm:$0xff] %v2209
                  %v2211 = vld [vmem:[%s1541 + $0x2570] sm:$0xff]
                  %2212 = vst [vmem:[%s1542 + $0xa70] sm:$0xff] %v2211
                  %v2213 = vld [vmem:[%s1541 + $0x2578] sm:$0xff]
                  %2214 = vst [vmem:[%s1542 + $0xa78] sm:$0xff] %v2213
                  %v2215 = vld [vmem:[%s1541 + $0x2a00] sm:$0xff]
                  %2216 = vst [vmem:[%s1542 + $0xa80] sm:$0xff] %v2215
                  %v2217 = vld [vmem:[%s1541 + $0x2a08] sm:$0xff]
                  %2218 = vst [vmem:[%s1542 + $0xa88] sm:$0xff] %v2217
                  %v2219 = vld [vmem:[%s1541 + $0x2a10] sm:$0xff]
                  %2220 = vst [vmem:[%s1542 + $0xa90] sm:$0xff] %v2219
                  %v2221 = vld [vmem:[%s1541 + $0x2a18] sm:$0xff]
                  %2222 = vst [vmem:[%s1542 + $0xa98] sm:$0xff] %v2221
                  %v2223 = vld [vmem:[%s1541 + $0x2a20] sm:$0xff]
                  %2224 = vst [vmem:[%s1542 + $0xaa0] sm:$0xff] %v2223
                  %v2225 = vld [vmem:[%s1541 + $0x2a28] sm:$0xff]
                  %2226 = vst [vmem:[%s1542 + $0xaa8] sm:$0xff] %v2225
                  %v2227 = vld [vmem:[%s1541 + $0x2a30] sm:$0xff]
                  %2228 = vst [vmem:[%s1542 + $0xab0] sm:$0xff] %v2227
                  %v2229 = vld [vmem:[%s1541 + $0x2a38] sm:$0xff]
                  %2230 = vst [vmem:[%s1542 + $0xab8] sm:$0xff] %v2229
                  %v2231 = vld [vmem:[%s1541 + $0x2a40] sm:$0xff]
                  %2232 = vst [vmem:[%s1542 + $0xac0] sm:$0xff] %v2231
                  %v2233 = vld [vmem:[%s1541 + $0x2a48] sm:$0xff]
                  %2234 = vst [vmem:[%s1542 + $0xac8] sm:$0xff] %v2233
                  %v2235 = vld [vmem:[%s1541 + $0x2a50] sm:$0xff]
                  %2236 = vst [vmem:[%s1542 + $0xad0] sm:$0xff] %v2235
                  %v2237 = vld [vmem:[%s1541 + $0x2a58] sm:$0xff]
                  %2238 = vst [vmem:[%s1542 + $0xad8] sm:$0xff] %v2237
                  %v2239 = vld [vmem:[%s1541 + $0x2a60] sm:$0xff]
                  %2240 = vst [vmem:[%s1542 + $0xae0] sm:$0xff] %v2239
                  %v2241 = vld [vmem:[%s1541 + $0x2a68] sm:$0xff]
                  %2242 = vst [vmem:[%s1542 + $0xae8] sm:$0xff] %v2241
                  %v2243 = vld [vmem:[%s1541 + $0x2a70] sm:$0xff]
                  %2244 = vst [vmem:[%s1542 + $0xaf0] sm:$0xff] %v2243
                  %v2245 = vld [vmem:[%s1541 + $0x2a78] sm:$0xff]
                  %2246 = vst [vmem:[%s1542 + $0xaf8] sm:$0xff] %v2245
                  %v2247 = vld [vmem:[%s1541 + $0x2a80] sm:$0xff]
                  %2248 = vst [vmem:[%s1542 + $0xb00] sm:$0xff] %v2247
                  %v2249 = vld [vmem:[%s1541 + $0x2a88] sm:$0xff]
                  %2250 = vst [vmem:[%s1542 + $0xb08] sm:$0xff] %v2249
                  %v2251 = vld [vmem:[%s1541 + $0x2a90] sm:$0xff]
                  %2252 = vst [vmem:[%s1542 + $0xb10] sm:$0xff] %v2251
                  %v2253 = vld [vmem:[%s1541 + $0x2a98] sm:$0xff]
                  %2254 = vst [vmem:[%s1542 + $0xb18] sm:$0xff] %v2253
                  %v2255 = vld [vmem:[%s1541 + $0x2aa0] sm:$0xff]
                  %2256 = vst [vmem:[%s1542 + $0xb20] sm:$0xff] %v2255
                  %v2257 = vld [vmem:[%s1541 + $0x2aa8] sm:$0xff]
                  %2258 = vst [vmem:[%s1542 + $0xb28] sm:$0xff] %v2257
                  %v2259 = vld [vmem:[%s1541 + $0x2ab0] sm:$0xff]
                  %2260 = vst [vmem:[%s1542 + $0xb30] sm:$0xff] %v2259
                  %v2261 = vld [vmem:[%s1541 + $0x2ab8] sm:$0xff]
                  %2262 = vst [vmem:[%s1542 + $0xb38] sm:$0xff] %v2261
                  %v2263 = vld [vmem:[%s1541 + $0x2ac0] sm:$0xff]
                  %2264 = vst [vmem:[%s1542 + $0xb40] sm:$0xff] %v2263
                  %v2265 = vld [vmem:[%s1541 + $0x2ac8] sm:$0xff]
                  %2266 = vst [vmem:[%s1542 + $0xb48] sm:$0xff] %v2265
                  %v2267 = vld [vmem:[%s1541 + $0x2ad0] sm:$0xff]
                  %2268 = vst [vmem:[%s1542 + $0xb50] sm:$0xff] %v2267
                  %v2269 = vld [vmem:[%s1541 + $0x2ad8] sm:$0xff]
                  %2270 = vst [vmem:[%s1542 + $0xb58] sm:$0xff] %v2269
                  %v2271 = vld [vmem:[%s1541 + $0x2ae0] sm:$0xff]
                  %2272 = vst [vmem:[%s1542 + $0xb60] sm:$0xff] %v2271
                  %v2273 = vld [vmem:[%s1541 + $0x2ae8] sm:$0xff]
                  %2274 = vst [vmem:[%s1542 + $0xb68] sm:$0xff] %v2273
                  %v2275 = vld [vmem:[%s1541 + $0x2af0] sm:$0xff]
                  %2276 = vst [vmem:[%s1542 + $0xb70] sm:$0xff] %v2275
                  %v2277 = vld [vmem:[%s1541 + $0x2af8] sm:$0xff]
                  %2278 = vst [vmem:[%s1542 + $0xb78] sm:$0xff] %v2277
                  %v2279 = vld [vmem:[%s1541 + $0x2b00] sm:$0xff]
                  %2280 = vst [vmem:[%s1542 + $0xb80] sm:$0xff] %v2279
                  %v2281 = vld [vmem:[%s1541 + $0x2b08] sm:$0xff]
                  %2282 = vst [vmem:[%s1542 + $0xb88] sm:$0xff] %v2281
                  %v2283 = vld [vmem:[%s1541 + $0x2b10] sm:$0xff]
                  %2284 = vst [vmem:[%s1542 + $0xb90] sm:$0xff] %v2283
                  %v2285 = vld [vmem:[%s1541 + $0x2b18] sm:$0xff]
                  %2286 = vst [vmem:[%s1542 + $0xb98] sm:$0xff] %v2285
                  %v2287 = vld [vmem:[%s1541 + $0x2b20] sm:$0xff]
                  %2288 = vst [vmem:[%s1542 + $0xba0] sm:$0xff] %v2287
                  %v2289 = vld [vmem:[%s1541 + $0x2b28] sm:$0xff]
                  %2290 = vst [vmem:[%s1542 + $0xba8] sm:$0xff] %v2289
                  %v2291 = vld [vmem:[%s1541 + $0x2b30] sm:$0xff]
                  %2292 = vst [vmem:[%s1542 + $0xbb0] sm:$0xff] %v2291
                  %v2293 = vld [vmem:[%s1541 + $0x2b38] sm:$0xff]
                  %2294 = vst [vmem:[%s1542 + $0xbb8] sm:$0xff] %v2293
                  %v2295 = vld [vmem:[%s1541 + $0x2b40] sm:$0xff]
                  %2296 = vst [vmem:[%s1542 + $0xbc0] sm:$0xff] %v2295
                  %v2297 = vld [vmem:[%s1541 + $0x2b48] sm:$0xff]
                  %2298 = vst [vmem:[%s1542 + $0xbc8] sm:$0xff] %v2297
                  %v2299 = vld [vmem:[%s1541 + $0x2b50] sm:$0xff]
                  %2300 = vst [vmem:[%s1542 + $0xbd0] sm:$0xff] %v2299
                  %v2301 = vld [vmem:[%s1541 + $0x2b58] sm:$0xff]
                  %2302 = vst [vmem:[%s1542 + $0xbd8] sm:$0xff] %v2301
                  %v2303 = vld [vmem:[%s1541 + $0x2b60] sm:$0xff]
                  %2304 = vst [vmem:[%s1542 + $0xbe0] sm:$0xff] %v2303
                  %v2305 = vld [vmem:[%s1541 + $0x2b68] sm:$0xff]
                  %2306 = vst [vmem:[%s1542 + $0xbe8] sm:$0xff] %v2305
                  %v2307 = vld [vmem:[%s1541 + $0x2b70] sm:$0xff]
                  %2308 = vst [vmem:[%s1542 + $0xbf0] sm:$0xff] %v2307
                  %v2309 = vld [vmem:[%s1541 + $0x2b78] sm:$0xff]
                  %2310 = vst [vmem:[%s1542 + $0xbf8] sm:$0xff] %v2309
                  %v2311 = vld [vmem:[%s1541 + $0x3000] sm:$0xff]
                  %2312 = vst [vmem:[%s1542 + $0xc00] sm:$0xff] %v2311
                  %v2313 = vld [vmem:[%s1541 + $0x3008] sm:$0xff]
                  %2314 = vst [vmem:[%s1542 + $0xc08] sm:$0xff] %v2313
                  %v2315 = vld [vmem:[%s1541 + $0x3010] sm:$0xff]
                  %2316 = vst [vmem:[%s1542 + $0xc10] sm:$0xff] %v2315
                  %v2317 = vld [vmem:[%s1541 + $0x3018] sm:$0xff]
                  %2318 = vst [vmem:[%s1542 + $0xc18] sm:$0xff] %v2317
                  %v2319 = vld [vmem:[%s1541 + $0x3020] sm:$0xff]
                  %2320 = vst [vmem:[%s1542 + $0xc20] sm:$0xff] %v2319
                  %v2321 = vld [vmem:[%s1541 + $0x3028] sm:$0xff]
                  %2322 = vst [vmem:[%s1542 + $0xc28] sm:$0xff] %v2321
                  %v2323 = vld [vmem:[%s1541 + $0x3030] sm:$0xff]
                  %2324 = vst [vmem:[%s1542 + $0xc30] sm:$0xff] %v2323
                  %v2325 = vld [vmem:[%s1541 + $0x3038] sm:$0xff]
                  %2326 = vst [vmem:[%s1542 + $0xc38] sm:$0xff] %v2325
                  %v2327 = vld [vmem:[%s1541 + $0x3040] sm:$0xff]
                  %2328 = vst [vmem:[%s1542 + $0xc40] sm:$0xff] %v2327
                  %v2329 = vld [vmem:[%s1541 + $0x3048] sm:$0xff]
                  %2330 = vst [vmem:[%s1542 + $0xc48] sm:$0xff] %v2329
                  %v2331 = vld [vmem:[%s1541 + $0x3050] sm:$0xff]
                  %2332 = vst [vmem:[%s1542 + $0xc50] sm:$0xff] %v2331
                  %v2333 = vld [vmem:[%s1541 + $0x3058] sm:$0xff]
                  %2334 = vst [vmem:[%s1542 + $0xc58] sm:$0xff] %v2333
                  %v2335 = vld [vmem:[%s1541 + $0x3060] sm:$0xff]
                  %2336 = vst [vmem:[%s1542 + $0xc60] sm:$0xff] %v2335
                  %v2337 = vld [vmem:[%s1541 + $0x3068] sm:$0xff]
                  %2338 = vst [vmem:[%s1542 + $0xc68] sm:$0xff] %v2337
                  %v2339 = vld [vmem:[%s1541 + $0x3070] sm:$0xff]
                  %2340 = vst [vmem:[%s1542 + $0xc70] sm:$0xff] %v2339
                  %v2341 = vld [vmem:[%s1541 + $0x3078] sm:$0xff]
                  %2342 = vst [vmem:[%s1542 + $0xc78] sm:$0xff] %v2341
                  %v2343 = vld [vmem:[%s1541 + $0x3080] sm:$0xff]
                  %2344 = vst [vmem:[%s1542 + $0xc80] sm:$0xff] %v2343
                  %v2345 = vld [vmem:[%s1541 + $0x3088] sm:$0xff]
                  %2346 = vst [vmem:[%s1542 + $0xc88] sm:$0xff] %v2345
                  %v2347 = vld [vmem:[%s1541 + $0x3090] sm:$0xff]
                  %2348 = vst [vmem:[%s1542 + $0xc90] sm:$0xff] %v2347
                  %v2349 = vld [vmem:[%s1541 + $0x3098] sm:$0xff]
                  %2350 = vst [vmem:[%s1542 + $0xc98] sm:$0xff] %v2349
                  %v2351 = vld [vmem:[%s1541 + $0x30a0] sm:$0xff]
                  %2352 = vst [vmem:[%s1542 + $0xca0] sm:$0xff] %v2351
                  %v2353 = vld [vmem:[%s1541 + $0x30a8] sm:$0xff]
                  %2354 = vst [vmem:[%s1542 + $0xca8] sm:$0xff] %v2353
                  %v2355 = vld [vmem:[%s1541 + $0x30b0] sm:$0xff]
                  %2356 = vst [vmem:[%s1542 + $0xcb0] sm:$0xff] %v2355
                  %v2357 = vld [vmem:[%s1541 + $0x30b8] sm:$0xff]
                  %2358 = vst [vmem:[%s1542 + $0xcb8] sm:$0xff] %v2357
                  %v2359 = vld [vmem:[%s1541 + $0x30c0] sm:$0xff]
                  %2360 = vst [vmem:[%s1542 + $0xcc0] sm:$0xff] %v2359
                  %v2361 = vld [vmem:[%s1541 + $0x30c8] sm:$0xff]
                  %2362 = vst [vmem:[%s1542 + $0xcc8] sm:$0xff] %v2361
                  %v2363 = vld [vmem:[%s1541 + $0x30d0] sm:$0xff]
                  %2364 = vst [vmem:[%s1542 + $0xcd0] sm:$0xff] %v2363
                  %v2365 = vld [vmem:[%s1541 + $0x30d8] sm:$0xff]
                  %2366 = vst [vmem:[%s1542 + $0xcd8] sm:$0xff] %v2365
                  %v2367 = vld [vmem:[%s1541 + $0x30e0] sm:$0xff]
                  %2368 = vst [vmem:[%s1542 + $0xce0] sm:$0xff] %v2367
                  %v2369 = vld [vmem:[%s1541 + $0x30e8] sm:$0xff]
                  %2370 = vst [vmem:[%s1542 + $0xce8] sm:$0xff] %v2369
                  %v2371 = vld [vmem:[%s1541 + $0x30f0] sm:$0xff]
                  %2372 = vst [vmem:[%s1542 + $0xcf0] sm:$0xff] %v2371
                  %v2373 = vld [vmem:[%s1541 + $0x30f8] sm:$0xff]
                  %2374 = vst [vmem:[%s1542 + $0xcf8] sm:$0xff] %v2373
                  %v2375 = vld [vmem:[%s1541 + $0x3100] sm:$0xff]
                  %2376 = vst [vmem:[%s1542 + $0xd00] sm:$0xff] %v2375
                  %v2377 = vld [vmem:[%s1541 + $0x3108] sm:$0xff]
                  %2378 = vst [vmem:[%s1542 + $0xd08] sm:$0xff] %v2377
                  %v2379 = vld [vmem:[%s1541 + $0x3110] sm:$0xff]
                  %2380 = vst [vmem:[%s1542 + $0xd10] sm:$0xff] %v2379
                  %v2381 = vld [vmem:[%s1541 + $0x3118] sm:$0xff]
                  %2382 = vst [vmem:[%s1542 + $0xd18] sm:$0xff] %v2381
                  %v2383 = vld [vmem:[%s1541 + $0x3120] sm:$0xff]
                  %2384 = vst [vmem:[%s1542 + $0xd20] sm:$0xff] %v2383
                  %v2385 = vld [vmem:[%s1541 + $0x3128] sm:$0xff]
                  %2386 = vst [vmem:[%s1542 + $0xd28] sm:$0xff] %v2385
                  %v2387 = vld [vmem:[%s1541 + $0x3130] sm:$0xff]
                  %2388 = vst [vmem:[%s1542 + $0xd30] sm:$0xff] %v2387
                  %v2389 = vld [vmem:[%s1541 + $0x3138] sm:$0xff]
                  %2390 = vst [vmem:[%s1542 + $0xd38] sm:$0xff] %v2389
                  %v2391 = vld [vmem:[%s1541 + $0x3140] sm:$0xff]
                  %2392 = vst [vmem:[%s1542 + $0xd40] sm:$0xff] %v2391
                  %v2393 = vld [vmem:[%s1541 + $0x3148] sm:$0xff]
                  %2394 = vst [vmem:[%s1542 + $0xd48] sm:$0xff] %v2393
                  %v2395 = vld [vmem:[%s1541 + $0x3150] sm:$0xff]
                  %2396 = vst [vmem:[%s1542 + $0xd50] sm:$0xff] %v2395
                  %v2397 = vld [vmem:[%s1541 + $0x3158] sm:$0xff]
                  %2398 = vst [vmem:[%s1542 + $0xd58] sm:$0xff] %v2397
                  %v2399 = vld [vmem:[%s1541 + $0x3160] sm:$0xff]
                  %2400 = vst [vmem:[%s1542 + $0xd60] sm:$0xff] %v2399
                  %v2401 = vld [vmem:[%s1541 + $0x3168] sm:$0xff]
                  %2402 = vst [vmem:[%s1542 + $0xd68] sm:$0xff] %v2401
                  %v2403 = vld [vmem:[%s1541 + $0x3170] sm:$0xff]
                  %2404 = vst [vmem:[%s1542 + $0xd70] sm:$0xff] %v2403
                  %v2405 = vld [vmem:[%s1541 + $0x3178] sm:$0xff]
                  %2406 = vst [vmem:[%s1542 + $0xd78] sm:$0xff] %v2405
                  %v2407 = vld [vmem:[%s1541 + $0x3600] sm:$0xff]
                  %2408 = vst [vmem:[%s1542 + $0xd80] sm:$0xff] %v2407
                  %v2409 = vld [vmem:[%s1541 + $0x3608] sm:$0xff]
                  %2410 = vst [vmem:[%s1542 + $0xd88] sm:$0xff] %v2409
                  %v2411 = vld [vmem:[%s1541 + $0x3610] sm:$0xff]
                  %2412 = vst [vmem:[%s1542 + $0xd90] sm:$0xff] %v2411
                  %v2413 = vld [vmem:[%s1541 + $0x3618] sm:$0xff]
                  %2414 = vst [vmem:[%s1542 + $0xd98] sm:$0xff] %v2413
                  %v2415 = vld [vmem:[%s1541 + $0x3620] sm:$0xff]
                  %2416 = vst [vmem:[%s1542 + $0xda0] sm:$0xff] %v2415
                  %v2417 = vld [vmem:[%s1541 + $0x3628] sm:$0xff]
                  %2418 = vst [vmem:[%s1542 + $0xda8] sm:$0xff] %v2417
                  %v2419 = vld [vmem:[%s1541 + $0x3630] sm:$0xff]
                  %2420 = vst [vmem:[%s1542 + $0xdb0] sm:$0xff] %v2419
                  %v2421 = vld [vmem:[%s1541 + $0x3638] sm:$0xff]
                  %2422 = vst [vmem:[%s1542 + $0xdb8] sm:$0xff] %v2421
                  %v2423 = vld [vmem:[%s1541 + $0x3640] sm:$0xff]
                  %2424 = vst [vmem:[%s1542 + $0xdc0] sm:$0xff] %v2423
                  %v2425 = vld [vmem:[%s1541 + $0x3648] sm:$0xff]
                  %2426 = vst [vmem:[%s1542 + $0xdc8] sm:$0xff] %v2425
                  %v2427 = vld [vmem:[%s1541 + $0x3650] sm:$0xff]
                  %2428 = vst [vmem:[%s1542 + $0xdd0] sm:$0xff] %v2427
                  %v2429 = vld [vmem:[%s1541 + $0x3658] sm:$0xff]
                  %2430 = vst [vmem:[%s1542 + $0xdd8] sm:$0xff] %v2429
                  %v2431 = vld [vmem:[%s1541 + $0x3660] sm:$0xff]
                  %2432 = vst [vmem:[%s1542 + $0xde0] sm:$0xff] %v2431
                  %v2433 = vld [vmem:[%s1541 + $0x3668] sm:$0xff]
                  %2434 = vst [vmem:[%s1542 + $0xde8] sm:$0xff] %v2433
                  %v2435 = vld [vmem:[%s1541 + $0x3670] sm:$0xff]
                  %2436 = vst [vmem:[%s1542 + $0xdf0] sm:$0xff] %v2435
                  %v2437 = vld [vmem:[%s1541 + $0x3678] sm:$0xff]
                  %2438 = vst [vmem:[%s1542 + $0xdf8] sm:$0xff] %v2437
                  %v2439 = vld [vmem:[%s1541 + $0x3680] sm:$0xff]
                  %2440 = vst [vmem:[%s1542 + $0xe00] sm:$0xff] %v2439
                  %v2441 = vld [vmem:[%s1541 + $0x3688] sm:$0xff]
                  %2442 = vst [vmem:[%s1542 + $0xe08] sm:$0xff] %v2441
                  %v2443 = vld [vmem:[%s1541 + $0x3690] sm:$0xff]
                  %2444 = vst [vmem:[%s1542 + $0xe10] sm:$0xff] %v2443
                  %v2445 = vld [vmem:[%s1541 + $0x3698] sm:$0xff]
                  %2446 = vst [vmem:[%s1542 + $0xe18] sm:$0xff] %v2445
                  %v2447 = vld [vmem:[%s1541 + $0x36a0] sm:$0xff]
                  %2448 = vst [vmem:[%s1542 + $0xe20] sm:$0xff] %v2447
                  %v2449 = vld [vmem:[%s1541 + $0x36a8] sm:$0xff]
                  %2450 = vst [vmem:[%s1542 + $0xe28] sm:$0xff] %v2449
                  %v2451 = vld [vmem:[%s1541 + $0x36b0] sm:$0xff]
                  %2452 = vst [vmem:[%s1542 + $0xe30] sm:$0xff] %v2451
                  %v2453 = vld [vmem:[%s1541 + $0x36b8] sm:$0xff]
                  %2454 = vst [vmem:[%s1542 + $0xe38] sm:$0xff] %v2453
                  %v2455 = vld [vmem:[%s1541 + $0x36c0] sm:$0xff]
                  %2456 = vst [vmem:[%s1542 + $0xe40] sm:$0xff] %v2455
                  %v2457 = vld [vmem:[%s1541 + $0x36c8] sm:$0xff]
                  %2458 = vst [vmem:[%s1542 + $0xe48] sm:$0xff] %v2457
                  %v2459 = vld [vmem:[%s1541 + $0x36d0] sm:$0xff]
                  %2460 = vst [vmem:[%s1542 + $0xe50] sm:$0xff] %v2459
                  %v2461 = vld [vmem:[%s1541 + $0x36d8] sm:$0xff]
                  %2462 = vst [vmem:[%s1542 + $0xe58] sm:$0xff] %v2461
                  %v2463 = vld [vmem:[%s1541 + $0x36e0] sm:$0xff]
                  %2464 = vst [vmem:[%s1542 + $0xe60] sm:$0xff] %v2463
                  %v2465 = vld [vmem:[%s1541 + $0x36e8] sm:$0xff]
                  %2466 = vst [vmem:[%s1542 + $0xe68] sm:$0xff] %v2465
                  %v2467 = vld [vmem:[%s1541 + $0x36f0] sm:$0xff]
                  %2468 = vst [vmem:[%s1542 + $0xe70] sm:$0xff] %v2467
                  %v2469 = vld [vmem:[%s1541 + $0x36f8] sm:$0xff]
                  %2470 = vst [vmem:[%s1542 + $0xe78] sm:$0xff] %v2469
                  %v2471 = vld [vmem:[%s1541 + $0x3700] sm:$0xff]
                  %2472 = vst [vmem:[%s1542 + $0xe80] sm:$0xff] %v2471
                  %v2473 = vld [vmem:[%s1541 + $0x3708] sm:$0xff]
                  %2474 = vst [vmem:[%s1542 + $0xe88] sm:$0xff] %v2473
                  %v2475 = vld [vmem:[%s1541 + $0x3710] sm:$0xff]
                  %2476 = vst [vmem:[%s1542 + $0xe90] sm:$0xff] %v2475
                  %v2477 = vld [vmem:[%s1541 + $0x3718] sm:$0xff]
                  %2478 = vst [vmem:[%s1542 + $0xe98] sm:$0xff] %v2477
                  %v2479 = vld [vmem:[%s1541 + $0x3720] sm:$0xff]
                  %2480 = vst [vmem:[%s1542 + $0xea0] sm:$0xff] %v2479
                  %v2481 = vld [vmem:[%s1541 + $0x3728] sm:$0xff]
                  %2482 = vst [vmem:[%s1542 + $0xea8] sm:$0xff] %v2481
                  %v2483 = vld [vmem:[%s1541 + $0x3730] sm:$0xff]
                  %2484 = vst [vmem:[%s1542 + $0xeb0] sm:$0xff] %v2483
                  %v2485 = vld [vmem:[%s1541 + $0x3738] sm:$0xff]
                  %2486 = vst [vmem:[%s1542 + $0xeb8] sm:$0xff] %v2485
                  %v2487 = vld [vmem:[%s1541 + $0x3740] sm:$0xff]
                  %2488 = vst [vmem:[%s1542 + $0xec0] sm:$0xff] %v2487
                  %v2489 = vld [vmem:[%s1541 + $0x3748] sm:$0xff]
                  %2490 = vst [vmem:[%s1542 + $0xec8] sm:$0xff] %v2489
                  %v2491 = vld [vmem:[%s1541 + $0x3750] sm:$0xff]
                  %2492 = vst [vmem:[%s1542 + $0xed0] sm:$0xff] %v2491
                  %v2493 = vld [vmem:[%s1541 + $0x3758] sm:$0xff]
                  %2494 = vst [vmem:[%s1542 + $0xed8] sm:$0xff] %v2493
                  %v2495 = vld [vmem:[%s1541 + $0x3760] sm:$0xff]
                  %2496 = vst [vmem:[%s1542 + $0xee0] sm:$0xff] %v2495
                  %v2497 = vld [vmem:[%s1541 + $0x3768] sm:$0xff]
                  %2498 = vst [vmem:[%s1542 + $0xee8] sm:$0xff] %v2497
                  %v2499 = vld [vmem:[%s1541 + $0x3770] sm:$0xff]
                  %2500 = vst [vmem:[%s1542 + $0xef0] sm:$0xff] %v2499
                  %v2501 = vld [vmem:[%s1541 + $0x3778] sm:$0xff]
                  %2502 = vst [vmem:[%s1542 + $0xef8] sm:$0xff] %v2501
                $region90: #{tudui_forward.1} parent=84 // loop_footer
                  %s1540 = sadd.s32 1, %s1536
                $region91: #{tudui_forward.1} parent=84 // loop_footer_branch
                  %1535 = sbr.rel target = $region87
                $region92: #{tudui_forward.1} parent=84 // loop_exit
                  _
              $region85: #{tudui_forward.1} parent=69 // pred_fallthru
                _
              // Predicated region
              $region93: #{tudui_forward.1} parent=69 // pred_check
                _
              $region94: #{tudui_forward.1} parent=69 // pred_check_branch
                %2504 = sbr.rel target = $region96
              $region95: #{tudui_forward.1} parent=69 // pred_region
                _
              $region96: #{tudui_forward.1} parent=69 // pred_fallthru
                _
            $region70: #{tudui_forward.1} parent=65 // pred_fallthru
              _
            // Predicated region
            $region71: #{tudui_forward.1} parent=65 // pred_check
              _
            $region72: #{tudui_forward.1} parent=65 // pred_check_branch
              %563 = sbr.rel target = $region74
            $region73: #{tudui_forward.1} parent=65 // pred_region
              loop: start=0, step=1, limit=1
              $region75: #{tudui_forward.1} parent=73 // loop_pre_header
                _
              $region76: #{tudui_forward.1} parent=73 // loop_header
                %s566 = sphi 0, %s570
                %p567 = scmp.ge.s32.totalorder %s566, 1
                %s571 = sphi %s557, %s557
                %s572 = sphi %s554, %s554
              $region77: #{tudui_forward.1} parent=73 // loop_header_branch
                %569 = sbr.rel (%p567) target = $region81
              $region78: #{tudui_forward.1} parent=73 // loop_body
                %v573 = vld [vmem:[%s571] sm:$0xff]
                %574 = vst [vmem:[%s572] sm:$0xff] %v573
                %v575 = vld [vmem:[%s571 + $0x8] sm:$0xff]
                %576 = vst [vmem:[%s572 + $0x8] sm:$0xff] %v575
                %v577 = vld [vmem:[%s571 + $0x10] sm:$0xff]
                %578 = vst [vmem:[%s572 + $0x10] sm:$0xff] %v577
                %v579 = vld [vmem:[%s571 + $0x18] sm:$0xff]
                %580 = vst [vmem:[%s572 + $0x18] sm:$0xff] %v579
                %v581 = vld [vmem:[%s571 + $0x20] sm:$0xff]
                %582 = vst [vmem:[%s572 + $0x20] sm:$0xff] %v581
                %v583 = vld [vmem:[%s571 + $0x28] sm:$0xff]
                %584 = vst [vmem:[%s572 + $0x28] sm:$0xff] %v583
                %v585 = vld [vmem:[%s571 + $0x30] sm:$0xff]
                %586 = vst [vmem:[%s572 + $0x30] sm:$0xff] %v585
                %v587 = vld [vmem:[%s571 + $0x38] sm:$0xff]
                %588 = vst [vmem:[%s572 + $0x38] sm:$0xff] %v587
                %v589 = vld [vmem:[%s571 + $0x40] sm:$0xff]
                %590 = vst [vmem:[%s572 + $0x40] sm:$0xff] %v589
                %v591 = vld [vmem:[%s571 + $0x48] sm:$0xff]
                %592 = vst [vmem:[%s572 + $0x48] sm:$0xff] %v591
                %v593 = vld [vmem:[%s571 + $0x50] sm:$0xff]
                %594 = vst [vmem:[%s572 + $0x50] sm:$0xff] %v593
                %v595 = vld [vmem:[%s571 + $0x58] sm:$0xff]
                %596 = vst [vmem:[%s572 + $0x58] sm:$0xff] %v595
                %v597 = vld [vmem:[%s571 + $0x60] sm:$0xff]
                %598 = vst [vmem:[%s572 + $0x60] sm:$0xff] %v597
                %v599 = vld [vmem:[%s571 + $0x68] sm:$0xff]
                %600 = vst [vmem:[%s572 + $0x68] sm:$0xff] %v599
                %v601 = vld [vmem:[%s571 + $0x70] sm:$0xff]
                %602 = vst [vmem:[%s572 + $0x70] sm:$0xff] %v601
                %v603 = vld [vmem:[%s571 + $0x78] sm:$0xff]
                %604 = vst [vmem:[%s572 + $0x78] sm:$0xff] %v603
                %v605 = vld [vmem:[%s571 + $0x80] sm:$0xff]
                %606 = vst [vmem:[%s572 + $0x80] sm:$0xff] %v605
                %v607 = vld [vmem:[%s571 + $0x88] sm:$0xff]
                %608 = vst [vmem:[%s572 + $0x88] sm:$0xff] %v607
                %v609 = vld [vmem:[%s571 + $0x90] sm:$0xff]
                %610 = vst [vmem:[%s572 + $0x90] sm:$0xff] %v609
                %v611 = vld [vmem:[%s571 + $0x98] sm:$0xff]
                %612 = vst [vmem:[%s572 + $0x98] sm:$0xff] %v611
                %v613 = vld [vmem:[%s571 + $0xa0] sm:$0xff]
                %614 = vst [vmem:[%s572 + $0xa0] sm:$0xff] %v613
                %v615 = vld [vmem:[%s571 + $0xa8] sm:$0xff]
                %616 = vst [vmem:[%s572 + $0xa8] sm:$0xff] %v615
                %v617 = vld [vmem:[%s571 + $0xb0] sm:$0xff]
                %618 = vst [vmem:[%s572 + $0xb0] sm:$0xff] %v617
                %v619 = vld [vmem:[%s571 + $0xb8] sm:$0xff]
                %620 = vst [vmem:[%s572 + $0xb8] sm:$0xff] %v619
                %v621 = vld [vmem:[%s571 + $0xc0] sm:$0xff]
                %622 = vst [vmem:[%s572 + $0xc0] sm:$0xff] %v621
                %v623 = vld [vmem:[%s571 + $0xc8] sm:$0xff]
                %624 = vst [vmem:[%s572 + $0xc8] sm:$0xff] %v623
                %v625 = vld [vmem:[%s571 + $0xd0] sm:$0xff]
                %626 = vst [vmem:[%s572 + $0xd0] sm:$0xff] %v625
                %v627 = vld [vmem:[%s571 + $0xd8] sm:$0xff]
                %628 = vst [vmem:[%s572 + $0xd8] sm:$0xff] %v627
                %v629 = vld [vmem:[%s571 + $0xe0] sm:$0xff]
                %630 = vst [vmem:[%s572 + $0xe0] sm:$0xff] %v629
                %v631 = vld [vmem:[%s571 + $0xe8] sm:$0xff]
                %632 = vst [vmem:[%s572 + $0xe8] sm:$0xff] %v631
                %v633 = vld [vmem:[%s571 + $0xf0] sm:$0xff]
                %634 = vst [vmem:[%s572 + $0xf0] sm:$0xff] %v633
                %v635 = vld [vmem:[%s571 + $0xf8] sm:$0xff]
                %636 = vst [vmem:[%s572 + $0xf8] sm:$0xff] %v635
                %v637 = vld [vmem:[%s571 + $0x100] sm:$0xff]
                %638 = vst [vmem:[%s572 + $0x100] sm:$0xff] %v637
                %v639 = vld [vmem:[%s571 + $0x108] sm:$0xff]
                %640 = vst [vmem:[%s572 + $0x108] sm:$0xff] %v639
                %v641 = vld [vmem:[%s571 + $0x110] sm:$0xff]
                %642 = vst [vmem:[%s572 + $0x110] sm:$0xff] %v641
                %v643 = vld [vmem:[%s571 + $0x118] sm:$0xff]
                %644 = vst [vmem:[%s572 + $0x118] sm:$0xff] %v643
                %v645 = vld [vmem:[%s571 + $0x120] sm:$0xff]
                %646 = vst [vmem:[%s572 + $0x120] sm:$0xff] %v645
                %v647 = vld [vmem:[%s571 + $0x128] sm:$0xff]
                %648 = vst [vmem:[%s572 + $0x128] sm:$0xff] %v647
                %v649 = vld [vmem:[%s571 + $0x130] sm:$0xff]
                %650 = vst [vmem:[%s572 + $0x130] sm:$0xff] %v649
                %v651 = vld [vmem:[%s571 + $0x138] sm:$0xff]
                %652 = vst [vmem:[%s572 + $0x138] sm:$0xff] %v651
                %v653 = vld [vmem:[%s571 + $0x140] sm:$0xff]
                %654 = vst [vmem:[%s572 + $0x140] sm:$0xff] %v653
                %v655 = vld [vmem:[%s571 + $0x148] sm:$0xff]
                %656 = vst [vmem:[%s572 + $0x148] sm:$0xff] %v655
                %v657 = vld [vmem:[%s571 + $0x150] sm:$0xff]
                %658 = vst [vmem:[%s572 + $0x150] sm:$0xff] %v657
                %v659 = vld [vmem:[%s571 + $0x158] sm:$0xff]
                %660 = vst [vmem:[%s572 + $0x158] sm:$0xff] %v659
                %v661 = vld [vmem:[%s571 + $0x160] sm:$0xff]
                %662 = vst [vmem:[%s572 + $0x160] sm:$0xff] %v661
                %v663 = vld [vmem:[%s571 + $0x168] sm:$0xff]
                %664 = vst [vmem:[%s572 + $0x168] sm:$0xff] %v663
                %v665 = vld [vmem:[%s571 + $0x170] sm:$0xff]
                %666 = vst [vmem:[%s572 + $0x170] sm:$0xff] %v665
                %v667 = vld [vmem:[%s571 + $0x178] sm:$0xff]
                %668 = vst [vmem:[%s572 + $0x178] sm:$0xff] %v667
                %v669 = vld [vmem:[%s571 + $0x600] sm:$0xff]
                %670 = vst [vmem:[%s572 + $0x180] sm:$0xff] %v669
                %v671 = vld [vmem:[%s571 + $0x608] sm:$0xff]
                %672 = vst [vmem:[%s572 + $0x188] sm:$0xff] %v671
                %v673 = vld [vmem:[%s571 + $0x610] sm:$0xff]
                %674 = vst [vmem:[%s572 + $0x190] sm:$0xff] %v673
                %v675 = vld [vmem:[%s571 + $0x618] sm:$0xff]
                %676 = vst [vmem:[%s572 + $0x198] sm:$0xff] %v675
                %v677 = vld [vmem:[%s571 + $0x620] sm:$0xff]
                %678 = vst [vmem:[%s572 + $0x1a0] sm:$0xff] %v677
                %v679 = vld [vmem:[%s571 + $0x628] sm:$0xff]
                %680 = vst [vmem:[%s572 + $0x1a8] sm:$0xff] %v679
                %v681 = vld [vmem:[%s571 + $0x630] sm:$0xff]
                %682 = vst [vmem:[%s572 + $0x1b0] sm:$0xff] %v681
                %v683 = vld [vmem:[%s571 + $0x638] sm:$0xff]
                %684 = vst [vmem:[%s572 + $0x1b8] sm:$0xff] %v683
                %v685 = vld [vmem:[%s571 + $0x640] sm:$0xff]
                %686 = vst [vmem:[%s572 + $0x1c0] sm:$0xff] %v685
                %v687 = vld [vmem:[%s571 + $0x648] sm:$0xff]
                %688 = vst [vmem:[%s572 + $0x1c8] sm:$0xff] %v687
                %v689 = vld [vmem:[%s571 + $0x650] sm:$0xff]
                %690 = vst [vmem:[%s572 + $0x1d0] sm:$0xff] %v689
                %v691 = vld [vmem:[%s571 + $0x658] sm:$0xff]
                %692 = vst [vmem:[%s572 + $0x1d8] sm:$0xff] %v691
                %v693 = vld [vmem:[%s571 + $0x660] sm:$0xff]
                %694 = vst [vmem:[%s572 + $0x1e0] sm:$0xff] %v693
                %v695 = vld [vmem:[%s571 + $0x668] sm:$0xff]
                %696 = vst [vmem:[%s572 + $0x1e8] sm:$0xff] %v695
                %v697 = vld [vmem:[%s571 + $0x670] sm:$0xff]
                %698 = vst [vmem:[%s572 + $0x1f0] sm:$0xff] %v697
                %v699 = vld [vmem:[%s571 + $0x678] sm:$0xff]
                %700 = vst [vmem:[%s572 + $0x1f8] sm:$0xff] %v699
                %v701 = vld [vmem:[%s571 + $0x680] sm:$0xff]
                %702 = vst [vmem:[%s572 + $0x200] sm:$0xff] %v701
                %v703 = vld [vmem:[%s571 + $0x688] sm:$0xff]
                %704 = vst [vmem:[%s572 + $0x208] sm:$0xff] %v703
                %v705 = vld [vmem:[%s571 + $0x690] sm:$0xff]
                %706 = vst [vmem:[%s572 + $0x210] sm:$0xff] %v705
                %v707 = vld [vmem:[%s571 + $0x698] sm:$0xff]
                %708 = vst [vmem:[%s572 + $0x218] sm:$0xff] %v707
                %v709 = vld [vmem:[%s571 + $0x6a0] sm:$0xff]
                %710 = vst [vmem:[%s572 + $0x220] sm:$0xff] %v709
                %v711 = vld [vmem:[%s571 + $0x6a8] sm:$0xff]
                %712 = vst [vmem:[%s572 + $0x228] sm:$0xff] %v711
                %v713 = vld [vmem:[%s571 + $0x6b0] sm:$0xff]
                %714 = vst [vmem:[%s572 + $0x230] sm:$0xff] %v713
                %v715 = vld [vmem:[%s571 + $0x6b8] sm:$0xff]
                %716 = vst [vmem:[%s572 + $0x238] sm:$0xff] %v715
                %v717 = vld [vmem:[%s571 + $0x6c0] sm:$0xff]
                %718 = vst [vmem:[%s572 + $0x240] sm:$0xff] %v717
                %v719 = vld [vmem:[%s571 + $0x6c8] sm:$0xff]
                %720 = vst [vmem:[%s572 + $0x248] sm:$0xff] %v719
                %v721 = vld [vmem:[%s571 + $0x6d0] sm:$0xff]
                %722 = vst [vmem:[%s572 + $0x250] sm:$0xff] %v721
                %v723 = vld [vmem:[%s571 + $0x6d8] sm:$0xff]
                %724 = vst [vmem:[%s572 + $0x258] sm:$0xff] %v723
                %v725 = vld [vmem:[%s571 + $0x6e0] sm:$0xff]
                %726 = vst [vmem:[%s572 + $0x260] sm:$0xff] %v725
                %v727 = vld [vmem:[%s571 + $0x6e8] sm:$0xff]
                %728 = vst [vmem:[%s572 + $0x268] sm:$0xff] %v727
                %v729 = vld [vmem:[%s571 + $0x6f0] sm:$0xff]
                %730 = vst [vmem:[%s572 + $0x270] sm:$0xff] %v729
                %v731 = vld [vmem:[%s571 + $0x6f8] sm:$0xff]
                %732 = vst [vmem:[%s572 + $0x278] sm:$0xff] %v731
                %v733 = vld [vmem:[%s571 + $0x700] sm:$0xff]
                %734 = vst [vmem:[%s572 + $0x280] sm:$0xff] %v733
                %v735 = vld [vmem:[%s571 + $0x708] sm:$0xff]
                %736 = vst [vmem:[%s572 + $0x288] sm:$0xff] %v735
                %v737 = vld [vmem:[%s571 + $0x710] sm:$0xff]
                %738 = vst [vmem:[%s572 + $0x290] sm:$0xff] %v737
                %v739 = vld [vmem:[%s571 + $0x718] sm:$0xff]
                %740 = vst [vmem:[%s572 + $0x298] sm:$0xff] %v739
                %v741 = vld [vmem:[%s571 + $0x720] sm:$0xff]
                %742 = vst [vmem:[%s572 + $0x2a0] sm:$0xff] %v741
                %v743 = vld [vmem:[%s571 + $0x728] sm:$0xff]
                %744 = vst [vmem:[%s572 + $0x2a8] sm:$0xff] %v743
                %v745 = vld [vmem:[%s571 + $0x730] sm:$0xff]
                %746 = vst [vmem:[%s572 + $0x2b0] sm:$0xff] %v745
                %v747 = vld [vmem:[%s571 + $0x738] sm:$0xff]
                %748 = vst [vmem:[%s572 + $0x2b8] sm:$0xff] %v747
                %v749 = vld [vmem:[%s571 + $0x740] sm:$0xff]
                %750 = vst [vmem:[%s572 + $0x2c0] sm:$0xff] %v749
                %v751 = vld [vmem:[%s571 + $0x748] sm:$0xff]
                %752 = vst [vmem:[%s572 + $0x2c8] sm:$0xff] %v751
                %v753 = vld [vmem:[%s571 + $0x750] sm:$0xff]
                %754 = vst [vmem:[%s572 + $0x2d0] sm:$0xff] %v753
                %v755 = vld [vmem:[%s571 + $0x758] sm:$0xff]
                %756 = vst [vmem:[%s572 + $0x2d8] sm:$0xff] %v755
                %v757 = vld [vmem:[%s571 + $0x760] sm:$0xff]
                %758 = vst [vmem:[%s572 + $0x2e0] sm:$0xff] %v757
                %v759 = vld [vmem:[%s571 + $0x768] sm:$0xff]
                %760 = vst [vmem:[%s572 + $0x2e8] sm:$0xff] %v759
                %v761 = vld [vmem:[%s571 + $0x770] sm:$0xff]
                %762 = vst [vmem:[%s572 + $0x2f0] sm:$0xff] %v761
                %v763 = vld [vmem:[%s571 + $0x778] sm:$0xff]
                %764 = vst [vmem:[%s572 + $0x2f8] sm:$0xff] %v763
                %v765 = vld [vmem:[%s571 + $0xc00] sm:$0xff]
                %766 = vst [vmem:[%s572 + $0x300] sm:$0xff] %v765
                %v767 = vld [vmem:[%s571 + $0xc08] sm:$0xff]
                %768 = vst [vmem:[%s572 + $0x308] sm:$0xff] %v767
                %v769 = vld [vmem:[%s571 + $0xc10] sm:$0xff]
                %770 = vst [vmem:[%s572 + $0x310] sm:$0xff] %v769
                %v771 = vld [vmem:[%s571 + $0xc18] sm:$0xff]
                %772 = vst [vmem:[%s572 + $0x318] sm:$0xff] %v771
                %v773 = vld [vmem:[%s571 + $0xc20] sm:$0xff]
                %774 = vst [vmem:[%s572 + $0x320] sm:$0xff] %v773
                %v775 = vld [vmem:[%s571 + $0xc28] sm:$0xff]
                %776 = vst [vmem:[%s572 + $0x328] sm:$0xff] %v775
                %v777 = vld [vmem:[%s571 + $0xc30] sm:$0xff]
                %778 = vst [vmem:[%s572 + $0x330] sm:$0xff] %v777
                %v779 = vld [vmem:[%s571 + $0xc38] sm:$0xff]
                %780 = vst [vmem:[%s572 + $0x338] sm:$0xff] %v779
                %v781 = vld [vmem:[%s571 + $0xc40] sm:$0xff]
                %782 = vst [vmem:[%s572 + $0x340] sm:$0xff] %v781
                %v783 = vld [vmem:[%s571 + $0xc48] sm:$0xff]
                %784 = vst [vmem:[%s572 + $0x348] sm:$0xff] %v783
                %v785 = vld [vmem:[%s571 + $0xc50] sm:$0xff]
                %786 = vst [vmem:[%s572 + $0x350] sm:$0xff] %v785
                %v787 = vld [vmem:[%s571 + $0xc58] sm:$0xff]
                %788 = vst [vmem:[%s572 + $0x358] sm:$0xff] %v787
                %v789 = vld [vmem:[%s571 + $0xc60] sm:$0xff]
                %790 = vst [vmem:[%s572 + $0x360] sm:$0xff] %v789
                %v791 = vld [vmem:[%s571 + $0xc68] sm:$0xff]
                %792 = vst [vmem:[%s572 + $0x368] sm:$0xff] %v791
                %v793 = vld [vmem:[%s571 + $0xc70] sm:$0xff]
                %794 = vst [vmem:[%s572 + $0x370] sm:$0xff] %v793
                %v795 = vld [vmem:[%s571 + $0xc78] sm:$0xff]
                %796 = vst [vmem:[%s572 + $0x378] sm:$0xff] %v795
                %v797 = vld [vmem:[%s571 + $0xc80] sm:$0xff]
                %798 = vst [vmem:[%s572 + $0x380] sm:$0xff] %v797
                %v799 = vld [vmem:[%s571 + $0xc88] sm:$0xff]
                %800 = vst [vmem:[%s572 + $0x388] sm:$0xff] %v799
                %v801 = vld [vmem:[%s571 + $0xc90] sm:$0xff]
                %802 = vst [vmem:[%s572 + $0x390] sm:$0xff] %v801
                %v803 = vld [vmem:[%s571 + $0xc98] sm:$0xff]
                %804 = vst [vmem:[%s572 + $0x398] sm:$0xff] %v803
                %v805 = vld [vmem:[%s571 + $0xca0] sm:$0xff]
                %806 = vst [vmem:[%s572 + $0x3a0] sm:$0xff] %v805
                %v807 = vld [vmem:[%s571 + $0xca8] sm:$0xff]
                %808 = vst [vmem:[%s572 + $0x3a8] sm:$0xff] %v807
                %v809 = vld [vmem:[%s571 + $0xcb0] sm:$0xff]
                %810 = vst [vmem:[%s572 + $0x3b0] sm:$0xff] %v809
                %v811 = vld [vmem:[%s571 + $0xcb8] sm:$0xff]
                %812 = vst [vmem:[%s572 + $0x3b8] sm:$0xff] %v811
                %v813 = vld [vmem:[%s571 + $0xcc0] sm:$0xff]
                %814 = vst [vmem:[%s572 + $0x3c0] sm:$0xff] %v813
                %v815 = vld [vmem:[%s571 + $0xcc8] sm:$0xff]
                %816 = vst [vmem:[%s572 + $0x3c8] sm:$0xff] %v815
                %v817 = vld [vmem:[%s571 + $0xcd0] sm:$0xff]
                %818 = vst [vmem:[%s572 + $0x3d0] sm:$0xff] %v817
                %v819 = vld [vmem:[%s571 + $0xcd8] sm:$0xff]
                %820 = vst [vmem:[%s572 + $0x3d8] sm:$0xff] %v819
                %v821 = vld [vmem:[%s571 + $0xce0] sm:$0xff]
                %822 = vst [vmem:[%s572 + $0x3e0] sm:$0xff] %v821
                %v823 = vld [vmem:[%s571 + $0xce8] sm:$0xff]
                %824 = vst [vmem:[%s572 + $0x3e8] sm:$0xff] %v823
                %v825 = vld [vmem:[%s571 + $0xcf0] sm:$0xff]
                %826 = vst [vmem:[%s572 + $0x3f0] sm:$0xff] %v825
                %v827 = vld [vmem:[%s571 + $0xcf8] sm:$0xff]
                %828 = vst [vmem:[%s572 + $0x3f8] sm:$0xff] %v827
                %v829 = vld [vmem:[%s571 + $0xd00] sm:$0xff]
                %830 = vst [vmem:[%s572 + $0x400] sm:$0xff] %v829
                %v831 = vld [vmem:[%s571 + $0xd08] sm:$0xff]
                %832 = vst [vmem:[%s572 + $0x408] sm:$0xff] %v831
                %v833 = vld [vmem:[%s571 + $0xd10] sm:$0xff]
                %834 = vst [vmem:[%s572 + $0x410] sm:$0xff] %v833
                %v835 = vld [vmem:[%s571 + $0xd18] sm:$0xff]
                %836 = vst [vmem:[%s572 + $0x418] sm:$0xff] %v835
                %v837 = vld [vmem:[%s571 + $0xd20] sm:$0xff]
                %838 = vst [vmem:[%s572 + $0x420] sm:$0xff] %v837
                %v839 = vld [vmem:[%s571 + $0xd28] sm:$0xff]
                %840 = vst [vmem:[%s572 + $0x428] sm:$0xff] %v839
                %v841 = vld [vmem:[%s571 + $0xd30] sm:$0xff]
                %842 = vst [vmem:[%s572 + $0x430] sm:$0xff] %v841
                %v843 = vld [vmem:[%s571 + $0xd38] sm:$0xff]
                %844 = vst [vmem:[%s572 + $0x438] sm:$0xff] %v843
                %v845 = vld [vmem:[%s571 + $0xd40] sm:$0xff]
                %846 = vst [vmem:[%s572 + $0x440] sm:$0xff] %v845
                %v847 = vld [vmem:[%s571 + $0xd48] sm:$0xff]
                %848 = vst [vmem:[%s572 + $0x448] sm:$0xff] %v847
                %v849 = vld [vmem:[%s571 + $0xd50] sm:$0xff]
                %850 = vst [vmem:[%s572 + $0x450] sm:$0xff] %v849
                %v851 = vld [vmem:[%s571 + $0xd58] sm:$0xff]
                %852 = vst [vmem:[%s572 + $0x458] sm:$0xff] %v851
                %v853 = vld [vmem:[%s571 + $0xd60] sm:$0xff]
                %854 = vst [vmem:[%s572 + $0x460] sm:$0xff] %v853
                %v855 = vld [vmem:[%s571 + $0xd68] sm:$0xff]
                %856 = vst [vmem:[%s572 + $0x468] sm:$0xff] %v855
                %v857 = vld [vmem:[%s571 + $0xd70] sm:$0xff]
                %858 = vst [vmem:[%s572 + $0x470] sm:$0xff] %v857
                %v859 = vld [vmem:[%s571 + $0xd78] sm:$0xff]
                %860 = vst [vmem:[%s572 + $0x478] sm:$0xff] %v859
                %v861 = vld [vmem:[%s571 + $0x1200] sm:$0xff]
                %862 = vst [vmem:[%s572 + $0x480] sm:$0xff] %v861
                %v863 = vld [vmem:[%s571 + $0x1208] sm:$0xff]
                %864 = vst [vmem:[%s572 + $0x488] sm:$0xff] %v863
                %v865 = vld [vmem:[%s571 + $0x1210] sm:$0xff]
                %866 = vst [vmem:[%s572 + $0x490] sm:$0xff] %v865
                %v867 = vld [vmem:[%s571 + $0x1218] sm:$0xff]
                %868 = vst [vmem:[%s572 + $0x498] sm:$0xff] %v867
                %v869 = vld [vmem:[%s571 + $0x1220] sm:$0xff]
                %870 = vst [vmem:[%s572 + $0x4a0] sm:$0xff] %v869
                %v871 = vld [vmem:[%s571 + $0x1228] sm:$0xff]
                %872 = vst [vmem:[%s572 + $0x4a8] sm:$0xff] %v871
                %v873 = vld [vmem:[%s571 + $0x1230] sm:$0xff]
                %874 = vst [vmem:[%s572 + $0x4b0] sm:$0xff] %v873
                %v875 = vld [vmem:[%s571 + $0x1238] sm:$0xff]
                %876 = vst [vmem:[%s572 + $0x4b8] sm:$0xff] %v875
                %v877 = vld [vmem:[%s571 + $0x1240] sm:$0xff]
                %878 = vst [vmem:[%s572 + $0x4c0] sm:$0xff] %v877
                %v879 = vld [vmem:[%s571 + $0x1248] sm:$0xff]
                %880 = vst [vmem:[%s572 + $0x4c8] sm:$0xff] %v879
                %v881 = vld [vmem:[%s571 + $0x1250] sm:$0xff]
                %882 = vst [vmem:[%s572 + $0x4d0] sm:$0xff] %v881
                %v883 = vld [vmem:[%s571 + $0x1258] sm:$0xff]
                %884 = vst [vmem:[%s572 + $0x4d8] sm:$0xff] %v883
                %v885 = vld [vmem:[%s571 + $0x1260] sm:$0xff]
                %886 = vst [vmem:[%s572 + $0x4e0] sm:$0xff] %v885
                %v887 = vld [vmem:[%s571 + $0x1268] sm:$0xff]
                %888 = vst [vmem:[%s572 + $0x4e8] sm:$0xff] %v887
                %v889 = vld [vmem:[%s571 + $0x1270] sm:$0xff]
                %890 = vst [vmem:[%s572 + $0x4f0] sm:$0xff] %v889
                %v891 = vld [vmem:[%s571 + $0x1278] sm:$0xff]
                %892 = vst [vmem:[%s572 + $0x4f8] sm:$0xff] %v891
                %v893 = vld [vmem:[%s571 + $0x1280] sm:$0xff]
                %894 = vst [vmem:[%s572 + $0x500] sm:$0xff] %v893
                %v895 = vld [vmem:[%s571 + $0x1288] sm:$0xff]
                %896 = vst [vmem:[%s572 + $0x508] sm:$0xff] %v895
                %v897 = vld [vmem:[%s571 + $0x1290] sm:$0xff]
                %898 = vst [vmem:[%s572 + $0x510] sm:$0xff] %v897
                %v899 = vld [vmem:[%s571 + $0x1298] sm:$0xff]
                %900 = vst [vmem:[%s572 + $0x518] sm:$0xff] %v899
                %v901 = vld [vmem:[%s571 + $0x12a0] sm:$0xff]
                %902 = vst [vmem:[%s572 + $0x520] sm:$0xff] %v901
                %v903 = vld [vmem:[%s571 + $0x12a8] sm:$0xff]
                %904 = vst [vmem:[%s572 + $0x528] sm:$0xff] %v903
                %v905 = vld [vmem:[%s571 + $0x12b0] sm:$0xff]
                %906 = vst [vmem:[%s572 + $0x530] sm:$0xff] %v905
                %v907 = vld [vmem:[%s571 + $0x12b8] sm:$0xff]
                %908 = vst [vmem:[%s572 + $0x538] sm:$0xff] %v907
                %v909 = vld [vmem:[%s571 + $0x12c0] sm:$0xff]
                %910 = vst [vmem:[%s572 + $0x540] sm:$0xff] %v909
                %v911 = vld [vmem:[%s571 + $0x12c8] sm:$0xff]
                %912 = vst [vmem:[%s572 + $0x548] sm:$0xff] %v911
                %v913 = vld [vmem:[%s571 + $0x12d0] sm:$0xff]
                %914 = vst [vmem:[%s572 + $0x550] sm:$0xff] %v913
                %v915 = vld [vmem:[%s571 + $0x12d8] sm:$0xff]
                %916 = vst [vmem:[%s572 + $0x558] sm:$0xff] %v915
                %v917 = vld [vmem:[%s571 + $0x12e0] sm:$0xff]
                %918 = vst [vmem:[%s572 + $0x560] sm:$0xff] %v917
                %v919 = vld [vmem:[%s571 + $0x12e8] sm:$0xff]
                %920 = vst [vmem:[%s572 + $0x568] sm:$0xff] %v919
                %v921 = vld [vmem:[%s571 + $0x12f0] sm:$0xff]
                %922 = vst [vmem:[%s572 + $0x570] sm:$0xff] %v921
                %v923 = vld [vmem:[%s571 + $0x12f8] sm:$0xff]
                %924 = vst [vmem:[%s572 + $0x578] sm:$0xff] %v923
                %v925 = vld [vmem:[%s571 + $0x1300] sm:$0xff]
                %926 = vst [vmem:[%s572 + $0x580] sm:$0xff] %v925
                %v927 = vld [vmem:[%s571 + $0x1308] sm:$0xff]
                %928 = vst [vmem:[%s572 + $0x588] sm:$0xff] %v927
                %v929 = vld [vmem:[%s571 + $0x1310] sm:$0xff]
                %930 = vst [vmem:[%s572 + $0x590] sm:$0xff] %v929
                %v931 = vld [vmem:[%s571 + $0x1318] sm:$0xff]
                %932 = vst [vmem:[%s572 + $0x598] sm:$0xff] %v931
                %v933 = vld [vmem:[%s571 + $0x1320] sm:$0xff]
                %934 = vst [vmem:[%s572 + $0x5a0] sm:$0xff] %v933
                %v935 = vld [vmem:[%s571 + $0x1328] sm:$0xff]
                %936 = vst [vmem:[%s572 + $0x5a8] sm:$0xff] %v935
                %v937 = vld [vmem:[%s571 + $0x1330] sm:$0xff]
                %938 = vst [vmem:[%s572 + $0x5b0] sm:$0xff] %v937
                %v939 = vld [vmem:[%s571 + $0x1338] sm:$0xff]
                %940 = vst [vmem:[%s572 + $0x5b8] sm:$0xff] %v939
                %v941 = vld [vmem:[%s571 + $0x1340] sm:$0xff]
                %942 = vst [vmem:[%s572 + $0x5c0] sm:$0xff] %v941
                %v943 = vld [vmem:[%s571 + $0x1348] sm:$0xff]
                %944 = vst [vmem:[%s572 + $0x5c8] sm:$0xff] %v943
                %v945 = vld [vmem:[%s571 + $0x1350] sm:$0xff]
                %946 = vst [vmem:[%s572 + $0x5d0] sm:$0xff] %v945
                %v947 = vld [vmem:[%s571 + $0x1358] sm:$0xff]
                %948 = vst [vmem:[%s572 + $0x5d8] sm:$0xff] %v947
                %v949 = vld [vmem:[%s571 + $0x1360] sm:$0xff]
                %950 = vst [vmem:[%s572 + $0x5e0] sm:$0xff] %v949
                %v951 = vld [vmem:[%s571 + $0x1368] sm:$0xff]
                %952 = vst [vmem:[%s572 + $0x5e8] sm:$0xff] %v951
                %v953 = vld [vmem:[%s571 + $0x1370] sm:$0xff]
                %954 = vst [vmem:[%s572 + $0x5f0] sm:$0xff] %v953
                %v955 = vld [vmem:[%s571 + $0x1378] sm:$0xff]
                %956 = vst [vmem:[%s572 + $0x5f8] sm:$0xff] %v955
                %v957 = vld [vmem:[%s571 + $0x1800] sm:$0xff]
                %958 = vst [vmem:[%s572 + $0x600] sm:$0xff] %v957
                %v959 = vld [vmem:[%s571 + $0x1808] sm:$0xff]
                %960 = vst [vmem:[%s572 + $0x608] sm:$0xff] %v959
                %v961 = vld [vmem:[%s571 + $0x1810] sm:$0xff]
                %962 = vst [vmem:[%s572 + $0x610] sm:$0xff] %v961
                %v963 = vld [vmem:[%s571 + $0x1818] sm:$0xff]
                %964 = vst [vmem:[%s572 + $0x618] sm:$0xff] %v963
                %v965 = vld [vmem:[%s571 + $0x1820] sm:$0xff]
                %966 = vst [vmem:[%s572 + $0x620] sm:$0xff] %v965
                %v967 = vld [vmem:[%s571 + $0x1828] sm:$0xff]
                %968 = vst [vmem:[%s572 + $0x628] sm:$0xff] %v967
                %v969 = vld [vmem:[%s571 + $0x1830] sm:$0xff]
                %970 = vst [vmem:[%s572 + $0x630] sm:$0xff] %v969
                %v971 = vld [vmem:[%s571 + $0x1838] sm:$0xff]
                %972 = vst [vmem:[%s572 + $0x638] sm:$0xff] %v971
                %v973 = vld [vmem:[%s571 + $0x1840] sm:$0xff]
                %974 = vst [vmem:[%s572 + $0x640] sm:$0xff] %v973
                %v975 = vld [vmem:[%s571 + $0x1848] sm:$0xff]
                %976 = vst [vmem:[%s572 + $0x648] sm:$0xff] %v975
                %v977 = vld [vmem:[%s571 + $0x1850] sm:$0xff]
                %978 = vst [vmem:[%s572 + $0x650] sm:$0xff] %v977
                %v979 = vld [vmem:[%s571 + $0x1858] sm:$0xff]
                %980 = vst [vmem:[%s572 + $0x658] sm:$0xff] %v979
                %v981 = vld [vmem:[%s571 + $0x1860] sm:$0xff]
                %982 = vst [vmem:[%s572 + $0x660] sm:$0xff] %v981
                %v983 = vld [vmem:[%s571 + $0x1868] sm:$0xff]
                %984 = vst [vmem:[%s572 + $0x668] sm:$0xff] %v983
                %v985 = vld [vmem:[%s571 + $0x1870] sm:$0xff]
                %986 = vst [vmem:[%s572 + $0x670] sm:$0xff] %v985
                %v987 = vld [vmem:[%s571 + $0x1878] sm:$0xff]
                %988 = vst [vmem:[%s572 + $0x678] sm:$0xff] %v987
                %v989 = vld [vmem:[%s571 + $0x1880] sm:$0xff]
                %990 = vst [vmem:[%s572 + $0x680] sm:$0xff] %v989
                %v991 = vld [vmem:[%s571 + $0x1888] sm:$0xff]
                %992 = vst [vmem:[%s572 + $0x688] sm:$0xff] %v991
                %v993 = vld [vmem:[%s571 + $0x1890] sm:$0xff]
                %994 = vst [vmem:[%s572 + $0x690] sm:$0xff] %v993
                %v995 = vld [vmem:[%s571 + $0x1898] sm:$0xff]
                %996 = vst [vmem:[%s572 + $0x698] sm:$0xff] %v995
                %v997 = vld [vmem:[%s571 + $0x18a0] sm:$0xff]
                %998 = vst [vmem:[%s572 + $0x6a0] sm:$0xff] %v997
                %v999 = vld [vmem:[%s571 + $0x18a8] sm:$0xff]
                %1000 = vst [vmem:[%s572 + $0x6a8] sm:$0xff] %v999
                %v1001 = vld [vmem:[%s571 + $0x18b0] sm:$0xff]
                %1002 = vst [vmem:[%s572 + $0x6b0] sm:$0xff] %v1001
                %v1003 = vld [vmem:[%s571 + $0x18b8] sm:$0xff]
                %1004 = vst [vmem:[%s572 + $0x6b8] sm:$0xff] %v1003
                %v1005 = vld [vmem:[%s571 + $0x18c0] sm:$0xff]
                %1006 = vst [vmem:[%s572 + $0x6c0] sm:$0xff] %v1005
                %v1007 = vld [vmem:[%s571 + $0x18c8] sm:$0xff]
                %1008 = vst [vmem:[%s572 + $0x6c8] sm:$0xff] %v1007
                %v1009 = vld [vmem:[%s571 + $0x18d0] sm:$0xff]
                %1010 = vst [vmem:[%s572 + $0x6d0] sm:$0xff] %v1009
                %v1011 = vld [vmem:[%s571 + $0x18d8] sm:$0xff]
                %1012 = vst [vmem:[%s572 + $0x6d8] sm:$0xff] %v1011
                %v1013 = vld [vmem:[%s571 + $0x18e0] sm:$0xff]
                %1014 = vst [vmem:[%s572 + $0x6e0] sm:$0xff] %v1013
                %v1015 = vld [vmem:[%s571 + $0x18e8] sm:$0xff]
                %1016 = vst [vmem:[%s572 + $0x6e8] sm:$0xff] %v1015
                %v1017 = vld [vmem:[%s571 + $0x18f0] sm:$0xff]
                %1018 = vst [vmem:[%s572 + $0x6f0] sm:$0xff] %v1017
                %v1019 = vld [vmem:[%s571 + $0x18f8] sm:$0xff]
                %1020 = vst [vmem:[%s572 + $0x6f8] sm:$0xff] %v1019
                %v1021 = vld [vmem:[%s571 + $0x1900] sm:$0xff]
                %1022 = vst [vmem:[%s572 + $0x700] sm:$0xff] %v1021
                %v1023 = vld [vmem:[%s571 + $0x1908] sm:$0xff]
                %1024 = vst [vmem:[%s572 + $0x708] sm:$0xff] %v1023
                %v1025 = vld [vmem:[%s571 + $0x1910] sm:$0xff]
                %1026 = vst [vmem:[%s572 + $0x710] sm:$0xff] %v1025
                %v1027 = vld [vmem:[%s571 + $0x1918] sm:$0xff]
                %1028 = vst [vmem:[%s572 + $0x718] sm:$0xff] %v1027
                %v1029 = vld [vmem:[%s571 + $0x1920] sm:$0xff]
                %1030 = vst [vmem:[%s572 + $0x720] sm:$0xff] %v1029
                %v1031 = vld [vmem:[%s571 + $0x1928] sm:$0xff]
                %1032 = vst [vmem:[%s572 + $0x728] sm:$0xff] %v1031
                %v1033 = vld [vmem:[%s571 + $0x1930] sm:$0xff]
                %1034 = vst [vmem:[%s572 + $0x730] sm:$0xff] %v1033
                %v1035 = vld [vmem:[%s571 + $0x1938] sm:$0xff]
                %1036 = vst [vmem:[%s572 + $0x738] sm:$0xff] %v1035
                %v1037 = vld [vmem:[%s571 + $0x1940] sm:$0xff]
                %1038 = vst [vmem:[%s572 + $0x740] sm:$0xff] %v1037
                %v1039 = vld [vmem:[%s571 + $0x1948] sm:$0xff]
                %1040 = vst [vmem:[%s572 + $0x748] sm:$0xff] %v1039
                %v1041 = vld [vmem:[%s571 + $0x1950] sm:$0xff]
                %1042 = vst [vmem:[%s572 + $0x750] sm:$0xff] %v1041
                %v1043 = vld [vmem:[%s571 + $0x1958] sm:$0xff]
                %1044 = vst [vmem:[%s572 + $0x758] sm:$0xff] %v1043
                %v1045 = vld [vmem:[%s571 + $0x1960] sm:$0xff]
                %1046 = vst [vmem:[%s572 + $0x760] sm:$0xff] %v1045
                %v1047 = vld [vmem:[%s571 + $0x1968] sm:$0xff]
                %1048 = vst [vmem:[%s572 + $0x768] sm:$0xff] %v1047
                %v1049 = vld [vmem:[%s571 + $0x1970] sm:$0xff]
                %1050 = vst [vmem:[%s572 + $0x770] sm:$0xff] %v1049
                %v1051 = vld [vmem:[%s571 + $0x1978] sm:$0xff]
                %1052 = vst [vmem:[%s572 + $0x778] sm:$0xff] %v1051
                %v1053 = vld [vmem:[%s571 + $0x1e00] sm:$0xff]
                %1054 = vst [vmem:[%s572 + $0x780] sm:$0xff] %v1053
                %v1055 = vld [vmem:[%s571 + $0x1e08] sm:$0xff]
                %1056 = vst [vmem:[%s572 + $0x788] sm:$0xff] %v1055
                %v1057 = vld [vmem:[%s571 + $0x1e10] sm:$0xff]
                %1058 = vst [vmem:[%s572 + $0x790] sm:$0xff] %v1057
                %v1059 = vld [vmem:[%s571 + $0x1e18] sm:$0xff]
                %1060 = vst [vmem:[%s572 + $0x798] sm:$0xff] %v1059
                %v1061 = vld [vmem:[%s571 + $0x1e20] sm:$0xff]
                %1062 = vst [vmem:[%s572 + $0x7a0] sm:$0xff] %v1061
                %v1063 = vld [vmem:[%s571 + $0x1e28] sm:$0xff]
                %1064 = vst [vmem:[%s572 + $0x7a8] sm:$0xff] %v1063
                %v1065 = vld [vmem:[%s571 + $0x1e30] sm:$0xff]
                %1066 = vst [vmem:[%s572 + $0x7b0] sm:$0xff] %v1065
                %v1067 = vld [vmem:[%s571 + $0x1e38] sm:$0xff]
                %1068 = vst [vmem:[%s572 + $0x7b8] sm:$0xff] %v1067
                %v1069 = vld [vmem:[%s571 + $0x1e40] sm:$0xff]
                %1070 = vst [vmem:[%s572 + $0x7c0] sm:$0xff] %v1069
                %v1071 = vld [vmem:[%s571 + $0x1e48] sm:$0xff]
                %1072 = vst [vmem:[%s572 + $0x7c8] sm:$0xff] %v1071
                %v1073 = vld [vmem:[%s571 + $0x1e50] sm:$0xff]
                %1074 = vst [vmem:[%s572 + $0x7d0] sm:$0xff] %v1073
                %v1075 = vld [vmem:[%s571 + $0x1e58] sm:$0xff]
                %1076 = vst [vmem:[%s572 + $0x7d8] sm:$0xff] %v1075
                %v1077 = vld [vmem:[%s571 + $0x1e60] sm:$0xff]
                %1078 = vst [vmem:[%s572 + $0x7e0] sm:$0xff] %v1077
                %v1079 = vld [vmem:[%s571 + $0x1e68] sm:$0xff]
                %1080 = vst [vmem:[%s572 + $0x7e8] sm:$0xff] %v1079
                %v1081 = vld [vmem:[%s571 + $0x1e70] sm:$0xff]
                %1082 = vst [vmem:[%s572 + $0x7f0] sm:$0xff] %v1081
                %v1083 = vld [vmem:[%s571 + $0x1e78] sm:$0xff]
                %1084 = vst [vmem:[%s572 + $0x7f8] sm:$0xff] %v1083
                %v1085 = vld [vmem:[%s571 + $0x1e80] sm:$0xff]
                %1086 = vst [vmem:[%s572 + $0x800] sm:$0xff] %v1085
                %v1087 = vld [vmem:[%s571 + $0x1e88] sm:$0xff]
                %1088 = vst [vmem:[%s572 + $0x808] sm:$0xff] %v1087
                %v1089 = vld [vmem:[%s571 + $0x1e90] sm:$0xff]
                %1090 = vst [vmem:[%s572 + $0x810] sm:$0xff] %v1089
                %v1091 = vld [vmem:[%s571 + $0x1e98] sm:$0xff]
                %1092 = vst [vmem:[%s572 + $0x818] sm:$0xff] %v1091
                %v1093 = vld [vmem:[%s571 + $0x1ea0] sm:$0xff]
                %1094 = vst [vmem:[%s572 + $0x820] sm:$0xff] %v1093
                %v1095 = vld [vmem:[%s571 + $0x1ea8] sm:$0xff]
                %1096 = vst [vmem:[%s572 + $0x828] sm:$0xff] %v1095
                %v1097 = vld [vmem:[%s571 + $0x1eb0] sm:$0xff]
                %1098 = vst [vmem:[%s572 + $0x830] sm:$0xff] %v1097
                %v1099 = vld [vmem:[%s571 + $0x1eb8] sm:$0xff]
                %1100 = vst [vmem:[%s572 + $0x838] sm:$0xff] %v1099
                %v1101 = vld [vmem:[%s571 + $0x1ec0] sm:$0xff]
                %1102 = vst [vmem:[%s572 + $0x840] sm:$0xff] %v1101
                %v1103 = vld [vmem:[%s571 + $0x1ec8] sm:$0xff]
                %1104 = vst [vmem:[%s572 + $0x848] sm:$0xff] %v1103
                %v1105 = vld [vmem:[%s571 + $0x1ed0] sm:$0xff]
                %1106 = vst [vmem:[%s572 + $0x850] sm:$0xff] %v1105
                %v1107 = vld [vmem:[%s571 + $0x1ed8] sm:$0xff]
                %1108 = vst [vmem:[%s572 + $0x858] sm:$0xff] %v1107
                %v1109 = vld [vmem:[%s571 + $0x1ee0] sm:$0xff]
                %1110 = vst [vmem:[%s572 + $0x860] sm:$0xff] %v1109
                %v1111 = vld [vmem:[%s571 + $0x1ee8] sm:$0xff]
                %1112 = vst [vmem:[%s572 + $0x868] sm:$0xff] %v1111
                %v1113 = vld [vmem:[%s571 + $0x1ef0] sm:$0xff]
                %1114 = vst [vmem:[%s572 + $0x870] sm:$0xff] %v1113
                %v1115 = vld [vmem:[%s571 + $0x1ef8] sm:$0xff]
                %1116 = vst [vmem:[%s572 + $0x878] sm:$0xff] %v1115
                %v1117 = vld [vmem:[%s571 + $0x1f00] sm:$0xff]
                %1118 = vst [vmem:[%s572 + $0x880] sm:$0xff] %v1117
                %v1119 = vld [vmem:[%s571 + $0x1f08] sm:$0xff]
                %1120 = vst [vmem:[%s572 + $0x888] sm:$0xff] %v1119
                %v1121 = vld [vmem:[%s571 + $0x1f10] sm:$0xff]
                %1122 = vst [vmem:[%s572 + $0x890] sm:$0xff] %v1121
                %v1123 = vld [vmem:[%s571 + $0x1f18] sm:$0xff]
                %1124 = vst [vmem:[%s572 + $0x898] sm:$0xff] %v1123
                %v1125 = vld [vmem:[%s571 + $0x1f20] sm:$0xff]
                %1126 = vst [vmem:[%s572 + $0x8a0] sm:$0xff] %v1125
                %v1127 = vld [vmem:[%s571 + $0x1f28] sm:$0xff]
                %1128 = vst [vmem:[%s572 + $0x8a8] sm:$0xff] %v1127
                %v1129 = vld [vmem:[%s571 + $0x1f30] sm:$0xff]
                %1130 = vst [vmem:[%s572 + $0x8b0] sm:$0xff] %v1129
                %v1131 = vld [vmem:[%s571 + $0x1f38] sm:$0xff]
                %1132 = vst [vmem:[%s572 + $0x8b8] sm:$0xff] %v1131
                %v1133 = vld [vmem:[%s571 + $0x1f40] sm:$0xff]
                %1134 = vst [vmem:[%s572 + $0x8c0] sm:$0xff] %v1133
                %v1135 = vld [vmem:[%s571 + $0x1f48] sm:$0xff]
                %1136 = vst [vmem:[%s572 + $0x8c8] sm:$0xff] %v1135
                %v1137 = vld [vmem:[%s571 + $0x1f50] sm:$0xff]
                %1138 = vst [vmem:[%s572 + $0x8d0] sm:$0xff] %v1137
                %v1139 = vld [vmem:[%s571 + $0x1f58] sm:$0xff]
                %1140 = vst [vmem:[%s572 + $0x8d8] sm:$0xff] %v1139
                %v1141 = vld [vmem:[%s571 + $0x1f60] sm:$0xff]
                %1142 = vst [vmem:[%s572 + $0x8e0] sm:$0xff] %v1141
                %v1143 = vld [vmem:[%s571 + $0x1f68] sm:$0xff]
                %1144 = vst [vmem:[%s572 + $0x8e8] sm:$0xff] %v1143
                %v1145 = vld [vmem:[%s571 + $0x1f70] sm:$0xff]
                %1146 = vst [vmem:[%s572 + $0x8f0] sm:$0xff] %v1145
                %v1147 = vld [vmem:[%s571 + $0x1f78] sm:$0xff]
                %1148 = vst [vmem:[%s572 + $0x8f8] sm:$0xff] %v1147
                %v1149 = vld [vmem:[%s571 + $0x2400] sm:$0xff]
                %1150 = vst [vmem:[%s572 + $0x900] sm:$0xff] %v1149
                %v1151 = vld [vmem:[%s571 + $0x2408] sm:$0xff]
                %1152 = vst [vmem:[%s572 + $0x908] sm:$0xff] %v1151
                %v1153 = vld [vmem:[%s571 + $0x2410] sm:$0xff]
                %1154 = vst [vmem:[%s572 + $0x910] sm:$0xff] %v1153
                %v1155 = vld [vmem:[%s571 + $0x2418] sm:$0xff]
                %1156 = vst [vmem:[%s572 + $0x918] sm:$0xff] %v1155
                %v1157 = vld [vmem:[%s571 + $0x2420] sm:$0xff]
                %1158 = vst [vmem:[%s572 + $0x920] sm:$0xff] %v1157
                %v1159 = vld [vmem:[%s571 + $0x2428] sm:$0xff]
                %1160 = vst [vmem:[%s572 + $0x928] sm:$0xff] %v1159
                %v1161 = vld [vmem:[%s571 + $0x2430] sm:$0xff]
                %1162 = vst [vmem:[%s572 + $0x930] sm:$0xff] %v1161
                %v1163 = vld [vmem:[%s571 + $0x2438] sm:$0xff]
                %1164 = vst [vmem:[%s572 + $0x938] sm:$0xff] %v1163
                %v1165 = vld [vmem:[%s571 + $0x2440] sm:$0xff]
                %1166 = vst [vmem:[%s572 + $0x940] sm:$0xff] %v1165
                %v1167 = vld [vmem:[%s571 + $0x2448] sm:$0xff]
                %1168 = vst [vmem:[%s572 + $0x948] sm:$0xff] %v1167
                %v1169 = vld [vmem:[%s571 + $0x2450] sm:$0xff]
                %1170 = vst [vmem:[%s572 + $0x950] sm:$0xff] %v1169
                %v1171 = vld [vmem:[%s571 + $0x2458] sm:$0xff]
                %1172 = vst [vmem:[%s572 + $0x958] sm:$0xff] %v1171
                %v1173 = vld [vmem:[%s571 + $0x2460] sm:$0xff]
                %1174 = vst [vmem:[%s572 + $0x960] sm:$0xff] %v1173
                %v1175 = vld [vmem:[%s571 + $0x2468] sm:$0xff]
                %1176 = vst [vmem:[%s572 + $0x968] sm:$0xff] %v1175
                %v1177 = vld [vmem:[%s571 + $0x2470] sm:$0xff]
                %1178 = vst [vmem:[%s572 + $0x970] sm:$0xff] %v1177
                %v1179 = vld [vmem:[%s571 + $0x2478] sm:$0xff]
                %1180 = vst [vmem:[%s572 + $0x978] sm:$0xff] %v1179
                %v1181 = vld [vmem:[%s571 + $0x2480] sm:$0xff]
                %1182 = vst [vmem:[%s572 + $0x980] sm:$0xff] %v1181
                %v1183 = vld [vmem:[%s571 + $0x2488] sm:$0xff]
                %1184 = vst [vmem:[%s572 + $0x988] sm:$0xff] %v1183
                %v1185 = vld [vmem:[%s571 + $0x2490] sm:$0xff]
                %1186 = vst [vmem:[%s572 + $0x990] sm:$0xff] %v1185
                %v1187 = vld [vmem:[%s571 + $0x2498] sm:$0xff]
                %1188 = vst [vmem:[%s572 + $0x998] sm:$0xff] %v1187
                %v1189 = vld [vmem:[%s571 + $0x24a0] sm:$0xff]
                %1190 = vst [vmem:[%s572 + $0x9a0] sm:$0xff] %v1189
                %v1191 = vld [vmem:[%s571 + $0x24a8] sm:$0xff]
                %1192 = vst [vmem:[%s572 + $0x9a8] sm:$0xff] %v1191
                %v1193 = vld [vmem:[%s571 + $0x24b0] sm:$0xff]
                %1194 = vst [vmem:[%s572 + $0x9b0] sm:$0xff] %v1193
                %v1195 = vld [vmem:[%s571 + $0x24b8] sm:$0xff]
                %1196 = vst [vmem:[%s572 + $0x9b8] sm:$0xff] %v1195
                %v1197 = vld [vmem:[%s571 + $0x24c0] sm:$0xff]
                %1198 = vst [vmem:[%s572 + $0x9c0] sm:$0xff] %v1197
                %v1199 = vld [vmem:[%s571 + $0x24c8] sm:$0xff]
                %1200 = vst [vmem:[%s572 + $0x9c8] sm:$0xff] %v1199
                %v1201 = vld [vmem:[%s571 + $0x24d0] sm:$0xff]
                %1202 = vst [vmem:[%s572 + $0x9d0] sm:$0xff] %v1201
                %v1203 = vld [vmem:[%s571 + $0x24d8] sm:$0xff]
                %1204 = vst [vmem:[%s572 + $0x9d8] sm:$0xff] %v1203
                %v1205 = vld [vmem:[%s571 + $0x24e0] sm:$0xff]
                %1206 = vst [vmem:[%s572 + $0x9e0] sm:$0xff] %v1205
                %v1207 = vld [vmem:[%s571 + $0x24e8] sm:$0xff]
                %1208 = vst [vmem:[%s572 + $0x9e8] sm:$0xff] %v1207
                %v1209 = vld [vmem:[%s571 + $0x24f0] sm:$0xff]
                %1210 = vst [vmem:[%s572 + $0x9f0] sm:$0xff] %v1209
                %v1211 = vld [vmem:[%s571 + $0x24f8] sm:$0xff]
                %1212 = vst [vmem:[%s572 + $0x9f8] sm:$0xff] %v1211
                %v1213 = vld [vmem:[%s571 + $0x2500] sm:$0xff]
                %1214 = vst [vmem:[%s572 + $0xa00] sm:$0xff] %v1213
                %v1215 = vld [vmem:[%s571 + $0x2508] sm:$0xff]
                %1216 = vst [vmem:[%s572 + $0xa08] sm:$0xff] %v1215
                %v1217 = vld [vmem:[%s571 + $0x2510] sm:$0xff]
                %1218 = vst [vmem:[%s572 + $0xa10] sm:$0xff] %v1217
                %v1219 = vld [vmem:[%s571 + $0x2518] sm:$0xff]
                %1220 = vst [vmem:[%s572 + $0xa18] sm:$0xff] %v1219
                %v1221 = vld [vmem:[%s571 + $0x2520] sm:$0xff]
                %1222 = vst [vmem:[%s572 + $0xa20] sm:$0xff] %v1221
                %v1223 = vld [vmem:[%s571 + $0x2528] sm:$0xff]
                %1224 = vst [vmem:[%s572 + $0xa28] sm:$0xff] %v1223
                %v1225 = vld [vmem:[%s571 + $0x2530] sm:$0xff]
                %1226 = vst [vmem:[%s572 + $0xa30] sm:$0xff] %v1225
                %v1227 = vld [vmem:[%s571 + $0x2538] sm:$0xff]
                %1228 = vst [vmem:[%s572 + $0xa38] sm:$0xff] %v1227
                %v1229 = vld [vmem:[%s571 + $0x2540] sm:$0xff]
                %1230 = vst [vmem:[%s572 + $0xa40] sm:$0xff] %v1229
                %v1231 = vld [vmem:[%s571 + $0x2548] sm:$0xff]
                %1232 = vst [vmem:[%s572 + $0xa48] sm:$0xff] %v1231
                %v1233 = vld [vmem:[%s571 + $0x2550] sm:$0xff]
                %1234 = vst [vmem:[%s572 + $0xa50] sm:$0xff] %v1233
                %v1235 = vld [vmem:[%s571 + $0x2558] sm:$0xff]
                %1236 = vst [vmem:[%s572 + $0xa58] sm:$0xff] %v1235
                %v1237 = vld [vmem:[%s571 + $0x2560] sm:$0xff]
                %1238 = vst [vmem:[%s572 + $0xa60] sm:$0xff] %v1237
                %v1239 = vld [vmem:[%s571 + $0x2568] sm:$0xff]
                %1240 = vst [vmem:[%s572 + $0xa68] sm:$0xff] %v1239
                %v1241 = vld [vmem:[%s571 + $0x2570] sm:$0xff]
                %1242 = vst [vmem:[%s572 + $0xa70] sm:$0xff] %v1241
                %v1243 = vld [vmem:[%s571 + $0x2578] sm:$0xff]
                %1244 = vst [vmem:[%s572 + $0xa78] sm:$0xff] %v1243
                %v1245 = vld [vmem:[%s571 + $0x2a00] sm:$0xff]
                %1246 = vst [vmem:[%s572 + $0xa80] sm:$0xff] %v1245
                %v1247 = vld [vmem:[%s571 + $0x2a08] sm:$0xff]
                %1248 = vst [vmem:[%s572 + $0xa88] sm:$0xff] %v1247
                %v1249 = vld [vmem:[%s571 + $0x2a10] sm:$0xff]
                %1250 = vst [vmem:[%s572 + $0xa90] sm:$0xff] %v1249
                %v1251 = vld [vmem:[%s571 + $0x2a18] sm:$0xff]
                %1252 = vst [vmem:[%s572 + $0xa98] sm:$0xff] %v1251
                %v1253 = vld [vmem:[%s571 + $0x2a20] sm:$0xff]
                %1254 = vst [vmem:[%s572 + $0xaa0] sm:$0xff] %v1253
                %v1255 = vld [vmem:[%s571 + $0x2a28] sm:$0xff]
                %1256 = vst [vmem:[%s572 + $0xaa8] sm:$0xff] %v1255
                %v1257 = vld [vmem:[%s571 + $0x2a30] sm:$0xff]
                %1258 = vst [vmem:[%s572 + $0xab0] sm:$0xff] %v1257
                %v1259 = vld [vmem:[%s571 + $0x2a38] sm:$0xff]
                %1260 = vst [vmem:[%s572 + $0xab8] sm:$0xff] %v1259
                %v1261 = vld [vmem:[%s571 + $0x2a40] sm:$0xff]
                %1262 = vst [vmem:[%s572 + $0xac0] sm:$0xff] %v1261
                %v1263 = vld [vmem:[%s571 + $0x2a48] sm:$0xff]
                %1264 = vst [vmem:[%s572 + $0xac8] sm:$0xff] %v1263
                %v1265 = vld [vmem:[%s571 + $0x2a50] sm:$0xff]
                %1266 = vst [vmem:[%s572 + $0xad0] sm:$0xff] %v1265
                %v1267 = vld [vmem:[%s571 + $0x2a58] sm:$0xff]
                %1268 = vst [vmem:[%s572 + $0xad8] sm:$0xff] %v1267
                %v1269 = vld [vmem:[%s571 + $0x2a60] sm:$0xff]
                %1270 = vst [vmem:[%s572 + $0xae0] sm:$0xff] %v1269
                %v1271 = vld [vmem:[%s571 + $0x2a68] sm:$0xff]
                %1272 = vst [vmem:[%s572 + $0xae8] sm:$0xff] %v1271
                %v1273 = vld [vmem:[%s571 + $0x2a70] sm:$0xff]
                %1274 = vst [vmem:[%s572 + $0xaf0] sm:$0xff] %v1273
                %v1275 = vld [vmem:[%s571 + $0x2a78] sm:$0xff]
                %1276 = vst [vmem:[%s572 + $0xaf8] sm:$0xff] %v1275
                %v1277 = vld [vmem:[%s571 + $0x2a80] sm:$0xff]
                %1278 = vst [vmem:[%s572 + $0xb00] sm:$0xff] %v1277
                %v1279 = vld [vmem:[%s571 + $0x2a88] sm:$0xff]
                %1280 = vst [vmem:[%s572 + $0xb08] sm:$0xff] %v1279
                %v1281 = vld [vmem:[%s571 + $0x2a90] sm:$0xff]
                %1282 = vst [vmem:[%s572 + $0xb10] sm:$0xff] %v1281
                %v1283 = vld [vmem:[%s571 + $0x2a98] sm:$0xff]
                %1284 = vst [vmem:[%s572 + $0xb18] sm:$0xff] %v1283
                %v1285 = vld [vmem:[%s571 + $0x2aa0] sm:$0xff]
                %1286 = vst [vmem:[%s572 + $0xb20] sm:$0xff] %v1285
                %v1287 = vld [vmem:[%s571 + $0x2aa8] sm:$0xff]
                %1288 = vst [vmem:[%s572 + $0xb28] sm:$0xff] %v1287
                %v1289 = vld [vmem:[%s571 + $0x2ab0] sm:$0xff]
                %1290 = vst [vmem:[%s572 + $0xb30] sm:$0xff] %v1289
                %v1291 = vld [vmem:[%s571 + $0x2ab8] sm:$0xff]
                %1292 = vst [vmem:[%s572 + $0xb38] sm:$0xff] %v1291
                %v1293 = vld [vmem:[%s571 + $0x2ac0] sm:$0xff]
                %1294 = vst [vmem:[%s572 + $0xb40] sm:$0xff] %v1293
                %v1295 = vld [vmem:[%s571 + $0x2ac8] sm:$0xff]
                %1296 = vst [vmem:[%s572 + $0xb48] sm:$0xff] %v1295
                %v1297 = vld [vmem:[%s571 + $0x2ad0] sm:$0xff]
                %1298 = vst [vmem:[%s572 + $0xb50] sm:$0xff] %v1297
                %v1299 = vld [vmem:[%s571 + $0x2ad8] sm:$0xff]
                %1300 = vst [vmem:[%s572 + $0xb58] sm:$0xff] %v1299
                %v1301 = vld [vmem:[%s571 + $0x2ae0] sm:$0xff]
                %1302 = vst [vmem:[%s572 + $0xb60] sm:$0xff] %v1301
                %v1303 = vld [vmem:[%s571 + $0x2ae8] sm:$0xff]
                %1304 = vst [vmem:[%s572 + $0xb68] sm:$0xff] %v1303
                %v1305 = vld [vmem:[%s571 + $0x2af0] sm:$0xff]
                %1306 = vst [vmem:[%s572 + $0xb70] sm:$0xff] %v1305
                %v1307 = vld [vmem:[%s571 + $0x2af8] sm:$0xff]
                %1308 = vst [vmem:[%s572 + $0xb78] sm:$0xff] %v1307
                %v1309 = vld [vmem:[%s571 + $0x2b00] sm:$0xff]
                %1310 = vst [vmem:[%s572 + $0xb80] sm:$0xff] %v1309
                %v1311 = vld [vmem:[%s571 + $0x2b08] sm:$0xff]
                %1312 = vst [vmem:[%s572 + $0xb88] sm:$0xff] %v1311
                %v1313 = vld [vmem:[%s571 + $0x2b10] sm:$0xff]
                %1314 = vst [vmem:[%s572 + $0xb90] sm:$0xff] %v1313
                %v1315 = vld [vmem:[%s571 + $0x2b18] sm:$0xff]
                %1316 = vst [vmem:[%s572 + $0xb98] sm:$0xff] %v1315
                %v1317 = vld [vmem:[%s571 + $0x2b20] sm:$0xff]
                %1318 = vst [vmem:[%s572 + $0xba0] sm:$0xff] %v1317
                %v1319 = vld [vmem:[%s571 + $0x2b28] sm:$0xff]
                %1320 = vst [vmem:[%s572 + $0xba8] sm:$0xff] %v1319
                %v1321 = vld [vmem:[%s571 + $0x2b30] sm:$0xff]
                %1322 = vst [vmem:[%s572 + $0xbb0] sm:$0xff] %v1321
                %v1323 = vld [vmem:[%s571 + $0x2b38] sm:$0xff]
                %1324 = vst [vmem:[%s572 + $0xbb8] sm:$0xff] %v1323
                %v1325 = vld [vmem:[%s571 + $0x2b40] sm:$0xff]
                %1326 = vst [vmem:[%s572 + $0xbc0] sm:$0xff] %v1325
                %v1327 = vld [vmem:[%s571 + $0x2b48] sm:$0xff]
                %1328 = vst [vmem:[%s572 + $0xbc8] sm:$0xff] %v1327
                %v1329 = vld [vmem:[%s571 + $0x2b50] sm:$0xff]
                %1330 = vst [vmem:[%s572 + $0xbd0] sm:$0xff] %v1329
                %v1331 = vld [vmem:[%s571 + $0x2b58] sm:$0xff]
                %1332 = vst [vmem:[%s572 + $0xbd8] sm:$0xff] %v1331
                %v1333 = vld [vmem:[%s571 + $0x2b60] sm:$0xff]
                %1334 = vst [vmem:[%s572 + $0xbe0] sm:$0xff] %v1333
                %v1335 = vld [vmem:[%s571 + $0x2b68] sm:$0xff]
                %1336 = vst [vmem:[%s572 + $0xbe8] sm:$0xff] %v1335
                %v1337 = vld [vmem:[%s571 + $0x2b70] sm:$0xff]
                %1338 = vst [vmem:[%s572 + $0xbf0] sm:$0xff] %v1337
                %v1339 = vld [vmem:[%s571 + $0x2b78] sm:$0xff]
                %1340 = vst [vmem:[%s572 + $0xbf8] sm:$0xff] %v1339
                %v1341 = vld [vmem:[%s571 + $0x3000] sm:$0xff]
                %1342 = vst [vmem:[%s572 + $0xc00] sm:$0xff] %v1341
                %v1343 = vld [vmem:[%s571 + $0x3008] sm:$0xff]
                %1344 = vst [vmem:[%s572 + $0xc08] sm:$0xff] %v1343
                %v1345 = vld [vmem:[%s571 + $0x3010] sm:$0xff]
                %1346 = vst [vmem:[%s572 + $0xc10] sm:$0xff] %v1345
                %v1347 = vld [vmem:[%s571 + $0x3018] sm:$0xff]
                %1348 = vst [vmem:[%s572 + $0xc18] sm:$0xff] %v1347
                %v1349 = vld [vmem:[%s571 + $0x3020] sm:$0xff]
                %1350 = vst [vmem:[%s572 + $0xc20] sm:$0xff] %v1349
                %v1351 = vld [vmem:[%s571 + $0x3028] sm:$0xff]
                %1352 = vst [vmem:[%s572 + $0xc28] sm:$0xff] %v1351
                %v1353 = vld [vmem:[%s571 + $0x3030] sm:$0xff]
                %1354 = vst [vmem:[%s572 + $0xc30] sm:$0xff] %v1353
                %v1355 = vld [vmem:[%s571 + $0x3038] sm:$0xff]
                %1356 = vst [vmem:[%s572 + $0xc38] sm:$0xff] %v1355
                %v1357 = vld [vmem:[%s571 + $0x3040] sm:$0xff]
                %1358 = vst [vmem:[%s572 + $0xc40] sm:$0xff] %v1357
                %v1359 = vld [vmem:[%s571 + $0x3048] sm:$0xff]
                %1360 = vst [vmem:[%s572 + $0xc48] sm:$0xff] %v1359
                %v1361 = vld [vmem:[%s571 + $0x3050] sm:$0xff]
                %1362 = vst [vmem:[%s572 + $0xc50] sm:$0xff] %v1361
                %v1363 = vld [vmem:[%s571 + $0x3058] sm:$0xff]
                %1364 = vst [vmem:[%s572 + $0xc58] sm:$0xff] %v1363
                %v1365 = vld [vmem:[%s571 + $0x3060] sm:$0xff]
                %1366 = vst [vmem:[%s572 + $0xc60] sm:$0xff] %v1365
                %v1367 = vld [vmem:[%s571 + $0x3068] sm:$0xff]
                %1368 = vst [vmem:[%s572 + $0xc68] sm:$0xff] %v1367
                %v1369 = vld [vmem:[%s571 + $0x3070] sm:$0xff]
                %1370 = vst [vmem:[%s572 + $0xc70] sm:$0xff] %v1369
                %v1371 = vld [vmem:[%s571 + $0x3078] sm:$0xff]
                %1372 = vst [vmem:[%s572 + $0xc78] sm:$0xff] %v1371
                %v1373 = vld [vmem:[%s571 + $0x3080] sm:$0xff]
                %1374 = vst [vmem:[%s572 + $0xc80] sm:$0xff] %v1373
                %v1375 = vld [vmem:[%s571 + $0x3088] sm:$0xff]
                %1376 = vst [vmem:[%s572 + $0xc88] sm:$0xff] %v1375
                %v1377 = vld [vmem:[%s571 + $0x3090] sm:$0xff]
                %1378 = vst [vmem:[%s572 + $0xc90] sm:$0xff] %v1377
                %v1379 = vld [vmem:[%s571 + $0x3098] sm:$0xff]
                %1380 = vst [vmem:[%s572 + $0xc98] sm:$0xff] %v1379
                %v1381 = vld [vmem:[%s571 + $0x30a0] sm:$0xff]
                %1382 = vst [vmem:[%s572 + $0xca0] sm:$0xff] %v1381
                %v1383 = vld [vmem:[%s571 + $0x30a8] sm:$0xff]
                %1384 = vst [vmem:[%s572 + $0xca8] sm:$0xff] %v1383
                %v1385 = vld [vmem:[%s571 + $0x30b0] sm:$0xff]
                %1386 = vst [vmem:[%s572 + $0xcb0] sm:$0xff] %v1385
                %v1387 = vld [vmem:[%s571 + $0x30b8] sm:$0xff]
                %1388 = vst [vmem:[%s572 + $0xcb8] sm:$0xff] %v1387
                %v1389 = vld [vmem:[%s571 + $0x30c0] sm:$0xff]
                %1390 = vst [vmem:[%s572 + $0xcc0] sm:$0xff] %v1389
                %v1391 = vld [vmem:[%s571 + $0x30c8] sm:$0xff]
                %1392 = vst [vmem:[%s572 + $0xcc8] sm:$0xff] %v1391
                %v1393 = vld [vmem:[%s571 + $0x30d0] sm:$0xff]
                %1394 = vst [vmem:[%s572 + $0xcd0] sm:$0xff] %v1393
                %v1395 = vld [vmem:[%s571 + $0x30d8] sm:$0xff]
                %1396 = vst [vmem:[%s572 + $0xcd8] sm:$0xff] %v1395
                %v1397 = vld [vmem:[%s571 + $0x30e0] sm:$0xff]
                %1398 = vst [vmem:[%s572 + $0xce0] sm:$0xff] %v1397
                %v1399 = vld [vmem:[%s571 + $0x30e8] sm:$0xff]
                %1400 = vst [vmem:[%s572 + $0xce8] sm:$0xff] %v1399
                %v1401 = vld [vmem:[%s571 + $0x30f0] sm:$0xff]
                %1402 = vst [vmem:[%s572 + $0xcf0] sm:$0xff] %v1401
                %v1403 = vld [vmem:[%s571 + $0x30f8] sm:$0xff]
                %1404 = vst [vmem:[%s572 + $0xcf8] sm:$0xff] %v1403
                %v1405 = vld [vmem:[%s571 + $0x3100] sm:$0xff]
                %1406 = vst [vmem:[%s572 + $0xd00] sm:$0xff] %v1405
                %v1407 = vld [vmem:[%s571 + $0x3108] sm:$0xff]
                %1408 = vst [vmem:[%s572 + $0xd08] sm:$0xff] %v1407
                %v1409 = vld [vmem:[%s571 + $0x3110] sm:$0xff]
                %1410 = vst [vmem:[%s572 + $0xd10] sm:$0xff] %v1409
                %v1411 = vld [vmem:[%s571 + $0x3118] sm:$0xff]
                %1412 = vst [vmem:[%s572 + $0xd18] sm:$0xff] %v1411
                %v1413 = vld [vmem:[%s571 + $0x3120] sm:$0xff]
                %1414 = vst [vmem:[%s572 + $0xd20] sm:$0xff] %v1413
                %v1415 = vld [vmem:[%s571 + $0x3128] sm:$0xff]
                %1416 = vst [vmem:[%s572 + $0xd28] sm:$0xff] %v1415
                %v1417 = vld [vmem:[%s571 + $0x3130] sm:$0xff]
                %1418 = vst [vmem:[%s572 + $0xd30] sm:$0xff] %v1417
                %v1419 = vld [vmem:[%s571 + $0x3138] sm:$0xff]
                %1420 = vst [vmem:[%s572 + $0xd38] sm:$0xff] %v1419
                %v1421 = vld [vmem:[%s571 + $0x3140] sm:$0xff]
                %1422 = vst [vmem:[%s572 + $0xd40] sm:$0xff] %v1421
                %v1423 = vld [vmem:[%s571 + $0x3148] sm:$0xff]
                %1424 = vst [vmem:[%s572 + $0xd48] sm:$0xff] %v1423
                %v1425 = vld [vmem:[%s571 + $0x3150] sm:$0xff]
                %1426 = vst [vmem:[%s572 + $0xd50] sm:$0xff] %v1425
                %v1427 = vld [vmem:[%s571 + $0x3158] sm:$0xff]
                %1428 = vst [vmem:[%s572 + $0xd58] sm:$0xff] %v1427
                %v1429 = vld [vmem:[%s571 + $0x3160] sm:$0xff]
                %1430 = vst [vmem:[%s572 + $0xd60] sm:$0xff] %v1429
                %v1431 = vld [vmem:[%s571 + $0x3168] sm:$0xff]
                %1432 = vst [vmem:[%s572 + $0xd68] sm:$0xff] %v1431
                %v1433 = vld [vmem:[%s571 + $0x3170] sm:$0xff]
                %1434 = vst [vmem:[%s572 + $0xd70] sm:$0xff] %v1433
                %v1435 = vld [vmem:[%s571 + $0x3178] sm:$0xff]
                %1436 = vst [vmem:[%s572 + $0xd78] sm:$0xff] %v1435
                %v1437 = vld [vmem:[%s571 + $0x3600] sm:$0xff]
                %1438 = vst [vmem:[%s572 + $0xd80] sm:$0xff] %v1437
                %v1439 = vld [vmem:[%s571 + $0x3608] sm:$0xff]
                %1440 = vst [vmem:[%s572 + $0xd88] sm:$0xff] %v1439
                %v1441 = vld [vmem:[%s571 + $0x3610] sm:$0xff]
                %1442 = vst [vmem:[%s572 + $0xd90] sm:$0xff] %v1441
                %v1443 = vld [vmem:[%s571 + $0x3618] sm:$0xff]
                %1444 = vst [vmem:[%s572 + $0xd98] sm:$0xff] %v1443
                %v1445 = vld [vmem:[%s571 + $0x3620] sm:$0xff]
                %1446 = vst [vmem:[%s572 + $0xda0] sm:$0xff] %v1445
                %v1447 = vld [vmem:[%s571 + $0x3628] sm:$0xff]
                %1448 = vst [vmem:[%s572 + $0xda8] sm:$0xff] %v1447
                %v1449 = vld [vmem:[%s571 + $0x3630] sm:$0xff]
                %1450 = vst [vmem:[%s572 + $0xdb0] sm:$0xff] %v1449
                %v1451 = vld [vmem:[%s571 + $0x3638] sm:$0xff]
                %1452 = vst [vmem:[%s572 + $0xdb8] sm:$0xff] %v1451
                %v1453 = vld [vmem:[%s571 + $0x3640] sm:$0xff]
                %1454 = vst [vmem:[%s572 + $0xdc0] sm:$0xff] %v1453
                %v1455 = vld [vmem:[%s571 + $0x3648] sm:$0xff]
                %1456 = vst [vmem:[%s572 + $0xdc8] sm:$0xff] %v1455
                %v1457 = vld [vmem:[%s571 + $0x3650] sm:$0xff]
                %1458 = vst [vmem:[%s572 + $0xdd0] sm:$0xff] %v1457
                %v1459 = vld [vmem:[%s571 + $0x3658] sm:$0xff]
                %1460 = vst [vmem:[%s572 + $0xdd8] sm:$0xff] %v1459
                %v1461 = vld [vmem:[%s571 + $0x3660] sm:$0xff]
                %1462 = vst [vmem:[%s572 + $0xde0] sm:$0xff] %v1461
                %v1463 = vld [vmem:[%s571 + $0x3668] sm:$0xff]
                %1464 = vst [vmem:[%s572 + $0xde8] sm:$0xff] %v1463
                %v1465 = vld [vmem:[%s571 + $0x3670] sm:$0xff]
                %1466 = vst [vmem:[%s572 + $0xdf0] sm:$0xff] %v1465
                %v1467 = vld [vmem:[%s571 + $0x3678] sm:$0xff]
                %1468 = vst [vmem:[%s572 + $0xdf8] sm:$0xff] %v1467
                %v1469 = vld [vmem:[%s571 + $0x3680] sm:$0xff]
                %1470 = vst [vmem:[%s572 + $0xe00] sm:$0xff] %v1469
                %v1471 = vld [vmem:[%s571 + $0x3688] sm:$0xff]
                %1472 = vst [vmem:[%s572 + $0xe08] sm:$0xff] %v1471
                %v1473 = vld [vmem:[%s571 + $0x3690] sm:$0xff]
                %1474 = vst [vmem:[%s572 + $0xe10] sm:$0xff] %v1473
                %v1475 = vld [vmem:[%s571 + $0x3698] sm:$0xff]
                %1476 = vst [vmem:[%s572 + $0xe18] sm:$0xff] %v1475
                %v1477 = vld [vmem:[%s571 + $0x36a0] sm:$0xff]
                %1478 = vst [vmem:[%s572 + $0xe20] sm:$0xff] %v1477
                %v1479 = vld [vmem:[%s571 + $0x36a8] sm:$0xff]
                %1480 = vst [vmem:[%s572 + $0xe28] sm:$0xff] %v1479
                %v1481 = vld [vmem:[%s571 + $0x36b0] sm:$0xff]
                %1482 = vst [vmem:[%s572 + $0xe30] sm:$0xff] %v1481
                %v1483 = vld [vmem:[%s571 + $0x36b8] sm:$0xff]
                %1484 = vst [vmem:[%s572 + $0xe38] sm:$0xff] %v1483
                %v1485 = vld [vmem:[%s571 + $0x36c0] sm:$0xff]
                %1486 = vst [vmem:[%s572 + $0xe40] sm:$0xff] %v1485
                %v1487 = vld [vmem:[%s571 + $0x36c8] sm:$0xff]
                %1488 = vst [vmem:[%s572 + $0xe48] sm:$0xff] %v1487
                %v1489 = vld [vmem:[%s571 + $0x36d0] sm:$0xff]
                %1490 = vst [vmem:[%s572 + $0xe50] sm:$0xff] %v1489
                %v1491 = vld [vmem:[%s571 + $0x36d8] sm:$0xff]
                %1492 = vst [vmem:[%s572 + $0xe58] sm:$0xff] %v1491
                %v1493 = vld [vmem:[%s571 + $0x36e0] sm:$0xff]
                %1494 = vst [vmem:[%s572 + $0xe60] sm:$0xff] %v1493
                %v1495 = vld [vmem:[%s571 + $0x36e8] sm:$0xff]
                %1496 = vst [vmem:[%s572 + $0xe68] sm:$0xff] %v1495
                %v1497 = vld [vmem:[%s571 + $0x36f0] sm:$0xff]
                %1498 = vst [vmem:[%s572 + $0xe70] sm:$0xff] %v1497
                %v1499 = vld [vmem:[%s571 + $0x36f8] sm:$0xff]
                %1500 = vst [vmem:[%s572 + $0xe78] sm:$0xff] %v1499
                %v1501 = vld [vmem:[%s571 + $0x3700] sm:$0xff]
                %1502 = vst [vmem:[%s572 + $0xe80] sm:$0xff] %v1501
                %v1503 = vld [vmem:[%s571 + $0x3708] sm:$0xff]
                %1504 = vst [vmem:[%s572 + $0xe88] sm:$0xff] %v1503
                %v1505 = vld [vmem:[%s571 + $0x3710] sm:$0xff]
                %1506 = vst [vmem:[%s572 + $0xe90] sm:$0xff] %v1505
                %v1507 = vld [vmem:[%s571 + $0x3718] sm:$0xff]
                %1508 = vst [vmem:[%s572 + $0xe98] sm:$0xff] %v1507
                %v1509 = vld [vmem:[%s571 + $0x3720] sm:$0xff]
                %1510 = vst [vmem:[%s572 + $0xea0] sm:$0xff] %v1509
                %v1511 = vld [vmem:[%s571 + $0x3728] sm:$0xff]
                %1512 = vst [vmem:[%s572 + $0xea8] sm:$0xff] %v1511
                %v1513 = vld [vmem:[%s571 + $0x3730] sm:$0xff]
                %1514 = vst [vmem:[%s572 + $0xeb0] sm:$0xff] %v1513
                %v1515 = vld [vmem:[%s571 + $0x3738] sm:$0xff]
                %1516 = vst [vmem:[%s572 + $0xeb8] sm:$0xff] %v1515
                %v1517 = vld [vmem:[%s571 + $0x3740] sm:$0xff]
                %1518 = vst [vmem:[%s572 + $0xec0] sm:$0xff] %v1517
                %v1519 = vld [vmem:[%s571 + $0x3748] sm:$0xff]
                %1520 = vst [vmem:[%s572 + $0xec8] sm:$0xff] %v1519
                %v1521 = vld [vmem:[%s571 + $0x3750] sm:$0xff]
                %1522 = vst [vmem:[%s572 + $0xed0] sm:$0xff] %v1521
                %v1523 = vld [vmem:[%s571 + $0x3758] sm:$0xff]
                %1524 = vst [vmem:[%s572 + $0xed8] sm:$0xff] %v1523
                %v1525 = vld [vmem:[%s571 + $0x3760] sm:$0xff]
                %1526 = vst [vmem:[%s572 + $0xee0] sm:$0xff] %v1525
                %v1527 = vld [vmem:[%s571 + $0x3768] sm:$0xff]
                %1528 = vst [vmem:[%s572 + $0xee8] sm:$0xff] %v1527
                %v1529 = vld [vmem:[%s571 + $0x3770] sm:$0xff]
                %1530 = vst [vmem:[%s572 + $0xef0] sm:$0xff] %v1529
                %v1531 = vld [vmem:[%s571 + $0x3778] sm:$0xff]
                %1532 = vst [vmem:[%s572 + $0xef8] sm:$0xff] %v1531
              $region79: #{tudui_forward.1} parent=73 // loop_footer
                %s570 = sadd.s32 1, %s566
              $region80: #{tudui_forward.1} parent=73 // loop_footer_branch
                %565 = sbr.rel target = $region76
              $region81: #{tudui_forward.1} parent=73 // loop_exit
                _
            $region74: #{tudui_forward.1} parent=65 // pred_fallthru
              _
          $region66: #{tudui_forward.1} parent=61 // pred_fallthru
            _
          %2505 = vnop
        $region62: #{tudui_forward.1} parent=19 // pred_fallthru
          _
      $region20: #{tudui_forward.1} parent=5 // pred_fallthru
        _
      %p2506 = scmp.le.s32.totalorder 1, %s10
      %p2507 = scmp.lt.s32.totalorder %s10, 5
      %p2508 = pnand %p2506, %p2507
      %p2509 = pneg %p2508
      // Predicated region
      $region97: #{tudui_forward.1} parent=5 // pred_check
        _
      $region98: #{tudui_forward.1} parent=5 // pred_check_branch
        %2511 = sbr.rel (%p2508) target = $region100
      $region99: #{tudui_forward.1} parent=5 // pred_region
        %s2512 = ssub.s32 %s10, 1
        %s2513 = sand.u32 %s23, 1
        %s2514 = sand.u32 %s23, 1
        %s2515 = smul.addr %s2514, 768
        %s2516 = scalar_lea.vmem [#allocation3], %s2515
        // Predicated region
        $region101: #{tudui_forward.1} parent=99 // pred_check
          %p2517 = pneg %p36
        $region102: #{tudui_forward.1} parent=99 // pred_check_branch
          %2519 = sbr.rel (%p2517) target = $region104
        $region103: #{tudui_forward.1} parent=99 // pred_region
          _
        $region104: #{tudui_forward.1} parent=99 // pred_fallthru
          _
        %s2520 = sand.u32 %s49, 1
        %s2521 = sand.u32 %s49, 1
        %s2522 = smul.addr %s2521, 3840
        %s2523 = scalar_lea.vmem [#allocation4], %s2522
        // Predicated region
        $region105: #{tudui_forward.1} parent=99 // pred_check
          %p2524 = pneg %p62
        $region106: #{tudui_forward.1} parent=99 // pred_check_branch
          %2526 = sbr.rel (%p2524) target = $region108
        $region107: #{tudui_forward.1} parent=99 // pred_region
          _
        $region108: #{tudui_forward.1} parent=99 // pred_fallthru
          _
        %s2527 = sand.u32 %s23, 1
        %s2528 = sand.u32 %s23, 1
        %s2529 = smul.addr %s2528, 768
        %s2530 = scalar_lea.vmem [#allocation3], %s2529
        %p2531 = pneg %p36
        %p2532 = pneg %p33
        %s2533 = sand.u32 %s49, 1
        %s2534 = sand.u32 %s49, 1
        %s2535 = smul.addr %s2534, 3840
        %s2536 = scalar_lea.vmem [#allocation4], %s2535
        %p2537 = pneg %p62
        %p2538 = pneg %p59
        %p2539 = pneg %p83
        %p2540 = pneg %p80
        %p2541 = pneg %p104
        %p2542 = pneg %p101
        %s2543 = smul.u32 48, %s15
        %s2544 = smul.u32 48, %s15
        %p2545 = scmp.eq.s32.totalorder %s15, 0
        // Predicated region
        $region109: #{tudui_forward.1} parent=99 // pred_check
          %p2546 = pneg %p2545
        $region110: #{tudui_forward.1} parent=99 // pred_check_branch
          %2548 = sbr.rel (%p2546) target = $region112
        $region111: #{tudui_forward.1} parent=99 // pred_region
          %2549 = vst [vmem:[#allocation2] sm:$0xff] 0.0
          %2550 = vst [vmem:[#allocation2 + $0x8] sm:$0xff] 0.0
          %2551 = vst [vmem:[#allocation2 + $0x10] sm:$0xff] 0.0
          %2552 = vst [vmem:[#allocation2 + $0x18] sm:$0xff] 0.0
          %2553 = vst [vmem:[#allocation2 + $0x20] sm:$0xff] 0.0
          %2554 = vst [vmem:[#allocation2 + $0x28] sm:$0xff] 0.0
          %2555 = vst [vmem:[#allocation2 + $0x30] sm:$0xff] 0.0
          %2556 = vst [vmem:[#allocation2 + $0x38] sm:$0xff] 0.0
          %2557 = vst [vmem:[#allocation2 + $0x40] sm:$0xff] 0.0
          %2558 = vst [vmem:[#allocation2 + $0x48] sm:$0xff] 0.0
          %2559 = vst [vmem:[#allocation2 + $0x50] sm:$0xff] 0.0
          %2560 = vst [vmem:[#allocation2 + $0x58] sm:$0xff] 0.0
          %2561 = vst [vmem:[#allocation2 + $0x60] sm:$0xff] 0.0
          %2562 = vst [vmem:[#allocation2 + $0x68] sm:$0xff] 0.0
          %2563 = vst [vmem:[#allocation2 + $0x70] sm:$0xff] 0.0
          %2564 = vst [vmem:[#allocation2 + $0x78] sm:$0xff] 0.0
          %2565 = vst [vmem:[#allocation2 + $0x80] sm:$0xff] 0.0
          %2566 = vst [vmem:[#allocation2 + $0x88] sm:$0xff] 0.0
          %2567 = vst [vmem:[#allocation2 + $0x90] sm:$0xff] 0.0
          %2568 = vst [vmem:[#allocation2 + $0x98] sm:$0xff] 0.0
        $region112: #{tudui_forward.1} parent=99 // pred_fallthru
          _
        %v2569 = vld [vmem:[%s2516] sm:$0xff]
        %v2570 = vld [vmem:[%s2516 + $0x8] sm:$0xff]
        %v2571 = vld [vmem:[%s2516 + $0x10] sm:$0xff]
        %v2572 = vld [vmem:[%s2516 + $0x18] sm:$0xff]
        %v2573 = vld [vmem:[%s2516 + $0x20] sm:$0xff]
        %v2574 = vld [vmem:[%s2516 + $0x28] sm:$0xff]
        %v2575 = vld [vmem:[%s2516 + $0x30] sm:$0xff]
        %v2576 = vld [vmem:[%s2516 + $0x38] sm:$0xff]
        %v2577 = vld [vmem:[%s2516 + $0x40] sm:$0xff]
        %v2578 = vld [vmem:[%s2516 + $0x48] sm:$0xff]
        %v2579 = vld [vmem:[%s2516 + $0x50] sm:$0xff]
        %v2580 = vld [vmem:[%s2516 + $0x58] sm:$0xff]
        %v2581 = vld [vmem:[%s2516 + $0x60] sm:$0xff]
        %v2582 = vld [vmem:[%s2516 + $0x68] sm:$0xff]
        %v2583 = vld [vmem:[%s2516 + $0x70] sm:$0xff]
        %v2584 = vld [vmem:[%s2516 + $0x78] sm:$0xff]
        %v2585 = vld [vmem:[%s2516 + $0x80] sm:$0xff]
        %v2586 = vld [vmem:[%s2516 + $0x88] sm:$0xff]
        %v2587 = vld [vmem:[%s2516 + $0x90] sm:$0xff]
        %v2588 = vld [vmem:[%s2516 + $0x98] sm:$0xff]
        %v2589 = vld [vmem:[%s2516 + $0xa0] sm:$0xff]
        %v2590 = vld [vmem:[%s2516 + $0xa8] sm:$0xff]
        %v2591 = vld [vmem:[%s2516 + $0xb0] sm:$0xff]
        %v2592 = vld [vmem:[%s2516 + $0xb8] sm:$0xff]
        %v2593 = vld [vmem:[%s2516 + $0xc0] sm:$0xff]
        %v2594 = vld [vmem:[%s2516 + $0xc8] sm:$0xff]
        %v2595 = vld [vmem:[%s2516 + $0xd0] sm:$0xff]
        %v2596 = vld [vmem:[%s2516 + $0xd8] sm:$0xff]
        %v2597 = vld [vmem:[%s2516 + $0xe0] sm:$0xff]
        %v2598 = vld [vmem:[%s2516 + $0xe8] sm:$0xff]
        %v2599 = vld [vmem:[%s2516 + $0xf0] sm:$0xff]
        %v2600 = vld [vmem:[%s2516 + $0xf8] sm:$0xff]
        %v2601 = vld [vmem:[%s2516 + $0x100] sm:$0xff]
        %v2602 = vld [vmem:[%s2516 + $0x108] sm:$0xff]
        %v2603 = vld [vmem:[%s2516 + $0x110] sm:$0xff]
        %v2604 = vld [vmem:[%s2516 + $0x118] sm:$0xff]
        %v2605 = vld [vmem:[%s2516 + $0x120] sm:$0xff]
        %v2606 = vld [vmem:[%s2516 + $0x128] sm:$0xff]
        %v2607 = vld [vmem:[%s2516 + $0x130] sm:$0xff]
        %v2608 = vld [vmem:[%s2516 + $0x138] sm:$0xff]
        %v2609 = vld [vmem:[%s2516 + $0x140] sm:$0xff]
        %v2610 = vld [vmem:[%s2516 + $0x148] sm:$0xff]
        %v2611 = vld [vmem:[%s2516 + $0x150] sm:$0xff]
        %v2612 = vld [vmem:[%s2516 + $0x158] sm:$0xff]
        %v2613 = vld [vmem:[%s2516 + $0x160] sm:$0xff]
        %v2614 = vld [vmem:[%s2516 + $0x168] sm:$0xff]
        %v2615 = vld [vmem:[%s2516 + $0x170] sm:$0xff]
        %v2616 = vld [vmem:[%s2516 + $0x178] sm:$0xff]
        %v2617 = vld [vmem:[#allocation2] sm:$0xff]
        %v2618 = vld [vmem:[%s2523] sm:$0xff]
        %v2619 = vld [vmem:[%s2523 + $0x8] sm:$0xff]
        %v2620 = vld [vmem:[%s2523 + $0x10] sm:$0xff]
        %v2621 = vld [vmem:[%s2523 + $0x18] sm:$0xff]
        %v2622 = vld [vmem:[%s2523 + $0x20] sm:$0xff]
        %v2623 = vld [vmem:[%s2523 + $0x28] sm:$0xff]
        %v2624 = vld [vmem:[%s2523 + $0x30] sm:$0xff]
        %v2625 = vld [vmem:[%s2523 + $0x38] sm:$0xff]
        %v2626 = vld [vmem:[%s2523 + $0x40] sm:$0xff]
        %v2627 = vld [vmem:[%s2523 + $0x48] sm:$0xff]
        %v2628 = vld [vmem:[%s2523 + $0x50] sm:$0xff]
        %v2629 = vld [vmem:[%s2523 + $0x58] sm:$0xff]
        %v2630 = vld [vmem:[%s2523 + $0x60] sm:$0xff]
        %v2631 = vld [vmem:[%s2523 + $0x68] sm:$0xff]
        %v2632 = vld [vmem:[%s2523 + $0x70] sm:$0xff]
        %v2633 = vld [vmem:[%s2523 + $0x78] sm:$0xff]
        %v2634 = vld [vmem:[%s2523 + $0x80] sm:$0xff]
        %v2635 = vld [vmem:[%s2523 + $0x88] sm:$0xff]
        %v2636 = vld [vmem:[%s2523 + $0x90] sm:$0xff]
        %v2637 = vld [vmem:[%s2523 + $0x98] sm:$0xff]
        %v2638 = vld [vmem:[%s2523 + $0xa0] sm:$0xff]
        %v2639 = vld [vmem:[%s2523 + $0xa8] sm:$0xff]
        %v2640 = vld [vmem:[%s2523 + $0xb0] sm:$0xff]
        %v2641 = vld [vmem:[%s2523 + $0xb8] sm:$0xff]
        %v2642 = vld [vmem:[%s2523 + $0xc0] sm:$0xff]
        %v2643 = vld [vmem:[%s2523 + $0xc8] sm:$0xff]
        %v2644 = vld [vmem:[%s2523 + $0xd0] sm:$0xff]
        %v2645 = vld [vmem:[%s2523 + $0xd8] sm:$0xff]
        %v2646 = vld [vmem:[%s2523 + $0xe0] sm:$0xff]
        %v2647 = vld [vmem:[%s2523 + $0xe8] sm:$0xff]
        %v2648 = vld [vmem:[%s2523 + $0xf0] sm:$0xff]
        %v2649 = vld [vmem:[%s2523 + $0xf8] sm:$0xff]
        %v2650 = vld [vmem:[%s2523 + $0x100] sm:$0xff]
        %v2651 = vld [vmem:[%s2523 + $0x108] sm:$0xff]
        %v2652 = vld [vmem:[%s2523 + $0x110] sm:$0xff]
        %v2653 = vld [vmem:[%s2523 + $0x118] sm:$0xff]
        %v2654 = vld [vmem:[%s2523 + $0x120] sm:$0xff]
        %v2655 = vld [vmem:[%s2523 + $0x128] sm:$0xff]
        %v2656 = vld [vmem:[%s2523 + $0x130] sm:$0xff]
        %v2657 = vld [vmem:[%s2523 + $0x138] sm:$0xff]
        %v2658 = vld [vmem:[%s2523 + $0x140] sm:$0xff]
        %v2659 = vld [vmem:[%s2523 + $0x148] sm:$0xff]
        %v2660 = vld [vmem:[%s2523 + $0x150] sm:$0xff]
        %v2661 = vld [vmem:[%s2523 + $0x158] sm:$0xff]
        %v2662 = vld [vmem:[%s2523 + $0x160] sm:$0xff]
        %v2663 = vld [vmem:[%s2523 + $0x168] sm:$0xff]
        %v2664 = vld [vmem:[%s2523 + $0x170] sm:$0xff]
        %v2665 = vld [vmem:[%s2523 + $0x178] sm:$0xff]
        %v2666 = vmul.f32 %v2569, %v2618
        %v2667 = vmul.f32 %v2570, %v2619
        %v2668 = vmul.f32 %v2571, %v2620
        %v2669 = vmul.f32 %v2572, %v2621
        %v2670 = vmul.f32 %v2573, %v2622
        %v2671 = vmul.f32 %v2574, %v2623
        %v2672 = vmul.f32 %v2575, %v2624
        %v2673 = vmul.f32 %v2576, %v2625
        %v2674 = vmul.f32 %v2577, %v2626
        %v2675 = vmul.f32 %v2578, %v2627
        %v2676 = vmul.f32 %v2579, %v2628
        %v2677 = vmul.f32 %v2580, %v2629
        %v2678 = vmul.f32 %v2581, %v2630
        %v2679 = vmul.f32 %v2582, %v2631
        %v2680 = vmul.f32 %v2583, %v2632
        %v2681 = vmul.f32 %v2584, %v2633
        %v2682 = vmul.f32 %v2585, %v2634
        %v2683 = vmul.f32 %v2586, %v2635
        %v2684 = vmul.f32 %v2587, %v2636
        %v2685 = vmul.f32 %v2588, %v2637
        %v2686 = vmul.f32 %v2589, %v2638
        %v2687 = vmul.f32 %v2590, %v2639
        %v2688 = vmul.f32 %v2591, %v2640
        %v2689 = vmul.f32 %v2592, %v2641
        %v2690 = vmul.f32 %v2593, %v2642
        %v2691 = vmul.f32 %v2594, %v2643
        %v2692 = vmul.f32 %v2595, %v2644
        %v2693 = vmul.f32 %v2596, %v2645
        %v2694 = vmul.f32 %v2597, %v2646
        %v2695 = vmul.f32 %v2598, %v2647
        %v2696 = vmul.f32 %v2599, %v2648
        %v2697 = vmul.f32 %v2600, %v2649
        %v2698 = vmul.f32 %v2601, %v2650
        %v2699 = vmul.f32 %v2602, %v2651
        %v2700 = vmul.f32 %v2603, %v2652
        %v2701 = vmul.f32 %v2604, %v2653
        %v2702 = vmul.f32 %v2605, %v2654
        %v2703 = vmul.f32 %v2606, %v2655
        %v2704 = vmul.f32 %v2607, %v2656
        %v2705 = vmul.f32 %v2608, %v2657
        %v2706 = vmul.f32 %v2609, %v2658
        %v2707 = vmul.f32 %v2610, %v2659
        %v2708 = vmul.f32 %v2611, %v2660
        %v2709 = vmul.f32 %v2612, %v2661
        %v2710 = vmul.f32 %v2613, %v2662
        %v2711 = vmul.f32 %v2614, %v2663
        %v2712 = vmul.f32 %v2615, %v2664
        %v2713 = vmul.f32 %v2616, %v2665
        %v2714 = vadd.f32 %v2666, %v2667
        %v2715 = vadd.f32 %v2714, %v2668
        %v2716 = vadd.f32 %v2715, %v2669
        %v2717 = vadd.f32 %v2716, %v2670
        %v2718 = vadd.f32 %v2717, %v2671
        %v2719 = vadd.f32 %v2718, %v2672
        %v2720 = vadd.f32 %v2719, %v2673
        %v2721 = vadd.f32 %v2720, %v2674
        %v2722 = vadd.f32 %v2721, %v2675
        %v2723 = vadd.f32 %v2722, %v2676
        %v2724 = vadd.f32 %v2723, %v2677
        %v2725 = vadd.f32 %v2724, %v2678
        %v2726 = vadd.f32 %v2725, %v2679
        %v2727 = vadd.f32 %v2726, %v2680
        %v2728 = vadd.f32 %v2727, %v2681
        %v2729 = vadd.f32 %v2728, %v2682
        %v2730 = vadd.f32 %v2729, %v2683
        %v2731 = vadd.f32 %v2730, %v2684
        %v2732 = vadd.f32 %v2731, %v2685
        %v2733 = vadd.f32 %v2732, %v2686
        %v2734 = vadd.f32 %v2733, %v2687
        %v2735 = vadd.f32 %v2734, %v2688
        %v2736 = vadd.f32 %v2735, %v2689
        %v2737 = vadd.f32 %v2736, %v2690
        %v2738 = vadd.f32 %v2737, %v2691
        %v2739 = vadd.f32 %v2738, %v2692
        %v2740 = vadd.f32 %v2739, %v2693
        %v2741 = vadd.f32 %v2740, %v2694
        %v2742 = vadd.f32 %v2741, %v2695
        %v2743 = vadd.f32 %v2742, %v2696
        %v2744 = vadd.f32 %v2743, %v2697
        %v2745 = vadd.f32 %v2744, %v2698
        %v2746 = vadd.f32 %v2745, %v2699
        %v2747 = vadd.f32 %v2746, %v2700
        %v2748 = vadd.f32 %v2747, %v2701
        %v2749 = vadd.f32 %v2748, %v2702
        %v2750 = vadd.f32 %v2749, %v2703
        %v2751 = vadd.f32 %v2750, %v2704
        %v2752 = vadd.f32 %v2751, %v2705
        %v2753 = vadd.f32 %v2752, %v2706
        %v2754 = vadd.f32 %v2753, %v2707
        %v2755 = vadd.f32 %v2754, %v2708
        %v2756 = vadd.f32 %v2755, %v2709
        %v2757 = vadd.f32 %v2756, %v2710
        %v2758 = vadd.f32 %v2757, %v2711
        %v2759 = vadd.f32 %v2758, %v2712
        %v2760 = vadd.f32 %v2759, %v2713
        %v2761 = vadd.f32 %v2617, %v2760
        %2762 = vst [vmem:[#allocation2] sm:$0xff] %v2761
        %s2763 = scalar_lea.vmem [#allocation2], 8
        %v2764 = vld [vmem:[%s2763] sm:$0xff]
        %s2765 = scalar_lea.vmem %s2523, 384 [#allocation4]
        %v2766 = vld [vmem:[%s2765] sm:$0xff]
        %v2767 = vld [vmem:[%s2765 + $0x8] sm:$0xff]
        %v2768 = vld [vmem:[%s2765 + $0x10] sm:$0xff]
        %v2769 = vld [vmem:[%s2765 + $0x18] sm:$0xff]
        %v2770 = vld [vmem:[%s2765 + $0x20] sm:$0xff]
        %v2771 = vld [vmem:[%s2765 + $0x28] sm:$0xff]
        %v2772 = vld [vmem:[%s2765 + $0x30] sm:$0xff]
        %v2773 = vld [vmem:[%s2765 + $0x38] sm:$0xff]
        %v2774 = vld [vmem:[%s2765 + $0x40] sm:$0xff]
        %v2775 = vld [vmem:[%s2765 + $0x48] sm:$0xff]
        %v2776 = vld [vmem:[%s2765 + $0x50] sm:$0xff]
        %v2777 = vld [vmem:[%s2765 + $0x58] sm:$0xff]
        %v2778 = vld [vmem:[%s2765 + $0x60] sm:$0xff]
        %v2779 = vld [vmem:[%s2765 + $0x68] sm:$0xff]
        %v2780 = vld [vmem:[%s2765 + $0x70] sm:$0xff]
        %v2781 = vld [vmem:[%s2765 + $0x78] sm:$0xff]
        %v2782 = vld [vmem:[%s2765 + $0x80] sm:$0xff]
        %v2783 = vld [vmem:[%s2765 + $0x88] sm:$0xff]
        %v2784 = vld [vmem:[%s2765 + $0x90] sm:$0xff]
        %v2785 = vld [vmem:[%s2765 + $0x98] sm:$0xff]
        %v2786 = vld [vmem:[%s2765 + $0xa0] sm:$0xff]
        %v2787 = vld [vmem:[%s2765 + $0xa8] sm:$0xff]
        %v2788 = vld [vmem:[%s2765 + $0xb0] sm:$0xff]
        %v2789 = vld [vmem:[%s2765 + $0xb8] sm:$0xff]
        %v2790 = vld [vmem:[%s2765 + $0xc0] sm:$0xff]
        %v2791 = vld [vmem:[%s2765 + $0xc8] sm:$0xff]
        %v2792 = vld [vmem:[%s2765 + $0xd0] sm:$0xff]
        %v2793 = vld [vmem:[%s2765 + $0xd8] sm:$0xff]
        %v2794 = vld [vmem:[%s2765 + $0xe0] sm:$0xff]
        %v2795 = vld [vmem:[%s2765 + $0xe8] sm:$0xff]
        %v2796 = vld [vmem:[%s2765 + $0xf0] sm:$0xff]
        %v2797 = vld [vmem:[%s2765 + $0xf8] sm:$0xff]
        %v2798 = vld [vmem:[%s2765 + $0x100] sm:$0xff]
        %v2799 = vld [vmem:[%s2765 + $0x108] sm:$0xff]
        %v2800 = vld [vmem:[%s2765 + $0x110] sm:$0xff]
        %v2801 = vld [vmem:[%s2765 + $0x118] sm:$0xff]
        %v2802 = vld [vmem:[%s2765 + $0x120] sm:$0xff]
        %v2803 = vld [vmem:[%s2765 + $0x128] sm:$0xff]
        %v2804 = vld [vmem:[%s2765 + $0x130] sm:$0xff]
        %v2805 = vld [vmem:[%s2765 + $0x138] sm:$0xff]
        %v2806 = vld [vmem:[%s2765 + $0x140] sm:$0xff]
        %v2807 = vld [vmem:[%s2765 + $0x148] sm:$0xff]
        %v2808 = vld [vmem:[%s2765 + $0x150] sm:$0xff]
        %v2809 = vld [vmem:[%s2765 + $0x158] sm:$0xff]
        %v2810 = vld [vmem:[%s2765 + $0x160] sm:$0xff]
        %v2811 = vld [vmem:[%s2765 + $0x168] sm:$0xff]
        %v2812 = vld [vmem:[%s2765 + $0x170] sm:$0xff]
        %v2813 = vld [vmem:[%s2765 + $0x178] sm:$0xff]
        %v2814 = vmul.f32 %v2569, %v2766
        %v2815 = vmul.f32 %v2570, %v2767
        %v2816 = vmul.f32 %v2571, %v2768
        %v2817 = vmul.f32 %v2572, %v2769
        %v2818 = vmul.f32 %v2573, %v2770
        %v2819 = vmul.f32 %v2574, %v2771
        %v2820 = vmul.f32 %v2575, %v2772
        %v2821 = vmul.f32 %v2576, %v2773
        %v2822 = vmul.f32 %v2577, %v2774
        %v2823 = vmul.f32 %v2578, %v2775
        %v2824 = vmul.f32 %v2579, %v2776
        %v2825 = vmul.f32 %v2580, %v2777
        %v2826 = vmul.f32 %v2581, %v2778
        %v2827 = vmul.f32 %v2582, %v2779
        %v2828 = vmul.f32 %v2583, %v2780
        %v2829 = vmul.f32 %v2584, %v2781
        %v2830 = vmul.f32 %v2585, %v2782
        %v2831 = vmul.f32 %v2586, %v2783
        %v2832 = vmul.f32 %v2587, %v2784
        %v2833 = vmul.f32 %v2588, %v2785
        %v2834 = vmul.f32 %v2589, %v2786
        %v2835 = vmul.f32 %v2590, %v2787
        %v2836 = vmul.f32 %v2591, %v2788
        %v2837 = vmul.f32 %v2592, %v2789
        %v2838 = vmul.f32 %v2593, %v2790
        %v2839 = vmul.f32 %v2594, %v2791
        %v2840 = vmul.f32 %v2595, %v2792
        %v2841 = vmul.f32 %v2596, %v2793
        %v2842 = vmul.f32 %v2597, %v2794
        %v2843 = vmul.f32 %v2598, %v2795
        %v2844 = vmul.f32 %v2599, %v2796
        %v2845 = vmul.f32 %v2600, %v2797
        %v2846 = vmul.f32 %v2601, %v2798
        %v2847 = vmul.f32 %v2602, %v2799
        %v2848 = vmul.f32 %v2603, %v2800
        %v2849 = vmul.f32 %v2604, %v2801
        %v2850 = vmul.f32 %v2605, %v2802
        %v2851 = vmul.f32 %v2606, %v2803
        %v2852 = vmul.f32 %v2607, %v2804
        %v2853 = vmul.f32 %v2608, %v2805
        %v2854 = vmul.f32 %v2609, %v2806
        %v2855 = vmul.f32 %v2610, %v2807
        %v2856 = vmul.f32 %v2611, %v2808
        %v2857 = vmul.f32 %v2612, %v2809
        %v2858 = vmul.f32 %v2613, %v2810
        %v2859 = vmul.f32 %v2614, %v2811
        %v2860 = vmul.f32 %v2615, %v2812
        %v2861 = vmul.f32 %v2616, %v2813
        %v2862 = vadd.f32 %v2814, %v2815
        %v2863 = vadd.f32 %v2862, %v2816
        %v2864 = vadd.f32 %v2863, %v2817
        %v2865 = vadd.f32 %v2864, %v2818
        %v2866 = vadd.f32 %v2865, %v2819
        %v2867 = vadd.f32 %v2866, %v2820
        %v2868 = vadd.f32 %v2867, %v2821
        %v2869 = vadd.f32 %v2868, %v2822
        %v2870 = vadd.f32 %v2869, %v2823
        %v2871 = vadd.f32 %v2870, %v2824
        %v2872 = vadd.f32 %v2871, %v2825
        %v2873 = vadd.f32 %v2872, %v2826
        %v2874 = vadd.f32 %v2873, %v2827
        %v2875 = vadd.f32 %v2874, %v2828
        %v2876 = vadd.f32 %v2875, %v2829
        %v2877 = vadd.f32 %v2876, %v2830
        %v2878 = vadd.f32 %v2877, %v2831
        %v2879 = vadd.f32 %v2878, %v2832
        %v2880 = vadd.f32 %v2879, %v2833
        %v2881 = vadd.f32 %v2880, %v2834
        %v2882 = vadd.f32 %v2881, %v2835
        %v2883 = vadd.f32 %v2882, %v2836
        %v2884 = vadd.f32 %v2883, %v2837
        %v2885 = vadd.f32 %v2884, %v2838
        %v2886 = vadd.f32 %v2885, %v2839
        %v2887 = vadd.f32 %v2886, %v2840
        %v2888 = vadd.f32 %v2887, %v2841
        %v2889 = vadd.f32 %v2888, %v2842
        %v2890 = vadd.f32 %v2889, %v2843
        %v2891 = vadd.f32 %v2890, %v2844
        %v2892 = vadd.f32 %v2891, %v2845
        %v2893 = vadd.f32 %v2892, %v2846
        %v2894 = vadd.f32 %v2893, %v2847
        %v2895 = vadd.f32 %v2894, %v2848
        %v2896 = vadd.f32 %v2895, %v2849
        %v2897 = vadd.f32 %v2896, %v2850
        %v2898 = vadd.f32 %v2897, %v2851
        %v2899 = vadd.f32 %v2898, %v2852
        %v2900 = vadd.f32 %v2899, %v2853
        %v2901 = vadd.f32 %v2900, %v2854
        %v2902 = vadd.f32 %v2901, %v2855
        %v2903 = vadd.f32 %v2902, %v2856
        %v2904 = vadd.f32 %v2903, %v2857
        %v2905 = vadd.f32 %v2904, %v2858
        %v2906 = vadd.f32 %v2905, %v2859
        %v2907 = vadd.f32 %v2906, %v2860
        %v2908 = vadd.f32 %v2907, %v2861
        %v2909 = vadd.f32 %v2764, %v2908
        %2910 = vst [vmem:[%s2763] sm:$0xff] %v2909
        %s2911 = scalar_lea.vmem [#allocation2], 16
        %v2912 = vld [vmem:[%s2911] sm:$0xff]
        %s2913 = scalar_lea.vmem %s2523, 768 [#allocation4]
        %v2914 = vld [vmem:[%s2913] sm:$0xff]
        %v2915 = vld [vmem:[%s2913 + $0x8] sm:$0xff]
        %v2916 = vld [vmem:[%s2913 + $0x10] sm:$0xff]
        %v2917 = vld [vmem:[%s2913 + $0x18] sm:$0xff]
        %v2918 = vld [vmem:[%s2913 + $0x20] sm:$0xff]
        %v2919 = vld [vmem:[%s2913 + $0x28] sm:$0xff]
        %v2920 = vld [vmem:[%s2913 + $0x30] sm:$0xff]
        %v2921 = vld [vmem:[%s2913 + $0x38] sm:$0xff]
        %v2922 = vld [vmem:[%s2913 + $0x40] sm:$0xff]
        %v2923 = vld [vmem:[%s2913 + $0x48] sm:$0xff]
        %v2924 = vld [vmem:[%s2913 + $0x50] sm:$0xff]
        %v2925 = vld [vmem:[%s2913 + $0x58] sm:$0xff]
        %v2926 = vld [vmem:[%s2913 + $0x60] sm:$0xff]
        %v2927 = vld [vmem:[%s2913 + $0x68] sm:$0xff]
        %v2928 = vld [vmem:[%s2913 + $0x70] sm:$0xff]
        %v2929 = vld [vmem:[%s2913 + $0x78] sm:$0xff]
        %v2930 = vld [vmem:[%s2913 + $0x80] sm:$0xff]
        %v2931 = vld [vmem:[%s2913 + $0x88] sm:$0xff]
        %v2932 = vld [vmem:[%s2913 + $0x90] sm:$0xff]
        %v2933 = vld [vmem:[%s2913 + $0x98] sm:$0xff]
        %v2934 = vld [vmem:[%s2913 + $0xa0] sm:$0xff]
        %v2935 = vld [vmem:[%s2913 + $0xa8] sm:$0xff]
        %v2936 = vld [vmem:[%s2913 + $0xb0] sm:$0xff]
        %v2937 = vld [vmem:[%s2913 + $0xb8] sm:$0xff]
        %v2938 = vld [vmem:[%s2913 + $0xc0] sm:$0xff]
        %v2939 = vld [vmem:[%s2913 + $0xc8] sm:$0xff]
        %v2940 = vld [vmem:[%s2913 + $0xd0] sm:$0xff]
        %v2941 = vld [vmem:[%s2913 + $0xd8] sm:$0xff]
        %v2942 = vld [vmem:[%s2913 + $0xe0] sm:$0xff]
        %v2943 = vld [vmem:[%s2913 + $0xe8] sm:$0xff]
        %v2944 = vld [vmem:[%s2913 + $0xf0] sm:$0xff]
        %v2945 = vld [vmem:[%s2913 + $0xf8] sm:$0xff]
        %v2946 = vld [vmem:[%s2913 + $0x100] sm:$0xff]
        %v2947 = vld [vmem:[%s2913 + $0x108] sm:$0xff]
        %v2948 = vld [vmem:[%s2913 + $0x110] sm:$0xff]
        %v2949 = vld [vmem:[%s2913 + $0x118] sm:$0xff]
        %v2950 = vld [vmem:[%s2913 + $0x120] sm:$0xff]
        %v2951 = vld [vmem:[%s2913 + $0x128] sm:$0xff]
        %v2952 = vld [vmem:[%s2913 + $0x130] sm:$0xff]
        %v2953 = vld [vmem:[%s2913 + $0x138] sm:$0xff]
        %v2954 = vld [vmem:[%s2913 + $0x140] sm:$0xff]
        %v2955 = vld [vmem:[%s2913 + $0x148] sm:$0xff]
        %v2956 = vld [vmem:[%s2913 + $0x150] sm:$0xff]
        %v2957 = vld [vmem:[%s2913 + $0x158] sm:$0xff]
        %v2958 = vld [vmem:[%s2913 + $0x160] sm:$0xff]
        %v2959 = vld [vmem:[%s2913 + $0x168] sm:$0xff]
        %v2960 = vld [vmem:[%s2913 + $0x170] sm:$0xff]
        %v2961 = vld [vmem:[%s2913 + $0x178] sm:$0xff]
        %v2962 = vmul.f32 %v2569, %v2914
        %v2963 = vmul.f32 %v2570, %v2915
        %v2964 = vmul.f32 %v2571, %v2916
        %v2965 = vmul.f32 %v2572, %v2917
        %v2966 = vmul.f32 %v2573, %v2918
        %v2967 = vmul.f32 %v2574, %v2919
        %v2968 = vmul.f32 %v2575, %v2920
        %v2969 = vmul.f32 %v2576, %v2921
        %v2970 = vmul.f32 %v2577, %v2922
        %v2971 = vmul.f32 %v2578, %v2923
        %v2972 = vmul.f32 %v2579, %v2924
        %v2973 = vmul.f32 %v2580, %v2925
        %v2974 = vmul.f32 %v2581, %v2926
        %v2975 = vmul.f32 %v2582, %v2927
        %v2976 = vmul.f32 %v2583, %v2928
        %v2977 = vmul.f32 %v2584, %v2929
        %v2978 = vmul.f32 %v2585, %v2930
        %v2979 = vmul.f32 %v2586, %v2931
        %v2980 = vmul.f32 %v2587, %v2932
        %v2981 = vmul.f32 %v2588, %v2933
        %v2982 = vmul.f32 %v2589, %v2934
        %v2983 = vmul.f32 %v2590, %v2935
        %v2984 = vmul.f32 %v2591, %v2936
        %v2985 = vmul.f32 %v2592, %v2937
        %v2986 = vmul.f32 %v2593, %v2938
        %v2987 = vmul.f32 %v2594, %v2939
        %v2988 = vmul.f32 %v2595, %v2940
        %v2989 = vmul.f32 %v2596, %v2941
        %v2990 = vmul.f32 %v2597, %v2942
        %v2991 = vmul.f32 %v2598, %v2943
        %v2992 = vmul.f32 %v2599, %v2944
        %v2993 = vmul.f32 %v2600, %v2945
        %v2994 = vmul.f32 %v2601, %v2946
        %v2995 = vmul.f32 %v2602, %v2947
        %v2996 = vmul.f32 %v2603, %v2948
        %v2997 = vmul.f32 %v2604, %v2949
        %v2998 = vmul.f32 %v2605, %v2950
        %v2999 = vmul.f32 %v2606, %v2951
        %v3000 = vmul.f32 %v2607, %v2952
        %v3001 = vmul.f32 %v2608, %v2953
        %v3002 = vmul.f32 %v2609, %v2954
        %v3003 = vmul.f32 %v2610, %v2955
        %v3004 = vmul.f32 %v2611, %v2956
        %v3005 = vmul.f32 %v2612, %v2957
        %v3006 = vmul.f32 %v2613, %v2958
        %v3007 = vmul.f32 %v2614, %v2959
        %v3008 = vmul.f32 %v2615, %v2960
        %v3009 = vmul.f32 %v2616, %v2961
        %v3010 = vadd.f32 %v2962, %v2963
        %v3011 = vadd.f32 %v3010, %v2964
        %v3012 = vadd.f32 %v3011, %v2965
        %v3013 = vadd.f32 %v3012, %v2966
        %v3014 = vadd.f32 %v3013, %v2967
        %v3015 = vadd.f32 %v3014, %v2968
        %v3016 = vadd.f32 %v3015, %v2969
        %v3017 = vadd.f32 %v3016, %v2970
        %v3018 = vadd.f32 %v3017, %v2971
        %v3019 = vadd.f32 %v3018, %v2972
        %v3020 = vadd.f32 %v3019, %v2973
        %v3021 = vadd.f32 %v3020, %v2974
        %v3022 = vadd.f32 %v3021, %v2975
        %v3023 = vadd.f32 %v3022, %v2976
        %v3024 = vadd.f32 %v3023, %v2977
        %v3025 = vadd.f32 %v3024, %v2978
        %v3026 = vadd.f32 %v3025, %v2979
        %v3027 = vadd.f32 %v3026, %v2980
        %v3028 = vadd.f32 %v3027, %v2981
        %v3029 = vadd.f32 %v3028, %v2982
        %v3030 = vadd.f32 %v3029, %v2983
        %v3031 = vadd.f32 %v3030, %v2984
        %v3032 = vadd.f32 %v3031, %v2985
        %v3033 = vadd.f32 %v3032, %v2986
        %v3034 = vadd.f32 %v3033, %v2987
        %v3035 = vadd.f32 %v3034, %v2988
        %v3036 = vadd.f32 %v3035, %v2989
        %v3037 = vadd.f32 %v3036, %v2990
        %v3038 = vadd.f32 %v3037, %v2991
        %v3039 = vadd.f32 %v3038, %v2992
        %v3040 = vadd.f32 %v3039, %v2993
        %v3041 = vadd.f32 %v3040, %v2994
        %v3042 = vadd.f32 %v3041, %v2995
        %v3043 = vadd.f32 %v3042, %v2996
        %v3044 = vadd.f32 %v3043, %v2997
        %v3045 = vadd.f32 %v3044, %v2998
        %v3046 = vadd.f32 %v3045, %v2999
        %v3047 = vadd.f32 %v3046, %v3000
        %v3048 = vadd.f32 %v3047, %v3001
        %v3049 = vadd.f32 %v3048, %v3002
        %v3050 = vadd.f32 %v3049, %v3003
        %v3051 = vadd.f32 %v3050, %v3004
        %v3052 = vadd.f32 %v3051, %v3005
        %v3053 = vadd.f32 %v3052, %v3006
        %v3054 = vadd.f32 %v3053, %v3007
        %v3055 = vadd.f32 %v3054, %v3008
        %v3056 = vadd.f32 %v3055, %v3009
        %v3057 = vadd.f32 %v2912, %v3056
        %3058 = vst [vmem:[%s2911] sm:$0xff] %v3057
        %s3059 = scalar_lea.vmem [#allocation2], 24
        %v3060 = vld [vmem:[%s3059] sm:$0xff]
        %s3061 = scalar_lea.vmem %s2523, 1152 [#allocation4]
        %v3062 = vld [vmem:[%s3061] sm:$0xff]
        %v3063 = vld [vmem:[%s3061 + $0x8] sm:$0xff]
        %v3064 = vld [vmem:[%s3061 + $0x10] sm:$0xff]
        %v3065 = vld [vmem:[%s3061 + $0x18] sm:$0xff]
        %v3066 = vld [vmem:[%s3061 + $0x20] sm:$0xff]
        %v3067 = vld [vmem:[%s3061 + $0x28] sm:$0xff]
        %v3068 = vld [vmem:[%s3061 + $0x30] sm:$0xff]
        %v3069 = vld [vmem:[%s3061 + $0x38] sm:$0xff]
        %v3070 = vld [vmem:[%s3061 + $0x40] sm:$0xff]
        %v3071 = vld [vmem:[%s3061 + $0x48] sm:$0xff]
        %v3072 = vld [vmem:[%s3061 + $0x50] sm:$0xff]
        %v3073 = vld [vmem:[%s3061 + $0x58] sm:$0xff]
        %v3074 = vld [vmem:[%s3061 + $0x60] sm:$0xff]
        %v3075 = vld [vmem:[%s3061 + $0x68] sm:$0xff]
        %v3076 = vld [vmem:[%s3061 + $0x70] sm:$0xff]
        %v3077 = vld [vmem:[%s3061 + $0x78] sm:$0xff]
        %v3078 = vld [vmem:[%s3061 + $0x80] sm:$0xff]
        %v3079 = vld [vmem:[%s3061 + $0x88] sm:$0xff]
        %v3080 = vld [vmem:[%s3061 + $0x90] sm:$0xff]
        %v3081 = vld [vmem:[%s3061 + $0x98] sm:$0xff]
        %v3082 = vld [vmem:[%s3061 + $0xa0] sm:$0xff]
        %v3083 = vld [vmem:[%s3061 + $0xa8] sm:$0xff]
        %v3084 = vld [vmem:[%s3061 + $0xb0] sm:$0xff]
        %v3085 = vld [vmem:[%s3061 + $0xb8] sm:$0xff]
        %v3086 = vld [vmem:[%s3061 + $0xc0] sm:$0xff]
        %v3087 = vld [vmem:[%s3061 + $0xc8] sm:$0xff]
        %v3088 = vld [vmem:[%s3061 + $0xd0] sm:$0xff]
        %v3089 = vld [vmem:[%s3061 + $0xd8] sm:$0xff]
        %v3090 = vld [vmem:[%s3061 + $0xe0] sm:$0xff]
        %v3091 = vld [vmem:[%s3061 + $0xe8] sm:$0xff]
        %v3092 = vld [vmem:[%s3061 + $0xf0] sm:$0xff]
        %v3093 = vld [vmem:[%s3061 + $0xf8] sm:$0xff]
        %v3094 = vld [vmem:[%s3061 + $0x100] sm:$0xff]
        %v3095 = vld [vmem:[%s3061 + $0x108] sm:$0xff]
        %v3096 = vld [vmem:[%s3061 + $0x110] sm:$0xff]
        %v3097 = vld [vmem:[%s3061 + $0x118] sm:$0xff]
        %v3098 = vld [vmem:[%s3061 + $0x120] sm:$0xff]
        %v3099 = vld [vmem:[%s3061 + $0x128] sm:$0xff]
        %v3100 = vld [vmem:[%s3061 + $0x130] sm:$0xff]
        %v3101 = vld [vmem:[%s3061 + $0x138] sm:$0xff]
        %v3102 = vld [vmem:[%s3061 + $0x140] sm:$0xff]
        %v3103 = vld [vmem:[%s3061 + $0x148] sm:$0xff]
        %v3104 = vld [vmem:[%s3061 + $0x150] sm:$0xff]
        %v3105 = vld [vmem:[%s3061 + $0x158] sm:$0xff]
        %v3106 = vld [vmem:[%s3061 + $0x160] sm:$0xff]
        %v3107 = vld [vmem:[%s3061 + $0x168] sm:$0xff]
        %v3108 = vld [vmem:[%s3061 + $0x170] sm:$0xff]
        %v3109 = vld [vmem:[%s3061 + $0x178] sm:$0xff]
        %v3110 = vmul.f32 %v2569, %v3062
        %v3111 = vmul.f32 %v2570, %v3063
        %v3112 = vmul.f32 %v2571, %v3064
        %v3113 = vmul.f32 %v2572, %v3065
        %v3114 = vmul.f32 %v2573, %v3066
        %v3115 = vmul.f32 %v2574, %v3067
        %v3116 = vmul.f32 %v2575, %v3068
        %v3117 = vmul.f32 %v2576, %v3069
        %v3118 = vmul.f32 %v2577, %v3070
        %v3119 = vmul.f32 %v2578, %v3071
        %v3120 = vmul.f32 %v2579, %v3072
        %v3121 = vmul.f32 %v2580, %v3073
        %v3122 = vmul.f32 %v2581, %v3074
        %v3123 = vmul.f32 %v2582, %v3075
        %v3124 = vmul.f32 %v2583, %v3076
        %v3125 = vmul.f32 %v2584, %v3077
        %v3126 = vmul.f32 %v2585, %v3078
        %v3127 = vmul.f32 %v2586, %v3079
        %v3128 = vmul.f32 %v2587, %v3080
        %v3129 = vmul.f32 %v2588, %v3081
        %v3130 = vmul.f32 %v2589, %v3082
        %v3131 = vmul.f32 %v2590, %v3083
        %v3132 = vmul.f32 %v2591, %v3084
        %v3133 = vmul.f32 %v2592, %v3085
        %v3134 = vmul.f32 %v2593, %v3086
        %v3135 = vmul.f32 %v2594, %v3087
        %v3136 = vmul.f32 %v2595, %v3088
        %v3137 = vmul.f32 %v2596, %v3089
        %v3138 = vmul.f32 %v2597, %v3090
        %v3139 = vmul.f32 %v2598, %v3091
        %v3140 = vmul.f32 %v2599, %v3092
        %v3141 = vmul.f32 %v2600, %v3093
        %v3142 = vmul.f32 %v2601, %v3094
        %v3143 = vmul.f32 %v2602, %v3095
        %v3144 = vmul.f32 %v2603, %v3096
        %v3145 = vmul.f32 %v2604, %v3097
        %v3146 = vmul.f32 %v2605, %v3098
        %v3147 = vmul.f32 %v2606, %v3099
        %v3148 = vmul.f32 %v2607, %v3100
        %v3149 = vmul.f32 %v2608, %v3101
        %v3150 = vmul.f32 %v2609, %v3102
        %v3151 = vmul.f32 %v2610, %v3103
        %v3152 = vmul.f32 %v2611, %v3104
        %v3153 = vmul.f32 %v2612, %v3105
        %v3154 = vmul.f32 %v2613, %v3106
        %v3155 = vmul.f32 %v2614, %v3107
        %v3156 = vmul.f32 %v2615, %v3108
        %v3157 = vmul.f32 %v2616, %v3109
        %v3158 = vadd.f32 %v3110, %v3111
        %v3159 = vadd.f32 %v3158, %v3112
        %v3160 = vadd.f32 %v3159, %v3113
        %v3161 = vadd.f32 %v3160, %v3114
        %v3162 = vadd.f32 %v3161, %v3115
        %v3163 = vadd.f32 %v3162, %v3116
        %v3164 = vadd.f32 %v3163, %v3117
        %v3165 = vadd.f32 %v3164, %v3118
        %v3166 = vadd.f32 %v3165, %v3119
        %v3167 = vadd.f32 %v3166, %v3120
        %v3168 = vadd.f32 %v3167, %v3121
        %v3169 = vadd.f32 %v3168, %v3122
        %v3170 = vadd.f32 %v3169, %v3123
        %v3171 = vadd.f32 %v3170, %v3124
        %v3172 = vadd.f32 %v3171, %v3125
        %v3173 = vadd.f32 %v3172, %v3126
        %v3174 = vadd.f32 %v3173, %v3127
        %v3175 = vadd.f32 %v3174, %v3128
        %v3176 = vadd.f32 %v3175, %v3129
        %v3177 = vadd.f32 %v3176, %v3130
        %v3178 = vadd.f32 %v3177, %v3131
        %v3179 = vadd.f32 %v3178, %v3132
        %v3180 = vadd.f32 %v3179, %v3133
        %v3181 = vadd.f32 %v3180, %v3134
        %v3182 = vadd.f32 %v3181, %v3135
        %v3183 = vadd.f32 %v3182, %v3136
        %v3184 = vadd.f32 %v3183, %v3137
        %v3185 = vadd.f32 %v3184, %v3138
        %v3186 = vadd.f32 %v3185, %v3139
        %v3187 = vadd.f32 %v3186, %v3140
        %v3188 = vadd.f32 %v3187, %v3141
        %v3189 = vadd.f32 %v3188, %v3142
        %v3190 = vadd.f32 %v3189, %v3143
        %v3191 = vadd.f32 %v3190, %v3144
        %v3192 = vadd.f32 %v3191, %v3145
        %v3193 = vadd.f32 %v3192, %v3146
        %v3194 = vadd.f32 %v3193, %v3147
        %v3195 = vadd.f32 %v3194, %v3148
        %v3196 = vadd.f32 %v3195, %v3149
        %v3197 = vadd.f32 %v3196, %v3150
        %v3198 = vadd.f32 %v3197, %v3151
        %v3199 = vadd.f32 %v3198, %v3152
        %v3200 = vadd.f32 %v3199, %v3153
        %v3201 = vadd.f32 %v3200, %v3154
        %v3202 = vadd.f32 %v3201, %v3155
        %v3203 = vadd.f32 %v3202, %v3156
        %v3204 = vadd.f32 %v3203, %v3157
        %v3205 = vadd.f32 %v3060, %v3204
        %3206 = vst [vmem:[%s3059] sm:$0xff] %v3205
        %s3207 = scalar_lea.vmem [#allocation2], 32
        %v3208 = vld [vmem:[%s3207] sm:$0xff]
        %s3209 = scalar_lea.vmem %s2523, 1536 [#allocation4]
        %v3210 = vld [vmem:[%s3209] sm:$0xff]
        %v3211 = vld [vmem:[%s3209 + $0x8] sm:$0xff]
        %v3212 = vld [vmem:[%s3209 + $0x10] sm:$0xff]
        %v3213 = vld [vmem:[%s3209 + $0x18] sm:$0xff]
        %v3214 = vld [vmem:[%s3209 + $0x20] sm:$0xff]
        %v3215 = vld [vmem:[%s3209 + $0x28] sm:$0xff]
        %v3216 = vld [vmem:[%s3209 + $0x30] sm:$0xff]
        %v3217 = vld [vmem:[%s3209 + $0x38] sm:$0xff]
        %v3218 = vld [vmem:[%s3209 + $0x40] sm:$0xff]
        %v3219 = vld [vmem:[%s3209 + $0x48] sm:$0xff]
        %v3220 = vld [vmem:[%s3209 + $0x50] sm:$0xff]
        %v3221 = vld [vmem:[%s3209 + $0x58] sm:$0xff]
        %v3222 = vld [vmem:[%s3209 + $0x60] sm:$0xff]
        %v3223 = vld [vmem:[%s3209 + $0x68] sm:$0xff]
        %v3224 = vld [vmem:[%s3209 + $0x70] sm:$0xff]
        %v3225 = vld [vmem:[%s3209 + $0x78] sm:$0xff]
        %v3226 = vld [vmem:[%s3209 + $0x80] sm:$0xff]
        %v3227 = vld [vmem:[%s3209 + $0x88] sm:$0xff]
        %v3228 = vld [vmem:[%s3209 + $0x90] sm:$0xff]
        %v3229 = vld [vmem:[%s3209 + $0x98] sm:$0xff]
        %v3230 = vld [vmem:[%s3209 + $0xa0] sm:$0xff]
        %v3231 = vld [vmem:[%s3209 + $0xa8] sm:$0xff]
        %v3232 = vld [vmem:[%s3209 + $0xb0] sm:$0xff]
        %v3233 = vld [vmem:[%s3209 + $0xb8] sm:$0xff]
        %v3234 = vld [vmem:[%s3209 + $0xc0] sm:$0xff]
        %v3235 = vld [vmem:[%s3209 + $0xc8] sm:$0xff]
        %v3236 = vld [vmem:[%s3209 + $0xd0] sm:$0xff]
        %v3237 = vld [vmem:[%s3209 + $0xd8] sm:$0xff]
        %v3238 = vld [vmem:[%s3209 + $0xe0] sm:$0xff]
        %v3239 = vld [vmem:[%s3209 + $0xe8] sm:$0xff]
        %v3240 = vld [vmem:[%s3209 + $0xf0] sm:$0xff]
        %v3241 = vld [vmem:[%s3209 + $0xf8] sm:$0xff]
        %v3242 = vld [vmem:[%s3209 + $0x100] sm:$0xff]
        %v3243 = vld [vmem:[%s3209 + $0x108] sm:$0xff]
        %v3244 = vld [vmem:[%s3209 + $0x110] sm:$0xff]
        %v3245 = vld [vmem:[%s3209 + $0x118] sm:$0xff]
        %v3246 = vld [vmem:[%s3209 + $0x120] sm:$0xff]
        %v3247 = vld [vmem:[%s3209 + $0x128] sm:$0xff]
        %v3248 = vld [vmem:[%s3209 + $0x130] sm:$0xff]
        %v3249 = vld [vmem:[%s3209 + $0x138] sm:$0xff]
        %v3250 = vld [vmem:[%s3209 + $0x140] sm:$0xff]
        %v3251 = vld [vmem:[%s3209 + $0x148] sm:$0xff]
        %v3252 = vld [vmem:[%s3209 + $0x150] sm:$0xff]
        %v3253 = vld [vmem:[%s3209 + $0x158] sm:$0xff]
        %v3254 = vld [vmem:[%s3209 + $0x160] sm:$0xff]
        %v3255 = vld [vmem:[%s3209 + $0x168] sm:$0xff]
        %v3256 = vld [vmem:[%s3209 + $0x170] sm:$0xff]
        %v3257 = vld [vmem:[%s3209 + $0x178] sm:$0xff]
        %v3258 = vmul.f32 %v2569, %v3210
        %v3259 = vmul.f32 %v2570, %v3211
        %v3260 = vmul.f32 %v2571, %v3212
        %v3261 = vmul.f32 %v2572, %v3213
        %v3262 = vmul.f32 %v2573, %v3214
        %v3263 = vmul.f32 %v2574, %v3215
        %v3264 = vmul.f32 %v2575, %v3216
        %v3265 = vmul.f32 %v2576, %v3217
        %v3266 = vmul.f32 %v2577, %v3218
        %v3267 = vmul.f32 %v2578, %v3219
        %v3268 = vmul.f32 %v2579, %v3220
        %v3269 = vmul.f32 %v2580, %v3221
        %v3270 = vmul.f32 %v2581, %v3222
        %v3271 = vmul.f32 %v2582, %v3223
        %v3272 = vmul.f32 %v2583, %v3224
        %v3273 = vmul.f32 %v2584, %v3225
        %v3274 = vmul.f32 %v2585, %v3226
        %v3275 = vmul.f32 %v2586, %v3227
        %v3276 = vmul.f32 %v2587, %v3228
        %v3277 = vmul.f32 %v2588, %v3229
        %v3278 = vmul.f32 %v2589, %v3230
        %v3279 = vmul.f32 %v2590, %v3231
        %v3280 = vmul.f32 %v2591, %v3232
        %v3281 = vmul.f32 %v2592, %v3233
        %v3282 = vmul.f32 %v2593, %v3234
        %v3283 = vmul.f32 %v2594, %v3235
        %v3284 = vmul.f32 %v2595, %v3236
        %v3285 = vmul.f32 %v2596, %v3237
        %v3286 = vmul.f32 %v2597, %v3238
        %v3287 = vmul.f32 %v2598, %v3239
        %v3288 = vmul.f32 %v2599, %v3240
        %v3289 = vmul.f32 %v2600, %v3241
        %v3290 = vmul.f32 %v2601, %v3242
        %v3291 = vmul.f32 %v2602, %v3243
        %v3292 = vmul.f32 %v2603, %v3244
        %v3293 = vmul.f32 %v2604, %v3245
        %v3294 = vmul.f32 %v2605, %v3246
        %v3295 = vmul.f32 %v2606, %v3247
        %v3296 = vmul.f32 %v2607, %v3248
        %v3297 = vmul.f32 %v2608, %v3249
        %v3298 = vmul.f32 %v2609, %v3250
        %v3299 = vmul.f32 %v2610, %v3251
        %v3300 = vmul.f32 %v2611, %v3252
        %v3301 = vmul.f32 %v2612, %v3253
        %v3302 = vmul.f32 %v2613, %v3254
        %v3303 = vmul.f32 %v2614, %v3255
        %v3304 = vmul.f32 %v2615, %v3256
        %v3305 = vmul.f32 %v2616, %v3257
        %v3306 = vadd.f32 %v3258, %v3259
        %v3307 = vadd.f32 %v3306, %v3260
        %v3308 = vadd.f32 %v3307, %v3261
        %v3309 = vadd.f32 %v3308, %v3262
        %v3310 = vadd.f32 %v3309, %v3263
        %v3311 = vadd.f32 %v3310, %v3264
        %v3312 = vadd.f32 %v3311, %v3265
        %v3313 = vadd.f32 %v3312, %v3266
        %v3314 = vadd.f32 %v3313, %v3267
        %v3315 = vadd.f32 %v3314, %v3268
        %v3316 = vadd.f32 %v3315, %v3269
        %v3317 = vadd.f32 %v3316, %v3270
        %v3318 = vadd.f32 %v3317, %v3271
        %v3319 = vadd.f32 %v3318, %v3272
        %v3320 = vadd.f32 %v3319, %v3273
        %v3321 = vadd.f32 %v3320, %v3274
        %v3322 = vadd.f32 %v3321, %v3275
        %v3323 = vadd.f32 %v3322, %v3276
        %v3324 = vadd.f32 %v3323, %v3277
        %v3325 = vadd.f32 %v3324, %v3278
        %v3326 = vadd.f32 %v3325, %v3279
        %v3327 = vadd.f32 %v3326, %v3280
        %v3328 = vadd.f32 %v3327, %v3281
        %v3329 = vadd.f32 %v3328, %v3282
        %v3330 = vadd.f32 %v3329, %v3283
        %v3331 = vadd.f32 %v3330, %v3284
        %v3332 = vadd.f32 %v3331, %v3285
        %v3333 = vadd.f32 %v3332, %v3286
        %v3334 = vadd.f32 %v3333, %v3287
        %v3335 = vadd.f32 %v3334, %v3288
        %v3336 = vadd.f32 %v3335, %v3289
        %v3337 = vadd.f32 %v3336, %v3290
        %v3338 = vadd.f32 %v3337, %v3291
        %v3339 = vadd.f32 %v3338, %v3292
        %v3340 = vadd.f32 %v3339, %v3293
        %v3341 = vadd.f32 %v3340, %v3294
        %v3342 = vadd.f32 %v3341, %v3295
        %v3343 = vadd.f32 %v3342, %v3296
        %v3344 = vadd.f32 %v3343, %v3297
        %v3345 = vadd.f32 %v3344, %v3298
        %v3346 = vadd.f32 %v3345, %v3299
        %v3347 = vadd.f32 %v3346, %v3300
        %v3348 = vadd.f32 %v3347, %v3301
        %v3349 = vadd.f32 %v3348, %v3302
        %v3350 = vadd.f32 %v3349, %v3303
        %v3351 = vadd.f32 %v3350, %v3304
        %v3352 = vadd.f32 %v3351, %v3305
        %v3353 = vadd.f32 %v3208, %v3352
        %3354 = vst [vmem:[%s3207] sm:$0xff] %v3353
        %s3355 = scalar_lea.vmem [#allocation2], 40
        %v3356 = vld [vmem:[%s3355] sm:$0xff]
        %s3357 = scalar_lea.vmem %s2523, 1920 [#allocation4]
        %v3358 = vld [vmem:[%s3357] sm:$0xff]
        %v3359 = vld [vmem:[%s3357 + $0x8] sm:$0xff]
        %v3360 = vld [vmem:[%s3357 + $0x10] sm:$0xff]
        %v3361 = vld [vmem:[%s3357 + $0x18] sm:$0xff]
        %v3362 = vld [vmem:[%s3357 + $0x20] sm:$0xff]
        %v3363 = vld [vmem:[%s3357 + $0x28] sm:$0xff]
        %v3364 = vld [vmem:[%s3357 + $0x30] sm:$0xff]
        %v3365 = vld [vmem:[%s3357 + $0x38] sm:$0xff]
        %v3366 = vld [vmem:[%s3357 + $0x40] sm:$0xff]
        %v3367 = vld [vmem:[%s3357 + $0x48] sm:$0xff]
        %v3368 = vld [vmem:[%s3357 + $0x50] sm:$0xff]
        %v3369 = vld [vmem:[%s3357 + $0x58] sm:$0xff]
        %v3370 = vld [vmem:[%s3357 + $0x60] sm:$0xff]
        %v3371 = vld [vmem:[%s3357 + $0x68] sm:$0xff]
        %v3372 = vld [vmem:[%s3357 + $0x70] sm:$0xff]
        %v3373 = vld [vmem:[%s3357 + $0x78] sm:$0xff]
        %v3374 = vld [vmem:[%s3357 + $0x80] sm:$0xff]
        %v3375 = vld [vmem:[%s3357 + $0x88] sm:$0xff]
        %v3376 = vld [vmem:[%s3357 + $0x90] sm:$0xff]
        %v3377 = vld [vmem:[%s3357 + $0x98] sm:$0xff]
        %v3378 = vld [vmem:[%s3357 + $0xa0] sm:$0xff]
        %v3379 = vld [vmem:[%s3357 + $0xa8] sm:$0xff]
        %v3380 = vld [vmem:[%s3357 + $0xb0] sm:$0xff]
        %v3381 = vld [vmem:[%s3357 + $0xb8] sm:$0xff]
        %v3382 = vld [vmem:[%s3357 + $0xc0] sm:$0xff]
        %v3383 = vld [vmem:[%s3357 + $0xc8] sm:$0xff]
        %v3384 = vld [vmem:[%s3357 + $0xd0] sm:$0xff]
        %v3385 = vld [vmem:[%s3357 + $0xd8] sm:$0xff]
        %v3386 = vld [vmem:[%s3357 + $0xe0] sm:$0xff]
        %v3387 = vld [vmem:[%s3357 + $0xe8] sm:$0xff]
        %v3388 = vld [vmem:[%s3357 + $0xf0] sm:$0xff]
        %v3389 = vld [vmem:[%s3357 + $0xf8] sm:$0xff]
        %v3390 = vld [vmem:[%s3357 + $0x100] sm:$0xff]
        %v3391 = vld [vmem:[%s3357 + $0x108] sm:$0xff]
        %v3392 = vld [vmem:[%s3357 + $0x110] sm:$0xff]
        %v3393 = vld [vmem:[%s3357 + $0x118] sm:$0xff]
        %v3394 = vld [vmem:[%s3357 + $0x120] sm:$0xff]
        %v3395 = vld [vmem:[%s3357 + $0x128] sm:$0xff]
        %v3396 = vld [vmem:[%s3357 + $0x130] sm:$0xff]
        %v3397 = vld [vmem:[%s3357 + $0x138] sm:$0xff]
        %v3398 = vld [vmem:[%s3357 + $0x140] sm:$0xff]
        %v3399 = vld [vmem:[%s3357 + $0x148] sm:$0xff]
        %v3400 = vld [vmem:[%s3357 + $0x150] sm:$0xff]
        %v3401 = vld [vmem:[%s3357 + $0x158] sm:$0xff]
        %v3402 = vld [vmem:[%s3357 + $0x160] sm:$0xff]
        %v3403 = vld [vmem:[%s3357 + $0x168] sm:$0xff]
        %v3404 = vld [vmem:[%s3357 + $0x170] sm:$0xff]
        %v3405 = vld [vmem:[%s3357 + $0x178] sm:$0xff]
        %v3406 = vmul.f32 %v2569, %v3358
        %v3407 = vmul.f32 %v2570, %v3359
        %v3408 = vmul.f32 %v2571, %v3360
        %v3409 = vmul.f32 %v2572, %v3361
        %v3410 = vmul.f32 %v2573, %v3362
        %v3411 = vmul.f32 %v2574, %v3363
        %v3412 = vmul.f32 %v2575, %v3364
        %v3413 = vmul.f32 %v2576, %v3365
        %v3414 = vmul.f32 %v2577, %v3366
        %v3415 = vmul.f32 %v2578, %v3367
        %v3416 = vmul.f32 %v2579, %v3368
        %v3417 = vmul.f32 %v2580, %v3369
        %v3418 = vmul.f32 %v2581, %v3370
        %v3419 = vmul.f32 %v2582, %v3371
        %v3420 = vmul.f32 %v2583, %v3372
        %v3421 = vmul.f32 %v2584, %v3373
        %v3422 = vmul.f32 %v2585, %v3374
        %v3423 = vmul.f32 %v2586, %v3375
        %v3424 = vmul.f32 %v2587, %v3376
        %v3425 = vmul.f32 %v2588, %v3377
        %v3426 = vmul.f32 %v2589, %v3378
        %v3427 = vmul.f32 %v2590, %v3379
        %v3428 = vmul.f32 %v2591, %v3380
        %v3429 = vmul.f32 %v2592, %v3381
        %v3430 = vmul.f32 %v2593, %v3382
        %v3431 = vmul.f32 %v2594, %v3383
        %v3432 = vmul.f32 %v2595, %v3384
        %v3433 = vmul.f32 %v2596, %v3385
        %v3434 = vmul.f32 %v2597, %v3386
        %v3435 = vmul.f32 %v2598, %v3387
        %v3436 = vmul.f32 %v2599, %v3388
        %v3437 = vmul.f32 %v2600, %v3389
        %v3438 = vmul.f32 %v2601, %v3390
        %v3439 = vmul.f32 %v2602, %v3391
        %v3440 = vmul.f32 %v2603, %v3392
        %v3441 = vmul.f32 %v2604, %v3393
        %v3442 = vmul.f32 %v2605, %v3394
        %v3443 = vmul.f32 %v2606, %v3395
        %v3444 = vmul.f32 %v2607, %v3396
        %v3445 = vmul.f32 %v2608, %v3397
        %v3446 = vmul.f32 %v2609, %v3398
        %v3447 = vmul.f32 %v2610, %v3399
        %v3448 = vmul.f32 %v2611, %v3400
        %v3449 = vmul.f32 %v2612, %v3401
        %v3450 = vmul.f32 %v2613, %v3402
        %v3451 = vmul.f32 %v2614, %v3403
        %v3452 = vmul.f32 %v2615, %v3404
        %v3453 = vmul.f32 %v2616, %v3405
        %v3454 = vadd.f32 %v3406, %v3407
        %v3455 = vadd.f32 %v3454, %v3408
        %v3456 = vadd.f32 %v3455, %v3409
        %v3457 = vadd.f32 %v3456, %v3410
        %v3458 = vadd.f32 %v3457, %v3411
        %v3459 = vadd.f32 %v3458, %v3412
        %v3460 = vadd.f32 %v3459, %v3413
        %v3461 = vadd.f32 %v3460, %v3414
        %v3462 = vadd.f32 %v3461, %v3415
        %v3463 = vadd.f32 %v3462, %v3416
        %v3464 = vadd.f32 %v3463, %v3417
        %v3465 = vadd.f32 %v3464, %v3418
        %v3466 = vadd.f32 %v3465, %v3419
        %v3467 = vadd.f32 %v3466, %v3420
        %v3468 = vadd.f32 %v3467, %v3421
        %v3469 = vadd.f32 %v3468, %v3422
        %v3470 = vadd.f32 %v3469, %v3423
        %v3471 = vadd.f32 %v3470, %v3424
        %v3472 = vadd.f32 %v3471, %v3425
        %v3473 = vadd.f32 %v3472, %v3426
        %v3474 = vadd.f32 %v3473, %v3427
        %v3475 = vadd.f32 %v3474, %v3428
        %v3476 = vadd.f32 %v3475, %v3429
        %v3477 = vadd.f32 %v3476, %v3430
        %v3478 = vadd.f32 %v3477, %v3431
        %v3479 = vadd.f32 %v3478, %v3432
        %v3480 = vadd.f32 %v3479, %v3433
        %v3481 = vadd.f32 %v3480, %v3434
        %v3482 = vadd.f32 %v3481, %v3435
        %v3483 = vadd.f32 %v3482, %v3436
        %v3484 = vadd.f32 %v3483, %v3437
        %v3485 = vadd.f32 %v3484, %v3438
        %v3486 = vadd.f32 %v3485, %v3439
        %v3487 = vadd.f32 %v3486, %v3440
        %v3488 = vadd.f32 %v3487, %v3441
        %v3489 = vadd.f32 %v3488, %v3442
        %v3490 = vadd.f32 %v3489, %v3443
        %v3491 = vadd.f32 %v3490, %v3444
        %v3492 = vadd.f32 %v3491, %v3445
        %v3493 = vadd.f32 %v3492, %v3446
        %v3494 = vadd.f32 %v3493, %v3447
        %v3495 = vadd.f32 %v3494, %v3448
        %v3496 = vadd.f32 %v3495, %v3449
        %v3497 = vadd.f32 %v3496, %v3450
        %v3498 = vadd.f32 %v3497, %v3451
        %v3499 = vadd.f32 %v3498, %v3452
        %v3500 = vadd.f32 %v3499, %v3453
        %v3501 = vadd.f32 %v3356, %v3500
        %3502 = vst [vmem:[%s3355] sm:$0xff] %v3501
        %s3503 = scalar_lea.vmem [#allocation2], 48
        %v3504 = vld [vmem:[%s3503] sm:$0xff]
        %s3505 = scalar_lea.vmem %s2523, 2304 [#allocation4]
        %v3506 = vld [vmem:[%s3505] sm:$0xff]
        %v3507 = vld [vmem:[%s3505 + $0x8] sm:$0xff]
        %v3508 = vld [vmem:[%s3505 + $0x10] sm:$0xff]
        %v3509 = vld [vmem:[%s3505 + $0x18] sm:$0xff]
        %v3510 = vld [vmem:[%s3505 + $0x20] sm:$0xff]
        %v3511 = vld [vmem:[%s3505 + $0x28] sm:$0xff]
        %v3512 = vld [vmem:[%s3505 + $0x30] sm:$0xff]
        %v3513 = vld [vmem:[%s3505 + $0x38] sm:$0xff]
        %v3514 = vld [vmem:[%s3505 + $0x40] sm:$0xff]
        %v3515 = vld [vmem:[%s3505 + $0x48] sm:$0xff]
        %v3516 = vld [vmem:[%s3505 + $0x50] sm:$0xff]
        %v3517 = vld [vmem:[%s3505 + $0x58] sm:$0xff]
        %v3518 = vld [vmem:[%s3505 + $0x60] sm:$0xff]
        %v3519 = vld [vmem:[%s3505 + $0x68] sm:$0xff]
        %v3520 = vld [vmem:[%s3505 + $0x70] sm:$0xff]
        %v3521 = vld [vmem:[%s3505 + $0x78] sm:$0xff]
        %v3522 = vld [vmem:[%s3505 + $0x80] sm:$0xff]
        %v3523 = vld [vmem:[%s3505 + $0x88] sm:$0xff]
        %v3524 = vld [vmem:[%s3505 + $0x90] sm:$0xff]
        %v3525 = vld [vmem:[%s3505 + $0x98] sm:$0xff]
        %v3526 = vld [vmem:[%s3505 + $0xa0] sm:$0xff]
        %v3527 = vld [vmem:[%s3505 + $0xa8] sm:$0xff]
        %v3528 = vld [vmem:[%s3505 + $0xb0] sm:$0xff]
        %v3529 = vld [vmem:[%s3505 + $0xb8] sm:$0xff]
        %v3530 = vld [vmem:[%s3505 + $0xc0] sm:$0xff]
        %v3531 = vld [vmem:[%s3505 + $0xc8] sm:$0xff]
        %v3532 = vld [vmem:[%s3505 + $0xd0] sm:$0xff]
        %v3533 = vld [vmem:[%s3505 + $0xd8] sm:$0xff]
        %v3534 = vld [vmem:[%s3505 + $0xe0] sm:$0xff]
        %v3535 = vld [vmem:[%s3505 + $0xe8] sm:$0xff]
        %v3536 = vld [vmem:[%s3505 + $0xf0] sm:$0xff]
        %v3537 = vld [vmem:[%s3505 + $0xf8] sm:$0xff]
        %v3538 = vld [vmem:[%s3505 + $0x100] sm:$0xff]
        %v3539 = vld [vmem:[%s3505 + $0x108] sm:$0xff]
        %v3540 = vld [vmem:[%s3505 + $0x110] sm:$0xff]
        %v3541 = vld [vmem:[%s3505 + $0x118] sm:$0xff]
        %v3542 = vld [vmem:[%s3505 + $0x120] sm:$0xff]
        %v3543 = vld [vmem:[%s3505 + $0x128] sm:$0xff]
        %v3544 = vld [vmem:[%s3505 + $0x130] sm:$0xff]
        %v3545 = vld [vmem:[%s3505 + $0x138] sm:$0xff]
        %v3546 = vld [vmem:[%s3505 + $0x140] sm:$0xff]
        %v3547 = vld [vmem:[%s3505 + $0x148] sm:$0xff]
        %v3548 = vld [vmem:[%s3505 + $0x150] sm:$0xff]
        %v3549 = vld [vmem:[%s3505 + $0x158] sm:$0xff]
        %v3550 = vld [vmem:[%s3505 + $0x160] sm:$0xff]
        %v3551 = vld [vmem:[%s3505 + $0x168] sm:$0xff]
        %v3552 = vld [vmem:[%s3505 + $0x170] sm:$0xff]
        %v3553 = vld [vmem:[%s3505 + $0x178] sm:$0xff]
        %v3554 = vmul.f32 %v2569, %v3506
        %v3555 = vmul.f32 %v2570, %v3507
        %v3556 = vmul.f32 %v2571, %v3508
        %v3557 = vmul.f32 %v2572, %v3509
        %v3558 = vmul.f32 %v2573, %v3510
        %v3559 = vmul.f32 %v2574, %v3511
        %v3560 = vmul.f32 %v2575, %v3512
        %v3561 = vmul.f32 %v2576, %v3513
        %v3562 = vmul.f32 %v2577, %v3514
        %v3563 = vmul.f32 %v2578, %v3515
        %v3564 = vmul.f32 %v2579, %v3516
        %v3565 = vmul.f32 %v2580, %v3517
        %v3566 = vmul.f32 %v2581, %v3518
        %v3567 = vmul.f32 %v2582, %v3519
        %v3568 = vmul.f32 %v2583, %v3520
        %v3569 = vmul.f32 %v2584, %v3521
        %v3570 = vmul.f32 %v2585, %v3522
        %v3571 = vmul.f32 %v2586, %v3523
        %v3572 = vmul.f32 %v2587, %v3524
        %v3573 = vmul.f32 %v2588, %v3525
        %v3574 = vmul.f32 %v2589, %v3526
        %v3575 = vmul.f32 %v2590, %v3527
        %v3576 = vmul.f32 %v2591, %v3528
        %v3577 = vmul.f32 %v2592, %v3529
        %v3578 = vmul.f32 %v2593, %v3530
        %v3579 = vmul.f32 %v2594, %v3531
        %v3580 = vmul.f32 %v2595, %v3532
        %v3581 = vmul.f32 %v2596, %v3533
        %v3582 = vmul.f32 %v2597, %v3534
        %v3583 = vmul.f32 %v2598, %v3535
        %v3584 = vmul.f32 %v2599, %v3536
        %v3585 = vmul.f32 %v2600, %v3537
        %v3586 = vmul.f32 %v2601, %v3538
        %v3587 = vmul.f32 %v2602, %v3539
        %v3588 = vmul.f32 %v2603, %v3540
        %v3589 = vmul.f32 %v2604, %v3541
        %v3590 = vmul.f32 %v2605, %v3542
        %v3591 = vmul.f32 %v2606, %v3543
        %v3592 = vmul.f32 %v2607, %v3544
        %v3593 = vmul.f32 %v2608, %v3545
        %v3594 = vmul.f32 %v2609, %v3546
        %v3595 = vmul.f32 %v2610, %v3547
        %v3596 = vmul.f32 %v2611, %v3548
        %v3597 = vmul.f32 %v2612, %v3549
        %v3598 = vmul.f32 %v2613, %v3550
        %v3599 = vmul.f32 %v2614, %v3551
        %v3600 = vmul.f32 %v2615, %v3552
        %v3601 = vmul.f32 %v2616, %v3553
        %v3602 = vadd.f32 %v3554, %v3555
        %v3603 = vadd.f32 %v3602, %v3556
        %v3604 = vadd.f32 %v3603, %v3557
        %v3605 = vadd.f32 %v3604, %v3558
        %v3606 = vadd.f32 %v3605, %v3559
        %v3607 = vadd.f32 %v3606, %v3560
        %v3608 = vadd.f32 %v3607, %v3561
        %v3609 = vadd.f32 %v3608, %v3562
        %v3610 = vadd.f32 %v3609, %v3563
        %v3611 = vadd.f32 %v3610, %v3564
        %v3612 = vadd.f32 %v3611, %v3565
        %v3613 = vadd.f32 %v3612, %v3566
        %v3614 = vadd.f32 %v3613, %v3567
        %v3615 = vadd.f32 %v3614, %v3568
        %v3616 = vadd.f32 %v3615, %v3569
        %v3617 = vadd.f32 %v3616, %v3570
        %v3618 = vadd.f32 %v3617, %v3571
        %v3619 = vadd.f32 %v3618, %v3572
        %v3620 = vadd.f32 %v3619, %v3573
        %v3621 = vadd.f32 %v3620, %v3574
        %v3622 = vadd.f32 %v3621, %v3575
        %v3623 = vadd.f32 %v3622, %v3576
        %v3624 = vadd.f32 %v3623, %v3577
        %v3625 = vadd.f32 %v3624, %v3578
        %v3626 = vadd.f32 %v3625, %v3579
        %v3627 = vadd.f32 %v3626, %v3580
        %v3628 = vadd.f32 %v3627, %v3581
        %v3629 = vadd.f32 %v3628, %v3582
        %v3630 = vadd.f32 %v3629, %v3583
        %v3631 = vadd.f32 %v3630, %v3584
        %v3632 = vadd.f32 %v3631, %v3585
        %v3633 = vadd.f32 %v3632, %v3586
        %v3634 = vadd.f32 %v3633, %v3587
        %v3635 = vadd.f32 %v3634, %v3588
        %v3636 = vadd.f32 %v3635, %v3589
        %v3637 = vadd.f32 %v3636, %v3590
        %v3638 = vadd.f32 %v3637, %v3591
        %v3639 = vadd.f32 %v3638, %v3592
        %v3640 = vadd.f32 %v3639, %v3593
        %v3641 = vadd.f32 %v3640, %v3594
        %v3642 = vadd.f32 %v3641, %v3595
        %v3643 = vadd.f32 %v3642, %v3596
        %v3644 = vadd.f32 %v3643, %v3597
        %v3645 = vadd.f32 %v3644, %v3598
        %v3646 = vadd.f32 %v3645, %v3599
        %v3647 = vadd.f32 %v3646, %v3600
        %v3648 = vadd.f32 %v3647, %v3601
        %v3649 = vadd.f32 %v3504, %v3648
        %3650 = vst [vmem:[%s3503] sm:$0xff] %v3649
        %s3651 = scalar_lea.vmem [#allocation2], 56
        %v3652 = vld [vmem:[%s3651] sm:$0xff]
        %s3653 = scalar_lea.vmem %s2523, 2688 [#allocation4]
        %v3654 = vld [vmem:[%s3653] sm:$0xff]
        %v3655 = vld [vmem:[%s3653 + $0x8] sm:$0xff]
        %v3656 = vld [vmem:[%s3653 + $0x10] sm:$0xff]
        %v3657 = vld [vmem:[%s3653 + $0x18] sm:$0xff]
        %v3658 = vld [vmem:[%s3653 + $0x20] sm:$0xff]
        %v3659 = vld [vmem:[%s3653 + $0x28] sm:$0xff]
        %v3660 = vld [vmem:[%s3653 + $0x30] sm:$0xff]
        %v3661 = vld [vmem:[%s3653 + $0x38] sm:$0xff]
        %v3662 = vld [vmem:[%s3653 + $0x40] sm:$0xff]
        %v3663 = vld [vmem:[%s3653 + $0x48] sm:$0xff]
        %v3664 = vld [vmem:[%s3653 + $0x50] sm:$0xff]
        %v3665 = vld [vmem:[%s3653 + $0x58] sm:$0xff]
        %v3666 = vld [vmem:[%s3653 + $0x60] sm:$0xff]
        %v3667 = vld [vmem:[%s3653 + $0x68] sm:$0xff]
        %v3668 = vld [vmem:[%s3653 + $0x70] sm:$0xff]
        %v3669 = vld [vmem:[%s3653 + $0x78] sm:$0xff]
        %v3670 = vld [vmem:[%s3653 + $0x80] sm:$0xff]
        %v3671 = vld [vmem:[%s3653 + $0x88] sm:$0xff]
        %v3672 = vld [vmem:[%s3653 + $0x90] sm:$0xff]
        %v3673 = vld [vmem:[%s3653 + $0x98] sm:$0xff]
        %v3674 = vld [vmem:[%s3653 + $0xa0] sm:$0xff]
        %v3675 = vld [vmem:[%s3653 + $0xa8] sm:$0xff]
        %v3676 = vld [vmem:[%s3653 + $0xb0] sm:$0xff]
        %v3677 = vld [vmem:[%s3653 + $0xb8] sm:$0xff]
        %v3678 = vld [vmem:[%s3653 + $0xc0] sm:$0xff]
        %v3679 = vld [vmem:[%s3653 + $0xc8] sm:$0xff]
        %v3680 = vld [vmem:[%s3653 + $0xd0] sm:$0xff]
        %v3681 = vld [vmem:[%s3653 + $0xd8] sm:$0xff]
        %v3682 = vld [vmem:[%s3653 + $0xe0] sm:$0xff]
        %v3683 = vld [vmem:[%s3653 + $0xe8] sm:$0xff]
        %v3684 = vld [vmem:[%s3653 + $0xf0] sm:$0xff]
        %v3685 = vld [vmem:[%s3653 + $0xf8] sm:$0xff]
        %v3686 = vld [vmem:[%s3653 + $0x100] sm:$0xff]
        %v3687 = vld [vmem:[%s3653 + $0x108] sm:$0xff]
        %v3688 = vld [vmem:[%s3653 + $0x110] sm:$0xff]
        %v3689 = vld [vmem:[%s3653 + $0x118] sm:$0xff]
        %v3690 = vld [vmem:[%s3653 + $0x120] sm:$0xff]
        %v3691 = vld [vmem:[%s3653 + $0x128] sm:$0xff]
        %v3692 = vld [vmem:[%s3653 + $0x130] sm:$0xff]
        %v3693 = vld [vmem:[%s3653 + $0x138] sm:$0xff]
        %v3694 = vld [vmem:[%s3653 + $0x140] sm:$0xff]
        %v3695 = vld [vmem:[%s3653 + $0x148] sm:$0xff]
        %v3696 = vld [vmem:[%s3653 + $0x150] sm:$0xff]
        %v3697 = vld [vmem:[%s3653 + $0x158] sm:$0xff]
        %v3698 = vld [vmem:[%s3653 + $0x160] sm:$0xff]
        %v3699 = vld [vmem:[%s3653 + $0x168] sm:$0xff]
        %v3700 = vld [vmem:[%s3653 + $0x170] sm:$0xff]
        %v3701 = vld [vmem:[%s3653 + $0x178] sm:$0xff]
        %v3702 = vmul.f32 %v2569, %v3654
        %v3703 = vmul.f32 %v2570, %v3655
        %v3704 = vmul.f32 %v2571, %v3656
        %v3705 = vmul.f32 %v2572, %v3657
        %v3706 = vmul.f32 %v2573, %v3658
        %v3707 = vmul.f32 %v2574, %v3659
        %v3708 = vmul.f32 %v2575, %v3660
        %v3709 = vmul.f32 %v2576, %v3661
        %v3710 = vmul.f32 %v2577, %v3662
        %v3711 = vmul.f32 %v2578, %v3663
        %v3712 = vmul.f32 %v2579, %v3664
        %v3713 = vmul.f32 %v2580, %v3665
        %v3714 = vmul.f32 %v2581, %v3666
        %v3715 = vmul.f32 %v2582, %v3667
        %v3716 = vmul.f32 %v2583, %v3668
        %v3717 = vmul.f32 %v2584, %v3669
        %v3718 = vmul.f32 %v2585, %v3670
        %v3719 = vmul.f32 %v2586, %v3671
        %v3720 = vmul.f32 %v2587, %v3672
        %v3721 = vmul.f32 %v2588, %v3673
        %v3722 = vmul.f32 %v2589, %v3674
        %v3723 = vmul.f32 %v2590, %v3675
        %v3724 = vmul.f32 %v2591, %v3676
        %v3725 = vmul.f32 %v2592, %v3677
        %v3726 = vmul.f32 %v2593, %v3678
        %v3727 = vmul.f32 %v2594, %v3679
        %v3728 = vmul.f32 %v2595, %v3680
        %v3729 = vmul.f32 %v2596, %v3681
        %v3730 = vmul.f32 %v2597, %v3682
        %v3731 = vmul.f32 %v2598, %v3683
        %v3732 = vmul.f32 %v2599, %v3684
        %v3733 = vmul.f32 %v2600, %v3685
        %v3734 = vmul.f32 %v2601, %v3686
        %v3735 = vmul.f32 %v2602, %v3687
        %v3736 = vmul.f32 %v2603, %v3688
        %v3737 = vmul.f32 %v2604, %v3689
        %v3738 = vmul.f32 %v2605, %v3690
        %v3739 = vmul.f32 %v2606, %v3691
        %v3740 = vmul.f32 %v2607, %v3692
        %v3741 = vmul.f32 %v2608, %v3693
        %v3742 = vmul.f32 %v2609, %v3694
        %v3743 = vmul.f32 %v2610, %v3695
        %v3744 = vmul.f32 %v2611, %v3696
        %v3745 = vmul.f32 %v2612, %v3697
        %v3746 = vmul.f32 %v2613, %v3698
        %v3747 = vmul.f32 %v2614, %v3699
        %v3748 = vmul.f32 %v2615, %v3700
        %v3749 = vmul.f32 %v2616, %v3701
        %v3750 = vadd.f32 %v3702, %v3703
        %v3751 = vadd.f32 %v3750, %v3704
        %v3752 = vadd.f32 %v3751, %v3705
        %v3753 = vadd.f32 %v3752, %v3706
        %v3754 = vadd.f32 %v3753, %v3707
        %v3755 = vadd.f32 %v3754, %v3708
        %v3756 = vadd.f32 %v3755, %v3709
        %v3757 = vadd.f32 %v3756, %v3710
        %v3758 = vadd.f32 %v3757, %v3711
        %v3759 = vadd.f32 %v3758, %v3712
        %v3760 = vadd.f32 %v3759, %v3713
        %v3761 = vadd.f32 %v3760, %v3714
        %v3762 = vadd.f32 %v3761, %v3715
        %v3763 = vadd.f32 %v3762, %v3716
        %v3764 = vadd.f32 %v3763, %v3717
        %v3765 = vadd.f32 %v3764, %v3718
        %v3766 = vadd.f32 %v3765, %v3719
        %v3767 = vadd.f32 %v3766, %v3720
        %v3768 = vadd.f32 %v3767, %v3721
        %v3769 = vadd.f32 %v3768, %v3722
        %v3770 = vadd.f32 %v3769, %v3723
        %v3771 = vadd.f32 %v3770, %v3724
        %v3772 = vadd.f32 %v3771, %v3725
        %v3773 = vadd.f32 %v3772, %v3726
        %v3774 = vadd.f32 %v3773, %v3727
        %v3775 = vadd.f32 %v3774, %v3728
        %v3776 = vadd.f32 %v3775, %v3729
        %v3777 = vadd.f32 %v3776, %v3730
        %v3778 = vadd.f32 %v3777, %v3731
        %v3779 = vadd.f32 %v3778, %v3732
        %v3780 = vadd.f32 %v3779, %v3733
        %v3781 = vadd.f32 %v3780, %v3734
        %v3782 = vadd.f32 %v3781, %v3735
        %v3783 = vadd.f32 %v3782, %v3736
        %v3784 = vadd.f32 %v3783, %v3737
        %v3785 = vadd.f32 %v3784, %v3738
        %v3786 = vadd.f32 %v3785, %v3739
        %v3787 = vadd.f32 %v3786, %v3740
        %v3788 = vadd.f32 %v3787, %v3741
        %v3789 = vadd.f32 %v3788, %v3742
        %v3790 = vadd.f32 %v3789, %v3743
        %v3791 = vadd.f32 %v3790, %v3744
        %v3792 = vadd.f32 %v3791, %v3745
        %v3793 = vadd.f32 %v3792, %v3746
        %v3794 = vadd.f32 %v3793, %v3747
        %v3795 = vadd.f32 %v3794, %v3748
        %v3796 = vadd.f32 %v3795, %v3749
        %v3797 = vadd.f32 %v3652, %v3796
        %3798 = vst [vmem:[%s3651] sm:$0xff] %v3797
        %s3799 = scalar_lea.vmem [#allocation2], 64
        %v3800 = vld [vmem:[%s3799] sm:$0xff]
        %s3801 = scalar_lea.vmem %s2523, 3072 [#allocation4]
        %v3802 = vld [vmem:[%s3801] sm:$0xff]
        %v3803 = vld [vmem:[%s3801 + $0x8] sm:$0xff]
        %v3804 = vld [vmem:[%s3801 + $0x10] sm:$0xff]
        %v3805 = vld [vmem:[%s3801 + $0x18] sm:$0xff]
        %v3806 = vld [vmem:[%s3801 + $0x20] sm:$0xff]
        %v3807 = vld [vmem:[%s3801 + $0x28] sm:$0xff]
        %v3808 = vld [vmem:[%s3801 + $0x30] sm:$0xff]
        %v3809 = vld [vmem:[%s3801 + $0x38] sm:$0xff]
        %v3810 = vld [vmem:[%s3801 + $0x40] sm:$0xff]
        %v3811 = vld [vmem:[%s3801 + $0x48] sm:$0xff]
        %v3812 = vld [vmem:[%s3801 + $0x50] sm:$0xff]
        %v3813 = vld [vmem:[%s3801 + $0x58] sm:$0xff]
        %v3814 = vld [vmem:[%s3801 + $0x60] sm:$0xff]
        %v3815 = vld [vmem:[%s3801 + $0x68] sm:$0xff]
        %v3816 = vld [vmem:[%s3801 + $0x70] sm:$0xff]
        %v3817 = vld [vmem:[%s3801 + $0x78] sm:$0xff]
        %v3818 = vld [vmem:[%s3801 + $0x80] sm:$0xff]
        %v3819 = vld [vmem:[%s3801 + $0x88] sm:$0xff]
        %v3820 = vld [vmem:[%s3801 + $0x90] sm:$0xff]
        %v3821 = vld [vmem:[%s3801 + $0x98] sm:$0xff]
        %v3822 = vld [vmem:[%s3801 + $0xa0] sm:$0xff]
        %v3823 = vld [vmem:[%s3801 + $0xa8] sm:$0xff]
        %v3824 = vld [vmem:[%s3801 + $0xb0] sm:$0xff]
        %v3825 = vld [vmem:[%s3801 + $0xb8] sm:$0xff]
        %v3826 = vld [vmem:[%s3801 + $0xc0] sm:$0xff]
        %v3827 = vld [vmem:[%s3801 + $0xc8] sm:$0xff]
        %v3828 = vld [vmem:[%s3801 + $0xd0] sm:$0xff]
        %v3829 = vld [vmem:[%s3801 + $0xd8] sm:$0xff]
        %v3830 = vld [vmem:[%s3801 + $0xe0] sm:$0xff]
        %v3831 = vld [vmem:[%s3801 + $0xe8] sm:$0xff]
        %v3832 = vld [vmem:[%s3801 + $0xf0] sm:$0xff]
        %v3833 = vld [vmem:[%s3801 + $0xf8] sm:$0xff]
        %v3834 = vld [vmem:[%s3801 + $0x100] sm:$0xff]
        %v3835 = vld [vmem:[%s3801 + $0x108] sm:$0xff]
        %v3836 = vld [vmem:[%s3801 + $0x110] sm:$0xff]
        %v3837 = vld [vmem:[%s3801 + $0x118] sm:$0xff]
        %v3838 = vld [vmem:[%s3801 + $0x120] sm:$0xff]
        %v3839 = vld [vmem:[%s3801 + $0x128] sm:$0xff]
        %v3840 = vld [vmem:[%s3801 + $0x130] sm:$0xff]
        %v3841 = vld [vmem:[%s3801 + $0x138] sm:$0xff]
        %v3842 = vld [vmem:[%s3801 + $0x140] sm:$0xff]
        %v3843 = vld [vmem:[%s3801 + $0x148] sm:$0xff]
        %v3844 = vld [vmem:[%s3801 + $0x150] sm:$0xff]
        %v3845 = vld [vmem:[%s3801 + $0x158] sm:$0xff]
        %v3846 = vld [vmem:[%s3801 + $0x160] sm:$0xff]
        %v3847 = vld [vmem:[%s3801 + $0x168] sm:$0xff]
        %v3848 = vld [vmem:[%s3801 + $0x170] sm:$0xff]
        %v3849 = vld [vmem:[%s3801 + $0x178] sm:$0xff]
        %v3850 = vmul.f32 %v2569, %v3802
        %v3851 = vmul.f32 %v2570, %v3803
        %v3852 = vmul.f32 %v2571, %v3804
        %v3853 = vmul.f32 %v2572, %v3805
        %v3854 = vmul.f32 %v2573, %v3806
        %v3855 = vmul.f32 %v2574, %v3807
        %v3856 = vmul.f32 %v2575, %v3808
        %v3857 = vmul.f32 %v2576, %v3809
        %v3858 = vmul.f32 %v2577, %v3810
        %v3859 = vmul.f32 %v2578, %v3811
        %v3860 = vmul.f32 %v2579, %v3812
        %v3861 = vmul.f32 %v2580, %v3813
        %v3862 = vmul.f32 %v2581, %v3814
        %v3863 = vmul.f32 %v2582, %v3815
        %v3864 = vmul.f32 %v2583, %v3816
        %v3865 = vmul.f32 %v2584, %v3817
        %v3866 = vmul.f32 %v2585, %v3818
        %v3867 = vmul.f32 %v2586, %v3819
        %v3868 = vmul.f32 %v2587, %v3820
        %v3869 = vmul.f32 %v2588, %v3821
        %v3870 = vmul.f32 %v2589, %v3822
        %v3871 = vmul.f32 %v2590, %v3823
        %v3872 = vmul.f32 %v2591, %v3824
        %v3873 = vmul.f32 %v2592, %v3825
        %v3874 = vmul.f32 %v2593, %v3826
        %v3875 = vmul.f32 %v2594, %v3827
        %v3876 = vmul.f32 %v2595, %v3828
        %v3877 = vmul.f32 %v2596, %v3829
        %v3878 = vmul.f32 %v2597, %v3830
        %v3879 = vmul.f32 %v2598, %v3831
        %v3880 = vmul.f32 %v2599, %v3832
        %v3881 = vmul.f32 %v2600, %v3833
        %v3882 = vmul.f32 %v2601, %v3834
        %v3883 = vmul.f32 %v2602, %v3835
        %v3884 = vmul.f32 %v2603, %v3836
        %v3885 = vmul.f32 %v2604, %v3837
        %v3886 = vmul.f32 %v2605, %v3838
        %v3887 = vmul.f32 %v2606, %v3839
        %v3888 = vmul.f32 %v2607, %v3840
        %v3889 = vmul.f32 %v2608, %v3841
        %v3890 = vmul.f32 %v2609, %v3842
        %v3891 = vmul.f32 %v2610, %v3843
        %v3892 = vmul.f32 %v2611, %v3844
        %v3893 = vmul.f32 %v2612, %v3845
        %v3894 = vmul.f32 %v2613, %v3846
        %v3895 = vmul.f32 %v2614, %v3847
        %v3896 = vmul.f32 %v2615, %v3848
        %v3897 = vmul.f32 %v2616, %v3849
        %v3898 = vadd.f32 %v3850, %v3851
        %v3899 = vadd.f32 %v3898, %v3852
        %v3900 = vadd.f32 %v3899, %v3853
        %v3901 = vadd.f32 %v3900, %v3854
        %v3902 = vadd.f32 %v3901, %v3855
        %v3903 = vadd.f32 %v3902, %v3856
        %v3904 = vadd.f32 %v3903, %v3857
        %v3905 = vadd.f32 %v3904, %v3858
        %v3906 = vadd.f32 %v3905, %v3859
        %v3907 = vadd.f32 %v3906, %v3860
        %v3908 = vadd.f32 %v3907, %v3861
        %v3909 = vadd.f32 %v3908, %v3862
        %v3910 = vadd.f32 %v3909, %v3863
        %v3911 = vadd.f32 %v3910, %v3864
        %v3912 = vadd.f32 %v3911, %v3865
        %v3913 = vadd.f32 %v3912, %v3866
        %v3914 = vadd.f32 %v3913, %v3867
        %v3915 = vadd.f32 %v3914, %v3868
        %v3916 = vadd.f32 %v3915, %v3869
        %v3917 = vadd.f32 %v3916, %v3870
        %v3918 = vadd.f32 %v3917, %v3871
        %v3919 = vadd.f32 %v3918, %v3872
        %v3920 = vadd.f32 %v3919, %v3873
        %v3921 = vadd.f32 %v3920, %v3874
        %v3922 = vadd.f32 %v3921, %v3875
        %v3923 = vadd.f32 %v3922, %v3876
        %v3924 = vadd.f32 %v3923, %v3877
        %v3925 = vadd.f32 %v3924, %v3878
        %v3926 = vadd.f32 %v3925, %v3879
        %v3927 = vadd.f32 %v3926, %v3880
        %v3928 = vadd.f32 %v3927, %v3881
        %v3929 = vadd.f32 %v3928, %v3882
        %v3930 = vadd.f32 %v3929, %v3883
        %v3931 = vadd.f32 %v3930, %v3884
        %v3932 = vadd.f32 %v3931, %v3885
        %v3933 = vadd.f32 %v3932, %v3886
        %v3934 = vadd.f32 %v3933, %v3887
        %v3935 = vadd.f32 %v3934, %v3888
        %v3936 = vadd.f32 %v3935, %v3889
        %v3937 = vadd.f32 %v3936, %v3890
        %v3938 = vadd.f32 %v3937, %v3891
        %v3939 = vadd.f32 %v3938, %v3892
        %v3940 = vadd.f32 %v3939, %v3893
        %v3941 = vadd.f32 %v3940, %v3894
        %v3942 = vadd.f32 %v3941, %v3895
        %v3943 = vadd.f32 %v3942, %v3896
        %v3944 = vadd.f32 %v3943, %v3897
        %v3945 = vadd.f32 %v3800, %v3944
        %3946 = vst [vmem:[%s3799] sm:$0xff] %v3945
        %s3947 = scalar_lea.vmem [#allocation2], 72
        %v3948 = vld [vmem:[%s3947] sm:$0xff]
        %s3949 = scalar_lea.vmem %s2523, 3456 [#allocation4]
        %v3950 = vld [vmem:[%s3949] sm:$0xff]
        %v3951 = vld [vmem:[%s3949 + $0x8] sm:$0xff]
        %v3952 = vld [vmem:[%s3949 + $0x10] sm:$0xff]
        %v3953 = vld [vmem:[%s3949 + $0x18] sm:$0xff]
        %v3954 = vld [vmem:[%s3949 + $0x20] sm:$0xff]
        %v3955 = vld [vmem:[%s3949 + $0x28] sm:$0xff]
        %v3956 = vld [vmem:[%s3949 + $0x30] sm:$0xff]
        %v3957 = vld [vmem:[%s3949 + $0x38] sm:$0xff]
        %v3958 = vld [vmem:[%s3949 + $0x40] sm:$0xff]
        %v3959 = vld [vmem:[%s3949 + $0x48] sm:$0xff]
        %v3960 = vld [vmem:[%s3949 + $0x50] sm:$0xff]
        %v3961 = vld [vmem:[%s3949 + $0x58] sm:$0xff]
        %v3962 = vld [vmem:[%s3949 + $0x60] sm:$0xff]
        %v3963 = vld [vmem:[%s3949 + $0x68] sm:$0xff]
        %v3964 = vld [vmem:[%s3949 + $0x70] sm:$0xff]
        %v3965 = vld [vmem:[%s3949 + $0x78] sm:$0xff]
        %v3966 = vld [vmem:[%s3949 + $0x80] sm:$0xff]
        %v3967 = vld [vmem:[%s3949 + $0x88] sm:$0xff]
        %v3968 = vld [vmem:[%s3949 + $0x90] sm:$0xff]
        %v3969 = vld [vmem:[%s3949 + $0x98] sm:$0xff]
        %v3970 = vld [vmem:[%s3949 + $0xa0] sm:$0xff]
        %v3971 = vld [vmem:[%s3949 + $0xa8] sm:$0xff]
        %v3972 = vld [vmem:[%s3949 + $0xb0] sm:$0xff]
        %v3973 = vld [vmem:[%s3949 + $0xb8] sm:$0xff]
        %v3974 = vld [vmem:[%s3949 + $0xc0] sm:$0xff]
        %v3975 = vld [vmem:[%s3949 + $0xc8] sm:$0xff]
        %v3976 = vld [vmem:[%s3949 + $0xd0] sm:$0xff]
        %v3977 = vld [vmem:[%s3949 + $0xd8] sm:$0xff]
        %v3978 = vld [vmem:[%s3949 + $0xe0] sm:$0xff]
        %v3979 = vld [vmem:[%s3949 + $0xe8] sm:$0xff]
        %v3980 = vld [vmem:[%s3949 + $0xf0] sm:$0xff]
        %v3981 = vld [vmem:[%s3949 + $0xf8] sm:$0xff]
        %v3982 = vld [vmem:[%s3949 + $0x100] sm:$0xff]
        %v3983 = vld [vmem:[%s3949 + $0x108] sm:$0xff]
        %v3984 = vld [vmem:[%s3949 + $0x110] sm:$0xff]
        %v3985 = vld [vmem:[%s3949 + $0x118] sm:$0xff]
        %v3986 = vld [vmem:[%s3949 + $0x120] sm:$0xff]
        %v3987 = vld [vmem:[%s3949 + $0x128] sm:$0xff]
        %v3988 = vld [vmem:[%s3949 + $0x130] sm:$0xff]
        %v3989 = vld [vmem:[%s3949 + $0x138] sm:$0xff]
        %v3990 = vld [vmem:[%s3949 + $0x140] sm:$0xff]
        %v3991 = vld [vmem:[%s3949 + $0x148] sm:$0xff]
        %v3992 = vld [vmem:[%s3949 + $0x150] sm:$0xff]
        %v3993 = vld [vmem:[%s3949 + $0x158] sm:$0xff]
        %v3994 = vld [vmem:[%s3949 + $0x160] sm:$0xff]
        %v3995 = vld [vmem:[%s3949 + $0x168] sm:$0xff]
        %v3996 = vld [vmem:[%s3949 + $0x170] sm:$0xff]
        %v3997 = vld [vmem:[%s3949 + $0x178] sm:$0xff]
        %v3998 = vmul.f32 %v2569, %v3950
        %v3999 = vmul.f32 %v2570, %v3951
        %v4000 = vmul.f32 %v2571, %v3952
        %v4001 = vmul.f32 %v2572, %v3953
        %v4002 = vmul.f32 %v2573, %v3954
        %v4003 = vmul.f32 %v2574, %v3955
        %v4004 = vmul.f32 %v2575, %v3956
        %v4005 = vmul.f32 %v2576, %v3957
        %v4006 = vmul.f32 %v2577, %v3958
        %v4007 = vmul.f32 %v2578, %v3959
        %v4008 = vmul.f32 %v2579, %v3960
        %v4009 = vmul.f32 %v2580, %v3961
        %v4010 = vmul.f32 %v2581, %v3962
        %v4011 = vmul.f32 %v2582, %v3963
        %v4012 = vmul.f32 %v2583, %v3964
        %v4013 = vmul.f32 %v2584, %v3965
        %v4014 = vmul.f32 %v2585, %v3966
        %v4015 = vmul.f32 %v2586, %v3967
        %v4016 = vmul.f32 %v2587, %v3968
        %v4017 = vmul.f32 %v2588, %v3969
        %v4018 = vmul.f32 %v2589, %v3970
        %v4019 = vmul.f32 %v2590, %v3971
        %v4020 = vmul.f32 %v2591, %v3972
        %v4021 = vmul.f32 %v2592, %v3973
        %v4022 = vmul.f32 %v2593, %v3974
        %v4023 = vmul.f32 %v2594, %v3975
        %v4024 = vmul.f32 %v2595, %v3976
        %v4025 = vmul.f32 %v2596, %v3977
        %v4026 = vmul.f32 %v2597, %v3978
        %v4027 = vmul.f32 %v2598, %v3979
        %v4028 = vmul.f32 %v2599, %v3980
        %v4029 = vmul.f32 %v2600, %v3981
        %v4030 = vmul.f32 %v2601, %v3982
        %v4031 = vmul.f32 %v2602, %v3983
        %v4032 = vmul.f32 %v2603, %v3984
        %v4033 = vmul.f32 %v2604, %v3985
        %v4034 = vmul.f32 %v2605, %v3986
        %v4035 = vmul.f32 %v2606, %v3987
        %v4036 = vmul.f32 %v2607, %v3988
        %v4037 = vmul.f32 %v2608, %v3989
        %v4038 = vmul.f32 %v2609, %v3990
        %v4039 = vmul.f32 %v2610, %v3991
        %v4040 = vmul.f32 %v2611, %v3992
        %v4041 = vmul.f32 %v2612, %v3993
        %v4042 = vmul.f32 %v2613, %v3994
        %v4043 = vmul.f32 %v2614, %v3995
        %v4044 = vmul.f32 %v2615, %v3996
        %v4045 = vmul.f32 %v2616, %v3997
        %v4046 = vadd.f32 %v3998, %v3999
        %v4047 = vadd.f32 %v4046, %v4000
        %v4048 = vadd.f32 %v4047, %v4001
        %v4049 = vadd.f32 %v4048, %v4002
        %v4050 = vadd.f32 %v4049, %v4003
        %v4051 = vadd.f32 %v4050, %v4004
        %v4052 = vadd.f32 %v4051, %v4005
        %v4053 = vadd.f32 %v4052, %v4006
        %v4054 = vadd.f32 %v4053, %v4007
        %v4055 = vadd.f32 %v4054, %v4008
        %v4056 = vadd.f32 %v4055, %v4009
        %v4057 = vadd.f32 %v4056, %v4010
        %v4058 = vadd.f32 %v4057, %v4011
        %v4059 = vadd.f32 %v4058, %v4012
        %v4060 = vadd.f32 %v4059, %v4013
        %v4061 = vadd.f32 %v4060, %v4014
        %v4062 = vadd.f32 %v4061, %v4015
        %v4063 = vadd.f32 %v4062, %v4016
        %v4064 = vadd.f32 %v4063, %v4017
        %v4065 = vadd.f32 %v4064, %v4018
        %v4066 = vadd.f32 %v4065, %v4019
        %v4067 = vadd.f32 %v4066, %v4020
        %v4068 = vadd.f32 %v4067, %v4021
        %v4069 = vadd.f32 %v4068, %v4022
        %v4070 = vadd.f32 %v4069, %v4023
        %v4071 = vadd.f32 %v4070, %v4024
        %v4072 = vadd.f32 %v4071, %v4025
        %v4073 = vadd.f32 %v4072, %v4026
        %v4074 = vadd.f32 %v4073, %v4027
        %v4075 = vadd.f32 %v4074, %v4028
        %v4076 = vadd.f32 %v4075, %v4029
        %v4077 = vadd.f32 %v4076, %v4030
        %v4078 = vadd.f32 %v4077, %v4031
        %v4079 = vadd.f32 %v4078, %v4032
        %v4080 = vadd.f32 %v4079, %v4033
        %v4081 = vadd.f32 %v4080, %v4034
        %v4082 = vadd.f32 %v4081, %v4035
        %v4083 = vadd.f32 %v4082, %v4036
        %v4084 = vadd.f32 %v4083, %v4037
        %v4085 = vadd.f32 %v4084, %v4038
        %v4086 = vadd.f32 %v4085, %v4039
        %v4087 = vadd.f32 %v4086, %v4040
        %v4088 = vadd.f32 %v4087, %v4041
        %v4089 = vadd.f32 %v4088, %v4042
        %v4090 = vadd.f32 %v4089, %v4043
        %v4091 = vadd.f32 %v4090, %v4044
        %v4092 = vadd.f32 %v4091, %v4045
        %v4093 = vadd.f32 %v3948, %v4092
        %4094 = vst [vmem:[%s3947] sm:$0xff] %v4093
        %s4095 = scalar_lea.vmem %s2516, 384 [#allocation3]
        %v4096 = vld [vmem:[%s4095] sm:$0xff]
        %v4097 = vld [vmem:[%s4095 + $0x8] sm:$0xff]
        %v4098 = vld [vmem:[%s4095 + $0x10] sm:$0xff]
        %v4099 = vld [vmem:[%s4095 + $0x18] sm:$0xff]
        %v4100 = vld [vmem:[%s4095 + $0x20] sm:$0xff]
        %v4101 = vld [vmem:[%s4095 + $0x28] sm:$0xff]
        %v4102 = vld [vmem:[%s4095 + $0x30] sm:$0xff]
        %v4103 = vld [vmem:[%s4095 + $0x38] sm:$0xff]
        %v4104 = vld [vmem:[%s4095 + $0x40] sm:$0xff]
        %v4105 = vld [vmem:[%s4095 + $0x48] sm:$0xff]
        %v4106 = vld [vmem:[%s4095 + $0x50] sm:$0xff]
        %v4107 = vld [vmem:[%s4095 + $0x58] sm:$0xff]
        %v4108 = vld [vmem:[%s4095 + $0x60] sm:$0xff]
        %v4109 = vld [vmem:[%s4095 + $0x68] sm:$0xff]
        %v4110 = vld [vmem:[%s4095 + $0x70] sm:$0xff]
        %v4111 = vld [vmem:[%s4095 + $0x78] sm:$0xff]
        %v4112 = vld [vmem:[%s4095 + $0x80] sm:$0xff]
        %v4113 = vld [vmem:[%s4095 + $0x88] sm:$0xff]
        %v4114 = vld [vmem:[%s4095 + $0x90] sm:$0xff]
        %v4115 = vld [vmem:[%s4095 + $0x98] sm:$0xff]
        %v4116 = vld [vmem:[%s4095 + $0xa0] sm:$0xff]
        %v4117 = vld [vmem:[%s4095 + $0xa8] sm:$0xff]
        %v4118 = vld [vmem:[%s4095 + $0xb0] sm:$0xff]
        %v4119 = vld [vmem:[%s4095 + $0xb8] sm:$0xff]
        %v4120 = vld [vmem:[%s4095 + $0xc0] sm:$0xff]
        %v4121 = vld [vmem:[%s4095 + $0xc8] sm:$0xff]
        %v4122 = vld [vmem:[%s4095 + $0xd0] sm:$0xff]
        %v4123 = vld [vmem:[%s4095 + $0xd8] sm:$0xff]
        %v4124 = vld [vmem:[%s4095 + $0xe0] sm:$0xff]
        %v4125 = vld [vmem:[%s4095 + $0xe8] sm:$0xff]
        %v4126 = vld [vmem:[%s4095 + $0xf0] sm:$0xff]
        %v4127 = vld [vmem:[%s4095 + $0xf8] sm:$0xff]
        %v4128 = vld [vmem:[%s4095 + $0x100] sm:$0xff]
        %v4129 = vld [vmem:[%s4095 + $0x108] sm:$0xff]
        %v4130 = vld [vmem:[%s4095 + $0x110] sm:$0xff]
        %v4131 = vld [vmem:[%s4095 + $0x118] sm:$0xff]
        %v4132 = vld [vmem:[%s4095 + $0x120] sm:$0xff]
        %v4133 = vld [vmem:[%s4095 + $0x128] sm:$0xff]
        %v4134 = vld [vmem:[%s4095 + $0x130] sm:$0xff]
        %v4135 = vld [vmem:[%s4095 + $0x138] sm:$0xff]
        %v4136 = vld [vmem:[%s4095 + $0x140] sm:$0xff]
        %v4137 = vld [vmem:[%s4095 + $0x148] sm:$0xff]
        %v4138 = vld [vmem:[%s4095 + $0x150] sm:$0xff]
        %v4139 = vld [vmem:[%s4095 + $0x158] sm:$0xff]
        %v4140 = vld [vmem:[%s4095 + $0x160] sm:$0xff]
        %v4141 = vld [vmem:[%s4095 + $0x168] sm:$0xff]
        %v4142 = vld [vmem:[%s4095 + $0x170] sm:$0xff]
        %v4143 = vld [vmem:[%s4095 + $0x178] sm:$0xff]
        %s4144 = scalar_lea.vmem [#allocation2], 80
        %v4145 = vld [vmem:[%s4144] sm:$0xff]
        %v4146 = vld [vmem:[%s2523] sm:$0xff]
        %v4147 = vld [vmem:[%s2523 + $0x8] sm:$0xff]
        %v4148 = vld [vmem:[%s2523 + $0x10] sm:$0xff]
        %v4149 = vld [vmem:[%s2523 + $0x18] sm:$0xff]
        %v4150 = vld [vmem:[%s2523 + $0x20] sm:$0xff]
        %v4151 = vld [vmem:[%s2523 + $0x28] sm:$0xff]
        %v4152 = vld [vmem:[%s2523 + $0x30] sm:$0xff]
        %v4153 = vld [vmem:[%s2523 + $0x38] sm:$0xff]
        %v4154 = vld [vmem:[%s2523 + $0x40] sm:$0xff]
        %v4155 = vld [vmem:[%s2523 + $0x48] sm:$0xff]
        %v4156 = vld [vmem:[%s2523 + $0x50] sm:$0xff]
        %v4157 = vld [vmem:[%s2523 + $0x58] sm:$0xff]
        %v4158 = vld [vmem:[%s2523 + $0x60] sm:$0xff]
        %v4159 = vld [vmem:[%s2523 + $0x68] sm:$0xff]
        %v4160 = vld [vmem:[%s2523 + $0x70] sm:$0xff]
        %v4161 = vld [vmem:[%s2523 + $0x78] sm:$0xff]
        %v4162 = vld [vmem:[%s2523 + $0x80] sm:$0xff]
        %v4163 = vld [vmem:[%s2523 + $0x88] sm:$0xff]
        %v4164 = vld [vmem:[%s2523 + $0x90] sm:$0xff]
        %v4165 = vld [vmem:[%s2523 + $0x98] sm:$0xff]
        %v4166 = vld [vmem:[%s2523 + $0xa0] sm:$0xff]
        %v4167 = vld [vmem:[%s2523 + $0xa8] sm:$0xff]
        %v4168 = vld [vmem:[%s2523 + $0xb0] sm:$0xff]
        %v4169 = vld [vmem:[%s2523 + $0xb8] sm:$0xff]
        %v4170 = vld [vmem:[%s2523 + $0xc0] sm:$0xff]
        %v4171 = vld [vmem:[%s2523 + $0xc8] sm:$0xff]
        %v4172 = vld [vmem:[%s2523 + $0xd0] sm:$0xff]
        %v4173 = vld [vmem:[%s2523 + $0xd8] sm:$0xff]
        %v4174 = vld [vmem:[%s2523 + $0xe0] sm:$0xff]
        %v4175 = vld [vmem:[%s2523 + $0xe8] sm:$0xff]
        %v4176 = vld [vmem:[%s2523 + $0xf0] sm:$0xff]
        %v4177 = vld [vmem:[%s2523 + $0xf8] sm:$0xff]
        %v4178 = vld [vmem:[%s2523 + $0x100] sm:$0xff]
        %v4179 = vld [vmem:[%s2523 + $0x108] sm:$0xff]
        %v4180 = vld [vmem:[%s2523 + $0x110] sm:$0xff]
        %v4181 = vld [vmem:[%s2523 + $0x118] sm:$0xff]
        %v4182 = vld [vmem:[%s2523 + $0x120] sm:$0xff]
        %v4183 = vld [vmem:[%s2523 + $0x128] sm:$0xff]
        %v4184 = vld [vmem:[%s2523 + $0x130] sm:$0xff]
        %v4185 = vld [vmem:[%s2523 + $0x138] sm:$0xff]
        %v4186 = vld [vmem:[%s2523 + $0x140] sm:$0xff]
        %v4187 = vld [vmem:[%s2523 + $0x148] sm:$0xff]
        %v4188 = vld [vmem:[%s2523 + $0x150] sm:$0xff]
        %v4189 = vld [vmem:[%s2523 + $0x158] sm:$0xff]
        %v4190 = vld [vmem:[%s2523 + $0x160] sm:$0xff]
        %v4191 = vld [vmem:[%s2523 + $0x168] sm:$0xff]
        %v4192 = vld [vmem:[%s2523 + $0x170] sm:$0xff]
        %v4193 = vld [vmem:[%s2523 + $0x178] sm:$0xff]
        %v4194 = vmul.f32 %v4096, %v4146
        %v4195 = vmul.f32 %v4097, %v4147
        %v4196 = vmul.f32 %v4098, %v4148
        %v4197 = vmul.f32 %v4099, %v4149
        %v4198 = vmul.f32 %v4100, %v4150
        %v4199 = vmul.f32 %v4101, %v4151
        %v4200 = vmul.f32 %v4102, %v4152
        %v4201 = vmul.f32 %v4103, %v4153
        %v4202 = vmul.f32 %v4104, %v4154
        %v4203 = vmul.f32 %v4105, %v4155
        %v4204 = vmul.f32 %v4106, %v4156
        %v4205 = vmul.f32 %v4107, %v4157
        %v4206 = vmul.f32 %v4108, %v4158
        %v4207 = vmul.f32 %v4109, %v4159
        %v4208 = vmul.f32 %v4110, %v4160
        %v4209 = vmul.f32 %v4111, %v4161
        %v4210 = vmul.f32 %v4112, %v4162
        %v4211 = vmul.f32 %v4113, %v4163
        %v4212 = vmul.f32 %v4114, %v4164
        %v4213 = vmul.f32 %v4115, %v4165
        %v4214 = vmul.f32 %v4116, %v4166
        %v4215 = vmul.f32 %v4117, %v4167
        %v4216 = vmul.f32 %v4118, %v4168
        %v4217 = vmul.f32 %v4119, %v4169
        %v4218 = vmul.f32 %v4120, %v4170
        %v4219 = vmul.f32 %v4121, %v4171
        %v4220 = vmul.f32 %v4122, %v4172
        %v4221 = vmul.f32 %v4123, %v4173
        %v4222 = vmul.f32 %v4124, %v4174
        %v4223 = vmul.f32 %v4125, %v4175
        %v4224 = vmul.f32 %v4126, %v4176
        %v4225 = vmul.f32 %v4127, %v4177
        %v4226 = vmul.f32 %v4128, %v4178
        %v4227 = vmul.f32 %v4129, %v4179
        %v4228 = vmul.f32 %v4130, %v4180
        %v4229 = vmul.f32 %v4131, %v4181
        %v4230 = vmul.f32 %v4132, %v4182
        %v4231 = vmul.f32 %v4133, %v4183
        %v4232 = vmul.f32 %v4134, %v4184
        %v4233 = vmul.f32 %v4135, %v4185
        %v4234 = vmul.f32 %v4136, %v4186
        %v4235 = vmul.f32 %v4137, %v4187
        %v4236 = vmul.f32 %v4138, %v4188
        %v4237 = vmul.f32 %v4139, %v4189
        %v4238 = vmul.f32 %v4140, %v4190
        %v4239 = vmul.f32 %v4141, %v4191
        %v4240 = vmul.f32 %v4142, %v4192
        %v4241 = vmul.f32 %v4143, %v4193
        %v4242 = vadd.f32 %v4194, %v4195
        %v4243 = vadd.f32 %v4242, %v4196
        %v4244 = vadd.f32 %v4243, %v4197
        %v4245 = vadd.f32 %v4244, %v4198
        %v4246 = vadd.f32 %v4245, %v4199
        %v4247 = vadd.f32 %v4246, %v4200
        %v4248 = vadd.f32 %v4247, %v4201
        %v4249 = vadd.f32 %v4248, %v4202
        %v4250 = vadd.f32 %v4249, %v4203
        %v4251 = vadd.f32 %v4250, %v4204
        %v4252 = vadd.f32 %v4251, %v4205
        %v4253 = vadd.f32 %v4252, %v4206
        %v4254 = vadd.f32 %v4253, %v4207
        %v4255 = vadd.f32 %v4254, %v4208
        %v4256 = vadd.f32 %v4255, %v4209
        %v4257 = vadd.f32 %v4256, %v4210
        %v4258 = vadd.f32 %v4257, %v4211
        %v4259 = vadd.f32 %v4258, %v4212
        %v4260 = vadd.f32 %v4259, %v4213
        %v4261 = vadd.f32 %v4260, %v4214
        %v4262 = vadd.f32 %v4261, %v4215
        %v4263 = vadd.f32 %v4262, %v4216
        %v4264 = vadd.f32 %v4263, %v4217
        %v4265 = vadd.f32 %v4264, %v4218
        %v4266 = vadd.f32 %v4265, %v4219
        %v4267 = vadd.f32 %v4266, %v4220
        %v4268 = vadd.f32 %v4267, %v4221
        %v4269 = vadd.f32 %v4268, %v4222
        %v4270 = vadd.f32 %v4269, %v4223
        %v4271 = vadd.f32 %v4270, %v4224
        %v4272 = vadd.f32 %v4271, %v4225
        %v4273 = vadd.f32 %v4272, %v4226
        %v4274 = vadd.f32 %v4273, %v4227
        %v4275 = vadd.f32 %v4274, %v4228
        %v4276 = vadd.f32 %v4275, %v4229
        %v4277 = vadd.f32 %v4276, %v4230
        %v4278 = vadd.f32 %v4277, %v4231
        %v4279 = vadd.f32 %v4278, %v4232
        %v4280 = vadd.f32 %v4279, %v4233
        %v4281 = vadd.f32 %v4280, %v4234
        %v4282 = vadd.f32 %v4281, %v4235
        %v4283 = vadd.f32 %v4282, %v4236
        %v4284 = vadd.f32 %v4283, %v4237
        %v4285 = vadd.f32 %v4284, %v4238
        %v4286 = vadd.f32 %v4285, %v4239
        %v4287 = vadd.f32 %v4286, %v4240
        %v4288 = vadd.f32 %v4287, %v4241
        %v4289 = vadd.f32 %v4145, %v4288
        %4290 = vst [vmem:[%s4144] sm:$0xff] %v4289
        %s4291 = scalar_lea.vmem [#allocation2], 88
        %v4292 = vld [vmem:[%s4291] sm:$0xff]
        %v4293 = vld [vmem:[%s2765] sm:$0xff]
        %v4294 = vld [vmem:[%s2765 + $0x8] sm:$0xff]
        %v4295 = vld [vmem:[%s2765 + $0x10] sm:$0xff]
        %v4296 = vld [vmem:[%s2765 + $0x18] sm:$0xff]
        %v4297 = vld [vmem:[%s2765 + $0x20] sm:$0xff]
        %v4298 = vld [vmem:[%s2765 + $0x28] sm:$0xff]
        %v4299 = vld [vmem:[%s2765 + $0x30] sm:$0xff]
        %v4300 = vld [vmem:[%s2765 + $0x38] sm:$0xff]
        %v4301 = vld [vmem:[%s2765 + $0x40] sm:$0xff]
        %v4302 = vld [vmem:[%s2765 + $0x48] sm:$0xff]
        %v4303 = vld [vmem:[%s2765 + $0x50] sm:$0xff]
        %v4304 = vld [vmem:[%s2765 + $0x58] sm:$0xff]
        %v4305 = vld [vmem:[%s2765 + $0x60] sm:$0xff]
        %v4306 = vld [vmem:[%s2765 + $0x68] sm:$0xff]
        %v4307 = vld [vmem:[%s2765 + $0x70] sm:$0xff]
        %v4308 = vld [vmem:[%s2765 + $0x78] sm:$0xff]
        %v4309 = vld [vmem:[%s2765 + $0x80] sm:$0xff]
        %v4310 = vld [vmem:[%s2765 + $0x88] sm:$0xff]
        %v4311 = vld [vmem:[%s2765 + $0x90] sm:$0xff]
        %v4312 = vld [vmem:[%s2765 + $0x98] sm:$0xff]
        %v4313 = vld [vmem:[%s2765 + $0xa0] sm:$0xff]
        %v4314 = vld [vmem:[%s2765 + $0xa8] sm:$0xff]
        %v4315 = vld [vmem:[%s2765 + $0xb0] sm:$0xff]
        %v4316 = vld [vmem:[%s2765 + $0xb8] sm:$0xff]
        %v4317 = vld [vmem:[%s2765 + $0xc0] sm:$0xff]
        %v4318 = vld [vmem:[%s2765 + $0xc8] sm:$0xff]
        %v4319 = vld [vmem:[%s2765 + $0xd0] sm:$0xff]
        %v4320 = vld [vmem:[%s2765 + $0xd8] sm:$0xff]
        %v4321 = vld [vmem:[%s2765 + $0xe0] sm:$0xff]
        %v4322 = vld [vmem:[%s2765 + $0xe8] sm:$0xff]
        %v4323 = vld [vmem:[%s2765 + $0xf0] sm:$0xff]
        %v4324 = vld [vmem:[%s2765 + $0xf8] sm:$0xff]
        %v4325 = vld [vmem:[%s2765 + $0x100] sm:$0xff]
        %v4326 = vld [vmem:[%s2765 + $0x108] sm:$0xff]
        %v4327 = vld [vmem:[%s2765 + $0x110] sm:$0xff]
        %v4328 = vld [vmem:[%s2765 + $0x118] sm:$0xff]
        %v4329 = vld [vmem:[%s2765 + $0x120] sm:$0xff]
        %v4330 = vld [vmem:[%s2765 + $0x128] sm:$0xff]
        %v4331 = vld [vmem:[%s2765 + $0x130] sm:$0xff]
        %v4332 = vld [vmem:[%s2765 + $0x138] sm:$0xff]
        %v4333 = vld [vmem:[%s2765 + $0x140] sm:$0xff]
        %v4334 = vld [vmem:[%s2765 + $0x148] sm:$0xff]
        %v4335 = vld [vmem:[%s2765 + $0x150] sm:$0xff]
        %v4336 = vld [vmem:[%s2765 + $0x158] sm:$0xff]
        %v4337 = vld [vmem:[%s2765 + $0x160] sm:$0xff]
        %v4338 = vld [vmem:[%s2765 + $0x168] sm:$0xff]
        %v4339 = vld [vmem:[%s2765 + $0x170] sm:$0xff]
        %v4340 = vld [vmem:[%s2765 + $0x178] sm:$0xff]
        %v4341 = vmul.f32 %v4096, %v4293
        %v4342 = vmul.f32 %v4097, %v4294
        %v4343 = vmul.f32 %v4098, %v4295
        %v4344 = vmul.f32 %v4099, %v4296
        %v4345 = vmul.f32 %v4100, %v4297
        %v4346 = vmul.f32 %v4101, %v4298
        %v4347 = vmul.f32 %v4102, %v4299
        %v4348 = vmul.f32 %v4103, %v4300
        %v4349 = vmul.f32 %v4104, %v4301
        %v4350 = vmul.f32 %v4105, %v4302
        %v4351 = vmul.f32 %v4106, %v4303
        %v4352 = vmul.f32 %v4107, %v4304
        %v4353 = vmul.f32 %v4108, %v4305
        %v4354 = vmul.f32 %v4109, %v4306
        %v4355 = vmul.f32 %v4110, %v4307
        %v4356 = vmul.f32 %v4111, %v4308
        %v4357 = vmul.f32 %v4112, %v4309
        %v4358 = vmul.f32 %v4113, %v4310
        %v4359 = vmul.f32 %v4114, %v4311
        %v4360 = vmul.f32 %v4115, %v4312
        %v4361 = vmul.f32 %v4116, %v4313
        %v4362 = vmul.f32 %v4117, %v4314
        %v4363 = vmul.f32 %v4118, %v4315
        %v4364 = vmul.f32 %v4119, %v4316
        %v4365 = vmul.f32 %v4120, %v4317
        %v4366 = vmul.f32 %v4121, %v4318
        %v4367 = vmul.f32 %v4122, %v4319
        %v4368 = vmul.f32 %v4123, %v4320
        %v4369 = vmul.f32 %v4124, %v4321
        %v4370 = vmul.f32 %v4125, %v4322
        %v4371 = vmul.f32 %v4126, %v4323
        %v4372 = vmul.f32 %v4127, %v4324
        %v4373 = vmul.f32 %v4128, %v4325
        %v4374 = vmul.f32 %v4129, %v4326
        %v4375 = vmul.f32 %v4130, %v4327
        %v4376 = vmul.f32 %v4131, %v4328
        %v4377 = vmul.f32 %v4132, %v4329
        %v4378 = vmul.f32 %v4133, %v4330
        %v4379 = vmul.f32 %v4134, %v4331
        %v4380 = vmul.f32 %v4135, %v4332
        %v4381 = vmul.f32 %v4136, %v4333
        %v4382 = vmul.f32 %v4137, %v4334
        %v4383 = vmul.f32 %v4138, %v4335
        %v4384 = vmul.f32 %v4139, %v4336
        %v4385 = vmul.f32 %v4140, %v4337
        %v4386 = vmul.f32 %v4141, %v4338
        %v4387 = vmul.f32 %v4142, %v4339
        %v4388 = vmul.f32 %v4143, %v4340
        %v4389 = vadd.f32 %v4341, %v4342
        %v4390 = vadd.f32 %v4389, %v4343
        %v4391 = vadd.f32 %v4390, %v4344
        %v4392 = vadd.f32 %v4391, %v4345
        %v4393 = vadd.f32 %v4392, %v4346
        %v4394 = vadd.f32 %v4393, %v4347
        %v4395 = vadd.f32 %v4394, %v4348
        %v4396 = vadd.f32 %v4395, %v4349
        %v4397 = vadd.f32 %v4396, %v4350
        %v4398 = vadd.f32 %v4397, %v4351
        %v4399 = vadd.f32 %v4398, %v4352
        %v4400 = vadd.f32 %v4399, %v4353
        %v4401 = vadd.f32 %v4400, %v4354
        %v4402 = vadd.f32 %v4401, %v4355
        %v4403 = vadd.f32 %v4402, %v4356
        %v4404 = vadd.f32 %v4403, %v4357
        %v4405 = vadd.f32 %v4404, %v4358
        %v4406 = vadd.f32 %v4405, %v4359
        %v4407 = vadd.f32 %v4406, %v4360
        %v4408 = vadd.f32 %v4407, %v4361
        %v4409 = vadd.f32 %v4408, %v4362
        %v4410 = vadd.f32 %v4409, %v4363
        %v4411 = vadd.f32 %v4410, %v4364
        %v4412 = vadd.f32 %v4411, %v4365
        %v4413 = vadd.f32 %v4412, %v4366
        %v4414 = vadd.f32 %v4413, %v4367
        %v4415 = vadd.f32 %v4414, %v4368
        %v4416 = vadd.f32 %v4415, %v4369
        %v4417 = vadd.f32 %v4416, %v4370
        %v4418 = vadd.f32 %v4417, %v4371
        %v4419 = vadd.f32 %v4418, %v4372
        %v4420 = vadd.f32 %v4419, %v4373
        %v4421 = vadd.f32 %v4420, %v4374
        %v4422 = vadd.f32 %v4421, %v4375
        %v4423 = vadd.f32 %v4422, %v4376
        %v4424 = vadd.f32 %v4423, %v4377
        %v4425 = vadd.f32 %v4424, %v4378
        %v4426 = vadd.f32 %v4425, %v4379
        %v4427 = vadd.f32 %v4426, %v4380
        %v4428 = vadd.f32 %v4427, %v4381
        %v4429 = vadd.f32 %v4428, %v4382
        %v4430 = vadd.f32 %v4429, %v4383
        %v4431 = vadd.f32 %v4430, %v4384
        %v4432 = vadd.f32 %v4431, %v4385
        %v4433 = vadd.f32 %v4432, %v4386
        %v4434 = vadd.f32 %v4433, %v4387
        %v4435 = vadd.f32 %v4434, %v4388
        %v4436 = vadd.f32 %v4292, %v4435
        %4437 = vst [vmem:[%s4291] sm:$0xff] %v4436
        %s4438 = scalar_lea.vmem [#allocation2], 96
        %v4439 = vld [vmem:[%s4438] sm:$0xff]
        %v4440 = vld [vmem:[%s2913] sm:$0xff]
        %v4441 = vld [vmem:[%s2913 + $0x8] sm:$0xff]
        %v4442 = vld [vmem:[%s2913 + $0x10] sm:$0xff]
        %v4443 = vld [vmem:[%s2913 + $0x18] sm:$0xff]
        %v4444 = vld [vmem:[%s2913 + $0x20] sm:$0xff]
        %v4445 = vld [vmem:[%s2913 + $0x28] sm:$0xff]
        %v4446 = vld [vmem:[%s2913 + $0x30] sm:$0xff]
        %v4447 = vld [vmem:[%s2913 + $0x38] sm:$0xff]
        %v4448 = vld [vmem:[%s2913 + $0x40] sm:$0xff]
        %v4449 = vld [vmem:[%s2913 + $0x48] sm:$0xff]
        %v4450 = vld [vmem:[%s2913 + $0x50] sm:$0xff]
        %v4451 = vld [vmem:[%s2913 + $0x58] sm:$0xff]
        %v4452 = vld [vmem:[%s2913 + $0x60] sm:$0xff]
        %v4453 = vld [vmem:[%s2913 + $0x68] sm:$0xff]
        %v4454 = vld [vmem:[%s2913 + $0x70] sm:$0xff]
        %v4455 = vld [vmem:[%s2913 + $0x78] sm:$0xff]
        %v4456 = vld [vmem:[%s2913 + $0x80] sm:$0xff]
        %v4457 = vld [vmem:[%s2913 + $0x88] sm:$0xff]
        %v4458 = vld [vmem:[%s2913 + $0x90] sm:$0xff]
        %v4459 = vld [vmem:[%s2913 + $0x98] sm:$0xff]
        %v4460 = vld [vmem:[%s2913 + $0xa0] sm:$0xff]
        %v4461 = vld [vmem:[%s2913 + $0xa8] sm:$0xff]
        %v4462 = vld [vmem:[%s2913 + $0xb0] sm:$0xff]
        %v4463 = vld [vmem:[%s2913 + $0xb8] sm:$0xff]
        %v4464 = vld [vmem:[%s2913 + $0xc0] sm:$0xff]
        %v4465 = vld [vmem:[%s2913 + $0xc8] sm:$0xff]
        %v4466 = vld [vmem:[%s2913 + $0xd0] sm:$0xff]
        %v4467 = vld [vmem:[%s2913 + $0xd8] sm:$0xff]
        %v4468 = vld [vmem:[%s2913 + $0xe0] sm:$0xff]
        %v4469 = vld [vmem:[%s2913 + $0xe8] sm:$0xff]
        %v4470 = vld [vmem:[%s2913 + $0xf0] sm:$0xff]
        %v4471 = vld [vmem:[%s2913 + $0xf8] sm:$0xff]
        %v4472 = vld [vmem:[%s2913 + $0x100] sm:$0xff]
        %v4473 = vld [vmem:[%s2913 + $0x108] sm:$0xff]
        %v4474 = vld [vmem:[%s2913 + $0x110] sm:$0xff]
        %v4475 = vld [vmem:[%s2913 + $0x118] sm:$0xff]
        %v4476 = vld [vmem:[%s2913 + $0x120] sm:$0xff]
        %v4477 = vld [vmem:[%s2913 + $0x128] sm:$0xff]
        %v4478 = vld [vmem:[%s2913 + $0x130] sm:$0xff]
        %v4479 = vld [vmem:[%s2913 + $0x138] sm:$0xff]
        %v4480 = vld [vmem:[%s2913 + $0x140] sm:$0xff]
        %v4481 = vld [vmem:[%s2913 + $0x148] sm:$0xff]
        %v4482 = vld [vmem:[%s2913 + $0x150] sm:$0xff]
        %v4483 = vld [vmem:[%s2913 + $0x158] sm:$0xff]
        %v4484 = vld [vmem:[%s2913 + $0x160] sm:$0xff]
        %v4485 = vld [vmem:[%s2913 + $0x168] sm:$0xff]
        %v4486 = vld [vmem:[%s2913 + $0x170] sm:$0xff]
        %v4487 = vld [vmem:[%s2913 + $0x178] sm:$0xff]
        %v4488 = vmul.f32 %v4096, %v4440
        %v4489 = vmul.f32 %v4097, %v4441
        %v4490 = vmul.f32 %v4098, %v4442
        %v4491 = vmul.f32 %v4099, %v4443
        %v4492 = vmul.f32 %v4100, %v4444
        %v4493 = vmul.f32 %v4101, %v4445
        %v4494 = vmul.f32 %v4102, %v4446
        %v4495 = vmul.f32 %v4103, %v4447
        %v4496 = vmul.f32 %v4104, %v4448
        %v4497 = vmul.f32 %v4105, %v4449
        %v4498 = vmul.f32 %v4106, %v4450
        %v4499 = vmul.f32 %v4107, %v4451
        %v4500 = vmul.f32 %v4108, %v4452
        %v4501 = vmul.f32 %v4109, %v4453
        %v4502 = vmul.f32 %v4110, %v4454
        %v4503 = vmul.f32 %v4111, %v4455
        %v4504 = vmul.f32 %v4112, %v4456
        %v4505 = vmul.f32 %v4113, %v4457
        %v4506 = vmul.f32 %v4114, %v4458
        %v4507 = vmul.f32 %v4115, %v4459
        %v4508 = vmul.f32 %v4116, %v4460
        %v4509 = vmul.f32 %v4117, %v4461
        %v4510 = vmul.f32 %v4118, %v4462
        %v4511 = vmul.f32 %v4119, %v4463
        %v4512 = vmul.f32 %v4120, %v4464
        %v4513 = vmul.f32 %v4121, %v4465
        %v4514 = vmul.f32 %v4122, %v4466
        %v4515 = vmul.f32 %v4123, %v4467
        %v4516 = vmul.f32 %v4124, %v4468
        %v4517 = vmul.f32 %v4125, %v4469
        %v4518 = vmul.f32 %v4126, %v4470
        %v4519 = vmul.f32 %v4127, %v4471
        %v4520 = vmul.f32 %v4128, %v4472
        %v4521 = vmul.f32 %v4129, %v4473
        %v4522 = vmul.f32 %v4130, %v4474
        %v4523 = vmul.f32 %v4131, %v4475
        %v4524 = vmul.f32 %v4132, %v4476
        %v4525 = vmul.f32 %v4133, %v4477
        %v4526 = vmul.f32 %v4134, %v4478
        %v4527 = vmul.f32 %v4135, %v4479
        %v4528 = vmul.f32 %v4136, %v4480
        %v4529 = vmul.f32 %v4137, %v4481
        %v4530 = vmul.f32 %v4138, %v4482
        %v4531 = vmul.f32 %v4139, %v4483
        %v4532 = vmul.f32 %v4140, %v4484
        %v4533 = vmul.f32 %v4141, %v4485
        %v4534 = vmul.f32 %v4142, %v4486
        %v4535 = vmul.f32 %v4143, %v4487
        %v4536 = vadd.f32 %v4488, %v4489
        %v4537 = vadd.f32 %v4536, %v4490
        %v4538 = vadd.f32 %v4537, %v4491
        %v4539 = vadd.f32 %v4538, %v4492
        %v4540 = vadd.f32 %v4539, %v4493
        %v4541 = vadd.f32 %v4540, %v4494
        %v4542 = vadd.f32 %v4541, %v4495
        %v4543 = vadd.f32 %v4542, %v4496
        %v4544 = vadd.f32 %v4543, %v4497
        %v4545 = vadd.f32 %v4544, %v4498
        %v4546 = vadd.f32 %v4545, %v4499
        %v4547 = vadd.f32 %v4546, %v4500
        %v4548 = vadd.f32 %v4547, %v4501
        %v4549 = vadd.f32 %v4548, %v4502
        %v4550 = vadd.f32 %v4549, %v4503
        %v4551 = vadd.f32 %v4550, %v4504
        %v4552 = vadd.f32 %v4551, %v4505
        %v4553 = vadd.f32 %v4552, %v4506
        %v4554 = vadd.f32 %v4553, %v4507
        %v4555 = vadd.f32 %v4554, %v4508
        %v4556 = vadd.f32 %v4555, %v4509
        %v4557 = vadd.f32 %v4556, %v4510
        %v4558 = vadd.f32 %v4557, %v4511
        %v4559 = vadd.f32 %v4558, %v4512
        %v4560 = vadd.f32 %v4559, %v4513
        %v4561 = vadd.f32 %v4560, %v4514
        %v4562 = vadd.f32 %v4561, %v4515
        %v4563 = vadd.f32 %v4562, %v4516
        %v4564 = vadd.f32 %v4563, %v4517
        %v4565 = vadd.f32 %v4564, %v4518
        %v4566 = vadd.f32 %v4565, %v4519
        %v4567 = vadd.f32 %v4566, %v4520
        %v4568 = vadd.f32 %v4567, %v4521
        %v4569 = vadd.f32 %v4568, %v4522
        %v4570 = vadd.f32 %v4569, %v4523
        %v4571 = vadd.f32 %v4570, %v4524
        %v4572 = vadd.f32 %v4571, %v4525
        %v4573 = vadd.f32 %v4572, %v4526
        %v4574 = vadd.f32 %v4573, %v4527
        %v4575 = vadd.f32 %v4574, %v4528
        %v4576 = vadd.f32 %v4575, %v4529
        %v4577 = vadd.f32 %v4576, %v4530
        %v4578 = vadd.f32 %v4577, %v4531
        %v4579 = vadd.f32 %v4578, %v4532
        %v4580 = vadd.f32 %v4579, %v4533
        %v4581 = vadd.f32 %v4580, %v4534
        %v4582 = vadd.f32 %v4581, %v4535
        %v4583 = vadd.f32 %v4439, %v4582
        %4584 = vst [vmem:[%s4438] sm:$0xff] %v4583
        %s4585 = scalar_lea.vmem [#allocation2], 104
        %v4586 = vld [vmem:[%s4585] sm:$0xff]
        %v4587 = vld [vmem:[%s3061] sm:$0xff]
        %v4588 = vld [vmem:[%s3061 + $0x8] sm:$0xff]
        %v4589 = vld [vmem:[%s3061 + $0x10] sm:$0xff]
        %v4590 = vld [vmem:[%s3061 + $0x18] sm:$0xff]
        %v4591 = vld [vmem:[%s3061 + $0x20] sm:$0xff]
        %v4592 = vld [vmem:[%s3061 + $0x28] sm:$0xff]
        %v4593 = vld [vmem:[%s3061 + $0x30] sm:$0xff]
        %v4594 = vld [vmem:[%s3061 + $0x38] sm:$0xff]
        %v4595 = vld [vmem:[%s3061 + $0x40] sm:$0xff]
        %v4596 = vld [vmem:[%s3061 + $0x48] sm:$0xff]
        %v4597 = vld [vmem:[%s3061 + $0x50] sm:$0xff]
        %v4598 = vld [vmem:[%s3061 + $0x58] sm:$0xff]
        %v4599 = vld [vmem:[%s3061 + $0x60] sm:$0xff]
        %v4600 = vld [vmem:[%s3061 + $0x68] sm:$0xff]
        %v4601 = vld [vmem:[%s3061 + $0x70] sm:$0xff]
        %v4602 = vld [vmem:[%s3061 + $0x78] sm:$0xff]
        %v4603 = vld [vmem:[%s3061 + $0x80] sm:$0xff]
        %v4604 = vld [vmem:[%s3061 + $0x88] sm:$0xff]
        %v4605 = vld [vmem:[%s3061 + $0x90] sm:$0xff]
        %v4606 = vld [vmem:[%s3061 + $0x98] sm:$0xff]
        %v4607 = vld [vmem:[%s3061 + $0xa0] sm:$0xff]
        %v4608 = vld [vmem:[%s3061 + $0xa8] sm:$0xff]
        %v4609 = vld [vmem:[%s3061 + $0xb0] sm:$0xff]
        %v4610 = vld [vmem:[%s3061 + $0xb8] sm:$0xff]
        %v4611 = vld [vmem:[%s3061 + $0xc0] sm:$0xff]
        %v4612 = vld [vmem:[%s3061 + $0xc8] sm:$0xff]
        %v4613 = vld [vmem:[%s3061 + $0xd0] sm:$0xff]
        %v4614 = vld [vmem:[%s3061 + $0xd8] sm:$0xff]
        %v4615 = vld [vmem:[%s3061 + $0xe0] sm:$0xff]
        %v4616 = vld [vmem:[%s3061 + $0xe8] sm:$0xff]
        %v4617 = vld [vmem:[%s3061 + $0xf0] sm:$0xff]
        %v4618 = vld [vmem:[%s3061 + $0xf8] sm:$0xff]
        %v4619 = vld [vmem:[%s3061 + $0x100] sm:$0xff]
        %v4620 = vld [vmem:[%s3061 + $0x108] sm:$0xff]
        %v4621 = vld [vmem:[%s3061 + $0x110] sm:$0xff]
        %v4622 = vld [vmem:[%s3061 + $0x118] sm:$0xff]
        %v4623 = vld [vmem:[%s3061 + $0x120] sm:$0xff]
        %v4624 = vld [vmem:[%s3061 + $0x128] sm:$0xff]
        %v4625 = vld [vmem:[%s3061 + $0x130] sm:$0xff]
        %v4626 = vld [vmem:[%s3061 + $0x138] sm:$0xff]
        %v4627 = vld [vmem:[%s3061 + $0x140] sm:$0xff]
        %v4628 = vld [vmem:[%s3061 + $0x148] sm:$0xff]
        %v4629 = vld [vmem:[%s3061 + $0x150] sm:$0xff]
        %v4630 = vld [vmem:[%s3061 + $0x158] sm:$0xff]
        %v4631 = vld [vmem:[%s3061 + $0x160] sm:$0xff]
        %v4632 = vld [vmem:[%s3061 + $0x168] sm:$0xff]
        %v4633 = vld [vmem:[%s3061 + $0x170] sm:$0xff]
        %v4634 = vld [vmem:[%s3061 + $0x178] sm:$0xff]
        %v4635 = vmul.f32 %v4096, %v4587
        %v4636 = vmul.f32 %v4097, %v4588
        %v4637 = vmul.f32 %v4098, %v4589
        %v4638 = vmul.f32 %v4099, %v4590
        %v4639 = vmul.f32 %v4100, %v4591
        %v4640 = vmul.f32 %v4101, %v4592
        %v4641 = vmul.f32 %v4102, %v4593
        %v4642 = vmul.f32 %v4103, %v4594
        %v4643 = vmul.f32 %v4104, %v4595
        %v4644 = vmul.f32 %v4105, %v4596
        %v4645 = vmul.f32 %v4106, %v4597
        %v4646 = vmul.f32 %v4107, %v4598
        %v4647 = vmul.f32 %v4108, %v4599
        %v4648 = vmul.f32 %v4109, %v4600
        %v4649 = vmul.f32 %v4110, %v4601
        %v4650 = vmul.f32 %v4111, %v4602
        %v4651 = vmul.f32 %v4112, %v4603
        %v4652 = vmul.f32 %v4113, %v4604
        %v4653 = vmul.f32 %v4114, %v4605
        %v4654 = vmul.f32 %v4115, %v4606
        %v4655 = vmul.f32 %v4116, %v4607
        %v4656 = vmul.f32 %v4117, %v4608
        %v4657 = vmul.f32 %v4118, %v4609
        %v4658 = vmul.f32 %v4119, %v4610
        %v4659 = vmul.f32 %v4120, %v4611
        %v4660 = vmul.f32 %v4121, %v4612
        %v4661 = vmul.f32 %v4122, %v4613
        %v4662 = vmul.f32 %v4123, %v4614
        %v4663 = vmul.f32 %v4124, %v4615
        %v4664 = vmul.f32 %v4125, %v4616
        %v4665 = vmul.f32 %v4126, %v4617
        %v4666 = vmul.f32 %v4127, %v4618
        %v4667 = vmul.f32 %v4128, %v4619
        %v4668 = vmul.f32 %v4129, %v4620
        %v4669 = vmul.f32 %v4130, %v4621
        %v4670 = vmul.f32 %v4131, %v4622
        %v4671 = vmul.f32 %v4132, %v4623
        %v4672 = vmul.f32 %v4133, %v4624
        %v4673 = vmul.f32 %v4134, %v4625
        %v4674 = vmul.f32 %v4135, %v4626
        %v4675 = vmul.f32 %v4136, %v4627
        %v4676 = vmul.f32 %v4137, %v4628
        %v4677 = vmul.f32 %v4138, %v4629
        %v4678 = vmul.f32 %v4139, %v4630
        %v4679 = vmul.f32 %v4140, %v4631
        %v4680 = vmul.f32 %v4141, %v4632
        %v4681 = vmul.f32 %v4142, %v4633
        %v4682 = vmul.f32 %v4143, %v4634
        %v4683 = vadd.f32 %v4635, %v4636
        %v4684 = vadd.f32 %v4683, %v4637
        %v4685 = vadd.f32 %v4684, %v4638
        %v4686 = vadd.f32 %v4685, %v4639
        %v4687 = vadd.f32 %v4686, %v4640
        %v4688 = vadd.f32 %v4687, %v4641
        %v4689 = vadd.f32 %v4688, %v4642
        %v4690 = vadd.f32 %v4689, %v4643
        %v4691 = vadd.f32 %v4690, %v4644
        %v4692 = vadd.f32 %v4691, %v4645
        %v4693 = vadd.f32 %v4692, %v4646
        %v4694 = vadd.f32 %v4693, %v4647
        %v4695 = vadd.f32 %v4694, %v4648
        %v4696 = vadd.f32 %v4695, %v4649
        %v4697 = vadd.f32 %v4696, %v4650
        %v4698 = vadd.f32 %v4697, %v4651
        %v4699 = vadd.f32 %v4698, %v4652
        %v4700 = vadd.f32 %v4699, %v4653
        %v4701 = vadd.f32 %v4700, %v4654
        %v4702 = vadd.f32 %v4701, %v4655
        %v4703 = vadd.f32 %v4702, %v4656
        %v4704 = vadd.f32 %v4703, %v4657
        %v4705 = vadd.f32 %v4704, %v4658
        %v4706 = vadd.f32 %v4705, %v4659
        %v4707 = vadd.f32 %v4706, %v4660
        %v4708 = vadd.f32 %v4707, %v4661
        %v4709 = vadd.f32 %v4708, %v4662
        %v4710 = vadd.f32 %v4709, %v4663
        %v4711 = vadd.f32 %v4710, %v4664
        %v4712 = vadd.f32 %v4711, %v4665
        %v4713 = vadd.f32 %v4712, %v4666
        %v4714 = vadd.f32 %v4713, %v4667
        %v4715 = vadd.f32 %v4714, %v4668
        %v4716 = vadd.f32 %v4715, %v4669
        %v4717 = vadd.f32 %v4716, %v4670
        %v4718 = vadd.f32 %v4717, %v4671
        %v4719 = vadd.f32 %v4718, %v4672
        %v4720 = vadd.f32 %v4719, %v4673
        %v4721 = vadd.f32 %v4720, %v4674
        %v4722 = vadd.f32 %v4721, %v4675
        %v4723 = vadd.f32 %v4722, %v4676
        %v4724 = vadd.f32 %v4723, %v4677
        %v4725 = vadd.f32 %v4724, %v4678
        %v4726 = vadd.f32 %v4725, %v4679
        %v4727 = vadd.f32 %v4726, %v4680
        %v4728 = vadd.f32 %v4727, %v4681
        %v4729 = vadd.f32 %v4728, %v4682
        %v4730 = vadd.f32 %v4586, %v4729
        %4731 = vst [vmem:[%s4585] sm:$0xff] %v4730
        %s4732 = scalar_lea.vmem [#allocation2], 112
        %v4733 = vld [vmem:[%s4732] sm:$0xff]
        %v4734 = vld [vmem:[%s3209] sm:$0xff]
        %v4735 = vld [vmem:[%s3209 + $0x8] sm:$0xff]
        %v4736 = vld [vmem:[%s3209 + $0x10] sm:$0xff]
        %v4737 = vld [vmem:[%s3209 + $0x18] sm:$0xff]
        %v4738 = vld [vmem:[%s3209 + $0x20] sm:$0xff]
        %v4739 = vld [vmem:[%s3209 + $0x28] sm:$0xff]
        %v4740 = vld [vmem:[%s3209 + $0x30] sm:$0xff]
        %v4741 = vld [vmem:[%s3209 + $0x38] sm:$0xff]
        %v4742 = vld [vmem:[%s3209 + $0x40] sm:$0xff]
        %v4743 = vld [vmem:[%s3209 + $0x48] sm:$0xff]
        %v4744 = vld [vmem:[%s3209 + $0x50] sm:$0xff]
        %v4745 = vld [vmem:[%s3209 + $0x58] sm:$0xff]
        %v4746 = vld [vmem:[%s3209 + $0x60] sm:$0xff]
        %v4747 = vld [vmem:[%s3209 + $0x68] sm:$0xff]
        %v4748 = vld [vmem:[%s3209 + $0x70] sm:$0xff]
        %v4749 = vld [vmem:[%s3209 + $0x78] sm:$0xff]
        %v4750 = vld [vmem:[%s3209 + $0x80] sm:$0xff]
        %v4751 = vld [vmem:[%s3209 + $0x88] sm:$0xff]
        %v4752 = vld [vmem:[%s3209 + $0x90] sm:$0xff]
        %v4753 = vld [vmem:[%s3209 + $0x98] sm:$0xff]
        %v4754 = vld [vmem:[%s3209 + $0xa0] sm:$0xff]
        %v4755 = vld [vmem:[%s3209 + $0xa8] sm:$0xff]
        %v4756 = vld [vmem:[%s3209 + $0xb0] sm:$0xff]
        %v4757 = vld [vmem:[%s3209 + $0xb8] sm:$0xff]
        %v4758 = vld [vmem:[%s3209 + $0xc0] sm:$0xff]
        %v4759 = vld [vmem:[%s3209 + $0xc8] sm:$0xff]
        %v4760 = vld [vmem:[%s3209 + $0xd0] sm:$0xff]
        %v4761 = vld [vmem:[%s3209 + $0xd8] sm:$0xff]
        %v4762 = vld [vmem:[%s3209 + $0xe0] sm:$0xff]
        %v4763 = vld [vmem:[%s3209 + $0xe8] sm:$0xff]
        %v4764 = vld [vmem:[%s3209 + $0xf0] sm:$0xff]
        %v4765 = vld [vmem:[%s3209 + $0xf8] sm:$0xff]
        %v4766 = vld [vmem:[%s3209 + $0x100] sm:$0xff]
        %v4767 = vld [vmem:[%s3209 + $0x108] sm:$0xff]
        %v4768 = vld [vmem:[%s3209 + $0x110] sm:$0xff]
        %v4769 = vld [vmem:[%s3209 + $0x118] sm:$0xff]
        %v4770 = vld [vmem:[%s3209 + $0x120] sm:$0xff]
        %v4771 = vld [vmem:[%s3209 + $0x128] sm:$0xff]
        %v4772 = vld [vmem:[%s3209 + $0x130] sm:$0xff]
        %v4773 = vld [vmem:[%s3209 + $0x138] sm:$0xff]
        %v4774 = vld [vmem:[%s3209 + $0x140] sm:$0xff]
        %v4775 = vld [vmem:[%s3209 + $0x148] sm:$0xff]
        %v4776 = vld [vmem:[%s3209 + $0x150] sm:$0xff]
        %v4777 = vld [vmem:[%s3209 + $0x158] sm:$0xff]
        %v4778 = vld [vmem:[%s3209 + $0x160] sm:$0xff]
        %v4779 = vld [vmem:[%s3209 + $0x168] sm:$0xff]
        %v4780 = vld [vmem:[%s3209 + $0x170] sm:$0xff]
        %v4781 = vld [vmem:[%s3209 + $0x178] sm:$0xff]
        %v4782 = vmul.f32 %v4096, %v4734
        %v4783 = vmul.f32 %v4097, %v4735
        %v4784 = vmul.f32 %v4098, %v4736
        %v4785 = vmul.f32 %v4099, %v4737
        %v4786 = vmul.f32 %v4100, %v4738
        %v4787 = vmul.f32 %v4101, %v4739
        %v4788 = vmul.f32 %v4102, %v4740
        %v4789 = vmul.f32 %v4103, %v4741
        %v4790 = vmul.f32 %v4104, %v4742
        %v4791 = vmul.f32 %v4105, %v4743
        %v4792 = vmul.f32 %v4106, %v4744
        %v4793 = vmul.f32 %v4107, %v4745
        %v4794 = vmul.f32 %v4108, %v4746
        %v4795 = vmul.f32 %v4109, %v4747
        %v4796 = vmul.f32 %v4110, %v4748
        %v4797 = vmul.f32 %v4111, %v4749
        %v4798 = vmul.f32 %v4112, %v4750
        %v4799 = vmul.f32 %v4113, %v4751
        %v4800 = vmul.f32 %v4114, %v4752
        %v4801 = vmul.f32 %v4115, %v4753
        %v4802 = vmul.f32 %v4116, %v4754
        %v4803 = vmul.f32 %v4117, %v4755
        %v4804 = vmul.f32 %v4118, %v4756
        %v4805 = vmul.f32 %v4119, %v4757
        %v4806 = vmul.f32 %v4120, %v4758
        %v4807 = vmul.f32 %v4121, %v4759
        %v4808 = vmul.f32 %v4122, %v4760
        %v4809 = vmul.f32 %v4123, %v4761
        %v4810 = vmul.f32 %v4124, %v4762
        %v4811 = vmul.f32 %v4125, %v4763
        %v4812 = vmul.f32 %v4126, %v4764
        %v4813 = vmul.f32 %v4127, %v4765
        %v4814 = vmul.f32 %v4128, %v4766
        %v4815 = vmul.f32 %v4129, %v4767
        %v4816 = vmul.f32 %v4130, %v4768
        %v4817 = vmul.f32 %v4131, %v4769
        %v4818 = vmul.f32 %v4132, %v4770
        %v4819 = vmul.f32 %v4133, %v4771
        %v4820 = vmul.f32 %v4134, %v4772
        %v4821 = vmul.f32 %v4135, %v4773
        %v4822 = vmul.f32 %v4136, %v4774
        %v4823 = vmul.f32 %v4137, %v4775
        %v4824 = vmul.f32 %v4138, %v4776
        %v4825 = vmul.f32 %v4139, %v4777
        %v4826 = vmul.f32 %v4140, %v4778
        %v4827 = vmul.f32 %v4141, %v4779
        %v4828 = vmul.f32 %v4142, %v4780
        %v4829 = vmul.f32 %v4143, %v4781
        %v4830 = vadd.f32 %v4782, %v4783
        %v4831 = vadd.f32 %v4830, %v4784
        %v4832 = vadd.f32 %v4831, %v4785
        %v4833 = vadd.f32 %v4832, %v4786
        %v4834 = vadd.f32 %v4833, %v4787
        %v4835 = vadd.f32 %v4834, %v4788
        %v4836 = vadd.f32 %v4835, %v4789
        %v4837 = vadd.f32 %v4836, %v4790
        %v4838 = vadd.f32 %v4837, %v4791
        %v4839 = vadd.f32 %v4838, %v4792
        %v4840 = vadd.f32 %v4839, %v4793
        %v4841 = vadd.f32 %v4840, %v4794
        %v4842 = vadd.f32 %v4841, %v4795
        %v4843 = vadd.f32 %v4842, %v4796
        %v4844 = vadd.f32 %v4843, %v4797
        %v4845 = vadd.f32 %v4844, %v4798
        %v4846 = vadd.f32 %v4845, %v4799
        %v4847 = vadd.f32 %v4846, %v4800
        %v4848 = vadd.f32 %v4847, %v4801
        %v4849 = vadd.f32 %v4848, %v4802
        %v4850 = vadd.f32 %v4849, %v4803
        %v4851 = vadd.f32 %v4850, %v4804
        %v4852 = vadd.f32 %v4851, %v4805
        %v4853 = vadd.f32 %v4852, %v4806
        %v4854 = vadd.f32 %v4853, %v4807
        %v4855 = vadd.f32 %v4854, %v4808
        %v4856 = vadd.f32 %v4855, %v4809
        %v4857 = vadd.f32 %v4856, %v4810
        %v4858 = vadd.f32 %v4857, %v4811
        %v4859 = vadd.f32 %v4858, %v4812
        %v4860 = vadd.f32 %v4859, %v4813
        %v4861 = vadd.f32 %v4860, %v4814
        %v4862 = vadd.f32 %v4861, %v4815
        %v4863 = vadd.f32 %v4862, %v4816
        %v4864 = vadd.f32 %v4863, %v4817
        %v4865 = vadd.f32 %v4864, %v4818
        %v4866 = vadd.f32 %v4865, %v4819
        %v4867 = vadd.f32 %v4866, %v4820
        %v4868 = vadd.f32 %v4867, %v4821
        %v4869 = vadd.f32 %v4868, %v4822
        %v4870 = vadd.f32 %v4869, %v4823
        %v4871 = vadd.f32 %v4870, %v4824
        %v4872 = vadd.f32 %v4871, %v4825
        %v4873 = vadd.f32 %v4872, %v4826
        %v4874 = vadd.f32 %v4873, %v4827
        %v4875 = vadd.f32 %v4874, %v4828
        %v4876 = vadd.f32 %v4875, %v4829
        %v4877 = vadd.f32 %v4733, %v4876
        %4878 = vst [vmem:[%s4732] sm:$0xff] %v4877
        %s4879 = scalar_lea.vmem [#allocation2], 120
        %v4880 = vld [vmem:[%s4879] sm:$0xff]
        %v4881 = vld [vmem:[%s3357] sm:$0xff]
        %v4882 = vld [vmem:[%s3357 + $0x8] sm:$0xff]
        %v4883 = vld [vmem:[%s3357 + $0x10] sm:$0xff]
        %v4884 = vld [vmem:[%s3357 + $0x18] sm:$0xff]
        %v4885 = vld [vmem:[%s3357 + $0x20] sm:$0xff]
        %v4886 = vld [vmem:[%s3357 + $0x28] sm:$0xff]
        %v4887 = vld [vmem:[%s3357 + $0x30] sm:$0xff]
        %v4888 = vld [vmem:[%s3357 + $0x38] sm:$0xff]
        %v4889 = vld [vmem:[%s3357 + $0x40] sm:$0xff]
        %v4890 = vld [vmem:[%s3357 + $0x48] sm:$0xff]
        %v4891 = vld [vmem:[%s3357 + $0x50] sm:$0xff]
        %v4892 = vld [vmem:[%s3357 + $0x58] sm:$0xff]
        %v4893 = vld [vmem:[%s3357 + $0x60] sm:$0xff]
        %v4894 = vld [vmem:[%s3357 + $0x68] sm:$0xff]
        %v4895 = vld [vmem:[%s3357 + $0x70] sm:$0xff]
        %v4896 = vld [vmem:[%s3357 + $0x78] sm:$0xff]
        %v4897 = vld [vmem:[%s3357 + $0x80] sm:$0xff]
        %v4898 = vld [vmem:[%s3357 + $0x88] sm:$0xff]
        %v4899 = vld [vmem:[%s3357 + $0x90] sm:$0xff]
        %v4900 = vld [vmem:[%s3357 + $0x98] sm:$0xff]
        %v4901 = vld [vmem:[%s3357 + $0xa0] sm:$0xff]
        %v4902 = vld [vmem:[%s3357 + $0xa8] sm:$0xff]
        %v4903 = vld [vmem:[%s3357 + $0xb0] sm:$0xff]
        %v4904 = vld [vmem:[%s3357 + $0xb8] sm:$0xff]
        %v4905 = vld [vmem:[%s3357 + $0xc0] sm:$0xff]
        %v4906 = vld [vmem:[%s3357 + $0xc8] sm:$0xff]
        %v4907 = vld [vmem:[%s3357 + $0xd0] sm:$0xff]
        %v4908 = vld [vmem:[%s3357 + $0xd8] sm:$0xff]
        %v4909 = vld [vmem:[%s3357 + $0xe0] sm:$0xff]
        %v4910 = vld [vmem:[%s3357 + $0xe8] sm:$0xff]
        %v4911 = vld [vmem:[%s3357 + $0xf0] sm:$0xff]
        %v4912 = vld [vmem:[%s3357 + $0xf8] sm:$0xff]
        %v4913 = vld [vmem:[%s3357 + $0x100] sm:$0xff]
        %v4914 = vld [vmem:[%s3357 + $0x108] sm:$0xff]
        %v4915 = vld [vmem:[%s3357 + $0x110] sm:$0xff]
        %v4916 = vld [vmem:[%s3357 + $0x118] sm:$0xff]
        %v4917 = vld [vmem:[%s3357 + $0x120] sm:$0xff]
        %v4918 = vld [vmem:[%s3357 + $0x128] sm:$0xff]
        %v4919 = vld [vmem:[%s3357 + $0x130] sm:$0xff]
        %v4920 = vld [vmem:[%s3357 + $0x138] sm:$0xff]
        %v4921 = vld [vmem:[%s3357 + $0x140] sm:$0xff]
        %v4922 = vld [vmem:[%s3357 + $0x148] sm:$0xff]
        %v4923 = vld [vmem:[%s3357 + $0x150] sm:$0xff]
        %v4924 = vld [vmem:[%s3357 + $0x158] sm:$0xff]
        %v4925 = vld [vmem:[%s3357 + $0x160] sm:$0xff]
        %v4926 = vld [vmem:[%s3357 + $0x168] sm:$0xff]
        %v4927 = vld [vmem:[%s3357 + $0x170] sm:$0xff]
        %v4928 = vld [vmem:[%s3357 + $0x178] sm:$0xff]
        %v4929 = vmul.f32 %v4096, %v4881
        %v4930 = vmul.f32 %v4097, %v4882
        %v4931 = vmul.f32 %v4098, %v4883
        %v4932 = vmul.f32 %v4099, %v4884
        %v4933 = vmul.f32 %v4100, %v4885
        %v4934 = vmul.f32 %v4101, %v4886
        %v4935 = vmul.f32 %v4102, %v4887
        %v4936 = vmul.f32 %v4103, %v4888
        %v4937 = vmul.f32 %v4104, %v4889
        %v4938 = vmul.f32 %v4105, %v4890
        %v4939 = vmul.f32 %v4106, %v4891
        %v4940 = vmul.f32 %v4107, %v4892
        %v4941 = vmul.f32 %v4108, %v4893
        %v4942 = vmul.f32 %v4109, %v4894
        %v4943 = vmul.f32 %v4110, %v4895
        %v4944 = vmul.f32 %v4111, %v4896
        %v4945 = vmul.f32 %v4112, %v4897
        %v4946 = vmul.f32 %v4113, %v4898
        %v4947 = vmul.f32 %v4114, %v4899
        %v4948 = vmul.f32 %v4115, %v4900
        %v4949 = vmul.f32 %v4116, %v4901
        %v4950 = vmul.f32 %v4117, %v4902
        %v4951 = vmul.f32 %v4118, %v4903
        %v4952 = vmul.f32 %v4119, %v4904
        %v4953 = vmul.f32 %v4120, %v4905
        %v4954 = vmul.f32 %v4121, %v4906
        %v4955 = vmul.f32 %v4122, %v4907
        %v4956 = vmul.f32 %v4123, %v4908
        %v4957 = vmul.f32 %v4124, %v4909
        %v4958 = vmul.f32 %v4125, %v4910
        %v4959 = vmul.f32 %v4126, %v4911
        %v4960 = vmul.f32 %v4127, %v4912
        %v4961 = vmul.f32 %v4128, %v4913
        %v4962 = vmul.f32 %v4129, %v4914
        %v4963 = vmul.f32 %v4130, %v4915
        %v4964 = vmul.f32 %v4131, %v4916
        %v4965 = vmul.f32 %v4132, %v4917
        %v4966 = vmul.f32 %v4133, %v4918
        %v4967 = vmul.f32 %v4134, %v4919
        %v4968 = vmul.f32 %v4135, %v4920
        %v4969 = vmul.f32 %v4136, %v4921
        %v4970 = vmul.f32 %v4137, %v4922
        %v4971 = vmul.f32 %v4138, %v4923
        %v4972 = vmul.f32 %v4139, %v4924
        %v4973 = vmul.f32 %v4140, %v4925
        %v4974 = vmul.f32 %v4141, %v4926
        %v4975 = vmul.f32 %v4142, %v4927
        %v4976 = vmul.f32 %v4143, %v4928
        %v4977 = vadd.f32 %v4929, %v4930
        %v4978 = vadd.f32 %v4977, %v4931
        %v4979 = vadd.f32 %v4978, %v4932
        %v4980 = vadd.f32 %v4979, %v4933
        %v4981 = vadd.f32 %v4980, %v4934
        %v4982 = vadd.f32 %v4981, %v4935
        %v4983 = vadd.f32 %v4982, %v4936
        %v4984 = vadd.f32 %v4983, %v4937
        %v4985 = vadd.f32 %v4984, %v4938
        %v4986 = vadd.f32 %v4985, %v4939
        %v4987 = vadd.f32 %v4986, %v4940
        %v4988 = vadd.f32 %v4987, %v4941
        %v4989 = vadd.f32 %v4988, %v4942
        %v4990 = vadd.f32 %v4989, %v4943
        %v4991 = vadd.f32 %v4990, %v4944
        %v4992 = vadd.f32 %v4991, %v4945
        %v4993 = vadd.f32 %v4992, %v4946
        %v4994 = vadd.f32 %v4993, %v4947
        %v4995 = vadd.f32 %v4994, %v4948
        %v4996 = vadd.f32 %v4995, %v4949
        %v4997 = vadd.f32 %v4996, %v4950
        %v4998 = vadd.f32 %v4997, %v4951
        %v4999 = vadd.f32 %v4998, %v4952
        %v5000 = vadd.f32 %v4999, %v4953
        %v5001 = vadd.f32 %v5000, %v4954
        %v5002 = vadd.f32 %v5001, %v4955
        %v5003 = vadd.f32 %v5002, %v4956
        %v5004 = vadd.f32 %v5003, %v4957
        %v5005 = vadd.f32 %v5004, %v4958
        %v5006 = vadd.f32 %v5005, %v4959
        %v5007 = vadd.f32 %v5006, %v4960
        %v5008 = vadd.f32 %v5007, %v4961
        %v5009 = vadd.f32 %v5008, %v4962
        %v5010 = vadd.f32 %v5009, %v4963
        %v5011 = vadd.f32 %v5010, %v4964
        %v5012 = vadd.f32 %v5011, %v4965
        %v5013 = vadd.f32 %v5012, %v4966
        %v5014 = vadd.f32 %v5013, %v4967
        %v5015 = vadd.f32 %v5014, %v4968
        %v5016 = vadd.f32 %v5015, %v4969
        %v5017 = vadd.f32 %v5016, %v4970
        %v5018 = vadd.f32 %v5017, %v4971
        %v5019 = vadd.f32 %v5018, %v4972
        %v5020 = vadd.f32 %v5019, %v4973
        %v5021 = vadd.f32 %v5020, %v4974
        %v5022 = vadd.f32 %v5021, %v4975
        %v5023 = vadd.f32 %v5022, %v4976
        %v5024 = vadd.f32 %v4880, %v5023
        %5025 = vst [vmem:[%s4879] sm:$0xff] %v5024
        %s5026 = scalar_lea.vmem [#allocation2], 128
        %v5027 = vld [vmem:[%s5026] sm:$0xff]
        %v5028 = vld [vmem:[%s3505] sm:$0xff]
        %v5029 = vld [vmem:[%s3505 + $0x8] sm:$0xff]
        %v5030 = vld [vmem:[%s3505 + $0x10] sm:$0xff]
        %v5031 = vld [vmem:[%s3505 + $0x18] sm:$0xff]
        %v5032 = vld [vmem:[%s3505 + $0x20] sm:$0xff]
        %v5033 = vld [vmem:[%s3505 + $0x28] sm:$0xff]
        %v5034 = vld [vmem:[%s3505 + $0x30] sm:$0xff]
        %v5035 = vld [vmem:[%s3505 + $0x38] sm:$0xff]
        %v5036 = vld [vmem:[%s3505 + $0x40] sm:$0xff]
        %v5037 = vld [vmem:[%s3505 + $0x48] sm:$0xff]
        %v5038 = vld [vmem:[%s3505 + $0x50] sm:$0xff]
        %v5039 = vld [vmem:[%s3505 + $0x58] sm:$0xff]
        %v5040 = vld [vmem:[%s3505 + $0x60] sm:$0xff]
        %v5041 = vld [vmem:[%s3505 + $0x68] sm:$0xff]
        %v5042 = vld [vmem:[%s3505 + $0x70] sm:$0xff]
        %v5043 = vld [vmem:[%s3505 + $0x78] sm:$0xff]
        %v5044 = vld [vmem:[%s3505 + $0x80] sm:$0xff]
        %v5045 = vld [vmem:[%s3505 + $0x88] sm:$0xff]
        %v5046 = vld [vmem:[%s3505 + $0x90] sm:$0xff]
        %v5047 = vld [vmem:[%s3505 + $0x98] sm:$0xff]
        %v5048 = vld [vmem:[%s3505 + $0xa0] sm:$0xff]
        %v5049 = vld [vmem:[%s3505 + $0xa8] sm:$0xff]
        %v5050 = vld [vmem:[%s3505 + $0xb0] sm:$0xff]
        %v5051 = vld [vmem:[%s3505 + $0xb8] sm:$0xff]
        %v5052 = vld [vmem:[%s3505 + $0xc0] sm:$0xff]
        %v5053 = vld [vmem:[%s3505 + $0xc8] sm:$0xff]
        %v5054 = vld [vmem:[%s3505 + $0xd0] sm:$0xff]
        %v5055 = vld [vmem:[%s3505 + $0xd8] sm:$0xff]
        %v5056 = vld [vmem:[%s3505 + $0xe0] sm:$0xff]
        %v5057 = vld [vmem:[%s3505 + $0xe8] sm:$0xff]
        %v5058 = vld [vmem:[%s3505 + $0xf0] sm:$0xff]
        %v5059 = vld [vmem:[%s3505 + $0xf8] sm:$0xff]
        %v5060 = vld [vmem:[%s3505 + $0x100] sm:$0xff]
        %v5061 = vld [vmem:[%s3505 + $0x108] sm:$0xff]
        %v5062 = vld [vmem:[%s3505 + $0x110] sm:$0xff]
        %v5063 = vld [vmem:[%s3505 + $0x118] sm:$0xff]
        %v5064 = vld [vmem:[%s3505 + $0x120] sm:$0xff]
        %v5065 = vld [vmem:[%s3505 + $0x128] sm:$0xff]
        %v5066 = vld [vmem:[%s3505 + $0x130] sm:$0xff]
        %v5067 = vld [vmem:[%s3505 + $0x138] sm:$0xff]
        %v5068 = vld [vmem:[%s3505 + $0x140] sm:$0xff]
        %v5069 = vld [vmem:[%s3505 + $0x148] sm:$0xff]
        %v5070 = vld [vmem:[%s3505 + $0x150] sm:$0xff]
        %v5071 = vld [vmem:[%s3505 + $0x158] sm:$0xff]
        %v5072 = vld [vmem:[%s3505 + $0x160] sm:$0xff]
        %v5073 = vld [vmem:[%s3505 + $0x168] sm:$0xff]
        %v5074 = vld [vmem:[%s3505 + $0x170] sm:$0xff]
        %v5075 = vld [vmem:[%s3505 + $0x178] sm:$0xff]
        %v5076 = vmul.f32 %v4096, %v5028
        %v5077 = vmul.f32 %v4097, %v5029
        %v5078 = vmul.f32 %v4098, %v5030
        %v5079 = vmul.f32 %v4099, %v5031
        %v5080 = vmul.f32 %v4100, %v5032
        %v5081 = vmul.f32 %v4101, %v5033
        %v5082 = vmul.f32 %v4102, %v5034
        %v5083 = vmul.f32 %v4103, %v5035
        %v5084 = vmul.f32 %v4104, %v5036
        %v5085 = vmul.f32 %v4105, %v5037
        %v5086 = vmul.f32 %v4106, %v5038
        %v5087 = vmul.f32 %v4107, %v5039
        %v5088 = vmul.f32 %v4108, %v5040
        %v5089 = vmul.f32 %v4109, %v5041
        %v5090 = vmul.f32 %v4110, %v5042
        %v5091 = vmul.f32 %v4111, %v5043
        %v5092 = vmul.f32 %v4112, %v5044
        %v5093 = vmul.f32 %v4113, %v5045
        %v5094 = vmul.f32 %v4114, %v5046
        %v5095 = vmul.f32 %v4115, %v5047
        %v5096 = vmul.f32 %v4116, %v5048
        %v5097 = vmul.f32 %v4117, %v5049
        %v5098 = vmul.f32 %v4118, %v5050
        %v5099 = vmul.f32 %v4119, %v5051
        %v5100 = vmul.f32 %v4120, %v5052
        %v5101 = vmul.f32 %v4121, %v5053
        %v5102 = vmul.f32 %v4122, %v5054
        %v5103 = vmul.f32 %v4123, %v5055
        %v5104 = vmul.f32 %v4124, %v5056
        %v5105 = vmul.f32 %v4125, %v5057
        %v5106 = vmul.f32 %v4126, %v5058
        %v5107 = vmul.f32 %v4127, %v5059
        %v5108 = vmul.f32 %v4128, %v5060
        %v5109 = vmul.f32 %v4129, %v5061
        %v5110 = vmul.f32 %v4130, %v5062
        %v5111 = vmul.f32 %v4131, %v5063
        %v5112 = vmul.f32 %v4132, %v5064
        %v5113 = vmul.f32 %v4133, %v5065
        %v5114 = vmul.f32 %v4134, %v5066
        %v5115 = vmul.f32 %v4135, %v5067
        %v5116 = vmul.f32 %v4136, %v5068
        %v5117 = vmul.f32 %v4137, %v5069
        %v5118 = vmul.f32 %v4138, %v5070
        %v5119 = vmul.f32 %v4139, %v5071
        %v5120 = vmul.f32 %v4140, %v5072
        %v5121 = vmul.f32 %v4141, %v5073
        %v5122 = vmul.f32 %v4142, %v5074
        %v5123 = vmul.f32 %v4143, %v5075
        %v5124 = vadd.f32 %v5076, %v5077
        %v5125 = vadd.f32 %v5124, %v5078
        %v5126 = vadd.f32 %v5125, %v5079
        %v5127 = vadd.f32 %v5126, %v5080
        %v5128 = vadd.f32 %v5127, %v5081
        %v5129 = vadd.f32 %v5128, %v5082
        %v5130 = vadd.f32 %v5129, %v5083
        %v5131 = vadd.f32 %v5130, %v5084
        %v5132 = vadd.f32 %v5131, %v5085
        %v5133 = vadd.f32 %v5132, %v5086
        %v5134 = vadd.f32 %v5133, %v5087
        %v5135 = vadd.f32 %v5134, %v5088
        %v5136 = vadd.f32 %v5135, %v5089
        %v5137 = vadd.f32 %v5136, %v5090
        %v5138 = vadd.f32 %v5137, %v5091
        %v5139 = vadd.f32 %v5138, %v5092
        %v5140 = vadd.f32 %v5139, %v5093
        %v5141 = vadd.f32 %v5140, %v5094
        %v5142 = vadd.f32 %v5141, %v5095
        %v5143 = vadd.f32 %v5142, %v5096
        %v5144 = vadd.f32 %v5143, %v5097
        %v5145 = vadd.f32 %v5144, %v5098
        %v5146 = vadd.f32 %v5145, %v5099
        %v5147 = vadd.f32 %v5146, %v5100
        %v5148 = vadd.f32 %v5147, %v5101
        %v5149 = vadd.f32 %v5148, %v5102
        %v5150 = vadd.f32 %v5149, %v5103
        %v5151 = vadd.f32 %v5150, %v5104
        %v5152 = vadd.f32 %v5151, %v5105
        %v5153 = vadd.f32 %v5152, %v5106
        %v5154 = vadd.f32 %v5153, %v5107
        %v5155 = vadd.f32 %v5154, %v5108
        %v5156 = vadd.f32 %v5155, %v5109
        %v5157 = vadd.f32 %v5156, %v5110
        %v5158 = vadd.f32 %v5157, %v5111
        %v5159 = vadd.f32 %v5158, %v5112
        %v5160 = vadd.f32 %v5159, %v5113
        %v5161 = vadd.f32 %v5160, %v5114
        %v5162 = vadd.f32 %v5161, %v5115
        %v5163 = vadd.f32 %v5162, %v5116
        %v5164 = vadd.f32 %v5163, %v5117
        %v5165 = vadd.f32 %v5164, %v5118
        %v5166 = vadd.f32 %v5165, %v5119
        %v5167 = vadd.f32 %v5166, %v5120
        %v5168 = vadd.f32 %v5167, %v5121
        %v5169 = vadd.f32 %v5168, %v5122
        %v5170 = vadd.f32 %v5169, %v5123
        %v5171 = vadd.f32 %v5027, %v5170
        %5172 = vst [vmem:[%s5026] sm:$0xff] %v5171
        %s5173 = scalar_lea.vmem [#allocation2], 136
        %v5174 = vld [vmem:[%s5173] sm:$0xff]
        %v5175 = vld [vmem:[%s3653] sm:$0xff]
        %v5176 = vld [vmem:[%s3653 + $0x8] sm:$0xff]
        %v5177 = vld [vmem:[%s3653 + $0x10] sm:$0xff]
        %v5178 = vld [vmem:[%s3653 + $0x18] sm:$0xff]
        %v5179 = vld [vmem:[%s3653 + $0x20] sm:$0xff]
        %v5180 = vld [vmem:[%s3653 + $0x28] sm:$0xff]
        %v5181 = vld [vmem:[%s3653 + $0x30] sm:$0xff]
        %v5182 = vld [vmem:[%s3653 + $0x38] sm:$0xff]
        %v5183 = vld [vmem:[%s3653 + $0x40] sm:$0xff]
        %v5184 = vld [vmem:[%s3653 + $0x48] sm:$0xff]
        %v5185 = vld [vmem:[%s3653 + $0x50] sm:$0xff]
        %v5186 = vld [vmem:[%s3653 + $0x58] sm:$0xff]
        %v5187 = vld [vmem:[%s3653 + $0x60] sm:$0xff]
        %v5188 = vld [vmem:[%s3653 + $0x68] sm:$0xff]
        %v5189 = vld [vmem:[%s3653 + $0x70] sm:$0xff]
        %v5190 = vld [vmem:[%s3653 + $0x78] sm:$0xff]
        %v5191 = vld [vmem:[%s3653 + $0x80] sm:$0xff]
        %v5192 = vld [vmem:[%s3653 + $0x88] sm:$0xff]
        %v5193 = vld [vmem:[%s3653 + $0x90] sm:$0xff]
        %v5194 = vld [vmem:[%s3653 + $0x98] sm:$0xff]
        %v5195 = vld [vmem:[%s3653 + $0xa0] sm:$0xff]
        %v5196 = vld [vmem:[%s3653 + $0xa8] sm:$0xff]
        %v5197 = vld [vmem:[%s3653 + $0xb0] sm:$0xff]
        %v5198 = vld [vmem:[%s3653 + $0xb8] sm:$0xff]
        %v5199 = vld [vmem:[%s3653 + $0xc0] sm:$0xff]
        %v5200 = vld [vmem:[%s3653 + $0xc8] sm:$0xff]
        %v5201 = vld [vmem:[%s3653 + $0xd0] sm:$0xff]
        %v5202 = vld [vmem:[%s3653 + $0xd8] sm:$0xff]
        %v5203 = vld [vmem:[%s3653 + $0xe0] sm:$0xff]
        %v5204 = vld [vmem:[%s3653 + $0xe8] sm:$0xff]
        %v5205 = vld [vmem:[%s3653 + $0xf0] sm:$0xff]
        %v5206 = vld [vmem:[%s3653 + $0xf8] sm:$0xff]
        %v5207 = vld [vmem:[%s3653 + $0x100] sm:$0xff]
        %v5208 = vld [vmem:[%s3653 + $0x108] sm:$0xff]
        %v5209 = vld [vmem:[%s3653 + $0x110] sm:$0xff]
        %v5210 = vld [vmem:[%s3653 + $0x118] sm:$0xff]
        %v5211 = vld [vmem:[%s3653 + $0x120] sm:$0xff]
        %v5212 = vld [vmem:[%s3653 + $0x128] sm:$0xff]
        %v5213 = vld [vmem:[%s3653 + $0x130] sm:$0xff]
        %v5214 = vld [vmem:[%s3653 + $0x138] sm:$0xff]
        %v5215 = vld [vmem:[%s3653 + $0x140] sm:$0xff]
        %v5216 = vld [vmem:[%s3653 + $0x148] sm:$0xff]
        %v5217 = vld [vmem:[%s3653 + $0x150] sm:$0xff]
        %v5218 = vld [vmem:[%s3653 + $0x158] sm:$0xff]
        %v5219 = vld [vmem:[%s3653 + $0x160] sm:$0xff]
        %v5220 = vld [vmem:[%s3653 + $0x168] sm:$0xff]
        %v5221 = vld [vmem:[%s3653 + $0x170] sm:$0xff]
        %v5222 = vld [vmem:[%s3653 + $0x178] sm:$0xff]
        %v5223 = vmul.f32 %v4096, %v5175
        %v5224 = vmul.f32 %v4097, %v5176
        %v5225 = vmul.f32 %v4098, %v5177
        %v5226 = vmul.f32 %v4099, %v5178
        %v5227 = vmul.f32 %v4100, %v5179
        %v5228 = vmul.f32 %v4101, %v5180
        %v5229 = vmul.f32 %v4102, %v5181
        %v5230 = vmul.f32 %v4103, %v5182
        %v5231 = vmul.f32 %v4104, %v5183
        %v5232 = vmul.f32 %v4105, %v5184
        %v5233 = vmul.f32 %v4106, %v5185
        %v5234 = vmul.f32 %v4107, %v5186
        %v5235 = vmul.f32 %v4108, %v5187
        %v5236 = vmul.f32 %v4109, %v5188
        %v5237 = vmul.f32 %v4110, %v5189
        %v5238 = vmul.f32 %v4111, %v5190
        %v5239 = vmul.f32 %v4112, %v5191
        %v5240 = vmul.f32 %v4113, %v5192
        %v5241 = vmul.f32 %v4114, %v5193
        %v5242 = vmul.f32 %v4115, %v5194
        %v5243 = vmul.f32 %v4116, %v5195
        %v5244 = vmul.f32 %v4117, %v5196
        %v5245 = vmul.f32 %v4118, %v5197
        %v5246 = vmul.f32 %v4119, %v5198
        %v5247 = vmul.f32 %v4120, %v5199
        %v5248 = vmul.f32 %v4121, %v5200
        %v5249 = vmul.f32 %v4122, %v5201
        %v5250 = vmul.f32 %v4123, %v5202
        %v5251 = vmul.f32 %v4124, %v5203
        %v5252 = vmul.f32 %v4125, %v5204
        %v5253 = vmul.f32 %v4126, %v5205
        %v5254 = vmul.f32 %v4127, %v5206
        %v5255 = vmul.f32 %v4128, %v5207
        %v5256 = vmul.f32 %v4129, %v5208
        %v5257 = vmul.f32 %v4130, %v5209
        %v5258 = vmul.f32 %v4131, %v5210
        %v5259 = vmul.f32 %v4132, %v5211
        %v5260 = vmul.f32 %v4133, %v5212
        %v5261 = vmul.f32 %v4134, %v5213
        %v5262 = vmul.f32 %v4135, %v5214
        %v5263 = vmul.f32 %v4136, %v5215
        %v5264 = vmul.f32 %v4137, %v5216
        %v5265 = vmul.f32 %v4138, %v5217
        %v5266 = vmul.f32 %v4139, %v5218
        %v5267 = vmul.f32 %v4140, %v5219
        %v5268 = vmul.f32 %v4141, %v5220
        %v5269 = vmul.f32 %v4142, %v5221
        %v5270 = vmul.f32 %v4143, %v5222
        %v5271 = vadd.f32 %v5223, %v5224
        %v5272 = vadd.f32 %v5271, %v5225
        %v5273 = vadd.f32 %v5272, %v5226
        %v5274 = vadd.f32 %v5273, %v5227
        %v5275 = vadd.f32 %v5274, %v5228
        %v5276 = vadd.f32 %v5275, %v5229
        %v5277 = vadd.f32 %v5276, %v5230
        %v5278 = vadd.f32 %v5277, %v5231
        %v5279 = vadd.f32 %v5278, %v5232
        %v5280 = vadd.f32 %v5279, %v5233
        %v5281 = vadd.f32 %v5280, %v5234
        %v5282 = vadd.f32 %v5281, %v5235
        %v5283 = vadd.f32 %v5282, %v5236
        %v5284 = vadd.f32 %v5283, %v5237
        %v5285 = vadd.f32 %v5284, %v5238
        %v5286 = vadd.f32 %v5285, %v5239
        %v5287 = vadd.f32 %v5286, %v5240
        %v5288 = vadd.f32 %v5287, %v5241
        %v5289 = vadd.f32 %v5288, %v5242
        %v5290 = vadd.f32 %v5289, %v5243
        %v5291 = vadd.f32 %v5290, %v5244
        %v5292 = vadd.f32 %v5291, %v5245
        %v5293 = vadd.f32 %v5292, %v5246
        %v5294 = vadd.f32 %v5293, %v5247
        %v5295 = vadd.f32 %v5294, %v5248
        %v5296 = vadd.f32 %v5295, %v5249
        %v5297 = vadd.f32 %v5296, %v5250
        %v5298 = vadd.f32 %v5297, %v5251
        %v5299 = vadd.f32 %v5298, %v5252
        %v5300 = vadd.f32 %v5299, %v5253
        %v5301 = vadd.f32 %v5300, %v5254
        %v5302 = vadd.f32 %v5301, %v5255
        %v5303 = vadd.f32 %v5302, %v5256
        %v5304 = vadd.f32 %v5303, %v5257
        %v5305 = vadd.f32 %v5304, %v5258
        %v5306 = vadd.f32 %v5305, %v5259
        %v5307 = vadd.f32 %v5306, %v5260
        %v5308 = vadd.f32 %v5307, %v5261
        %v5309 = vadd.f32 %v5308, %v5262
        %v5310 = vadd.f32 %v5309, %v5263
        %v5311 = vadd.f32 %v5310, %v5264
        %v5312 = vadd.f32 %v5311, %v5265
        %v5313 = vadd.f32 %v5312, %v5266
        %v5314 = vadd.f32 %v5313, %v5267
        %v5315 = vadd.f32 %v5314, %v5268
        %v5316 = vadd.f32 %v5315, %v5269
        %v5317 = vadd.f32 %v5316, %v5270
        %v5318 = vadd.f32 %v5174, %v5317
        %5319 = vst [vmem:[%s5173] sm:$0xff] %v5318
        %s5320 = scalar_lea.vmem [#allocation2], 144
        %v5321 = vld [vmem:[%s5320] sm:$0xff]
        %v5322 = vld [vmem:[%s3801] sm:$0xff]
        %v5323 = vld [vmem:[%s3801 + $0x8] sm:$0xff]
        %v5324 = vld [vmem:[%s3801 + $0x10] sm:$0xff]
        %v5325 = vld [vmem:[%s3801 + $0x18] sm:$0xff]
        %v5326 = vld [vmem:[%s3801 + $0x20] sm:$0xff]
        %v5327 = vld [vmem:[%s3801 + $0x28] sm:$0xff]
        %v5328 = vld [vmem:[%s3801 + $0x30] sm:$0xff]
        %v5329 = vld [vmem:[%s3801 + $0x38] sm:$0xff]
        %v5330 = vld [vmem:[%s3801 + $0x40] sm:$0xff]
        %v5331 = vld [vmem:[%s3801 + $0x48] sm:$0xff]
        %v5332 = vld [vmem:[%s3801 + $0x50] sm:$0xff]
        %v5333 = vld [vmem:[%s3801 + $0x58] sm:$0xff]
        %v5334 = vld [vmem:[%s3801 + $0x60] sm:$0xff]
        %v5335 = vld [vmem:[%s3801 + $0x68] sm:$0xff]
        %v5336 = vld [vmem:[%s3801 + $0x70] sm:$0xff]
        %v5337 = vld [vmem:[%s3801 + $0x78] sm:$0xff]
        %v5338 = vld [vmem:[%s3801 + $0x80] sm:$0xff]
        %v5339 = vld [vmem:[%s3801 + $0x88] sm:$0xff]
        %v5340 = vld [vmem:[%s3801 + $0x90] sm:$0xff]
        %v5341 = vld [vmem:[%s3801 + $0x98] sm:$0xff]
        %v5342 = vld [vmem:[%s3801 + $0xa0] sm:$0xff]
        %v5343 = vld [vmem:[%s3801 + $0xa8] sm:$0xff]
        %v5344 = vld [vmem:[%s3801 + $0xb0] sm:$0xff]
        %v5345 = vld [vmem:[%s3801 + $0xb8] sm:$0xff]
        %v5346 = vld [vmem:[%s3801 + $0xc0] sm:$0xff]
        %v5347 = vld [vmem:[%s3801 + $0xc8] sm:$0xff]
        %v5348 = vld [vmem:[%s3801 + $0xd0] sm:$0xff]
        %v5349 = vld [vmem:[%s3801 + $0xd8] sm:$0xff]
        %v5350 = vld [vmem:[%s3801 + $0xe0] sm:$0xff]
        %v5351 = vld [vmem:[%s3801 + $0xe8] sm:$0xff]
        %v5352 = vld [vmem:[%s3801 + $0xf0] sm:$0xff]
        %v5353 = vld [vmem:[%s3801 + $0xf8] sm:$0xff]
        %v5354 = vld [vmem:[%s3801 + $0x100] sm:$0xff]
        %v5355 = vld [vmem:[%s3801 + $0x108] sm:$0xff]
        %v5356 = vld [vmem:[%s3801 + $0x110] sm:$0xff]
        %v5357 = vld [vmem:[%s3801 + $0x118] sm:$0xff]
        %v5358 = vld [vmem:[%s3801 + $0x120] sm:$0xff]
        %v5359 = vld [vmem:[%s3801 + $0x128] sm:$0xff]
        %v5360 = vld [vmem:[%s3801 + $0x130] sm:$0xff]
        %v5361 = vld [vmem:[%s3801 + $0x138] sm:$0xff]
        %v5362 = vld [vmem:[%s3801 + $0x140] sm:$0xff]
        %v5363 = vld [vmem:[%s3801 + $0x148] sm:$0xff]
        %v5364 = vld [vmem:[%s3801 + $0x150] sm:$0xff]
        %v5365 = vld [vmem:[%s3801 + $0x158] sm:$0xff]
        %v5366 = vld [vmem:[%s3801 + $0x160] sm:$0xff]
        %v5367 = vld [vmem:[%s3801 + $0x168] sm:$0xff]
        %v5368 = vld [vmem:[%s3801 + $0x170] sm:$0xff]
        %v5369 = vld [vmem:[%s3801 + $0x178] sm:$0xff]
        %v5370 = vmul.f32 %v4096, %v5322
        %v5371 = vmul.f32 %v4097, %v5323
        %v5372 = vmul.f32 %v4098, %v5324
        %v5373 = vmul.f32 %v4099, %v5325
        %v5374 = vmul.f32 %v4100, %v5326
        %v5375 = vmul.f32 %v4101, %v5327
        %v5376 = vmul.f32 %v4102, %v5328
        %v5377 = vmul.f32 %v4103, %v5329
        %v5378 = vmul.f32 %v4104, %v5330
        %v5379 = vmul.f32 %v4105, %v5331
        %v5380 = vmul.f32 %v4106, %v5332
        %v5381 = vmul.f32 %v4107, %v5333
        %v5382 = vmul.f32 %v4108, %v5334
        %v5383 = vmul.f32 %v4109, %v5335
        %v5384 = vmul.f32 %v4110, %v5336
        %v5385 = vmul.f32 %v4111, %v5337
        %v5386 = vmul.f32 %v4112, %v5338
        %v5387 = vmul.f32 %v4113, %v5339
        %v5388 = vmul.f32 %v4114, %v5340
        %v5389 = vmul.f32 %v4115, %v5341
        %v5390 = vmul.f32 %v4116, %v5342
        %v5391 = vmul.f32 %v4117, %v5343
        %v5392 = vmul.f32 %v4118, %v5344
        %v5393 = vmul.f32 %v4119, %v5345
        %v5394 = vmul.f32 %v4120, %v5346
        %v5395 = vmul.f32 %v4121, %v5347
        %v5396 = vmul.f32 %v4122, %v5348
        %v5397 = vmul.f32 %v4123, %v5349
        %v5398 = vmul.f32 %v4124, %v5350
        %v5399 = vmul.f32 %v4125, %v5351
        %v5400 = vmul.f32 %v4126, %v5352
        %v5401 = vmul.f32 %v4127, %v5353
        %v5402 = vmul.f32 %v4128, %v5354
        %v5403 = vmul.f32 %v4129, %v5355
        %v5404 = vmul.f32 %v4130, %v5356
        %v5405 = vmul.f32 %v4131, %v5357
        %v5406 = vmul.f32 %v4132, %v5358
        %v5407 = vmul.f32 %v4133, %v5359
        %v5408 = vmul.f32 %v4134, %v5360
        %v5409 = vmul.f32 %v4135, %v5361
        %v5410 = vmul.f32 %v4136, %v5362
        %v5411 = vmul.f32 %v4137, %v5363
        %v5412 = vmul.f32 %v4138, %v5364
        %v5413 = vmul.f32 %v4139, %v5365
        %v5414 = vmul.f32 %v4140, %v5366
        %v5415 = vmul.f32 %v4141, %v5367
        %v5416 = vmul.f32 %v4142, %v5368
        %v5417 = vmul.f32 %v4143, %v5369
        %v5418 = vadd.f32 %v5370, %v5371
        %v5419 = vadd.f32 %v5418, %v5372
        %v5420 = vadd.f32 %v5419, %v5373
        %v5421 = vadd.f32 %v5420, %v5374
        %v5422 = vadd.f32 %v5421, %v5375
        %v5423 = vadd.f32 %v5422, %v5376
        %v5424 = vadd.f32 %v5423, %v5377
        %v5425 = vadd.f32 %v5424, %v5378
        %v5426 = vadd.f32 %v5425, %v5379
        %v5427 = vadd.f32 %v5426, %v5380
        %v5428 = vadd.f32 %v5427, %v5381
        %v5429 = vadd.f32 %v5428, %v5382
        %v5430 = vadd.f32 %v5429, %v5383
        %v5431 = vadd.f32 %v5430, %v5384
        %v5432 = vadd.f32 %v5431, %v5385
        %v5433 = vadd.f32 %v5432, %v5386
        %v5434 = vadd.f32 %v5433, %v5387
        %v5435 = vadd.f32 %v5434, %v5388
        %v5436 = vadd.f32 %v5435, %v5389
        %v5437 = vadd.f32 %v5436, %v5390
        %v5438 = vadd.f32 %v5437, %v5391
        %v5439 = vadd.f32 %v5438, %v5392
        %v5440 = vadd.f32 %v5439, %v5393
        %v5441 = vadd.f32 %v5440, %v5394
        %v5442 = vadd.f32 %v5441, %v5395
        %v5443 = vadd.f32 %v5442, %v5396
        %v5444 = vadd.f32 %v5443, %v5397
        %v5445 = vadd.f32 %v5444, %v5398
        %v5446 = vadd.f32 %v5445, %v5399
        %v5447 = vadd.f32 %v5446, %v5400
        %v5448 = vadd.f32 %v5447, %v5401
        %v5449 = vadd.f32 %v5448, %v5402
        %v5450 = vadd.f32 %v5449, %v5403
        %v5451 = vadd.f32 %v5450, %v5404
        %v5452 = vadd.f32 %v5451, %v5405
        %v5453 = vadd.f32 %v5452, %v5406
        %v5454 = vadd.f32 %v5453, %v5407
        %v5455 = vadd.f32 %v5454, %v5408
        %v5456 = vadd.f32 %v5455, %v5409
        %v5457 = vadd.f32 %v5456, %v5410
        %v5458 = vadd.f32 %v5457, %v5411
        %v5459 = vadd.f32 %v5458, %v5412
        %v5460 = vadd.f32 %v5459, %v5413
        %v5461 = vadd.f32 %v5460, %v5414
        %v5462 = vadd.f32 %v5461, %v5415
        %v5463 = vadd.f32 %v5462, %v5416
        %v5464 = vadd.f32 %v5463, %v5417
        %v5465 = vadd.f32 %v5321, %v5464
        %5466 = vst [vmem:[%s5320] sm:$0xff] %v5465
        %s5467 = scalar_lea.vmem [#allocation2], 152
        %v5468 = vld [vmem:[%s5467] sm:$0xff]
        %v5469 = vld [vmem:[%s3949] sm:$0xff]
        %v5470 = vld [vmem:[%s3949 + $0x8] sm:$0xff]
        %v5471 = vld [vmem:[%s3949 + $0x10] sm:$0xff]
        %v5472 = vld [vmem:[%s3949 + $0x18] sm:$0xff]
        %v5473 = vld [vmem:[%s3949 + $0x20] sm:$0xff]
        %v5474 = vld [vmem:[%s3949 + $0x28] sm:$0xff]
        %v5475 = vld [vmem:[%s3949 + $0x30] sm:$0xff]
        %v5476 = vld [vmem:[%s3949 + $0x38] sm:$0xff]
        %v5477 = vld [vmem:[%s3949 + $0x40] sm:$0xff]
        %v5478 = vld [vmem:[%s3949 + $0x48] sm:$0xff]
        %v5479 = vld [vmem:[%s3949 + $0x50] sm:$0xff]
        %v5480 = vld [vmem:[%s3949 + $0x58] sm:$0xff]
        %v5481 = vld [vmem:[%s3949 + $0x60] sm:$0xff]
        %v5482 = vld [vmem:[%s3949 + $0x68] sm:$0xff]
        %v5483 = vld [vmem:[%s3949 + $0x70] sm:$0xff]
        %v5484 = vld [vmem:[%s3949 + $0x78] sm:$0xff]
        %v5485 = vld [vmem:[%s3949 + $0x80] sm:$0xff]
        %v5486 = vld [vmem:[%s3949 + $0x88] sm:$0xff]
        %v5487 = vld [vmem:[%s3949 + $0x90] sm:$0xff]
        %v5488 = vld [vmem:[%s3949 + $0x98] sm:$0xff]
        %v5489 = vld [vmem:[%s3949 + $0xa0] sm:$0xff]
        %v5490 = vld [vmem:[%s3949 + $0xa8] sm:$0xff]
        %v5491 = vld [vmem:[%s3949 + $0xb0] sm:$0xff]
        %v5492 = vld [vmem:[%s3949 + $0xb8] sm:$0xff]
        %v5493 = vld [vmem:[%s3949 + $0xc0] sm:$0xff]
        %v5494 = vld [vmem:[%s3949 + $0xc8] sm:$0xff]
        %v5495 = vld [vmem:[%s3949 + $0xd0] sm:$0xff]
        %v5496 = vld [vmem:[%s3949 + $0xd8] sm:$0xff]
        %v5497 = vld [vmem:[%s3949 + $0xe0] sm:$0xff]
        %v5498 = vld [vmem:[%s3949 + $0xe8] sm:$0xff]
        %v5499 = vld [vmem:[%s3949 + $0xf0] sm:$0xff]
        %v5500 = vld [vmem:[%s3949 + $0xf8] sm:$0xff]
        %v5501 = vld [vmem:[%s3949 + $0x100] sm:$0xff]
        %v5502 = vld [vmem:[%s3949 + $0x108] sm:$0xff]
        %v5503 = vld [vmem:[%s3949 + $0x110] sm:$0xff]
        %v5504 = vld [vmem:[%s3949 + $0x118] sm:$0xff]
        %v5505 = vld [vmem:[%s3949 + $0x120] sm:$0xff]
        %v5506 = vld [vmem:[%s3949 + $0x128] sm:$0xff]
        %v5507 = vld [vmem:[%s3949 + $0x130] sm:$0xff]
        %v5508 = vld [vmem:[%s3949 + $0x138] sm:$0xff]
        %v5509 = vld [vmem:[%s3949 + $0x140] sm:$0xff]
        %v5510 = vld [vmem:[%s3949 + $0x148] sm:$0xff]
        %v5511 = vld [vmem:[%s3949 + $0x150] sm:$0xff]
        %v5512 = vld [vmem:[%s3949 + $0x158] sm:$0xff]
        %v5513 = vld [vmem:[%s3949 + $0x160] sm:$0xff]
        %v5514 = vld [vmem:[%s3949 + $0x168] sm:$0xff]
        %v5515 = vld [vmem:[%s3949 + $0x170] sm:$0xff]
        %v5516 = vld [vmem:[%s3949 + $0x178] sm:$0xff]
        %v5517 = vmul.f32 %v4096, %v5469
        %v5518 = vmul.f32 %v4097, %v5470
        %v5519 = vmul.f32 %v4098, %v5471
        %v5520 = vmul.f32 %v4099, %v5472
        %v5521 = vmul.f32 %v4100, %v5473
        %v5522 = vmul.f32 %v4101, %v5474
        %v5523 = vmul.f32 %v4102, %v5475
        %v5524 = vmul.f32 %v4103, %v5476
        %v5525 = vmul.f32 %v4104, %v5477
        %v5526 = vmul.f32 %v4105, %v5478
        %v5527 = vmul.f32 %v4106, %v5479
        %v5528 = vmul.f32 %v4107, %v5480
        %v5529 = vmul.f32 %v4108, %v5481
        %v5530 = vmul.f32 %v4109, %v5482
        %v5531 = vmul.f32 %v4110, %v5483
        %v5532 = vmul.f32 %v4111, %v5484
        %v5533 = vmul.f32 %v4112, %v5485
        %v5534 = vmul.f32 %v4113, %v5486
        %v5535 = vmul.f32 %v4114, %v5487
        %v5536 = vmul.f32 %v4115, %v5488
        %v5537 = vmul.f32 %v4116, %v5489
        %v5538 = vmul.f32 %v4117, %v5490
        %v5539 = vmul.f32 %v4118, %v5491
        %v5540 = vmul.f32 %v4119, %v5492
        %v5541 = vmul.f32 %v4120, %v5493
        %v5542 = vmul.f32 %v4121, %v5494
        %v5543 = vmul.f32 %v4122, %v5495
        %v5544 = vmul.f32 %v4123, %v5496
        %v5545 = vmul.f32 %v4124, %v5497
        %v5546 = vmul.f32 %v4125, %v5498
        %v5547 = vmul.f32 %v4126, %v5499
        %v5548 = vmul.f32 %v4127, %v5500
        %v5549 = vmul.f32 %v4128, %v5501
        %v5550 = vmul.f32 %v4129, %v5502
        %v5551 = vmul.f32 %v4130, %v5503
        %v5552 = vmul.f32 %v4131, %v5504
        %v5553 = vmul.f32 %v4132, %v5505
        %v5554 = vmul.f32 %v4133, %v5506
        %v5555 = vmul.f32 %v4134, %v5507
        %v5556 = vmul.f32 %v4135, %v5508
        %v5557 = vmul.f32 %v4136, %v5509
        %v5558 = vmul.f32 %v4137, %v5510
        %v5559 = vmul.f32 %v4138, %v5511
        %v5560 = vmul.f32 %v4139, %v5512
        %v5561 = vmul.f32 %v4140, %v5513
        %v5562 = vmul.f32 %v4141, %v5514
        %v5563 = vmul.f32 %v4142, %v5515
        %v5564 = vmul.f32 %v4143, %v5516
        %v5565 = vadd.f32 %v5517, %v5518
        %v5566 = vadd.f32 %v5565, %v5519
        %v5567 = vadd.f32 %v5566, %v5520
        %v5568 = vadd.f32 %v5567, %v5521
        %v5569 = vadd.f32 %v5568, %v5522
        %v5570 = vadd.f32 %v5569, %v5523
        %v5571 = vadd.f32 %v5570, %v5524
        %v5572 = vadd.f32 %v5571, %v5525
        %v5573 = vadd.f32 %v5572, %v5526
        %v5574 = vadd.f32 %v5573, %v5527
        %v5575 = vadd.f32 %v5574, %v5528
        %v5576 = vadd.f32 %v5575, %v5529
        %v5577 = vadd.f32 %v5576, %v5530
        %v5578 = vadd.f32 %v5577, %v5531
        %v5579 = vadd.f32 %v5578, %v5532
        %v5580 = vadd.f32 %v5579, %v5533
        %v5581 = vadd.f32 %v5580, %v5534
        %v5582 = vadd.f32 %v5581, %v5535
        %v5583 = vadd.f32 %v5582, %v5536
        %v5584 = vadd.f32 %v5583, %v5537
        %v5585 = vadd.f32 %v5584, %v5538
        %v5586 = vadd.f32 %v5585, %v5539
        %v5587 = vadd.f32 %v5586, %v5540
        %v5588 = vadd.f32 %v5587, %v5541
        %v5589 = vadd.f32 %v5588, %v5542
        %v5590 = vadd.f32 %v5589, %v5543
        %v5591 = vadd.f32 %v5590, %v5544
        %v5592 = vadd.f32 %v5591, %v5545
        %v5593 = vadd.f32 %v5592, %v5546
        %v5594 = vadd.f32 %v5593, %v5547
        %v5595 = vadd.f32 %v5594, %v5548
        %v5596 = vadd.f32 %v5595, %v5549
        %v5597 = vadd.f32 %v5596, %v5550
        %v5598 = vadd.f32 %v5597, %v5551
        %v5599 = vadd.f32 %v5598, %v5552
        %v5600 = vadd.f32 %v5599, %v5553
        %v5601 = vadd.f32 %v5600, %v5554
        %v5602 = vadd.f32 %v5601, %v5555
        %v5603 = vadd.f32 %v5602, %v5556
        %v5604 = vadd.f32 %v5603, %v5557
        %v5605 = vadd.f32 %v5604, %v5558
        %v5606 = vadd.f32 %v5605, %v5559
        %v5607 = vadd.f32 %v5606, %v5560
        %v5608 = vadd.f32 %v5607, %v5561
        %v5609 = vadd.f32 %v5608, %v5562
        %v5610 = vadd.f32 %v5609, %v5563
        %v5611 = vadd.f32 %v5610, %v5564
        %v5612 = vadd.f32 %v5468, %v5611
        %5613 = vst [vmem:[%s5467] sm:$0xff] %v5612
        %p5614 = scmp.eq.s32.totalorder %s15, 3
        // Predicated region
        $region113: #{tudui_forward.1} parent=99 // pred_check
          %p5615 = pneg %p5614
        $region114: #{tudui_forward.1} parent=99 // pred_check_branch
          %5617 = sbr.rel (%p5615) target = $region116
        $region115: #{tudui_forward.1} parent=99 // pred_region
          %v5618 = vld [vmem:[#allocation2] sm:$0xff]
          %v5619 = vld [vmem:[#allocation2 + $0x8] sm:$0xff]
          %v5620 = vld [vmem:[#allocation2 + $0x10] sm:$0xff]
          %v5621 = vld [vmem:[#allocation2 + $0x18] sm:$0xff]
          %v5622 = vld [vmem:[#allocation2 + $0x20] sm:$0xff]
          %v5623 = vld [vmem:[#allocation2 + $0x28] sm:$0xff]
          %v5624 = vld [vmem:[#allocation2 + $0x30] sm:$0xff]
          %v5625 = vld [vmem:[#allocation2 + $0x38] sm:$0xff]
          %v5626 = vld [vmem:[#allocation2 + $0x40] sm:$0xff]
          %v5627 = vld [vmem:[#allocation2 + $0x48] sm:$0xff]
          %v5628 = vld [vmem:[#allocation2 + $0x50] sm:$0xff]
          %v5629 = vld [vmem:[#allocation2 + $0x58] sm:$0xff]
          %v5630 = vld [vmem:[#allocation2 + $0x60] sm:$0xff]
          %v5631 = vld [vmem:[#allocation2 + $0x68] sm:$0xff]
          %v5632 = vld [vmem:[#allocation2 + $0x70] sm:$0xff]
          %v5633 = vld [vmem:[#allocation2 + $0x78] sm:$0xff]
          %v5634 = vld [vmem:[#allocation2 + $0x80] sm:$0xff]
          %v5635 = vld [vmem:[#allocation2 + $0x88] sm:$0xff]
          %v5636 = vld [vmem:[#allocation2 + $0x90] sm:$0xff]
          %v5637 = vld [vmem:[#allocation2 + $0x98] sm:$0xff]
          %5638 = vadd.xlane.f32.xlu0 %v5618
          %v5639 = vpop.xlane.xlu0 %5638
          %5640 = vadd.xlane.f32.xlu0 %v5619
          %v5641 = vpop.xlane.xlu0 %5640
          %5642 = vadd.xlane.f32.xlu0 %v5620
          %v5643 = vpop.xlane.xlu0 %5642
          %5644 = vadd.xlane.f32.xlu0 %v5621
          %v5645 = vpop.xlane.xlu0 %5644
          %5646 = vadd.xlane.f32.xlu0 %v5622
          %v5647 = vpop.xlane.xlu0 %5646
          %5648 = vadd.xlane.f32.xlu0 %v5623
          %v5649 = vpop.xlane.xlu0 %5648
          %5650 = vadd.xlane.f32.xlu0 %v5624
          %v5651 = vpop.xlane.xlu0 %5650
          %5652 = vadd.xlane.f32.xlu0 %v5625
          %v5653 = vpop.xlane.xlu0 %5652
          %5654 = vadd.xlane.f32.xlu0 %v5626
          %v5655 = vpop.xlane.xlu0 %5654
          %5656 = vadd.xlane.f32.xlu0 %v5627
          %v5657 = vpop.xlane.xlu0 %5656
          %5658 = vadd.xlane.f32.xlu0 %v5628
          %v5659 = vpop.xlane.xlu0 %5658
          %5660 = vadd.xlane.f32.xlu0 %v5629
          %v5661 = vpop.xlane.xlu0 %5660
          %5662 = vadd.xlane.f32.xlu0 %v5630
          %v5663 = vpop.xlane.xlu0 %5662
          %5664 = vadd.xlane.f32.xlu0 %v5631
          %v5665 = vpop.xlane.xlu0 %5664
          %5666 = vadd.xlane.f32.xlu0 %v5632
          %v5667 = vpop.xlane.xlu0 %5666
          %5668 = vadd.xlane.f32.xlu0 %v5633
          %v5669 = vpop.xlane.xlu0 %5668
          %5670 = vadd.xlane.f32.xlu0 %v5634
          %v5671 = vpop.xlane.xlu0 %5670
          %5672 = vadd.xlane.f32.xlu0 %v5635
          %v5673 = vpop.xlane.xlu0 %5672
          %5674 = vadd.xlane.f32.xlu0 %v5636
          %v5675 = vpop.xlane.xlu0 %5674
          %5676 = vadd.xlane.f32.xlu0 %v5637
          %v5677 = vpop.xlane.xlu0 %5676
          %v5698 = vlaneseq
          %v5699 = vand.u32 %v5698, 127
          %v5700 = vlaneseq
          %v5701 = vshrl.u32 %v5700, 7
          %v5702 = vsub.s32 %v5699, %v5701
          %v5703 = vrot.slane %v5639, %v5702
          %v5704 = vlaneseq
          %v5705 = vshrl.u32 %v5704, 7
          %v5706 = vsub.s32 %v5699, %v5705
          %v5707 = vrot.slane %v5641, %v5706
          %v5708 = vlaneseq
          %v5709 = vshrl.u32 %v5708, 7
          %v5710 = vsub.s32 %v5699, %v5709
          %v5711 = vrot.slane %v5643, %v5710
          %v5712 = vlaneseq
          %v5713 = vshrl.u32 %v5712, 7
          %v5714 = vsub.s32 %v5699, %v5713
          %v5715 = vrot.slane %v5645, %v5714
          %v5716 = vlaneseq
          %v5717 = vshrl.u32 %v5716, 7
          %v5718 = vsub.s32 %v5699, %v5717
          %v5719 = vrot.slane %v5647, %v5718
          %v5720 = vlaneseq
          %v5721 = vshrl.u32 %v5720, 7
          %v5722 = vsub.s32 %v5699, %v5721
          %v5723 = vrot.slane %v5649, %v5722
          %v5724 = vlaneseq
          %v5725 = vshrl.u32 %v5724, 7
          %v5726 = vsub.s32 %v5699, %v5725
          %v5727 = vrot.slane %v5651, %v5726
          %v5728 = vlaneseq
          %v5729 = vshrl.u32 %v5728, 7
          %v5730 = vsub.s32 %v5699, %v5729
          %v5731 = vrot.slane %v5653, %v5730
          %v5732 = vlaneseq
          %v5733 = vshrl.u32 %v5732, 7
          %v5734 = vsub.s32 %v5699, %v5733
          %v5735 = vrot.slane %v5655, %v5734
          %v5736 = vlaneseq
          %v5737 = vshrl.u32 %v5736, 7
          %v5738 = vsub.s32 %v5699, %v5737
          %v5739 = vrot.slane %v5657, %v5738
          %v5740 = vlaneseq
          %v5741 = vshrl.u32 %v5740, 7
          %v5742 = vsub.s32 %v5699, %v5741
          %v5743 = vrot.slane %v5659, %v5742
          %v5744 = vlaneseq
          %v5745 = vshrl.u32 %v5744, 7
          %v5746 = vsub.s32 %v5699, %v5745
          %v5747 = vrot.slane %v5661, %v5746
          %v5748 = vlaneseq
          %v5749 = vshrl.u32 %v5748, 7
          %v5750 = vsub.s32 %v5699, %v5749
          %v5751 = vrot.slane %v5663, %v5750
          %v5752 = vlaneseq
          %v5753 = vshrl.u32 %v5752, 7
          %v5754 = vsub.s32 %v5699, %v5753
          %v5755 = vrot.slane %v5665, %v5754
          %v5756 = vlaneseq
          %v5757 = vshrl.u32 %v5756, 7
          %v5758 = vsub.s32 %v5699, %v5757
          %v5759 = vrot.slane %v5667, %v5758
          %v5760 = vlaneseq
          %v5761 = vshrl.u32 %v5760, 7
          %v5762 = vsub.s32 %v5699, %v5761
          %v5763 = vrot.slane %v5669, %v5762
          %v5764 = vlaneseq
          %v5765 = vshrl.u32 %v5764, 7
          %v5766 = vsub.s32 %v5699, %v5765
          %v5767 = vrot.slane %v5671, %v5766
          %v5768 = vlaneseq
          %v5769 = vshrl.u32 %v5768, 7
          %v5770 = vsub.s32 %v5699, %v5769
          %v5771 = vrot.slane %v5673, %v5770
          %v5772 = vlaneseq
          %v5773 = vshrl.u32 %v5772, 7
          %v5774 = vsub.s32 %v5699, %v5773
          %v5775 = vrot.slane %v5675, %v5774
          %v5776 = vlaneseq
          %v5777 = vshrl.u32 %v5776, 7
          %v5778 = vsub.s32 %v5699, %v5777
          %v5779 = vrot.slane %v5677, %v5778
          %vm5780 = vcmask 1041409
          %v5781 = vsel %vm5780, %v5707, %v5703
          %vm5782 = vcmask 1042434
          %v5783 = vsel %vm5782, %v5711, %v5781
          %vm5784 = vcmask 1043459
          %v5785 = vsel %vm5784, %v5715, %v5783
          %vm5786 = vcmask 1044484
          %v5787 = vsel %vm5786, %v5719, %v5785
          %vm5788 = vcmask 1045509
          %v5789 = vsel %vm5788, %v5723, %v5787
          %vm5790 = vcmask 1046534
          %v5791 = vsel %vm5790, %v5727, %v5789
          %vm5792 = vcmask 1047559
          %v5793 = vsel %vm5792, %v5731, %v5791
          %v5794 = vsel %vm5780, %v5739, %v5735
          %v5795 = vsel %vm5780, %v5747, %v5743
          %v5796 = vsel %vm5782, %v5751, %v5795
          %v5797 = vsel %vm5784, %v5755, %v5796
          %v5798 = vsel %vm5786, %v5759, %v5797
          %v5799 = vsel %vm5788, %v5763, %v5798
          %v5800 = vsel %vm5790, %v5767, %v5799
          %v5801 = vsel %vm5792, %v5771, %v5800
          %v5802 = vsel %vm5780, %v5779, %v5775
          %vm5807 = vcmask 64512
          %v5808 = vsel %vm5807, %v5793, 0.0
          %5809 = vadd.xlane.f32.xlu0 %v5808
          %v5810 = vpop.xlane.xlu0 %5809
          %vm5811 = vcmask 58368
          %v5812 = vsel %vm5811, %v5794, 0.0
          %5813 = vadd.xlane.f32.xlu0 %v5812
          %v5814 = vpop.xlane.xlu0 %5813
          %v5815 = vsel %vm5807, %v5801, 0.0
          %5816 = vadd.xlane.f32.xlu0 %v5815
          %v5817 = vpop.xlane.xlu0 %5816
          %v5818 = vsel %vm5811, %v5802, 0.0
          %5819 = vadd.xlane.f32.xlu0 %v5818
          %v5820 = vpop.xlane.xlu0 %5819
          %v5821 = vld [vmem:[%s2] sm:$0x1]
          %v5823 = vlaneseq
          %v5824 = vshrl.u32 %v5823, 7
          %v5825 = vsub.s32 0, %v5824
          %v5826 = vrot.slane %v5821, %v5825
          %5828 = vbcast.lane.b32.xlu0 %v5826, 256
          %v5829 = vpop.permute.xlu0 %5828
          %s5831 = sor.u32 256, 8
          %5832 = vbcast.lane.b32.xlu0 %v5826, %s5831
          %v5833 = vpop.permute.xlu0 %5832
          %v5836 = vadd.f32 %v5810, %v5829
          %v5837 = vadd.f32 %v5814, %v5833
          %v5838 = vadd.f32 %v5817, %v5829
          %v5839 = vadd.f32 %v5820, %v5833
          %5844 = vset.pattern.permute.xlu0 0
          %5845 = vperm.xlu0 %5844, %v5836
          %v5846 = vpop.permute.xlu0 %5845
          %5847 = vset.pattern.permute.xlu0 0
          %5848 = vperm.xlu0 %5847, %v5837
          %v5849 = vpop.permute.xlu0 %5848
          %5850 = vset.pattern.permute.xlu0 0
          %5851 = vperm.xlu0 %5850, %v5838
          %v5852 = vpop.permute.xlu0 %5851
          %5853 = vset.pattern.permute.xlu0 0
          %5854 = vperm.xlu0 %5853, %v5839
          %v5855 = vpop.permute.xlu0 %5854
          %v5856 = vlaneseq
          %v5857 = vshrl.u32 %v5856, 7
          %v5858 = vsub.s32 %v5699, %v5857
          %v5859 = vrot.slane %v5846, %v5858
          %v5860 = vadd.s32 %v5699, 4294967288
          %v5861 = vlaneseq
          %v5862 = vshrl.u32 %v5861, 7
          %v5863 = vsub.s32 %v5860, %v5862
          %v5864 = vrot.slane %v5849, %v5863
          %vm5865 = vcmask 130112
          %v5866 = vsel %vm5865, %v5864, %v5859
          %v5867 = vlaneseq
          %v5868 = vshrl.u32 %v5867, 7
          %v5869 = vsub.s32 %v5699, %v5868
          %v5870 = vrot.slane %v5852, %v5869
          %v5871 = vlaneseq
          %v5872 = vshrl.u32 %v5871, 7
          %v5873 = vsub.s32 %v5860, %v5872
          %v5874 = vrot.slane %v5855, %v5873
          %v5875 = vsel %vm5865, %v5874, %v5870
          %v5876 = vsel %vm5780, %v5875, %v5866
          %vm5878 = vcmask 74752
          %5879 = vst.msk [vmem:[#allocation5] sm:$0x3] %vm5878, %v5876
        $region116: #{tudui_forward.1} parent=99 // pred_fallthru
          _
        // Predicated region
        $region117: #{tudui_forward.1} parent=99 // pred_check
          %p5880 = pneg %p101
        $region118: #{tudui_forward.1} parent=99 // pred_check_branch
          %5882 = sbr.rel (%p5880) target = $region120
        $region119: #{tudui_forward.1} parent=99 // pred_region
          %s5884 = ssub.s32 32, 32
          %5885 = vsyncadd [#allocation6], %s5884
          %s5887 = sshll.u32 [#allocation5], 4
          %s5888 = int_to_ptr.vmem [resolvable:$true] %s5887
          %5890 = dma.vmem_to_hbm [thread:$0]  %s5888, 32, %s3, [#allocation6]
        $region120: #{tudui_forward.1} parent=99 // pred_fallthru
          _
        // Predicated region
        $region121: #{tudui_forward.1} parent=99 // pred_check
          %p5891 = pneg %p101
        $region122: #{tudui_forward.1} parent=99 // pred_check_branch
          %5893 = sbr.rel (%p5891) target = $region124
        $region123: #{tudui_forward.1} parent=99 // pred_region
          %5894 = dma.done [#allocation6], 32
        $region124: #{tudui_forward.1} parent=99 // pred_fallthru
          _
      $region100: #{tudui_forward.1} parent=5 // pred_fallthru
        _
      %p5895 = scmp.le.s32.totalorder 2, %s10
      // Predicated region
      $region125: #{tudui_forward.1} parent=5 // pred_check
        %p5896 = pneg %p5895
      $region126: #{tudui_forward.1} parent=5 // pred_check_branch
        %5898 = sbr.rel (%p5896) target = $region128
      $region127: #{tudui_forward.1} parent=5 // pred_region
        %s5899 = ssub.s32 %s10, 2
      $region128: #{tudui_forward.1} parent=5 // pred_fallthru
        _
    $region6: #{tudui_forward.1} parent=1 // loop_footer
      %s14 = sadd.s32 1, %s10
    $region7: #{tudui_forward.1} parent=1 // loop_footer_branch
      %9 = sbr.rel target = $region3
    $region8: #{tudui_forward.1} parent=1 // loop_exit
      _
    %5900 = vsyncpa [#allocation6], 1
    %s5901 = scalar_lea.sflag [#allocation6], 1
    %5902 = vsyncpa %s5901, 1

</llo_original>
